<compile_context>
chip_gen: v7x
topology: tpu7x:2x2x1
jax: 0.10.0
libtpu: 0.0.40
codegen_flags: <defaults>
</compile_context>

<pallas_src>
import functools
import numpy as np
import jax
import jax.numpy as jnp
from jax import lax
from jax.experimental import pallas as pl
from jax.experimental.pallas import tpu as pltpu

# ----------------- synthetic small config -----------------
VOCAB = 64
MAX_POS = 16
EMBEDDING_DIM = 32          # BERT hidden size
NUM_LAYERS = 2
NUM_HEADS = 2
HEAD_DIM = EMBEDDING_DIM // NUM_HEADS
FFN_DIM = 64
HIDDEN_SIZE = 16            # LSTM hidden size per direction
TARGET_SIZE = 8             # number of NER tags
LN_EPS = 1e-12


# ===================== in-kernel helpers =====================

def _layernorm(x, g, b, eps=LN_EPS):
    mu = jnp.mean(x, axis=-1, keepdims=True)
    var = jnp.mean(jnp.square(x - mu), axis=-1, keepdims=True)
    return (x - mu) * lax.rsqrt(var + eps) * g + b


def _gelu(x):
    # TODO(synk): HF BERT uses the exact erf GELU; tanh approximation used here.
    return 0.5 * x * (1.0 + jnp.tanh(0.7978845608028654 * (x + 0.044715 * x * x * x)))


def _lstm_cell(g4, c_prev, hh):
    i = jax.nn.sigmoid(g4[:, 0 * hh:1 * hh])
    f = jax.nn.sigmoid(g4[:, 1 * hh:2 * hh])
    g = jnp.tanh(g4[:, 2 * hh:3 * hh])
    o = jax.nn.sigmoid(g4[:, 3 * hh:4 * hh])
    c = f * c_prev + i * g
    return o * jnp.tanh(c), c


# ===================== single fused model kernel =====================

def _model_kernel(ids_ref, mask_ref,
                  wemb_ref, pemb_ref, temb_ref, eg_ref, eb_ref,
                  wqkv_ref, bqkv_ref, wo_ref, bo_ref, ln1g_ref, ln1b_ref,
                  w1_ref, b1_ref, w2_ref, b2_ref, ln2g_ref, ln2b_ref,
                  wih_ref, bih_ref, whhf_ref, whhb_ref, linw_ref, linb_ref,
                  start_ref, end_ref, transt_ref,
                  tags_ref, hcat_ref, hist_ref, *, num_heads):
    bf16 = jnp.bfloat16
    f32 = jnp.float32
    bidx = pl.program_id(0)
    s = mask_ref.shape[2]
    d = wemb_ref.shape[1]
    vocab = wemb_ref.shape[0]
    dh = d // num_heads
    num_layers = wqkv_ref.shape[0]
    hh = whhf_ref.shape[0]
    t = transt_ref.shape[0]
    scale = 1.0 / float(np.sqrt(dh))

    # ---- BERT embeddings (token lookup in-kernel, exact f32 select+reduce) ----
    wemb = wemb_ref[...]                                           # [V, D] f32
    sub_iota = lax.broadcasted_iota(jnp.int32, (vocab, 1), 0)      # [V, 1]
    rows = []
    for step in range(s):                                          # unrolled, S small
        sel = sub_iota == ids_ref[bidx, step]                      # SMEM scalar read
        rows.append(jnp.sum(jnp.where(sel, wemb, 0.0), axis=0, keepdims=True))
    emb = jnp.concatenate(rows, axis=0) + pemb_ref[0:s, :] + temb_ref[...]   # [S, D]
    x = _layernorm(emb, eg_ref[...], eb_ref[...])

    mask_f = mask_ref[0].astype(f32)                               # [1, S]
    bias = (1.0 - mask_f) * (-10000.0)                             # additive key mask

    # ---- BERT encoder layers (bf16 matmul operands, f32 accumulation) ----
    for l in range(num_layers):                                    # static, unrolled
        qkv = jnp.dot(x.astype(bf16), wqkv_ref[l],
                      preferred_element_type=f32) + bqkv_ref[l]    # [S, 3D] f32
        wo_l = wo_ref[l]                                           # [D, D] bf16
        attn = jnp.zeros((s, d), f32)
        for h in range(num_heads):                                 # static, unrolled
            base = 3 * dh * h                                      # per-head packed cols
            q = qkv[:, base:base + dh].astype(bf16)
            k = qkv[:, base + dh:base + 2 * dh].astype(bf16)
            v = qkv[:, base + 2 * dh:base + 3 * dh].astype(bf16)
            sc = lax.dot_general(q, k, (((1,), (1,)), ((), ())),
                                 preferred_element_type=f32) * scale     # [S, S]
            sc = sc + bias
            m = jnp.max(sc, axis=-1, keepdims=True)
            p = jnp.exp(sc - m)
            p = p * pl.reciprocal(jnp.sum(p, axis=-1, keepdims=True), approx=True)
            ctx_h = jnp.dot(p.astype(bf16), v, preferred_element_type=f32)   # [S, dh]
            # per-head accumulation into the output projection (no lane concat)
            attn = attn + jnp.dot(ctx_h.astype(bf16),
                                  wo_l[h * dh:(h + 1) * dh, :],
                                  preferred_element_type=f32)
        attn = attn + bo_ref[l]
        x = _layernorm(attn + x, ln1g_ref[l], ln1b_ref[l])

        ff = jnp.dot(x.astype(bf16), w1_ref[l],
                     preferred_element_type=f32) + b1_ref[l]
        ff = _gelu(ff)
        ff = jnp.dot(ff.astype(bf16), w2_ref[l],
                     preferred_element_type=f32) + b2_ref[l]
        x = _layernorm(ff + x, ln2g_ref[l], ln2b_ref[l])

    # ---- fused bidirectional LSTM ----
    xg = jnp.dot(x.astype(bf16), wih_ref[...],
                 preferred_element_type=f32) + bih_ref[...]        # [S, 8H]
    xg_f = xg[:, :4 * hh]                                          # hoisted lane split
    xg_b = xg[:, 4 * hh:]                                          # (done once, not per step)
    whh_f = whhf_ref[...]                                          # [H, 4H] bf16
    whh_b = whhb_ref[...]
    h_f = jnp.zeros((1, hh), f32)
    h_b = jnp.zeros((1, hh), f32)
    c_f = jnp.zeros((1, hh), f32)
    c_b = jnp.zeros((1, hh), f32)
    for step in range(s):                                          # unrolled (S small)
        gf = xg_f[step:step + 1, :] + jnp.dot(h_f.astype(bf16), whh_f,
                                              preferred_element_type=f32)
        gb = xg_b[s - 1 - step:s - step, :] + jnp.dot(h_b.astype(bf16), whh_b,
                                                      preferred_element_type=f32)
        h_f, c_f = _lstm_cell(gf, c_f, hh)
        h_b, c_b = _lstm_cell(gb, c_b, hh)
        hcat_ref[step:step + 1, 0:hh] = h_f                        # time = step
        hcat_ref[s - 1 - step:s - step, hh:2 * hh] = h_b           # time = s-1-step
    hcat = hcat_ref[...]                                           # [S, 2H]

    # ---- emission scores (linear) ----
    emis = jnp.dot(hcat.astype(bf16), linw_ref[...],
                   preferred_element_type=f32) + linb_ref[...]     # [S, T]

    # ---- CRF Viterbi forward pass ----
    mvalid = mask_ref[0] != 0                                      # [1, S]
    trans_t = transt_ref[...]                                      # transitions.T, [T, T]
    score = start_ref[...] + emis[0:1, :]                          # [1, T]
    for step in range(1, s):                                       # unrolled
        e = emis[step:step + 1, :]
        # ns[0, j, i] = score[i] + transitions[i, j] + e[j]
        ns = score[:, None, :] + trans_t[None, :, :] + e[:, :, None]      # [1, T, T]
        best = jnp.max(ns, axis=-1)                                # [1, T]
        iota3 = lax.broadcasted_iota(jnp.int32, ns.shape, 2)
        idx = jnp.min(jnp.where(ns == best[:, :, None], iota3, t),
                      axis=-1).astype(jnp.int32)                   # [1, T] backpointers
        m = mvalid[:, step:step + 1]
        score = jnp.where(m, best, score)
        hist_ref[step - 1:step, :] = idx                           # spill to VMEM scratch
    score = score + end_ref[...]

    # ---- in-kernel backtrace (no HBM history) ----
    length = jnp.sum(mask_f, axis=-1, keepdims=True).astype(jnp.int32)   # [1, 1]
    seq_end = length - 1
    tag_iota = lax.broadcasted_iota(jnp.int32, (1, t), 1)
    col_iota = lax.broadcasted_iota(jnp.int32, (1, s), 1)
    best_final = jnp.max(score, axis=-1, keepdims=True)
    last_tag = jnp.min(jnp.where(score == best_final, tag_iota, t),
                       axis=-1, keepdims=True).astype(jnp.int32)   # [1, 1]

    tags = jnp.zeros((1, s), jnp.int32)
    cur = jnp.zeros((1, 1), jnp.int32)
    for tt in range(s - 1, -1, -1):                                # unrolled
        row = tt if tt < s - 1 else s - 2                          # row s-1 never used
        bp = hist_ref[row:row + 1, :]                              # [1, T] int32
        followed = jnp.sum(jnp.where(tag_iota == cur, bp.astype(f32), 0.0),
                           axis=-1, keepdims=True).astype(jnp.int32)
        new = jnp.where(seq_end == tt, last_tag,
                        jnp.where(seq_end > tt, followed, jnp.zeros_like(last_tag)))
        cur = new
        tags = jnp.where(col_iota == tt, new, tags)
    tags_ref[0] = tags


# ===================== one-time parameter packing (outside jit) =====================

def pack_params(params):
    f32, bf16 = jnp.float32, jnp.bfloat16
    layers = params["layers"]
    dh = HEAD_DIM

    def qkv_w(lp):
        cols = []
        for h in range(NUM_HEADS):
            sl = slice(h * dh, (h + 1) * dh)
            cols += [lp["wq"][:, sl], lp["wk"][:, sl], lp["wv"][:, sl]]
        return jnp.concatenate(cols, axis=1)                       # [D, 3D] per-head packed

    def qkv_b(lp):
        cols = []
        for h in range(NUM_HEADS):
            sl = slice(h * dh, (h + 1) * dh)
            cols += [lp["bq"][sl], lp["bk"][sl], lp["bv"][sl]]
        return jnp.concatenate(cols)[None, :]                      # [1, 3D]

    def stk(fn, dt):
        return jnp.stack([fn(lp) for lp in layers]).astype(dt)

    lstm = params["lstm"]
    packed = (
        params["word_emb"].astype(f32),                            # [V, D]
        params["pos_emb"].astype(f32),                             # [MAX_POS, D]
        params["type_emb"][0:1].astype(f32),                       # [1, D]
        params["emb_ln_g"][None, :].astype(f32),
        params["emb_ln_b"][None, :].astype(f32),
        stk(qkv_w, bf16), stk(qkv_b, f32),                         # fused per-head QKV
        stk(lambda lp: lp["wo"], bf16), stk(lambda lp: lp["bo"][None, :], f32),
        stk(lambda lp: lp["ln1_g"][None, :], f32), stk(lambda lp: lp["ln1_b"][None, :], f32),
        stk(lambda lp: lp["w1"], bf16), stk(lambda lp: lp["b1"][None, :], f32),
        stk(lambda lp: lp["w2"], bf16), stk(lambda lp: lp["b2"][None, :], f32),
        stk(lambda lp: lp["ln2_g"][None, :], f32), stk(lambda lp: lp["ln2_b"][None, :], f32),
        jnp.concatenate([lstm["w_ih_f"].T, lstm["w_ih_b"].T], axis=1).astype(bf16),  # [D, 8H]
        jnp.concatenate([lstm["b_ih_f"] + lstm["b_hh_f"],
                         lstm["b_ih_b"] + lstm["b_hh_b"]])[None, :].astype(f32),     # [1, 8H]
        lstm["w_hh_f"].T.astype(bf16),                             # [H, 4H]
        lstm["w_hh_b"].T.astype(bf16),                             # [H, 4H]
        params["lin_w"].astype(bf16),                              # [2H, T]
        params["lin_b"][None, :].astype(f32),                      # [1, T]
        params["crf"]["start"][None, :].astype(f32),
        params["crf"]["end"][None, :].astype(f32),
        params["crf"]["trans"].T.astype(f32),                      # [T, T]
    )
    return packed


# ===================== forward (single fused pallas_call) =====================

def forward(packed, input_ids, mask):
    b, s = input_ids.shape
    D, L, F, H, T = EMBEDDING_DIM, NUM_LAYERS, FFN_DIM, HIDDEN_SIZE, TARGET_SIZE
    mask_i = mask.astype(jnp.int32)[:, None, :]                    # [B, 1, S]

    def full(shape):
        if len(shape) == 2:
            return pl.BlockSpec(shape, lambda i, ids: (0, 0))
        return pl.BlockSpec(shape, lambda i, ids: (0, 0, 0))

    in_specs = [
        pl.BlockSpec((1, 1, s), lambda i, ids: (i, 0, 0)),         # int mask
        full((VOCAB, D)), full((MAX_POS, D)), full((1, D)),        # embedding tables
        full((1, D)), full((1, D)),                                # embedding LN
        full((L, D, 3 * D)), full((L, 1, 3 * D)),                  # fused per-head QKV
        full((L, D, D)), full((L, 1, D)),                          # attention output proj
        full((L, 1, D)), full((L, 1, D)),                          # LN1
        full((L, D, F)), full((L, 1, F)),                          # FFN up
        full((L, F, D)), full((L, 1, D)),                          # FFN down
        full((L, 1, D)), full((L, 1, D)),                          # LN2
        full((D, 8 * H)), full((1, 8 * H)),                        # LSTM input proj
        full((H, 4 * H)), full((H, 4 * H)),                        # LSTM recurrent fwd/bwd
        full((2 * H, T)), full((1, T)),                            # emission linear
        full((1, T)), full((1, T)), full((T, T)),                  # CRF start/end/trans.T
    ]

    grid_spec = pltpu.PrefetchScalarGridSpec(
        num_scalar_prefetch=1,                                     # input_ids -> SMEM
        grid=(b,),
        in_specs=in_specs,
        out_specs=pl.BlockSpec((1, 1, s), lambda i, ids: (i, 0, 0)),
        scratch_shapes=[pltpu.VMEM((s, 2 * H), jnp.float32),       # LSTM hidden history
                        pltpu.VMEM((s, T), jnp.int32)],            # Viterbi backpointers
    )

    tags = pl.pallas_call(
        functools.partial(_model_kernel, num_heads=NUM_HEADS),
        grid_spec=grid_spec,
        out_shape=jax.ShapeDtypeStruct((b, 1, s), jnp.int32),
        compiler_params=pltpu.CompilerParams(dimension_semantics=("parallel",)),
    )(input_ids.astype(jnp.int32), mask_i, *packed)
    return tags[:, 0, :]                                           # [B, S]


# ===================== deterministic param init =====================

def init_params(key):
    keys = iter(jax.random.split(key, 128))

    def nrm(shape, scale=0.02):
        return scale * jax.random.normal(next(keys), shape, jnp.float32)

    def unif(shape, a):
        return jax.random.uniform(next(keys), shape, jnp.float32, -a, a)

    params = {
        "word_emb": nrm((VOCAB, EMBEDDING_DIM)),
        "pos_emb": nrm((MAX_POS, EMBEDDING_DIM)),
        "type_emb": nrm((2, EMBEDDING_DIM)),
        "emb_ln_g": jnp.ones((EMBEDDING_DIM,), jnp.float32),
        "emb_ln_b": jnp.zeros((EMBEDDING_DIM,), jnp.float32),
    }

    layers = []
    for _ in range(NUM_LAYERS):
        layers.append({
            "wq": nrm((EMBEDDING_DIM, EMBEDDING_DIM)), "bq": jnp.zeros((EMBEDDING_DIM,)),
            "wk": nrm((EMBEDDING_DIM, EMBEDDING_DIM)), "bk": jnp.zeros((EMBEDDING_DIM,)),
            "wv": nrm((EMBEDDING_DIM, EMBEDDING_DIM)), "bv": jnp.zeros((EMBEDDING_DIM,)),
            "wo": nrm((EMBEDDING_DIM, EMBEDDING_DIM)), "bo": jnp.zeros((EMBEDDING_DIM,)),
            "ln1_g": jnp.ones((EMBEDDING_DIM,)), "ln1_b": jnp.zeros((EMBEDDING_DIM,)),
            "w1": nrm((EMBEDDING_DIM, FFN_DIM)), "b1": jnp.zeros((FFN_DIM,)),
            "w2": nrm((FFN_DIM, EMBEDDING_DIM)), "b2": jnp.zeros((EMBEDDING_DIM,)),
            "ln2_g": jnp.ones((EMBEDDING_DIM,)), "ln2_b": jnp.zeros((EMBEDDING_DIM,)),
        })
    params["layers"] = layers

    k = 1.0 / np.sqrt(HIDDEN_SIZE)
    params["lstm"] = {
        "w_ih_f": unif((4 * HIDDEN_SIZE, EMBEDDING_DIM), k),
        "w_hh_f": unif((4 * HIDDEN_SIZE, HIDDEN_SIZE), k),
        "b_ih_f": unif((4 * HIDDEN_SIZE,), k), "b_hh_f": unif((4 * HIDDEN_SIZE,), k),
        "w_ih_b": unif((4 * HIDDEN_SIZE, EMBEDDING_DIM), k),
        "w_hh_b": unif((4 * HIDDEN_SIZE, HIDDEN_SIZE), k),
        "b_ih_b": unif((4 * HIDDEN_SIZE,), k), "b_hh_b": unif((4 * HIDDEN_SIZE,), k),
    }

    kl = 1.0 / np.sqrt(2 * HIDDEN_SIZE)
    params["lin_w"] = unif((2 * HIDDEN_SIZE, TARGET_SIZE), kl)
    params["lin_b"] = unif((TARGET_SIZE,), kl)

    params["crf"] = {
        "start": unif((TARGET_SIZE,), 0.1),
        "end": unif((TARGET_SIZE,), 0.1),
        "trans": unif((TARGET_SIZE, TARGET_SIZE), 0.1),
    }
    return params


# ===================== main =====================

if __name__ == "__main__":
    key = jax.random.PRNGKey(0)
    pkey, dkey = jax.random.split(key)
    params = init_params(pkey)
    packed = pack_params(params)          # one-time packing, outside jit

    B, S = 2, 8
    input_ids = jax.random.randint(dkey, (B, S), 0, VOCAB, dtype=jnp.int32)
    mask = jnp.array([[1] * S, [1] * 5 + [0] * (S - 5)], dtype=jnp.int32)

    tags = jax.jit(forward)(packed, input_ids, mask)
    tags = jax.block_until_ready(tags)
    assert tags.shape == (B, S) and tags.dtype == jnp.int32
    print("KERNEL_OK")
</pallas_src>

<mosaic_0001>
module attributes {stable_mosaic.version = 11 : i64} {
  func.func @_model_kernel(%arg0: i32, %arg1: memref<2x8xi32, #tpu.memory_space<smem>>, %arg2: memref<1x1x8xi32, #tpu.memory_space<vmem>>, %arg3: memref<64x32xf32, #tpu.memory_space<vmem>>, %arg4: memref<16x32xf32, #tpu.memory_space<vmem>>, %arg5: memref<1x32xf32, #tpu.memory_space<vmem>>, %arg6: memref<1x32xf32, #tpu.memory_space<vmem>>, %arg7: memref<1x32xf32, #tpu.memory_space<vmem>>, %arg8: memref<2x32x96xbf16, #tpu.memory_space<vmem>>, %arg9: memref<2x1x96xf32, #tpu.memory_space<vmem>>, %arg10: memref<2x32x32xbf16, #tpu.memory_space<vmem>>, %arg11: memref<2x1x32xf32, #tpu.memory_space<vmem>>, %arg12: memref<2x1x32xf32, #tpu.memory_space<vmem>>, %arg13: memref<2x1x32xf32, #tpu.memory_space<vmem>>, %arg14: memref<2x32x64xbf16, #tpu.memory_space<vmem>>, %arg15: memref<2x1x64xf32, #tpu.memory_space<vmem>>, %arg16: memref<2x64x32xbf16, #tpu.memory_space<vmem>>, %arg17: memref<2x1x32xf32, #tpu.memory_space<vmem>>, %arg18: memref<2x1x32xf32, #tpu.memory_space<vmem>>, %arg19: memref<2x1x32xf32, #tpu.memory_space<vmem>>, %arg20: memref<32x128xbf16, #tpu.memory_space<vmem>>, %arg21: memref<1x128xf32, #tpu.memory_space<vmem>>, %arg22: memref<16x64xbf16, #tpu.memory_space<vmem>>, %arg23: memref<16x64xbf16, #tpu.memory_space<vmem>>, %arg24: memref<32x8xbf16, #tpu.memory_space<vmem>>, %arg25: memref<1x8xf32, #tpu.memory_space<vmem>>, %arg26: memref<1x8xf32, #tpu.memory_space<vmem>>, %arg27: memref<1x8xf32, #tpu.memory_space<vmem>>, %arg28: memref<8x8xf32, #tpu.memory_space<vmem>>, %arg29: memref<1x1x8xi32, #tpu.memory_space<vmem>>, %arg30: memref<8x32xf32, #tpu.memory_space<vmem>>, %arg31: memref<8x8xi32, #tpu.memory_space<vmem>>) attributes {dimension_semantics = [#tpu.dimension_semantics<parallel>], iteration_bounds = array<i64: 2>, scalar_prefetch = 1 : i64, scratch_operands = 2 : i64, tpu.core_type = #tpu.core_type<tc>, window_params = [{transform_indices = @transform_0, window_bounds = array<i64: 1, 1, 8>}, {pipeline_mode = #tpu.pipeline_mode<synchronous>, transform_indices = @transform_1, window_bounds = array<i64: 64, 32>}, {pipeline_mode = #tpu.pipeline_mode<synchronous>, transform_indices = @transform_2, window_bounds = array<i64: 16, 32>}, {pipeline_mode = #tpu.pipeline_mode<synchronous>, transform_indices = @transform_3, window_bounds = array<i64: 1, 32>}, {pipeline_mode = #tpu.pipeline_mode<synchronous>, transform_indices = @transform_4, window_bounds = array<i64: 1, 32>}, {pipeline_mode = #tpu.pipeline_mode<synchronous>, transform_indices = @transform_5, window_bounds = array<i64: 1, 32>}, {pipeline_mode = #tpu.pipeline_mode<synchronous>, transform_indices = @transform_6, window_bounds = array<i64: 2, 32, 96>}, {pipeline_mode = #tpu.pipeline_mode<synchronous>, transform_indices = @transform_7, window_bounds = array<i64: 2, 1, 96>}, {pipeline_mode = #tpu.pipeline_mode<synchronous>, transform_indices = @transform_8, window_bounds = array<i64: 2, 32, 32>}, {pipeline_mode = #tpu.pipeline_mode<synchronous>, transform_indices = @transform_9, window_bounds = array<i64: 2, 1, 32>}, {pipeline_mode = #tpu.pipeline_mode<synchronous>, transform_indices = @transform_10, window_bounds = array<i64: 2, 1, 32>}, {pipeline_mode = #tpu.pipeline_mode<synchronous>, transform_indices = @transform_11, window_bounds = array<i64: 2, 1, 32>}, {pipeline_mode = #tpu.pipeline_mode<synchronous>, transform_indices = @transform_12, window_bounds = array<i64: 2, 32, 64>}, {pipeline_mode = #tpu.pipeline_mode<synchronous>, transform_indices = @transform_13, window_bounds = array<i64: 2, 1, 64>}, {pipeline_mode = #tpu.pipeline_mode<synchronous>, transform_indices = @transform_14, window_bounds = array<i64: 2, 64, 32>}, {pipeline_mode = #tpu.pipeline_mode<synchronous>, transform_indices = @transform_15, window_bounds = array<i64: 2, 1, 32>}, {pipeline_mode = #tpu.pipeline_mode<synchronous>, transform_indices = @transform_16, window_bounds = array<i64: 2, 1, 32>}, {pipeline_mode = #tpu.pipeline_mode<synchronous>, transform_indices = @transform_17, window_bounds = array<i64: 2, 1, 32>}, {pipeline_mode = #tpu.pipeline_mode<synchronous>, transform_indices = @transform_18, window_bounds = array<i64: 32, 128>}, {pipeline_mode = #tpu.pipeline_mode<synchronous>, transform_indices = @transform_19, window_bounds = array<i64: 1, 128>}, {pipeline_mode = #tpu.pipeline_mode<synchronous>, transform_indices = @transform_20, window_bounds = array<i64: 16, 64>}, {pipeline_mode = #tpu.pipeline_mode<synchronous>, transform_indices = @transform_21, window_bounds = array<i64: 16, 64>}, {pipeline_mode = #tpu.pipeline_mode<synchronous>, transform_indices = @transform_22, window_bounds = array<i64: 32, 8>}, {pipeline_mode = #tpu.pipeline_mode<synchronous>, transform_indices = @transform_23, window_bounds = array<i64: 1, 8>}, {pipeline_mode = #tpu.pipeline_mode<synchronous>, transform_indices = @transform_24, window_bounds = array<i64: 1, 8>}, {pipeline_mode = #tpu.pipeline_mode<synchronous>, transform_indices = @transform_25, window_bounds = array<i64: 1, 8>}, {pipeline_mode = #tpu.pipeline_mode<synchronous>, transform_indices = @transform_26, window_bounds = array<i64: 8, 8>}, {transform_indices = @transform_27, window_bounds = array<i64: 1, 1, 8>}]} {
    %c0 = arith.constant 0 : index
    %c0_0 = arith.constant 0 : index
    %0 = vector.load %arg3[%c0, %c0_0] : memref<64x32xf32, #tpu.memory_space<vmem>>, vector<64x32xf32>
    %1 = tpu.iota {dimensions = array<i32: 0>} : vector<64x1xi32>
    %2 = arith.index_cast %arg0 : i32 to index
    %c0_1 = arith.constant 0 : index
    %3 = memref.load %arg1[%2, %c0_1] : memref<2x8xi32, #tpu.memory_space<smem>>
    %4 = vector.broadcast %3 : i32 to vector<64x1xi32>
    %5 = arith.cmpi eq, %1, %4 : vector<64x1xi32>
    %cst = arith.constant 0.000000e+00 : f32
    %6 = vector.shape_cast %5 : vector<64x1xi1> to vector<64x1xi1>
    %7 = vector.broadcast %6 : vector<64x1xi1> to vector<64x32xi1>
    %8 = vector.broadcast %cst : f32 to vector<64x32xf32>
    %9 = arith.select %7, %0, %8 : vector<64x32xi1>, vector<64x32xf32>
    %cst_2 = arith.constant dense<0.000000e+00> : vector<32xf32>
    %10 = vector.multi_reduction <add>, %9, %cst_2 [0] : vector<64x32xf32> to vector<32xf32>
    %11 = vector.shape_cast %10 : vector<32xf32> to vector<1x32xf32>
    %12 = arith.index_cast %arg0 : i32 to index
    %c1 = arith.constant 1 : index
    %13 = memref.load %arg1[%12, %c1] : memref<2x8xi32, #tpu.memory_space<smem>>
    %14 = vector.broadcast %13 : i32 to vector<64x1xi32>
    %15 = arith.cmpi eq, %1, %14 : vector<64x1xi32>
    %cst_3 = arith.constant 0.000000e+00 : f32
    %16 = vector.shape_cast %15 : vector<64x1xi1> to vector<64x1xi1>
    %17 = vector.broadcast %16 : vector<64x1xi1> to vector<64x32xi1>
    %18 = vector.broadcast %cst_3 : f32 to vector<64x32xf32>
    %19 = arith.select %17, %0, %18 : vector<64x32xi1>, vector<64x32xf32>
    %cst_4 = arith.constant dense<0.000000e+00> : vector<32xf32>
    %20 = vector.multi_reduction <add>, %19, %cst_4 [0] : vector<64x32xf32> to vector<32xf32>
    %21 = vector.shape_cast %20 : vector<32xf32> to vector<1x32xf32>
    %22 = arith.index_cast %arg0 : i32 to index
    %c2 = arith.constant 2 : index
    %23 = memref.load %arg1[%22, %c2] : memref<2x8xi32, #tpu.memory_space<smem>>
    %24 = vector.broadcast %23 : i32 to vector<64x1xi32>
    %25 = arith.cmpi eq, %1, %24 : vector<64x1xi32>
    %cst_5 = arith.constant 0.000000e+00 : f32
    %26 = vector.shape_cast %25 : vector<64x1xi1> to vector<64x1xi1>
    %27 = vector.broadcast %26 : vector<64x1xi1> to vector<64x32xi1>
    %28 = vector.broadcast %cst_5 : f32 to vector<64x32xf32>
    %29 = arith.select %27, %0, %28 : vector<64x32xi1>, vector<64x32xf32>
    %cst_6 = arith.constant dense<0.000000e+00> : vector<32xf32>
    %30 = vector.multi_reduction <add>, %29, %cst_6 [0] : vector<64x32xf32> to vector<32xf32>
    %31 = vector.shape_cast %30 : vector<32xf32> to vector<1x32xf32>
    %32 = arith.index_cast %arg0 : i32 to index
    %c3 = arith.constant 3 : index
    %33 = memref.load %arg1[%32, %c3] : memref<2x8xi32, #tpu.memory_space<smem>>
    %34 = vector.broadcast %33 : i32 to vector<64x1xi32>
    %35 = arith.cmpi eq, %1, %34 : vector<64x1xi32>
    %cst_7 = arith.constant 0.000000e+00 : f32
    %36 = vector.shape_cast %35 : vector<64x1xi1> to vector<64x1xi1>
    %37 = vector.broadcast %36 : vector<64x1xi1> to vector<64x32xi1>
    %38 = vector.broadcast %cst_7 : f32 to vector<64x32xf32>
    %39 = arith.select %37, %0, %38 : vector<64x32xi1>, vector<64x32xf32>
    %cst_8 = arith.constant dense<0.000000e+00> : vector<32xf32>
    %40 = vector.multi_reduction <add>, %39, %cst_8 [0] : vector<64x32xf32> to vector<32xf32>
    %41 = vector.shape_cast %40 : vector<32xf32> to vector<1x32xf32>
    %42 = arith.index_cast %arg0 : i32 to index
    %c4 = arith.constant 4 : index
    %43 = memref.load %arg1[%42, %c4] : memref<2x8xi32, #tpu.memory_space<smem>>
    %44 = vector.broadcast %43 : i32 to vector<64x1xi32>
    %45 = arith.cmpi eq, %1, %44 : vector<64x1xi32>
    %cst_9 = arith.constant 0.000000e+00 : f32
    %46 = vector.shape_cast %45 : vector<64x1xi1> to vector<64x1xi1>
    %47 = vector.broadcast %46 : vector<64x1xi1> to vector<64x32xi1>
    %48 = vector.broadcast %cst_9 : f32 to vector<64x32xf32>
    %49 = arith.select %47, %0, %48 : vector<64x32xi1>, vector<64x32xf32>
    %cst_10 = arith.constant dense<0.000000e+00> : vector<32xf32>
    %50 = vector.multi_reduction <add>, %49, %cst_10 [0] : vector<64x32xf32> to vector<32xf32>
    %51 = vector.shape_cast %50 : vector<32xf32> to vector<1x32xf32>
    %52 = arith.index_cast %arg0 : i32 to index
    %c5 = arith.constant 5 : index
    %53 = memref.load %arg1[%52, %c5] : memref<2x8xi32, #tpu.memory_space<smem>>
    %54 = vector.broadcast %53 : i32 to vector<64x1xi32>
    %55 = arith.cmpi eq, %1, %54 : vector<64x1xi32>
    %cst_11 = arith.constant 0.000000e+00 : f32
    %56 = vector.shape_cast %55 : vector<64x1xi1> to vector<64x1xi1>
    %57 = vector.broadcast %56 : vector<64x1xi1> to vector<64x32xi1>
    %58 = vector.broadcast %cst_11 : f32 to vector<64x32xf32>
    %59 = arith.select %57, %0, %58 : vector<64x32xi1>, vector<64x32xf32>
    %cst_12 = arith.constant dense<0.000000e+00> : vector<32xf32>
    %60 = vector.multi_reduction <add>, %59, %cst_12 [0] : vector<64x32xf32> to vector<32xf32>
    %61 = vector.shape_cast %60 : vector<32xf32> to vector<1x32xf32>
    %62 = arith.index_cast %arg0 : i32 to index
    %c6 = arith.constant 6 : index
    %63 = memref.load %arg1[%62, %c6] : memref<2x8xi32, #tpu.memory_space<smem>>
    %64 = vector.broadcast %63 : i32 to vector<64x1xi32>
    %65 = arith.cmpi eq, %1, %64 : vector<64x1xi32>
    %cst_13 = arith.constant 0.000000e+00 : f32
    %66 = vector.shape_cast %65 : vector<64x1xi1> to vector<64x1xi1>
    %67 = vector.broadcast %66 : vector<64x1xi1> to vector<64x32xi1>
    %68 = vector.broadcast %cst_13 : f32 to vector<64x32xf32>
    %69 = arith.select %67, %0, %68 : vector<64x32xi1>, vector<64x32xf32>
    %cst_14 = arith.constant dense<0.000000e+00> : vector<32xf32>
    %70 = vector.multi_reduction <add>, %69, %cst_14 [0] : vector<64x32xf32> to vector<32xf32>
    %71 = vector.shape_cast %70 : vector<32xf32> to vector<1x32xf32>
    %72 = arith.index_cast %arg0 : i32 to index
    %c7 = arith.constant 7 : index
    %73 = memref.load %arg1[%72, %c7] : memref<2x8xi32, #tpu.memory_space<smem>>
    %74 = vector.broadcast %73 : i32 to vector<64x1xi32>
    %75 = arith.cmpi eq, %1, %74 : vector<64x1xi32>
    %cst_15 = arith.constant 0.000000e+00 : f32
    %76 = vector.shape_cast %75 : vector<64x1xi1> to vector<64x1xi1>
    %77 = vector.broadcast %76 : vector<64x1xi1> to vector<64x32xi1>
    %78 = vector.broadcast %cst_15 : f32 to vector<64x32xf32>
    %79 = arith.select %77, %0, %78 : vector<64x32xi1>, vector<64x32xf32>
    %cst_16 = arith.constant dense<0.000000e+00> : vector<32xf32>
    %80 = vector.multi_reduction <add>, %79, %cst_16 [0] : vector<64x32xf32> to vector<32xf32>
    %81 = vector.shape_cast %80 : vector<32xf32> to vector<1x32xf32>
    %82 = tpu.concatenate %11, %21, %31, %41, %51, %61, %71, %81 in 0 : vector<1x32xf32>, vector<1x32xf32>, vector<1x32xf32>, vector<1x32xf32>, vector<1x32xf32>, vector<1x32xf32>, vector<1x32xf32>, vector<1x32xf32> -> vector<8x32xf32>
    %c0_17 = arith.constant 0 : index
    %c0_18 = arith.constant 0 : index
    %83 = vector.load %arg4[%c0_17, %c0_18] : memref<16x32xf32, #tpu.memory_space<vmem>>, vector<8x32xf32>
    %84 = arith.addf %82, %83 : vector<8x32xf32>
    %c0_19 = arith.constant 0 : index
    %c0_20 = arith.constant 0 : index
    %85 = vector.load %arg5[%c0_19, %c0_20] : memref<1x32xf32, #tpu.memory_space<vmem>>, vector<1x32xf32>
    %86 = vector.broadcast %85 : vector<1x32xf32> to vector<8x32xf32>
    %87 = arith.addf %84, %86 : vector<8x32xf32>
    %c0_21 = arith.constant 0 : index
    %c0_22 = arith.constant 0 : index
    %88 = vector.load %arg6[%c0_21, %c0_22] : memref<1x32xf32, #tpu.memory_space<vmem>>, vector<1x32xf32>
    %c0_23 = arith.constant 0 : index
    %c0_24 = arith.constant 0 : index
    %89 = vector.load %arg7[%c0_23, %c0_24] : memref<1x32xf32, #tpu.memory_space<vmem>>, vector<1x32xf32>
    %cst_25 = arith.constant dense<0.000000e+00> : vector<8xf32>
    %90 = vector.multi_reduction <add>, %87, %cst_25 [1] : vector<8x32xf32> to vector<8xf32>
    %91 = vector.shape_cast %90 : vector<8xf32> to vector<8x1xf32>
    %cst_26 = arith.constant 3.200000e+01 : f32
    %92 = vector.broadcast %cst_26 : f32 to vector<8x1xf32>
    %93 = arith.divf %91, %92 : vector<8x1xf32>
    %94 = vector.broadcast %93 : vector<8x1xf32> to vector<8x32xf32>
    %95 = arith.subf %87, %94 : vector<8x32xf32>
    %96 = arith.mulf %95, %95 : vector<8x32xf32>
    %cst_27 = arith.constant dense<0.000000e+00> : vector<8xf32>
    %97 = vector.multi_reduction <add>, %96, %cst_27 [1] : vector<8x32xf32> to vector<8xf32>
    %98 = vector.shape_cast %97 : vector<8xf32> to vector<8x1xf32>
    %cst_28 = arith.constant 3.200000e+01 : f32
    %99 = vector.broadcast %cst_28 : f32 to vector<8x1xf32>
    %100 = arith.divf %98, %99 : vector<8x1xf32>
    %101 = vector.broadcast %93 : vector<8x1xf32> to vector<8x32xf32>
    %102 = arith.subf %87, %101 : vector<8x32xf32>
    %cst_29 = arith.constant 9.99999996E-13 : f32
    %103 = vector.broadcast %cst_29 : f32 to vector<8x1xf32>
    %104 = arith.addf %100, %103 : vector<8x1xf32>
    %105 = math.rsqrt %104 : vector<8x1xf32>
    %106 = vector.broadcast %105 : vector<8x1xf32> to vector<8x32xf32>
    %107 = arith.mulf %102, %106 : vector<8x32xf32>
    %108 = vector.broadcast %88 : vector<1x32xf32> to vector<8x32xf32>
    %109 = arith.mulf %107, %108 : vector<8x32xf32>
    %110 = vector.broadcast %89 : vector<1x32xf32> to vector<8x32xf32>
    %111 = arith.addf %109, %110 : vector<8x32xf32>
    %c0_30 = arith.constant 0 : index
    %c0_31 = arith.constant 0 : index
    %c0_32 = arith.constant 0 : index
    %112 = vector.load %arg2[%c0_30, %c0_31, %c0_32] : memref<1x1x8xi32, #tpu.memory_space<vmem>>, vector<1x1x8xi32>
    %113 = vector.shape_cast %112 : vector<1x1x8xi32> to vector<1x8xi32>
    %114 = arith.sitofp %113 : vector<1x8xi32> to vector<1x8xf32>
    %cst_33 = arith.constant 1.000000e+00 : f32
    %115 = vector.broadcast %cst_33 : f32 to vector<1x8xf32>
    %116 = arith.subf %115, %114 : vector<1x8xf32>
    %cst_34 = arith.constant -1.000000e+04 : f32
    %117 = vector.broadcast %cst_34 : f32 to vector<1x8xf32>
    %118 = arith.mulf %116, %117 : vector<1x8xf32>
    %119 = arith.truncf %111 : vector<8x32xf32> to vector<8x32xbf16>
    %c0_35 = arith.constant 0 : index
    %c0_36 = arith.constant 0 : index
    %c0_37 = arith.constant 0 : index
    %120 = vector.load %arg8[%c0_35, %c0_36, %c0_37] : memref<2x32x96xbf16, #tpu.memory_space<vmem>>, vector<1x32x96xbf16>
    %121 = vector.shape_cast %120 : vector<1x32x96xbf16> to vector<32x96xbf16>
    %cst_38 = arith.constant dense<0.000000e+00> : vector<8x96xf32>
    %122 = tpu.matmul %119, %121, %cst_38 {dimension_numbers = #tpu.dot_dimension_numbers<[1], [0], [0], [1], [0, 0, 1, 1], [], []>} : vector<8x32xbf16>, vector<32x96xbf16>, vector<8x96xf32> -> vector<8x96xf32>
    %c0_39 = arith.constant 0 : index
    %c0_40 = arith.constant 0 : index
    %c0_41 = arith.constant 0 : index
    %123 = vector.load %arg9[%c0_39, %c0_40, %c0_41] : memref<2x1x96xf32, #tpu.memory_space<vmem>>, vector<1x1x96xf32>
    %124 = vector.shape_cast %123 : vector<1x1x96xf32> to vector<1x96xf32>
    %125 = vector.broadcast %124 : vector<1x96xf32> to vector<8x96xf32>
    %126 = arith.addf %122, %125 : vector<8x96xf32>
    %c0_42 = arith.constant 0 : index
    %c0_43 = arith.constant 0 : index
    %c0_44 = arith.constant 0 : index
    %127 = vector.load %arg10[%c0_42, %c0_43, %c0_44] : memref<2x32x32xbf16, #tpu.memory_space<vmem>>, vector<1x32x32xbf16>
    %128 = vector.shape_cast %127 : vector<1x32x32xbf16> to vector<32x32xbf16>
    %cst_45 = arith.constant 0.000000e+00 : f32
    %129 = vector.broadcast %cst_45 : f32 to vector<8x32xf32>
    %130 = vector.extract_strided_slice %126 {offsets = [0, 0], sizes = [8, 16], strides = [1, 1]} : vector<8x96xf32> to vector<8x16xf32>
    %131 = arith.truncf %130 : vector<8x16xf32> to vector<8x16xbf16>
    %132 = vector.extract_strided_slice %126 {offsets = [0, 16], sizes = [8, 16], strides = [1, 1]} : vector<8x96xf32> to vector<8x16xf32>
    %133 = arith.truncf %132 : vector<8x16xf32> to vector<8x16xbf16>
    %134 = vector.extract_strided_slice %126 {offsets = [0, 32], sizes = [8, 16], strides = [1, 1]} : vector<8x96xf32> to vector<8x16xf32>
    %135 = arith.truncf %134 : vector<8x16xf32> to vector<8x16xbf16>
    %cst_46 = arith.constant dense<0.000000e+00> : vector<8x8xf32>
    %136 = tpu.matmul %131, %133, %cst_46 {dimension_numbers = #tpu.dot_dimension_numbers<[1], [1], [0], [0], [0, 0, 1, 0], [], []>} : vector<8x16xbf16>, vector<8x16xbf16>, vector<8x8xf32> -> vector<8x8xf32>
    %cst_47 = arith.constant 2.500000e-01 : f32
    %137 = vector.broadcast %cst_47 : f32 to vector<8x8xf32>
    %138 = arith.mulf %136, %137 : vector<8x8xf32>
    %139 = vector.broadcast %118 : vector<1x8xf32> to vector<8x8xf32>
    %140 = arith.addf %138, %139 : vector<8x8xf32>
    %cst_48 = arith.constant dense<0xFF800000> : vector<8xf32>
    %141 = vector.multi_reduction <maximumf>, %140, %cst_48 [1] : vector<8x8xf32> to vector<8xf32>
    %142 = vector.shape_cast %141 : vector<8xf32> to vector<8x1xf32>
    %143 = vector.broadcast %142 : vector<8x1xf32> to vector<8x8xf32>
    %144 = arith.subf %140, %143 : vector<8x8xf32>
    %145 = math.exp %144 : vector<8x8xf32>
    %cst_49 = arith.constant dense<0.000000e+00> : vector<8xf32>
    %146 = vector.multi_reduction <add>, %145, %cst_49 [1] : vector<8x8xf32> to vector<8xf32>
    %147 = vector.shape_cast %146 : vector<8xf32> to vector<8x1xf32>
    %148 = tpu.reciprocal %147 {approx = true} : vector<8x1xf32> -> vector<8x1xf32>
    %149 = vector.broadcast %148 : vector<8x1xf32> to vector<8x8xf32>
    %150 = arith.mulf %145, %149 : vector<8x8xf32>
    %151 = arith.truncf %150 : vector<8x8xf32> to vector<8x8xbf16>
    %cst_50 = arith.constant dense<0.000000e+00> : vector<8x16xf32>
    %152 = tpu.matmul %151, %135, %cst_50 {dimension_numbers = #tpu.dot_dimension_numbers<[1], [0], [0], [1], [0, 0, 1, 1], [], []>} : vector<8x8xbf16>, vector<8x16xbf16>, vector<8x16xf32> -> vector<8x16xf32>
    %153 = arith.truncf %152 : vector<8x16xf32> to vector<8x16xbf16>
    %154 = vector.extract_strided_slice %128 {offsets = [0, 0], sizes = [16, 32], strides = [1, 1]} : vector<32x32xbf16> to vector<16x32xbf16>
    %cst_51 = arith.constant dense<0.000000e+00> : vector<8x32xf32>
    %155 = tpu.matmul %153, %154, %cst_51 {dimension_numbers = #tpu.dot_dimension_numbers<[1], [0], [0], [1], [0, 0, 1, 1], [], []>} : vector<8x16xbf16>, vector<16x32xbf16>, vector<8x32xf32> -> vector<8x32xf32>
    %156 = arith.addf %129, %155 : vector<8x32xf32>
    %157 = vector.extract_strided_slice %126 {offsets = [0, 48], sizes = [8, 16], strides = [1, 1]} : vector<8x96xf32> to vector<8x16xf32>
    %158 = arith.truncf %157 : vector<8x16xf32> to vector<8x16xbf16>
    %159 = vector.extract_strided_slice %126 {offsets = [0, 64], sizes = [8, 16], strides = [1, 1]} : vector<8x96xf32> to vector<8x16xf32>
    %160 = arith.truncf %159 : vector<8x16xf32> to vector<8x16xbf16>
    %161 = vector.extract_strided_slice %126 {offsets = [0, 80], sizes = [8, 16], strides = [1, 1]} : vector<8x96xf32> to vector<8x16xf32>
    %162 = arith.truncf %161 : vector<8x16xf32> to vector<8x16xbf16>
    %cst_52 = arith.constant dense<0.000000e+00> : vector<8x8xf32>
    %163 = tpu.matmul %158, %160, %cst_52 {dimension_numbers = #tpu.dot_dimension_numbers<[1], [1], [0], [0], [0, 0, 1, 0], [], []>} : vector<8x16xbf16>, vector<8x16xbf16>, vector<8x8xf32> -> vector<8x8xf32>
    %cst_53 = arith.constant 2.500000e-01 : f32
    %164 = vector.broadcast %cst_53 : f32 to vector<8x8xf32>
    %165 = arith.mulf %163, %164 : vector<8x8xf32>
    %166 = vector.broadcast %118 : vector<1x8xf32> to vector<8x8xf32>
    %167 = arith.addf %165, %166 : vector<8x8xf32>
    %cst_54 = arith.constant dense<0xFF800000> : vector<8xf32>
    %168 = vector.multi_reduction <maximumf>, %167, %cst_54 [1] : vector<8x8xf32> to vector<8xf32>
    %169 = vector.shape_cast %168 : vector<8xf32> to vector<8x1xf32>
    %170 = vector.broadcast %169 : vector<8x1xf32> to vector<8x8xf32>
    %171 = arith.subf %167, %170 : vector<8x8xf32>
    %172 = math.exp %171 : vector<8x8xf32>
    %cst_55 = arith.constant dense<0.000000e+00> : vector<8xf32>
    %173 = vector.multi_reduction <add>, %172, %cst_55 [1] : vector<8x8xf32> to vector<8xf32>
    %174 = vector.shape_cast %173 : vector<8xf32> to vector<8x1xf32>
    %175 = tpu.reciprocal %174 {approx = true} : vector<8x1xf32> -> vector<8x1xf32>
    %176 = vector.broadcast %175 : vector<8x1xf32> to vector<8x8xf32>
    %177 = arith.mulf %172, %176 : vector<8x8xf32>
    %178 = arith.truncf %177 : vector<8x8xf32> to vector<8x8xbf16>
    %cst_56 = arith.constant dense<0.000000e+00> : vector<8x16xf32>
    %179 = tpu.matmul %178, %162, %cst_56 {dimension_numbers = #tpu.dot_dimension_numbers<[1], [0], [0], [1], [0, 0, 1, 1], [], []>} : vector<8x8xbf16>, vector<8x16xbf16>, vector<8x16xf32> -> vector<8x16xf32>
    %180 = arith.truncf %179 : vector<8x16xf32> to vector<8x16xbf16>
    %181 = vector.extract_strided_slice %128 {offsets = [16, 0], sizes = [16, 32], strides = [1, 1]} : vector<32x32xbf16> to vector<16x32xbf16>
    %cst_57 = arith.constant dense<0.000000e+00> : vector<8x32xf32>
    %182 = tpu.matmul %180, %181, %cst_57 {dimension_numbers = #tpu.dot_dimension_numbers<[1], [0], [0], [1], [0, 0, 1, 1], [], []>} : vector<8x16xbf16>, vector<16x32xbf16>, vector<8x32xf32> -> vector<8x32xf32>
    %183 = arith.addf %156, %182 : vector<8x32xf32>
    %c0_58 = arith.constant 0 : index
    %c0_59 = arith.constant 0 : index
    %c0_60 = arith.constant 0 : index
    %184 = vector.load %arg11[%c0_58, %c0_59, %c0_60] : memref<2x1x32xf32, #tpu.memory_space<vmem>>, vector<1x1x32xf32>
    %185 = vector.shape_cast %184 : vector<1x1x32xf32> to vector<1x32xf32>
    %186 = vector.broadcast %185 : vector<1x32xf32> to vector<8x32xf32>
    %187 = arith.addf %183, %186 : vector<8x32xf32>
    %188 = arith.addf %187, %111 : vector<8x32xf32>
    %c0_61 = arith.constant 0 : index
    %c0_62 = arith.constant 0 : index
    %c0_63 = arith.constant 0 : index
    %189 = vector.load %arg12[%c0_61, %c0_62, %c0_63] : memref<2x1x32xf32, #tpu.memory_space<vmem>>, vector<1x1x32xf32>
    %190 = vector.shape_cast %189 : vector<1x1x32xf32> to vector<1x32xf32>
    %c0_64 = arith.constant 0 : index
    %c0_65 = arith.constant 0 : index
    %c0_66 = arith.constant 0 : index
    %191 = vector.load %arg13[%c0_64, %c0_65, %c0_66] : memref<2x1x32xf32, #tpu.memory_space<vmem>>, vector<1x1x32xf32>
    %192 = vector.shape_cast %191 : vector<1x1x32xf32> to vector<1x32xf32>
    %cst_67 = arith.constant dense<0.000000e+00> : vector<8xf32>
    %193 = vector.multi_reduction <add>, %188, %cst_67 [1] : vector<8x32xf32> to vector<8xf32>
    %194 = vector.shape_cast %193 : vector<8xf32> to vector<8x1xf32>
    %cst_68 = arith.constant 3.200000e+01 : f32
    %195 = vector.broadcast %cst_68 : f32 to vector<8x1xf32>
    %196 = arith.divf %194, %195 : vector<8x1xf32>
    %197 = vector.broadcast %196 : vector<8x1xf32> to vector<8x32xf32>
    %198 = arith.subf %188, %197 : vector<8x32xf32>
    %199 = arith.mulf %198, %198 : vector<8x32xf32>
    %cst_69 = arith.constant dense<0.000000e+00> : vector<8xf32>
    %200 = vector.multi_reduction <add>, %199, %cst_69 [1] : vector<8x32xf32> to vector<8xf32>
    %201 = vector.shape_cast %200 : vector<8xf32> to vector<8x1xf32>
    %cst_70 = arith.constant 3.200000e+01 : f32
    %202 = vector.broadcast %cst_70 : f32 to vector<8x1xf32>
    %203 = arith.divf %201, %202 : vector<8x1xf32>
    %204 = vector.broadcast %196 : vector<8x1xf32> to vector<8x32xf32>
    %205 = arith.subf %188, %204 : vector<8x32xf32>
    %cst_71 = arith.constant 9.99999996E-13 : f32
    %206 = vector.broadcast %cst_71 : f32 to vector<8x1xf32>
    %207 = arith.addf %203, %206 : vector<8x1xf32>
    %208 = math.rsqrt %207 : vector<8x1xf32>
    %209 = vector.broadcast %208 : vector<8x1xf32> to vector<8x32xf32>
    %210 = arith.mulf %205, %209 : vector<8x32xf32>
    %211 = vector.broadcast %190 : vector<1x32xf32> to vector<8x32xf32>
    %212 = arith.mulf %210, %211 : vector<8x32xf32>
    %213 = vector.broadcast %192 : vector<1x32xf32> to vector<8x32xf32>
    %214 = arith.addf %212, %213 : vector<8x32xf32>
    %215 = arith.truncf %214 : vector<8x32xf32> to vector<8x32xbf16>
    %c0_72 = arith.constant 0 : index
    %c0_73 = arith.constant 0 : index
    %c0_74 = arith.constant 0 : index
    %216 = vector.load %arg14[%c0_72, %c0_73, %c0_74] : memref<2x32x64xbf16, #tpu.memory_space<vmem>>, vector<1x32x64xbf16>
    %217 = vector.shape_cast %216 : vector<1x32x64xbf16> to vector<32x64xbf16>
    %cst_75 = arith.constant dense<0.000000e+00> : vector<8x64xf32>
    %218 = tpu.matmul %215, %217, %cst_75 {dimension_numbers = #tpu.dot_dimension_numbers<[1], [0], [0], [1], [0, 0, 1, 1], [], []>} : vector<8x32xbf16>, vector<32x64xbf16>, vector<8x64xf32> -> vector<8x64xf32>
    %c0_76 = arith.constant 0 : index
    %c0_77 = arith.constant 0 : index
    %c0_78 = arith.constant 0 : index
    %219 = vector.load %arg15[%c0_76, %c0_77, %c0_78] : memref<2x1x64xf32, #tpu.memory_space<vmem>>, vector<1x1x64xf32>
    %220 = vector.shape_cast %219 : vector<1x1x64xf32> to vector<1x64xf32>
    %221 = vector.broadcast %220 : vector<1x64xf32> to vector<8x64xf32>
    %222 = arith.addf %218, %221 : vector<8x64xf32>
    %cst_79 = arith.constant 5.000000e-01 : f32
    %223 = vector.broadcast %cst_79 : f32 to vector<8x64xf32>
    %224 = arith.mulf %223, %222 : vector<8x64xf32>
    %cst_80 = arith.constant 4.471500e-02 : f32
    %225 = vector.broadcast %cst_80 : f32 to vector<8x64xf32>
    %226 = arith.mulf %225, %222 : vector<8x64xf32>
    %227 = arith.mulf %226, %222 : vector<8x64xf32>
    %228 = arith.mulf %227, %222 : vector<8x64xf32>
    %229 = arith.addf %222, %228 : vector<8x64xf32>
    %cst_81 = arith.constant 0.797884583 : f32
    %230 = vector.broadcast %cst_81 : f32 to vector<8x64xf32>
    %231 = arith.mulf %230, %229 : vector<8x64xf32>
    %232 = math.tanh %231 : vector<8x64xf32>
    %cst_82 = arith.constant 1.000000e+00 : f32
    %233 = vector.broadcast %cst_82 : f32 to vector<8x64xf32>
    %234 = arith.addf %233, %232 : vector<8x64xf32>
    %235 = arith.mulf %224, %234 : vector<8x64xf32>
    %236 = arith.truncf %235 : vector<8x64xf32> to vector<8x64xbf16>
    %c0_83 = arith.constant 0 : index
    %c0_84 = arith.constant 0 : index
    %c0_85 = arith.constant 0 : index
    %237 = vector.load %arg16[%c0_83, %c0_84, %c0_85] : memref<2x64x32xbf16, #tpu.memory_space<vmem>>, vector<1x64x32xbf16>
    %238 = vector.shape_cast %237 : vector<1x64x32xbf16> to vector<64x32xbf16>
    %cst_86 = arith.constant dense<0.000000e+00> : vector<8x32xf32>
    %239 = tpu.matmul %236, %238, %cst_86 {dimension_numbers = #tpu.dot_dimension_numbers<[1], [0], [0], [1], [0, 0, 1, 1], [], []>} : vector<8x64xbf16>, vector<64x32xbf16>, vector<8x32xf32> -> vector<8x32xf32>
    %c0_87 = arith.constant 0 : index
    %c0_88 = arith.constant 0 : index
    %c0_89 = arith.constant 0 : index
    %240 = vector.load %arg17[%c0_87, %c0_88, %c0_89] : memref<2x1x32xf32, #tpu.memory_space<vmem>>, vector<1x1x32xf32>
    %241 = vector.shape_cast %240 : vector<1x1x32xf32> to vector<1x32xf32>
    %242 = vector.broadcast %241 : vector<1x32xf32> to vector<8x32xf32>
    %243 = arith.addf %239, %242 : vector<8x32xf32>
    %244 = arith.addf %243, %214 : vector<8x32xf32>
    %c0_90 = arith.constant 0 : index
    %c0_91 = arith.constant 0 : index
    %c0_92 = arith.constant 0 : index
    %245 = vector.load %arg18[%c0_90, %c0_91, %c0_92] : memref<2x1x32xf32, #tpu.memory_space<vmem>>, vector<1x1x32xf32>
    %246 = vector.shape_cast %245 : vector<1x1x32xf32> to vector<1x32xf32>
    %c0_93 = arith.constant 0 : index
    %c0_94 = arith.constant 0 : index
    %c0_95 = arith.constant 0 : index
    %247 = vector.load %arg19[%c0_93, %c0_94, %c0_95] : memref<2x1x32xf32, #tpu.memory_space<vmem>>, vector<1x1x32xf32>
    %248 = vector.shape_cast %247 : vector<1x1x32xf32> to vector<1x32xf32>
    %cst_96 = arith.constant dense<0.000000e+00> : vector<8xf32>
    %249 = vector.multi_reduction <add>, %244, %cst_96 [1] : vector<8x32xf32> to vector<8xf32>
    %250 = vector.shape_cast %249 : vector<8xf32> to vector<8x1xf32>
    %cst_97 = arith.constant 3.200000e+01 : f32
    %251 = vector.broadcast %cst_97 : f32 to vector<8x1xf32>
    %252 = arith.divf %250, %251 : vector<8x1xf32>
    %253 = vector.broadcast %252 : vector<8x1xf32> to vector<8x32xf32>
    %254 = arith.subf %244, %253 : vector<8x32xf32>
    %255 = arith.mulf %254, %254 : vector<8x32xf32>
    %cst_98 = arith.constant dense<0.000000e+00> : vector<8xf32>
    %256 = vector.multi_reduction <add>, %255, %cst_98 [1] : vector<8x32xf32> to vector<8xf32>
    %257 = vector.shape_cast %256 : vector<8xf32> to vector<8x1xf32>
    %cst_99 = arith.constant 3.200000e+01 : f32
    %258 = vector.broadcast %cst_99 : f32 to vector<8x1xf32>
    %259 = arith.divf %257, %258 : vector<8x1xf32>
    %260 = vector.broadcast %252 : vector<8x1xf32> to vector<8x32xf32>
    %261 = arith.subf %244, %260 : vector<8x32xf32>
    %cst_100 = arith.constant 9.99999996E-13 : f32
    %262 = vector.broadcast %cst_100 : f32 to vector<8x1xf32>
    %263 = arith.addf %259, %262 : vector<8x1xf32>
    %264 = math.rsqrt %263 : vector<8x1xf32>
    %265 = vector.broadcast %264 : vector<8x1xf32> to vector<8x32xf32>
    %266 = arith.mulf %261, %265 : vector<8x32xf32>
    %267 = vector.broadcast %246 : vector<1x32xf32> to vector<8x32xf32>
    %268 = arith.mulf %266, %267 : vector<8x32xf32>
    %269 = vector.broadcast %248 : vector<1x32xf32> to vector<8x32xf32>
    %270 = arith.addf %268, %269 : vector<8x32xf32>
    %271 = arith.truncf %270 : vector<8x32xf32> to vector<8x32xbf16>
    %c1_101 = arith.constant 1 : index
    %c0_102 = arith.constant 0 : index
    %c0_103 = arith.constant 0 : index
    %272 = vector.load %arg8[%c1_101, %c0_102, %c0_103] : memref<2x32x96xbf16, #tpu.memory_space<vmem>>, vector<1x32x96xbf16>
    %273 = vector.shape_cast %272 : vector<1x32x96xbf16> to vector<32x96xbf16>
    %cst_104 = arith.constant dense<0.000000e+00> : vector<8x96xf32>
    %274 = tpu.matmul %271, %273, %cst_104 {dimension_numbers = #tpu.dot_dimension_numbers<[1], [0], [0], [1], [0, 0, 1, 1], [], []>} : vector<8x32xbf16>, vector<32x96xbf16>, vector<8x96xf32> -> vector<8x96xf32>
    %c1_105 = arith.constant 1 : index
    %c0_106 = arith.constant 0 : index
    %c0_107 = arith.constant 0 : index
    %275 = vector.load %arg9[%c1_105, %c0_106, %c0_107] : memref<2x1x96xf32, #tpu.memory_space<vmem>>, vector<1x1x96xf32>
    %276 = vector.shape_cast %275 : vector<1x1x96xf32> to vector<1x96xf32>
    %277 = vector.broadcast %276 : vector<1x96xf32> to vector<8x96xf32>
    %278 = arith.addf %274, %277 : vector<8x96xf32>
    %c1_108 = arith.constant 1 : index
    %c0_109 = arith.constant 0 : index
    %c0_110 = arith.constant 0 : index
    %279 = vector.load %arg10[%c1_108, %c0_109, %c0_110] : memref<2x32x32xbf16, #tpu.memory_space<vmem>>, vector<1x32x32xbf16>
    %280 = vector.shape_cast %279 : vector<1x32x32xbf16> to vector<32x32xbf16>
    %cst_111 = arith.constant 0.000000e+00 : f32
    %281 = vector.broadcast %cst_111 : f32 to vector<8x32xf32>
    %282 = vector.extract_strided_slice %278 {offsets = [0, 0], sizes = [8, 16], strides = [1, 1]} : vector<8x96xf32> to vector<8x16xf32>
    %283 = arith.truncf %282 : vector<8x16xf32> to vector<8x16xbf16>
    %284 = vector.extract_strided_slice %278 {offsets = [0, 16], sizes = [8, 16], strides = [1, 1]} : vector<8x96xf32> to vector<8x16xf32>
    %285 = arith.truncf %284 : vector<8x16xf32> to vector<8x16xbf16>
    %286 = vector.extract_strided_slice %278 {offsets = [0, 32], sizes = [8, 16], strides = [1, 1]} : vector<8x96xf32> to vector<8x16xf32>
    %287 = arith.truncf %286 : vector<8x16xf32> to vector<8x16xbf16>
    %cst_112 = arith.constant dense<0.000000e+00> : vector<8x8xf32>
    %288 = tpu.matmul %283, %285, %cst_112 {dimension_numbers = #tpu.dot_dimension_numbers<[1], [1], [0], [0], [0, 0, 1, 0], [], []>} : vector<8x16xbf16>, vector<8x16xbf16>, vector<8x8xf32> -> vector<8x8xf32>
    %cst_113 = arith.constant 2.500000e-01 : f32
    %289 = vector.broadcast %cst_113 : f32 to vector<8x8xf32>
    %290 = arith.mulf %288, %289 : vector<8x8xf32>
    %291 = vector.broadcast %118 : vector<1x8xf32> to vector<8x8xf32>
    %292 = arith.addf %290, %291 : vector<8x8xf32>
    %cst_114 = arith.constant dense<0xFF800000> : vector<8xf32>
    %293 = vector.multi_reduction <maximumf>, %292, %cst_114 [1] : vector<8x8xf32> to vector<8xf32>
    %294 = vector.shape_cast %293 : vector<8xf32> to vector<8x1xf32>
    %295 = vector.broadcast %294 : vector<8x1xf32> to vector<8x8xf32>
    %296 = arith.subf %292, %295 : vector<8x8xf32>
    %297 = math.exp %296 : vector<8x8xf32>
    %cst_115 = arith.constant dense<0.000000e+00> : vector<8xf32>
    %298 = vector.multi_reduction <add>, %297, %cst_115 [1] : vector<8x8xf32> to vector<8xf32>
    %299 = vector.shape_cast %298 : vector<8xf32> to vector<8x1xf32>
    %300 = tpu.reciprocal %299 {approx = true} : vector<8x1xf32> -> vector<8x1xf32>
    %301 = vector.broadcast %300 : vector<8x1xf32> to vector<8x8xf32>
    %302 = arith.mulf %297, %301 : vector<8x8xf32>
    %303 = arith.truncf %302 : vector<8x8xf32> to vector<8x8xbf16>
    %cst_116 = arith.constant dense<0.000000e+00> : vector<8x16xf32>
    %304 = tpu.matmul %303, %287, %cst_116 {dimension_numbers = #tpu.dot_dimension_numbers<[1], [0], [0], [1], [0, 0, 1, 1], [], []>} : vector<8x8xbf16>, vector<8x16xbf16>, vector<8x16xf32> -> vector<8x16xf32>
    %305 = arith.truncf %304 : vector<8x16xf32> to vector<8x16xbf16>
    %306 = vector.extract_strided_slice %280 {offsets = [0, 0], sizes = [16, 32], strides = [1, 1]} : vector<32x32xbf16> to vector<16x32xbf16>
    %cst_117 = arith.constant dense<0.000000e+00> : vector<8x32xf32>
    %307 = tpu.matmul %305, %306, %cst_117 {dimension_numbers = #tpu.dot_dimension_numbers<[1], [0], [0], [1], [0, 0, 1, 1], [], []>} : vector<8x16xbf16>, vector<16x32xbf16>, vector<8x32xf32> -> vector<8x32xf32>
    %308 = arith.addf %281, %307 : vector<8x32xf32>
    %309 = vector.extract_strided_slice %278 {offsets = [0, 48], sizes = [8, 16], strides = [1, 1]} : vector<8x96xf32> to vector<8x16xf32>
    %310 = arith.truncf %309 : vector<8x16xf32> to vector<8x16xbf16>
    %311 = vector.extract_strided_slice %278 {offsets = [0, 64], sizes = [8, 16], strides = [1, 1]} : vector<8x96xf32> to vector<8x16xf32>
    %312 = arith.truncf %311 : vector<8x16xf32> to vector<8x16xbf16>
    %313 = vector.extract_strided_slice %278 {offsets = [0, 80], sizes = [8, 16], strides = [1, 1]} : vector<8x96xf32> to vector<8x16xf32>
    %314 = arith.truncf %313 : vector<8x16xf32> to vector<8x16xbf16>
    %cst_118 = arith.constant dense<0.000000e+00> : vector<8x8xf32>
    %315 = tpu.matmul %310, %312, %cst_118 {dimension_numbers = #tpu.dot_dimension_numbers<[1], [1], [0], [0], [0, 0, 1, 0], [], []>} : vector<8x16xbf16>, vector<8x16xbf16>, vector<8x8xf32> -> vector<8x8xf32>
    %cst_119 = arith.constant 2.500000e-01 : f32
    %316 = vector.broadcast %cst_119 : f32 to vector<8x8xf32>
    %317 = arith.mulf %315, %316 : vector<8x8xf32>
    %318 = vector.broadcast %118 : vector<1x8xf32> to vector<8x8xf32>
    %319 = arith.addf %317, %318 : vector<8x8xf32>
    %cst_120 = arith.constant dense<0xFF800000> : vector<8xf32>
    %320 = vector.multi_reduction <maximumf>, %319, %cst_120 [1] : vector<8x8xf32> to vector<8xf32>
    %321 = vector.shape_cast %320 : vector<8xf32> to vector<8x1xf32>
    %322 = vector.broadcast %321 : vector<8x1xf32> to vector<8x8xf32>
    %323 = arith.subf %319, %322 : vector<8x8xf32>
    %324 = math.exp %323 : vector<8x8xf32>
    %cst_121 = arith.constant dense<0.000000e+00> : vector<8xf32>
    %325 = vector.multi_reduction <add>, %324, %cst_121 [1] : vector<8x8xf32> to vector<8xf32>
    %326 = vector.shape_cast %325 : vector<8xf32> to vector<8x1xf32>
    %327 = tpu.reciprocal %326 {approx = true} : vector<8x1xf32> -> vector<8x1xf32>
    %328 = vector.broadcast %327 : vector<8x1xf32> to vector<8x8xf32>
    %329 = arith.mulf %324, %328 : vector<8x8xf32>
    %330 = arith.truncf %329 : vector<8x8xf32> to vector<8x8xbf16>
    %cst_122 = arith.constant dense<0.000000e+00> : vector<8x16xf32>
    %331 = tpu.matmul %330, %314, %cst_122 {dimension_numbers = #tpu.dot_dimension_numbers<[1], [0], [0], [1], [0, 0, 1, 1], [], []>} : vector<8x8xbf16>, vector<8x16xbf16>, vector<8x16xf32> -> vector<8x16xf32>
    %332 = arith.truncf %331 : vector<8x16xf32> to vector<8x16xbf16>
    %333 = vector.extract_strided_slice %280 {offsets = [16, 0], sizes = [16, 32], strides = [1, 1]} : vector<32x32xbf16> to vector<16x32xbf16>
    %cst_123 = arith.constant dense<0.000000e+00> : vector<8x32xf32>
    %334 = tpu.matmul %332, %333, %cst_123 {dimension_numbers = #tpu.dot_dimension_numbers<[1], [0], [0], [1], [0, 0, 1, 1], [], []>} : vector<8x16xbf16>, vector<16x32xbf16>, vector<8x32xf32> -> vector<8x32xf32>
    %335 = arith.addf %308, %334 : vector<8x32xf32>
    %c1_124 = arith.constant 1 : index
    %c0_125 = arith.constant 0 : index
    %c0_126 = arith.constant 0 : index
    %336 = vector.load %arg11[%c1_124, %c0_125, %c0_126] : memref<2x1x32xf32, #tpu.memory_space<vmem>>, vector<1x1x32xf32>
    %337 = vector.shape_cast %336 : vector<1x1x32xf32> to vector<1x32xf32>
    %338 = vector.broadcast %337 : vector<1x32xf32> to vector<8x32xf32>
    %339 = arith.addf %335, %338 : vector<8x32xf32>
    %340 = arith.addf %339, %270 : vector<8x32xf32>
    %c1_127 = arith.constant 1 : index
    %c0_128 = arith.constant 0 : index
    %c0_129 = arith.constant 0 : index
    %341 = vector.load %arg12[%c1_127, %c0_128, %c0_129] : memref<2x1x32xf32, #tpu.memory_space<vmem>>, vector<1x1x32xf32>
    %342 = vector.shape_cast %341 : vector<1x1x32xf32> to vector<1x32xf32>
    %c1_130 = arith.constant 1 : index
    %c0_131 = arith.constant 0 : index
    %c0_132 = arith.constant 0 : index
    %343 = vector.load %arg13[%c1_130, %c0_131, %c0_132] : memref<2x1x32xf32, #tpu.memory_space<vmem>>, vector<1x1x32xf32>
    %344 = vector.shape_cast %343 : vector<1x1x32xf32> to vector<1x32xf32>
    %cst_133 = arith.constant dense<0.000000e+00> : vector<8xf32>
    %345 = vector.multi_reduction <add>, %340, %cst_133 [1] : vector<8x32xf32> to vector<8xf32>
    %346 = vector.shape_cast %345 : vector<8xf32> to vector<8x1xf32>
    %cst_134 = arith.constant 3.200000e+01 : f32
    %347 = vector.broadcast %cst_134 : f32 to vector<8x1xf32>
    %348 = arith.divf %346, %347 : vector<8x1xf32>
    %349 = vector.broadcast %348 : vector<8x1xf32> to vector<8x32xf32>
    %350 = arith.subf %340, %349 : vector<8x32xf32>
    %351 = arith.mulf %350, %350 : vector<8x32xf32>
    %cst_135 = arith.constant dense<0.000000e+00> : vector<8xf32>
    %352 = vector.multi_reduction <add>, %351, %cst_135 [1] : vector<8x32xf32> to vector<8xf32>
    %353 = vector.shape_cast %352 : vector<8xf32> to vector<8x1xf32>
    %cst_136 = arith.constant 3.200000e+01 : f32
    %354 = vector.broadcast %cst_136 : f32 to vector<8x1xf32>
    %355 = arith.divf %353, %354 : vector<8x1xf32>
    %356 = vector.broadcast %348 : vector<8x1xf32> to vector<8x32xf32>
    %357 = arith.subf %340, %356 : vector<8x32xf32>
    %cst_137 = arith.constant 9.99999996E-13 : f32
    %358 = vector.broadcast %cst_137 : f32 to vector<8x1xf32>
    %359 = arith.addf %355, %358 : vector<8x1xf32>
    %360 = math.rsqrt %359 : vector<8x1xf32>
    %361 = vector.broadcast %360 : vector<8x1xf32> to vector<8x32xf32>
    %362 = arith.mulf %357, %361 : vector<8x32xf32>
    %363 = vector.broadcast %342 : vector<1x32xf32> to vector<8x32xf32>
    %364 = arith.mulf %362, %363 : vector<8x32xf32>
    %365 = vector.broadcast %344 : vector<1x32xf32> to vector<8x32xf32>
    %366 = arith.addf %364, %365 : vector<8x32xf32>
    %367 = arith.truncf %366 : vector<8x32xf32> to vector<8x32xbf16>
    %c1_138 = arith.constant 1 : index
    %c0_139 = arith.constant 0 : index
    %c0_140 = arith.constant 0 : index
    %368 = vector.load %arg14[%c1_138, %c0_139, %c0_140] : memref<2x32x64xbf16, #tpu.memory_space<vmem>>, vector<1x32x64xbf16>
    %369 = vector.shape_cast %368 : vector<1x32x64xbf16> to vector<32x64xbf16>
    %cst_141 = arith.constant dense<0.000000e+00> : vector<8x64xf32>
    %370 = tpu.matmul %367, %369, %cst_141 {dimension_numbers = #tpu.dot_dimension_numbers<[1], [0], [0], [1], [0, 0, 1, 1], [], []>} : vector<8x32xbf16>, vector<32x64xbf16>, vector<8x64xf32> -> vector<8x64xf32>
    %c1_142 = arith.constant 1 : index
    %c0_143 = arith.constant 0 : index
    %c0_144 = arith.constant 0 : index
    %371 = vector.load %arg15[%c1_142, %c0_143, %c0_144] : memref<2x1x64xf32, #tpu.memory_space<vmem>>, vector<1x1x64xf32>
    %372 = vector.shape_cast %371 : vector<1x1x64xf32> to vector<1x64xf32>
    %373 = vector.broadcast %372 : vector<1x64xf32> to vector<8x64xf32>
    %374 = arith.addf %370, %373 : vector<8x64xf32>
    %cst_145 = arith.constant 5.000000e-01 : f32
    %375 = vector.broadcast %cst_145 : f32 to vector<8x64xf32>
    %376 = arith.mulf %375, %374 : vector<8x64xf32>
    %cst_146 = arith.constant 4.471500e-02 : f32
    %377 = vector.broadcast %cst_146 : f32 to vector<8x64xf32>
    %378 = arith.mulf %377, %374 : vector<8x64xf32>
    %379 = arith.mulf %378, %374 : vector<8x64xf32>
    %380 = arith.mulf %379, %374 : vector<8x64xf32>
    %381 = arith.addf %374, %380 : vector<8x64xf32>
    %cst_147 = arith.constant 0.797884583 : f32
    %382 = vector.broadcast %cst_147 : f32 to vector<8x64xf32>
    %383 = arith.mulf %382, %381 : vector<8x64xf32>
    %384 = math.tanh %383 : vector<8x64xf32>
    %cst_148 = arith.constant 1.000000e+00 : f32
    %385 = vector.broadcast %cst_148 : f32 to vector<8x64xf32>
    %386 = arith.addf %385, %384 : vector<8x64xf32>
    %387 = arith.mulf %376, %386 : vector<8x64xf32>
    %388 = arith.truncf %387 : vector<8x64xf32> to vector<8x64xbf16>
    %c1_149 = arith.constant 1 : index
    %c0_150 = arith.constant 0 : index
    %c0_151 = arith.constant 0 : index
    %389 = vector.load %arg16[%c1_149, %c0_150, %c0_151] : memref<2x64x32xbf16, #tpu.memory_space<vmem>>, vector<1x64x32xbf16>
    %390 = vector.shape_cast %389 : vector<1x64x32xbf16> to vector<64x32xbf16>
    %cst_152 = arith.constant dense<0.000000e+00> : vector<8x32xf32>
    %391 = tpu.matmul %388, %390, %cst_152 {dimension_numbers = #tpu.dot_dimension_numbers<[1], [0], [0], [1], [0, 0, 1, 1], [], []>} : vector<8x64xbf16>, vector<64x32xbf16>, vector<8x32xf32> -> vector<8x32xf32>
    %c1_153 = arith.constant 1 : index
    %c0_154 = arith.constant 0 : index
    %c0_155 = arith.constant 0 : index
    %392 = vector.load %arg17[%c1_153, %c0_154, %c0_155] : memref<2x1x32xf32, #tpu.memory_space<vmem>>, vector<1x1x32xf32>
    %393 = vector.shape_cast %392 : vector<1x1x32xf32> to vector<1x32xf32>
    %394 = vector.broadcast %393 : vector<1x32xf32> to vector<8x32xf32>
    %395 = arith.addf %391, %394 : vector<8x32xf32>
    %396 = arith.addf %395, %366 : vector<8x32xf32>
    %c1_156 = arith.constant 1 : index
    %c0_157 = arith.constant 0 : index
    %c0_158 = arith.constant 0 : index
    %397 = vector.load %arg18[%c1_156, %c0_157, %c0_158] : memref<2x1x32xf32, #tpu.memory_space<vmem>>, vector<1x1x32xf32>
    %398 = vector.shape_cast %397 : vector<1x1x32xf32> to vector<1x32xf32>
    %c1_159 = arith.constant 1 : index
    %c0_160 = arith.constant 0 : index
    %c0_161 = arith.constant 0 : index
    %399 = vector.load %arg19[%c1_159, %c0_160, %c0_161] : memref<2x1x32xf32, #tpu.memory_space<vmem>>, vector<1x1x32xf32>
    %400 = vector.shape_cast %399 : vector<1x1x32xf32> to vector<1x32xf32>
    %cst_162 = arith.constant dense<0.000000e+00> : vector<8xf32>
    %401 = vector.multi_reduction <add>, %396, %cst_162 [1] : vector<8x32xf32> to vector<8xf32>
    %402 = vector.shape_cast %401 : vector<8xf32> to vector<8x1xf32>
    %cst_163 = arith.constant 3.200000e+01 : f32
    %403 = vector.broadcast %cst_163 : f32 to vector<8x1xf32>
    %404 = arith.divf %402, %403 : vector<8x1xf32>
    %405 = vector.broadcast %404 : vector<8x1xf32> to vector<8x32xf32>
    %406 = arith.subf %396, %405 : vector<8x32xf32>
    %407 = arith.mulf %406, %406 : vector<8x32xf32>
    %cst_164 = arith.constant dense<0.000000e+00> : vector<8xf32>
    %408 = vector.multi_reduction <add>, %407, %cst_164 [1] : vector<8x32xf32> to vector<8xf32>
    %409 = vector.shape_cast %408 : vector<8xf32> to vector<8x1xf32>
    %cst_165 = arith.constant 3.200000e+01 : f32
    %410 = vector.broadcast %cst_165 : f32 to vector<8x1xf32>
    %411 = arith.divf %409, %410 : vector<8x1xf32>
    %412 = vector.broadcast %404 : vector<8x1xf32> to vector<8x32xf32>
    %413 = arith.subf %396, %412 : vector<8x32xf32>
    %cst_166 = arith.constant 9.99999996E-13 : f32
    %414 = vector.broadcast %cst_166 : f32 to vector<8x1xf32>
    %415 = arith.addf %411, %414 : vector<8x1xf32>
    %416 = math.rsqrt %415 : vector<8x1xf32>
    %417 = vector.broadcast %416 : vector<8x1xf32> to vector<8x32xf32>
    %418 = arith.mulf %413, %417 : vector<8x32xf32>
    %419 = vector.broadcast %398 : vector<1x32xf32> to vector<8x32xf32>
    %420 = arith.mulf %418, %419 : vector<8x32xf32>
    %421 = vector.broadcast %400 : vector<1x32xf32> to vector<8x32xf32>
    %422 = arith.addf %420, %421 : vector<8x32xf32>
    %423 = arith.truncf %422 : vector<8x32xf32> to vector<8x32xbf16>
    %c0_167 = arith.constant 0 : index
    %c0_168 = arith.constant 0 : index
    %424 = vector.load %arg20[%c0_167, %c0_168] : memref<32x128xbf16, #tpu.memory_space<vmem>>, vector<32x128xbf16>
    %cst_169 = arith.constant dense<0.000000e+00> : vector<8x128xf32>
    %425 = tpu.matmul %423, %424, %cst_169 {dimension_numbers = #tpu.dot_dimension_numbers<[1], [0], [0], [1], [0, 0, 1, 1], [], []>} : vector<8x32xbf16>, vector<32x128xbf16>, vector<8x128xf32> -> vector<8x128xf32>
    %c0_170 = arith.constant 0 : index
    %c0_171 = arith.constant 0 : index
    %426 = vector.load %arg21[%c0_170, %c0_171] : memref<1x128xf32, #tpu.memory_space<vmem>>, vector<1x128xf32>
    %427 = vector.broadcast %426 : vector<1x128xf32> to vector<8x128xf32>
    %428 = arith.addf %425, %427 : vector<8x128xf32>
    %429 = vector.extract_strided_slice %428 {offsets = [0, 0], sizes = [8, 64], strides = [1, 1]} : vector<8x128xf32> to vector<8x64xf32>
    %430 = vector.extract_strided_slice %428 {offsets = [0, 64], sizes = [8, 64], strides = [1, 1]} : vector<8x128xf32> to vector<8x64xf32>
    %c0_172 = arith.constant 0 : index
    %c0_173 = arith.constant 0 : index
    %431 = vector.load %arg22[%c0_172, %c0_173] : memref<16x64xbf16, #tpu.memory_space<vmem>>, vector<16x64xbf16>
    %c0_174 = arith.constant 0 : index
    %c0_175 = arith.constant 0 : index
    %432 = vector.load %arg23[%c0_174, %c0_175] : memref<16x64xbf16, #tpu.memory_space<vmem>>, vector<16x64xbf16>
    %cst_176 = arith.constant 0.000000e+00 : f32
    %433 = vector.broadcast %cst_176 : f32 to vector<1x16xf32>
    %cst_177 = arith.constant 0.000000e+00 : f32
    %434 = vector.broadcast %cst_177 : f32 to vector<1x16xf32>
    %cst_178 = arith.constant 0.000000e+00 : f32
    %435 = vector.broadcast %cst_178 : f32 to vector<1x16xf32>
    %cst_179 = arith.constant 0.000000e+00 : f32
    %436 = vector.broadcast %cst_179 : f32 to vector<1x16xf32>
    %437 = vector.extract_strided_slice %429 {offsets = [0, 0], sizes = [1, 64], strides = [1, 1]} : vector<8x64xf32> to vector<1x64xf32>
    %438 = arith.truncf %433 : vector<1x16xf32> to vector<1x16xbf16>
    %cst_180 = arith.constant dense<0.000000e+00> : vector<1x64xf32>
    %439 = tpu.matmul %438, %431, %cst_180 {dimension_numbers = #tpu.dot_dimension_numbers<[1], [0], [0], [1], [0, 0, 1, 1], [], []>} : vector<1x16xbf16>, vector<16x64xbf16>, vector<1x64xf32> -> vector<1x64xf32>
    %440 = arith.addf %437, %439 : vector<1x64xf32>
    %441 = vector.extract_strided_slice %430 {offsets = [7, 0], sizes = [1, 64], strides = [1, 1]} : vector<8x64xf32> to vector<1x64xf32>
    %442 = arith.truncf %434 : vector<1x16xf32> to vector<1x16xbf16>
    %cst_181 = arith.constant dense<0.000000e+00> : vector<1x64xf32>
    %443 = tpu.matmul %442, %432, %cst_181 {dimension_numbers = #tpu.dot_dimension_numbers<[1], [0], [0], [1], [0, 0, 1, 1], [], []>} : vector<1x16xbf16>, vector<16x64xbf16>, vector<1x64xf32> -> vector<1x64xf32>
    %444 = arith.addf %441, %443 : vector<1x64xf32>
    %445 = vector.extract_strided_slice %440 {offsets = [0, 0], sizes = [1, 16], strides = [1, 1]} : vector<1x64xf32> to vector<1x16xf32>
    %446 = arith.negf %445 : vector<1x16xf32>
    %447 = math.exp %446 : vector<1x16xf32>
    %cst_182 = arith.constant 1.000000e+00 : f32
    %448 = vector.broadcast %cst_182 : f32 to vector<1x16xf32>
    %449 = arith.addf %448, %447 : vector<1x16xf32>
    %450 = arith.divf %448, %449 : vector<1x16xf32>
    %451 = vector.extract_strided_slice %440 {offsets = [0, 16], sizes = [1, 16], strides = [1, 1]} : vector<1x64xf32> to vector<1x16xf32>
    %452 = arith.negf %451 : vector<1x16xf32>
    %453 = math.exp %452 : vector<1x16xf32>
    %cst_183 = arith.constant 1.000000e+00 : f32
    %454 = vector.broadcast %cst_183 : f32 to vector<1x16xf32>
    %455 = arith.addf %454, %453 : vector<1x16xf32>
    %456 = arith.divf %454, %455 : vector<1x16xf32>
    %457 = vector.extract_strided_slice %440 {offsets = [0, 32], sizes = [1, 16], strides = [1, 1]} : vector<1x64xf32> to vector<1x16xf32>
    %458 = math.tanh %457 : vector<1x16xf32>
    %459 = vector.extract_strided_slice %440 {offsets = [0, 48], sizes = [1, 16], strides = [1, 1]} : vector<1x64xf32> to vector<1x16xf32>
    %460 = arith.negf %459 : vector<1x16xf32>
    %461 = math.exp %460 : vector<1x16xf32>
    %cst_184 = arith.constant 1.000000e+00 : f32
    %462 = vector.broadcast %cst_184 : f32 to vector<1x16xf32>
    %463 = arith.addf %462, %461 : vector<1x16xf32>
    %464 = arith.divf %462, %463 : vector<1x16xf32>
    %465 = arith.mulf %456, %435 : vector<1x16xf32>
    %466 = arith.mulf %450, %458 : vector<1x16xf32>
    %467 = arith.addf %465, %466 : vector<1x16xf32>
    %468 = math.tanh %467 : vector<1x16xf32>
    %469 = arith.mulf %464, %468 : vector<1x16xf32>
    %470 = vector.extract_strided_slice %444 {offsets = [0, 0], sizes = [1, 16], strides = [1, 1]} : vector<1x64xf32> to vector<1x16xf32>
    %471 = arith.negf %470 : vector<1x16xf32>
    %472 = math.exp %471 : vector<1x16xf32>
    %cst_185 = arith.constant 1.000000e+00 : f32
    %473 = vector.broadcast %cst_185 : f32 to vector<1x16xf32>
    %474 = arith.addf %473, %472 : vector<1x16xf32>
    %475 = arith.divf %473, %474 : vector<1x16xf32>
    %476 = vector.extract_strided_slice %444 {offsets = [0, 16], sizes = [1, 16], strides = [1, 1]} : vector<1x64xf32> to vector<1x16xf32>
    %477 = arith.negf %476 : vector<1x16xf32>
    %478 = math.exp %477 : vector<1x16xf32>
    %cst_186 = arith.constant 1.000000e+00 : f32
    %479 = vector.broadcast %cst_186 : f32 to vector<1x16xf32>
    %480 = arith.addf %479, %478 : vector<1x16xf32>
    %481 = arith.divf %479, %480 : vector<1x16xf32>
    %482 = vector.extract_strided_slice %444 {offsets = [0, 32], sizes = [1, 16], strides = [1, 1]} : vector<1x64xf32> to vector<1x16xf32>
    %483 = math.tanh %482 : vector<1x16xf32>
    %484 = vector.extract_strided_slice %444 {offsets = [0, 48], sizes = [1, 16], strides = [1, 1]} : vector<1x64xf32> to vector<1x16xf32>
    %485 = arith.negf %484 : vector<1x16xf32>
    %486 = math.exp %485 : vector<1x16xf32>
    %cst_187 = arith.constant 1.000000e+00 : f32
    %487 = vector.broadcast %cst_187 : f32 to vector<1x16xf32>
    %488 = arith.addf %487, %486 : vector<1x16xf32>
    %489 = arith.divf %487, %488 : vector<1x16xf32>
    %490 = arith.mulf %481, %436 : vector<1x16xf32>
    %491 = arith.mulf %475, %483 : vector<1x16xf32>
    %492 = arith.addf %490, %491 : vector<1x16xf32>
    %493 = math.tanh %492 : vector<1x16xf32>
    %494 = arith.mulf %489, %493 : vector<1x16xf32>
    %c0_188 = arith.constant 0 : index
    %c0_189 = arith.constant 0 : index
    %495 = vector.load %arg30[%c0_188, %c0_189] : memref<8x32xf32, #tpu.memory_space<vmem>>, vector<1x16xf32>
    tpu.vector_store %arg30[%c0_188, %c0_189], %469 {strides = array<i32>} : memref<8x32xf32, #tpu.memory_space<vmem>>, vector<1x16xf32>,
    %c7_190 = arith.constant 7 : index
    %c16 = arith.constant 16 : index
    %496 = vector.load %arg30[%c7_190, %c16] : memref<8x32xf32, #tpu.memory_space<vmem>>, vector<1x16xf32>
    tpu.vector_store %arg30[%c7_190, %c16], %494 {strides = array<i32>} : memref<8x32xf32, #tpu.memory_space<vmem>>, vector<1x16xf32>,
    %497 = vector.extract_strided_slice %429 {offsets = [1, 0], sizes = [1, 64], strides = [1, 1]} : vector<8x64xf32> to vector<1x64xf32>
    %498 = arith.truncf %469 : vector<1x16xf32> to vector<1x16xbf16>
    %cst_191 = arith.constant dense<0.000000e+00> : vector<1x64xf32>
    %499 = tpu.matmul %498, %431, %cst_191 {dimension_numbers = #tpu.dot_dimension_numbers<[1], [0], [0], [1], [0, 0, 1, 1], [], []>} : vector<1x16xbf16>, vector<16x64xbf16>, vector<1x64xf32> -> vector<1x64xf32>
    %500 = arith.addf %497, %499 : vector<1x64xf32>
    %501 = vector.extract_strided_slice %430 {offsets = [6, 0], sizes = [1, 64], strides = [1, 1]} : vector<8x64xf32> to vector<1x64xf32>
    %502 = arith.truncf %494 : vector<1x16xf32> to vector<1x16xbf16>
    %cst_192 = arith.constant dense<0.000000e+00> : vector<1x64xf32>
    %503 = tpu.matmul %502, %432, %cst_192 {dimension_numbers = #tpu.dot_dimension_numbers<[1], [0], [0], [1], [0, 0, 1, 1], [], []>} : vector<1x16xbf16>, vector<16x64xbf16>, vector<1x64xf32> -> vector<1x64xf32>
    %504 = arith.addf %501, %503 : vector<1x64xf32>
    %505 = vector.extract_strided_slice %500 {offsets = [0, 0], sizes = [1, 16], strides = [1, 1]} : vector<1x64xf32> to vector<1x16xf32>
    %506 = arith.negf %505 : vector<1x16xf32>
    %507 = math.exp %506 : vector<1x16xf32>
    %cst_193 = arith.constant 1.000000e+00 : f32
    %508 = vector.broadcast %cst_193 : f32 to vector<1x16xf32>
    %509 = arith.addf %508, %507 : vector<1x16xf32>
    %510 = arith.divf %508, %509 : vector<1x16xf32>
    %511 = vector.extract_strided_slice %500 {offsets = [0, 16], sizes = [1, 16], strides = [1, 1]} : vector<1x64xf32> to vector<1x16xf32>
    %512 = arith.negf %511 : vector<1x16xf32>
    %513 = math.exp %512 : vector<1x16xf32>
    %cst_194 = arith.constant 1.000000e+00 : f32
    %514 = vector.broadcast %cst_194 : f32 to vector<1x16xf32>
    %515 = arith.addf %514, %513 : vector<1x16xf32>
    %516 = arith.divf %514, %515 : vector<1x16xf32>
    %517 = vector.extract_strided_slice %500 {offsets = [0, 32], sizes = [1, 16], strides = [1, 1]} : vector<1x64xf32> to vector<1x16xf32>
    %518 = math.tanh %517 : vector<1x16xf32>
    %519 = vector.extract_strided_slice %500 {offsets = [0, 48], sizes = [1, 16], strides = [1, 1]} : vector<1x64xf32> to vector<1x16xf32>
    %520 = arith.negf %519 : vector<1x16xf32>
    %521 = math.exp %520 : vector<1x16xf32>
    %cst_195 = arith.constant 1.000000e+00 : f32
    %522 = vector.broadcast %cst_195 : f32 to vector<1x16xf32>
    %523 = arith.addf %522, %521 : vector<1x16xf32>
    %524 = arith.divf %522, %523 : vector<1x16xf32>
    %525 = arith.mulf %516, %467 : vector<1x16xf32>
    %526 = arith.mulf %510, %518 : vector<1x16xf32>
    %527 = arith.addf %525, %526 : vector<1x16xf32>
    %528 = math.tanh %527 : vector<1x16xf32>
    %529 = arith.mulf %524, %528 : vector<1x16xf32>
    %530 = vector.extract_strided_slice %504 {offsets = [0, 0], sizes = [1, 16], strides = [1, 1]} : vector<1x64xf32> to vector<1x16xf32>
    %531 = arith.negf %530 : vector<1x16xf32>
    %532 = math.exp %531 : vector<1x16xf32>
    %cst_196 = arith.constant 1.000000e+00 : f32
    %533 = vector.broadcast %cst_196 : f32 to vector<1x16xf32>
    %534 = arith.addf %533, %532 : vector<1x16xf32>
    %535 = arith.divf %533, %534 : vector<1x16xf32>
    %536 = vector.extract_strided_slice %504 {offsets = [0, 16], sizes = [1, 16], strides = [1, 1]} : vector<1x64xf32> to vector<1x16xf32>
    %537 = arith.negf %536 : vector<1x16xf32>
    %538 = math.exp %537 : vector<1x16xf32>
    %cst_197 = arith.constant 1.000000e+00 : f32
    %539 = vector.broadcast %cst_197 : f32 to vector<1x16xf32>
    %540 = arith.addf %539, %538 : vector<1x16xf32>
    %541 = arith.divf %539, %540 : vector<1x16xf32>
    %542 = vector.extract_strided_slice %504 {offsets = [0, 32], sizes = [1, 16], strides = [1, 1]} : vector<1x64xf32> to vector<1x16xf32>
    %543 = math.tanh %542 : vector<1x16xf32>
    %544 = vector.extract_strided_slice %504 {offsets = [0, 48], sizes = [1, 16], strides = [1, 1]} : vector<1x64xf32> to vector<1x16xf32>
    %545 = arith.negf %544 : vector<1x16xf32>
    %546 = math.exp %545 : vector<1x16xf32>
    %cst_198 = arith.constant 1.000000e+00 : f32
    %547 = vector.broadcast %cst_198 : f32 to vector<1x16xf32>
    %548 = arith.addf %547, %546 : vector<1x16xf32>
    %549 = arith.divf %547, %548 : vector<1x16xf32>
    %550 = arith.mulf %541, %492 : vector<1x16xf32>
    %551 = arith.mulf %535, %543 : vector<1x16xf32>
    %552 = arith.addf %550, %551 : vector<1x16xf32>
    %553 = math.tanh %552 : vector<1x16xf32>
    %554 = arith.mulf %549, %553 : vector<1x16xf32>
    %c1_199 = arith.constant 1 : index
    %c0_200 = arith.constant 0 : index
    %555 = vector.load %arg30[%c1_199, %c0_200] : memref<8x32xf32, #tpu.memory_space<vmem>>, vector<1x16xf32>
    tpu.vector_store %arg30[%c1_199, %c0_200], %529 {strides = array<i32>} : memref<8x32xf32, #tpu.memory_space<vmem>>, vector<1x16xf32>,
    %c6_201 = arith.constant 6 : index
    %c16_202 = arith.constant 16 : index
    %556 = vector.load %arg30[%c6_201, %c16_202] : memref<8x32xf32, #tpu.memory_space<vmem>>, vector<1x16xf32>
    tpu.vector_store %arg30[%c6_201, %c16_202], %554 {strides = array<i32>} : memref<8x32xf32, #tpu.memory_space<vmem>>, vector<1x16xf32>,
    %557 = vector.extract_strided_slice %429 {offsets = [2, 0], sizes = [1, 64], strides = [1, 1]} : vector<8x64xf32> to vector<1x64xf32>
    %558 = arith.truncf %529 : vector<1x16xf32> to vector<1x16xbf16>
    %cst_203 = arith.constant dense<0.000000e+00> : vector<1x64xf32>
    %559 = tpu.matmul %558, %431, %cst_203 {dimension_numbers = #tpu.dot_dimension_numbers<[1], [0], [0], [1], [0, 0, 1, 1], [], []>} : vector<1x16xbf16>, vector<16x64xbf16>, vector<1x64xf32> -> vector<1x64xf32>
    %560 = arith.addf %557, %559 : vector<1x64xf32>
    %561 = vector.extract_strided_slice %430 {offsets = [5, 0], sizes = [1, 64], strides = [1, 1]} : vector<8x64xf32> to vector<1x64xf32>
    %562 = arith.truncf %554 : vector<1x16xf32> to vector<1x16xbf16>
    %cst_204 = arith.constant dense<0.000000e+00> : vector<1x64xf32>
    %563 = tpu.matmul %562, %432, %cst_204 {dimension_numbers = #tpu.dot_dimension_numbers<[1], [0], [0], [1], [0, 0, 1, 1], [], []>} : vector<1x16xbf16>, vector<16x64xbf16>, vector<1x64xf32> -> vector<1x64xf32>
    %564 = arith.addf %561, %563 : vector<1x64xf32>
    %565 = vector.extract_strided_slice %560 {offsets = [0, 0], sizes = [1, 16], strides = [1, 1]} : vector<1x64xf32> to vector<1x16xf32>
    %566 = arith.negf %565 : vector<1x16xf32>
    %567 = math.exp %566 : vector<1x16xf32>
    %cst_205 = arith.constant 1.000000e+00 : f32
    %568 = vector.broadcast %cst_205 : f32 to vector<1x16xf32>
    %569 = arith.addf %568, %567 : vector<1x16xf32>
    %570 = arith.divf %568, %569 : vector<1x16xf32>
    %571 = vector.extract_strided_slice %560 {offsets = [0, 16], sizes = [1, 16], strides = [1, 1]} : vector<1x64xf32> to vector<1x16xf32>
    %572 = arith.negf %571 : vector<1x16xf32>
    %573 = math.exp %572 : vector<1x16xf32>
    %cst_206 = arith.constant 1.000000e+00 : f32
    %574 = vector.broadcast %cst_206 : f32 to vector<1x16xf32>
    %575 = arith.addf %574, %573 : vector<1x16xf32>
    %576 = arith.divf %574, %575 : vector<1x16xf32>
    %577 = vector.extract_strided_slice %560 {offsets = [0, 32], sizes = [1, 16], strides = [1, 1]} : vector<1x64xf32> to vector<1x16xf32>
    %578 = math.tanh %577 : vector<1x16xf32>
    %579 = vector.extract_strided_slice %560 {offsets = [0, 48], sizes = [1, 16], strides = [1, 1]} : vector<1x64xf32> to vector<1x16xf32>
    %580 = arith.negf %579 : vector<1x16xf32>
    %581 = math.exp %580 : vector<1x16xf32>
    %cst_207 = arith.constant 1.000000e+00 : f32
    %582 = vector.broadcast %cst_207 : f32 to vector<1x16xf32>
    %583 = arith.addf %582, %581 : vector<1x16xf32>
    %584 = arith.divf %582, %583 : vector<1x16xf32>
    %585 = arith.mulf %576, %527 : vector<1x16xf32>
    %586 = arith.mulf %570, %578 : vector<1x16xf32>
    %587 = arith.addf %585, %586 : vector<1x16xf32>
    %588 = math.tanh %587 : vector<1x16xf32>
    %589 = arith.mulf %584, %588 : vector<1x16xf32>
    %590 = vector.extract_strided_slice %564 {offsets = [0, 0], sizes = [1, 16], strides = [1, 1]} : vector<1x64xf32> to vector<1x16xf32>
    %591 = arith.negf %590 : vector<1x16xf32>
    %592 = math.exp %591 : vector<1x16xf32>
    %cst_208 = arith.constant 1.000000e+00 : f32
    %593 = vector.broadcast %cst_208 : f32 to vector<1x16xf32>
    %594 = arith.addf %593, %592 : vector<1x16xf32>
    %595 = arith.divf %593, %594 : vector<1x16xf32>
    %596 = vector.extract_strided_slice %564 {offsets = [0, 16], sizes = [1, 16], strides = [1, 1]} : vector<1x64xf32> to vector<1x16xf32>
    %597 = arith.negf %596 : vector<1x16xf32>
    %598 = math.exp %597 : vector<1x16xf32>
    %cst_209 = arith.constant 1.000000e+00 : f32
    %599 = vector.broadcast %cst_209 : f32 to vector<1x16xf32>
    %600 = arith.addf %599, %598 : vector<1x16xf32>
    %601 = arith.divf %599, %600 : vector<1x16xf32>
    %602 = vector.extract_strided_slice %564 {offsets = [0, 32], sizes = [1, 16], strides = [1, 1]} : vector<1x64xf32> to vector<1x16xf32>
    %603 = math.tanh %602 : vector<1x16xf32>
    %604 = vector.extract_strided_slice %564 {offsets = [0, 48], sizes = [1, 16], strides = [1, 1]} : vector<1x64xf32> to vector<1x16xf32>
    %605 = arith.negf %604 : vector<1x16xf32>
    %606 = math.exp %605 : vector<1x16xf32>
    %cst_210 = arith.constant 1.000000e+00 : f32
    %607 = vector.broadcast %cst_210 : f32 to vector<1x16xf32>
    %608 = arith.addf %607, %606 : vector<1x16xf32>
    %609 = arith.divf %607, %608 : vector<1x16xf32>
    %610 = arith.mulf %601, %552 : vector<1x16xf32>
    %611 = arith.mulf %595, %603 : vector<1x16xf32>
    %612 = arith.addf %610, %611 : vector<1x16xf32>
    %613 = math.tanh %612 : vector<1x16xf32>
    %614 = arith.mulf %609, %613 : vector<1x16xf32>
    %c2_211 = arith.constant 2 : index
    %c0_212 = arith.constant 0 : index
    %615 = vector.load %arg30[%c2_211, %c0_212] : memref<8x32xf32, #tpu.memory_space<vmem>>, vector<1x16xf32>
    tpu.vector_store %arg30[%c2_211, %c0_212], %589 {strides = array<i32>} : memref<8x32xf32, #tpu.memory_space<vmem>>, vector<1x16xf32>,
    %c5_213 = arith.constant 5 : index
    %c16_214 = arith.constant 16 : index
    %616 = vector.load %arg30[%c5_213, %c16_214] : memref<8x32xf32, #tpu.memory_space<vmem>>, vector<1x16xf32>
    tpu.vector_store %arg30[%c5_213, %c16_214], %614 {strides = array<i32>} : memref<8x32xf32, #tpu.memory_space<vmem>>, vector<1x16xf32>,
    %617 = vector.extract_strided_slice %429 {offsets = [3, 0], sizes = [1, 64], strides = [1, 1]} : vector<8x64xf32> to vector<1x64xf32>
    %618 = arith.truncf %589 : vector<1x16xf32> to vector<1x16xbf16>
    %cst_215 = arith.constant dense<0.000000e+00> : vector<1x64xf32>
    %619 = tpu.matmul %618, %431, %cst_215 {dimension_numbers = #tpu.dot_dimension_numbers<[1], [0], [0], [1], [0, 0, 1, 1], [], []>} : vector<1x16xbf16>, vector<16x64xbf16>, vector<1x64xf32> -> vector<1x64xf32>
    %620 = arith.addf %617, %619 : vector<1x64xf32>
    %621 = vector.extract_strided_slice %430 {offsets = [4, 0], sizes = [1, 64], strides = [1, 1]} : vector<8x64xf32> to vector<1x64xf32>
    %622 = arith.truncf %614 : vector<1x16xf32> to vector<1x16xbf16>
    %cst_216 = arith.constant dense<0.000000e+00> : vector<1x64xf32>
    %623 = tpu.matmul %622, %432, %cst_216 {dimension_numbers = #tpu.dot_dimension_numbers<[1], [0], [0], [1], [0, 0, 1, 1], [], []>} : vector<1x16xbf16>, vector<16x64xbf16>, vector<1x64xf32> -> vector<1x64xf32>
    %624 = arith.addf %621, %623 : vector<1x64xf32>
    %625 = vector.extract_strided_slice %620 {offsets = [0, 0], sizes = [1, 16], strides = [1, 1]} : vector<1x64xf32> to vector<1x16xf32>
    %626 = arith.negf %625 : vector<1x16xf32>
    %627 = math.exp %626 : vector<1x16xf32>
    %cst_217 = arith.constant 1.000000e+00 : f32
    %628 = vector.broadcast %cst_217 : f32 to vector<1x16xf32>
    %629 = arith.addf %628, %627 : vector<1x16xf32>
    %630 = arith.divf %628, %629 : vector<1x16xf32>
    %631 = vector.extract_strided_slice %620 {offsets = [0, 16], sizes = [1, 16], strides = [1, 1]} : vector<1x64xf32> to vector<1x16xf32>
    %632 = arith.negf %631 : vector<1x16xf32>
    %633 = math.exp %632 : vector<1x16xf32>
    %cst_218 = arith.constant 1.000000e+00 : f32
    %634 = vector.broadcast %cst_218 : f32 to vector<1x16xf32>
    %635 = arith.addf %634, %633 : vector<1x16xf32>
    %636 = arith.divf %634, %635 : vector<1x16xf32>
    %637 = vector.extract_strided_slice %620 {offsets = [0, 32], sizes = [1, 16], strides = [1, 1]} : vector<1x64xf32> to vector<1x16xf32>
    %638 = math.tanh %637 : vector<1x16xf32>
    %639 = vector.extract_strided_slice %620 {offsets = [0, 48], sizes = [1, 16], strides = [1, 1]} : vector<1x64xf32> to vector<1x16xf32>
    %640 = arith.negf %639 : vector<1x16xf32>
    %641 = math.exp %640 : vector<1x16xf32>
    %cst_219 = arith.constant 1.000000e+00 : f32
    %642 = vector.broadcast %cst_219 : f32 to vector<1x16xf32>
    %643 = arith.addf %642, %641 : vector<1x16xf32>
    %644 = arith.divf %642, %643 : vector<1x16xf32>
    %645 = arith.mulf %636, %587 : vector<1x16xf32>
    %646 = arith.mulf %630, %638 : vector<1x16xf32>
    %647 = arith.addf %645, %646 : vector<1x16xf32>
    %648 = math.tanh %647 : vector<1x16xf32>
    %649 = arith.mulf %644, %648 : vector<1x16xf32>
    %650 = vector.extract_strided_slice %624 {offsets = [0, 0], sizes = [1, 16], strides = [1, 1]} : vector<1x64xf32> to vector<1x16xf32>
    %651 = arith.negf %650 : vector<1x16xf32>
    %652 = math.exp %651 : vector<1x16xf32>
    %cst_220 = arith.constant 1.000000e+00 : f32
    %653 = vector.broadcast %cst_220 : f32 to vector<1x16xf32>
    %654 = arith.addf %653, %652 : vector<1x16xf32>
    %655 = arith.divf %653, %654 : vector<1x16xf32>
    %656 = vector.extract_strided_slice %624 {offsets = [0, 16], sizes = [1, 16], strides = [1, 1]} : vector<1x64xf32> to vector<1x16xf32>
    %657 = arith.negf %656 : vector<1x16xf32>
    %658 = math.exp %657 : vector<1x16xf32>
    %cst_221 = arith.constant 1.000000e+00 : f32
    %659 = vector.broadcast %cst_221 : f32 to vector<1x16xf32>
    %660 = arith.addf %659, %658 : vector<1x16xf32>
    %661 = arith.divf %659, %660 : vector<1x16xf32>
    %662 = vector.extract_strided_slice %624 {offsets = [0, 32], sizes = [1, 16], strides = [1, 1]} : vector<1x64xf32> to vector<1x16xf32>
    %663 = math.tanh %662 : vector<1x16xf32>
    %664 = vector.extract_strided_slice %624 {offsets = [0, 48], sizes = [1, 16], strides = [1, 1]} : vector<1x64xf32> to vector<1x16xf32>
    %665 = arith.negf %664 : vector<1x16xf32>
    %666 = math.exp %665 : vector<1x16xf32>
    %cst_222 = arith.constant 1.000000e+00 : f32
    %667 = vector.broadcast %cst_222 : f32 to vector<1x16xf32>
    %668 = arith.addf %667, %666 : vector<1x16xf32>
    %669 = arith.divf %667, %668 : vector<1x16xf32>
    %670 = arith.mulf %661, %612 : vector<1x16xf32>
    %671 = arith.mulf %655, %663 : vector<1x16xf32>
    %672 = arith.addf %670, %671 : vector<1x16xf32>
    %673 = math.tanh %672 : vector<1x16xf32>
    %674 = arith.mulf %669, %673 : vector<1x16xf32>
    %c3_223 = arith.constant 3 : index
    %c0_224 = arith.constant 0 : index
    %675 = vector.load %arg30[%c3_223, %c0_224] : memref<8x32xf32, #tpu.memory_space<vmem>>, vector<1x16xf32>
    tpu.vector_store %arg30[%c3_223, %c0_224], %649 {strides = array<i32>} : memref<8x32xf32, #tpu.memory_space<vmem>>, vector<1x16xf32>,
    %c4_225 = arith.constant 4 : index
    %c16_226 = arith.constant 16 : index
    %676 = vector.load %arg30[%c4_225, %c16_226] : memref<8x32xf32, #tpu.memory_space<vmem>>, vector<1x16xf32>
    tpu.vector_store %arg30[%c4_225, %c16_226], %674 {strides = array<i32>} : memref<8x32xf32, #tpu.memory_space<vmem>>, vector<1x16xf32>,
    %677 = vector.extract_strided_slice %429 {offsets = [4, 0], sizes = [1, 64], strides = [1, 1]} : vector<8x64xf32> to vector<1x64xf32>
    %678 = arith.truncf %649 : vector<1x16xf32> to vector<1x16xbf16>
    %cst_227 = arith.constant dense<0.000000e+00> : vector<1x64xf32>
    %679 = tpu.matmul %678, %431, %cst_227 {dimension_numbers = #tpu.dot_dimension_numbers<[1], [0], [0], [1], [0, 0, 1, 1], [], []>} : vector<1x16xbf16>, vector<16x64xbf16>, vector<1x64xf32> -> vector<1x64xf32>
    %680 = arith.addf %677, %679 : vector<1x64xf32>
    %681 = vector.extract_strided_slice %430 {offsets = [3, 0], sizes = [1, 64], strides = [1, 1]} : vector<8x64xf32> to vector<1x64xf32>
    %682 = arith.truncf %674 : vector<1x16xf32> to vector<1x16xbf16>
    %cst_228 = arith.constant dense<0.000000e+00> : vector<1x64xf32>
    %683 = tpu.matmul %682, %432, %cst_228 {dimension_numbers = #tpu.dot_dimension_numbers<[1], [0], [0], [1], [0, 0, 1, 1], [], []>} : vector<1x16xbf16>, vector<16x64xbf16>, vector<1x64xf32> -> vector<1x64xf32>
    %684 = arith.addf %681, %683 : vector<1x64xf32>
    %685 = vector.extract_strided_slice %680 {offsets = [0, 0], sizes = [1, 16], strides = [1, 1]} : vector<1x64xf32> to vector<1x16xf32>
    %686 = arith.negf %685 : vector<1x16xf32>
    %687 = math.exp %686 : vector<1x16xf32>
    %cst_229 = arith.constant 1.000000e+00 : f32
    %688 = vector.broadcast %cst_229 : f32 to vector<1x16xf32>
    %689 = arith.addf %688, %687 : vector<1x16xf32>
    %690 = arith.divf %688, %689 : vector<1x16xf32>
    %691 = vector.extract_strided_slice %680 {offsets = [0, 16], sizes = [1, 16], strides = [1, 1]} : vector<1x64xf32> to vector<1x16xf32>
    %692 = arith.negf %691 : vector<1x16xf32>
    %693 = math.exp %692 : vector<1x16xf32>
    %cst_230 = arith.constant 1.000000e+00 : f32
    %694 = vector.broadcast %cst_230 : f32 to vector<1x16xf32>
    %695 = arith.addf %694, %693 : vector<1x16xf32>
    %696 = arith.divf %694, %695 : vector<1x16xf32>
    %697 = vector.extract_strided_slice %680 {offsets = [0, 32], sizes = [1, 16], strides = [1, 1]} : vector<1x64xf32> to vector<1x16xf32>
    %698 = math.tanh %697 : vector<1x16xf32>
    %699 = vector.extract_strided_slice %680 {offsets = [0, 48], sizes = [1, 16], strides = [1, 1]} : vector<1x64xf32> to vector<1x16xf32>
    %700 = arith.negf %699 : vector<1x16xf32>
    %701 = math.exp %700 : vector<1x16xf32>
    %cst_231 = arith.constant 1.000000e+00 : f32
    %702 = vector.broadcast %cst_231 : f32 to vector<1x16xf32>
    %703 = arith.addf %702, %701 : vector<1x16xf32>
    %704 = arith.divf %702, %703 : vector<1x16xf32>
    %705 = arith.mulf %696, %647 : vector<1x16xf32>
    %706 = arith.mulf %690, %698 : vector<1x16xf32>
    %707 = arith.addf %705, %706 : vector<1x16xf32>
    %708 = math.tanh %707 : vector<1x16xf32>
    %709 = arith.mulf %704, %708 : vector<1x16xf32>
    %710 = vector.extract_strided_slice %684 {offsets = [0, 0], sizes = [1, 16], strides = [1, 1]} : vector<1x64xf32> to vector<1x16xf32>
    %711 = arith.negf %710 : vector<1x16xf32>
    %712 = math.exp %711 : vector<1x16xf32>
    %cst_232 = arith.constant 1.000000e+00 : f32
    %713 = vector.broadcast %cst_232 : f32 to vector<1x16xf32>
    %714 = arith.addf %713, %712 : vector<1x16xf32>
    %715 = arith.divf %713, %714 : vector<1x16xf32>
    %716 = vector.extract_strided_slice %684 {offsets = [0, 16], sizes = [1, 16], strides = [1, 1]} : vector<1x64xf32> to vector<1x16xf32>
    %717 = arith.negf %716 : vector<1x16xf32>
    %718 = math.exp %717 : vector<1x16xf32>
    %cst_233 = arith.constant 1.000000e+00 : f32
    %719 = vector.broadcast %cst_233 : f32 to vector<1x16xf32>
    %720 = arith.addf %719, %718 : vector<1x16xf32>
    %721 = arith.divf %719, %720 : vector<1x16xf32>
    %722 = vector.extract_strided_slice %684 {offsets = [0, 32], sizes = [1, 16], strides = [1, 1]} : vector<1x64xf32> to vector<1x16xf32>
    %723 = math.tanh %722 : vector<1x16xf32>
    %724 = vector.extract_strided_slice %684 {offsets = [0, 48], sizes = [1, 16], strides = [1, 1]} : vector<1x64xf32> to vector<1x16xf32>
    %725 = arith.negf %724 : vector<1x16xf32>
    %726 = math.exp %725 : vector<1x16xf32>
    %cst_234 = arith.constant 1.000000e+00 : f32
    %727 = vector.broadcast %cst_234 : f32 to vector<1x16xf32>
    %728 = arith.addf %727, %726 : vector<1x16xf32>
    %729 = arith.divf %727, %728 : vector<1x16xf32>
    %730 = arith.mulf %721, %672 : vector<1x16xf32>
    %731 = arith.mulf %715, %723 : vector<1x16xf32>
    %732 = arith.addf %730, %731 : vector<1x16xf32>
    %733 = math.tanh %732 : vector<1x16xf32>
    %734 = arith.mulf %729, %733 : vector<1x16xf32>
    %c4_235 = arith.constant 4 : index
    %c0_236 = arith.constant 0 : index
    %735 = vector.load %arg30[%c4_235, %c0_236] : memref<8x32xf32, #tpu.memory_space<vmem>>, vector<1x16xf32>
    tpu.vector_store %arg30[%c4_235, %c0_236], %709 {strides = array<i32>} : memref<8x32xf32, #tpu.memory_space<vmem>>, vector<1x16xf32>,
    %c3_237 = arith.constant 3 : index
    %c16_238 = arith.constant 16 : index
    %736 = vector.load %arg30[%c3_237, %c16_238] : memref<8x32xf32, #tpu.memory_space<vmem>>, vector<1x16xf32>
    tpu.vector_store %arg30[%c3_237, %c16_238], %734 {strides = array<i32>} : memref<8x32xf32, #tpu.memory_space<vmem>>, vector<1x16xf32>,
    %737 = vector.extract_strided_slice %429 {offsets = [5, 0], sizes = [1, 64], strides = [1, 1]} : vector<8x64xf32> to vector<1x64xf32>
    %738 = arith.truncf %709 : vector<1x16xf32> to vector<1x16xbf16>
    %cst_239 = arith.constant dense<0.000000e+00> : vector<1x64xf32>
    %739 = tpu.matmul %738, %431, %cst_239 {dimension_numbers = #tpu.dot_dimension_numbers<[1], [0], [0], [1], [0, 0, 1, 1], [], []>} : vector<1x16xbf16>, vector<16x64xbf16>, vector<1x64xf32> -> vector<1x64xf32>
    %740 = arith.addf %737, %739 : vector<1x64xf32>
    %741 = vector.extract_strided_slice %430 {offsets = [2, 0], sizes = [1, 64], strides = [1, 1]} : vector<8x64xf32> to vector<1x64xf32>
    %742 = arith.truncf %734 : vector<1x16xf32> to vector<1x16xbf16>
    %cst_240 = arith.constant dense<0.000000e+00> : vector<1x64xf32>
    %743 = tpu.matmul %742, %432, %cst_240 {dimension_numbers = #tpu.dot_dimension_numbers<[1], [0], [0], [1], [0, 0, 1, 1], [], []>} : vector<1x16xbf16>, vector<16x64xbf16>, vector<1x64xf32> -> vector<1x64xf32>
    %744 = arith.addf %741, %743 : vector<1x64xf32>
    %745 = vector.extract_strided_slice %740 {offsets = [0, 0], sizes = [1, 16], strides = [1, 1]} : vector<1x64xf32> to vector<1x16xf32>
    %746 = arith.negf %745 : vector<1x16xf32>
    %747 = math.exp %746 : vector<1x16xf32>
    %cst_241 = arith.constant 1.000000e+00 : f32
    %748 = vector.broadcast %cst_241 : f32 to vector<1x16xf32>
    %749 = arith.addf %748, %747 : vector<1x16xf32>
    %750 = arith.divf %748, %749 : vector<1x16xf32>
    %751 = vector.extract_strided_slice %740 {offsets = [0, 16], sizes = [1, 16], strides = [1, 1]} : vector<1x64xf32> to vector<1x16xf32>
    %752 = arith.negf %751 : vector<1x16xf32>
    %753 = math.exp %752 : vector<1x16xf32>
    %cst_242 = arith.constant 1.000000e+00 : f32
    %754 = vector.broadcast %cst_242 : f32 to vector<1x16xf32>
    %755 = arith.addf %754, %753 : vector<1x16xf32>
    %756 = arith.divf %754, %755 : vector<1x16xf32>
    %757 = vector.extract_strided_slice %740 {offsets = [0, 32], sizes = [1, 16], strides = [1, 1]} : vector<1x64xf32> to vector<1x16xf32>
    %758 = math.tanh %757 : vector<1x16xf32>
    %759 = vector.extract_strided_slice %740 {offsets = [0, 48], sizes = [1, 16], strides = [1, 1]} : vector<1x64xf32> to vector<1x16xf32>
    %760 = arith.negf %759 : vector<1x16xf32>
    %761 = math.exp %760 : vector<1x16xf32>
    %cst_243 = arith.constant 1.000000e+00 : f32
    %762 = vector.broadcast %cst_243 : f32 to vector<1x16xf32>
    %763 = arith.addf %762, %761 : vector<1x16xf32>
    %764 = arith.divf %762, %763 : vector<1x16xf32>
    %765 = arith.mulf %756, %707 : vector<1x16xf32>
    %766 = arith.mulf %750, %758 : vector<1x16xf32>
    %767 = arith.addf %765, %766 : vector<1x16xf32>
    %768 = math.tanh %767 : vector<1x16xf32>
    %769 = arith.mulf %764, %768 : vector<1x16xf32>
    %770 = vector.extract_strided_slice %744 {offsets = [0, 0], sizes = [1, 16], strides = [1, 1]} : vector<1x64xf32> to vector<1x16xf32>
    %771 = arith.negf %770 : vector<1x16xf32>
    %772 = math.exp %771 : vector<1x16xf32>
    %cst_244 = arith.constant 1.000000e+00 : f32
    %773 = vector.broadcast %cst_244 : f32 to vector<1x16xf32>
    %774 = arith.addf %773, %772 : vector<1x16xf32>
    %775 = arith.divf %773, %774 : vector<1x16xf32>
    %776 = vector.extract_strided_slice %744 {offsets = [0, 16], sizes = [1, 16], strides = [1, 1]} : vector<1x64xf32> to vector<1x16xf32>
    %777 = arith.negf %776 : vector<1x16xf32>
    %778 = math.exp %777 : vector<1x16xf32>
    %cst_245 = arith.constant 1.000000e+00 : f32
    %779 = vector.broadcast %cst_245 : f32 to vector<1x16xf32>
    %780 = arith.addf %779, %778 : vector<1x16xf32>
    %781 = arith.divf %779, %780 : vector<1x16xf32>
    %782 = vector.extract_strided_slice %744 {offsets = [0, 32], sizes = [1, 16], strides = [1, 1]} : vector<1x64xf32> to vector<1x16xf32>
    %783 = math.tanh %782 : vector<1x16xf32>
    %784 = vector.extract_strided_slice %744 {offsets = [0, 48], sizes = [1, 16], strides = [1, 1]} : vector<1x64xf32> to vector<1x16xf32>
    %785 = arith.negf %784 : vector<1x16xf32>
    %786 = math.exp %785 : vector<1x16xf32>
    %cst_246 = arith.constant 1.000000e+00 : f32
    %787 = vector.broadcast %cst_246 : f32 to vector<1x16xf32>
    %788 = arith.addf %787, %786 : vector<1x16xf32>
    %789 = arith.divf %787, %788 : vector<1x16xf32>
    %790 = arith.mulf %781, %732 : vector<1x16xf32>
    %791 = arith.mulf %775, %783 : vector<1x16xf32>
    %792 = arith.addf %790, %791 : vector<1x16xf32>
    %793 = math.tanh %792 : vector<1x16xf32>
    %794 = arith.mulf %789, %793 : vector<1x16xf32>
    %c5_247 = arith.constant 5 : index
    %c0_248 = arith.constant 0 : index
    %795 = vector.load %arg30[%c5_247, %c0_248] : memref<8x32xf32, #tpu.memory_space<vmem>>, vector<1x16xf32>
    tpu.vector_store %arg30[%c5_247, %c0_248], %769 {strides = array<i32>} : memref<8x32xf32, #tpu.memory_space<vmem>>, vector<1x16xf32>,
    %c2_249 = arith.constant 2 : index
    %c16_250 = arith.constant 16 : index
    %796 = vector.load %arg30[%c2_249, %c16_250] : memref<8x32xf32, #tpu.memory_space<vmem>>, vector<1x16xf32>
    tpu.vector_store %arg30[%c2_249, %c16_250], %794 {strides = array<i32>} : memref<8x32xf32, #tpu.memory_space<vmem>>, vector<1x16xf32>,
    %797 = vector.extract_strided_slice %429 {offsets = [6, 0], sizes = [1, 64], strides = [1, 1]} : vector<8x64xf32> to vector<1x64xf32>
    %798 = arith.truncf %769 : vector<1x16xf32> to vector<1x16xbf16>
    %cst_251 = arith.constant dense<0.000000e+00> : vector<1x64xf32>
    %799 = tpu.matmul %798, %431, %cst_251 {dimension_numbers = #tpu.dot_dimension_numbers<[1], [0], [0], [1], [0, 0, 1, 1], [], []>} : vector<1x16xbf16>, vector<16x64xbf16>, vector<1x64xf32> -> vector<1x64xf32>
    %800 = arith.addf %797, %799 : vector<1x64xf32>
    %801 = vector.extract_strided_slice %430 {offsets = [1, 0], sizes = [1, 64], strides = [1, 1]} : vector<8x64xf32> to vector<1x64xf32>
    %802 = arith.truncf %794 : vector<1x16xf32> to vector<1x16xbf16>
    %cst_252 = arith.constant dense<0.000000e+00> : vector<1x64xf32>
    %803 = tpu.matmul %802, %432, %cst_252 {dimension_numbers = #tpu.dot_dimension_numbers<[1], [0], [0], [1], [0, 0, 1, 1], [], []>} : vector<1x16xbf16>, vector<16x64xbf16>, vector<1x64xf32> -> vector<1x64xf32>
    %804 = arith.addf %801, %803 : vector<1x64xf32>
    %805 = vector.extract_strided_slice %800 {offsets = [0, 0], sizes = [1, 16], strides = [1, 1]} : vector<1x64xf32> to vector<1x16xf32>
    %806 = arith.negf %805 : vector<1x16xf32>
    %807 = math.exp %806 : vector<1x16xf32>
    %cst_253 = arith.constant 1.000000e+00 : f32
    %808 = vector.broadcast %cst_253 : f32 to vector<1x16xf32>
    %809 = arith.addf %808, %807 : vector<1x16xf32>
    %810 = arith.divf %808, %809 : vector<1x16xf32>
    %811 = vector.extract_strided_slice %800 {offsets = [0, 16], sizes = [1, 16], strides = [1, 1]} : vector<1x64xf32> to vector<1x16xf32>
    %812 = arith.negf %811 : vector<1x16xf32>
    %813 = math.exp %812 : vector<1x16xf32>
    %cst_254 = arith.constant 1.000000e+00 : f32
    %814 = vector.broadcast %cst_254 : f32 to vector<1x16xf32>
    %815 = arith.addf %814, %813 : vector<1x16xf32>
    %816 = arith.divf %814, %815 : vector<1x16xf32>
    %817 = vector.extract_strided_slice %800 {offsets = [0, 32], sizes = [1, 16], strides = [1, 1]} : vector<1x64xf32> to vector<1x16xf32>
    %818 = math.tanh %817 : vector<1x16xf32>
    %819 = vector.extract_strided_slice %800 {offsets = [0, 48], sizes = [1, 16], strides = [1, 1]} : vector<1x64xf32> to vector<1x16xf32>
    %820 = arith.negf %819 : vector<1x16xf32>
    %821 = math.exp %820 : vector<1x16xf32>
    %cst_255 = arith.constant 1.000000e+00 : f32
    %822 = vector.broadcast %cst_255 : f32 to vector<1x16xf32>
    %823 = arith.addf %822, %821 : vector<1x16xf32>
    %824 = arith.divf %822, %823 : vector<1x16xf32>
    %825 = arith.mulf %816, %767 : vector<1x16xf32>
    %826 = arith.mulf %810, %818 : vector<1x16xf32>
    %827 = arith.addf %825, %826 : vector<1x16xf32>
    %828 = math.tanh %827 : vector<1x16xf32>
    %829 = arith.mulf %824, %828 : vector<1x16xf32>
    %830 = vector.extract_strided_slice %804 {offsets = [0, 0], sizes = [1, 16], strides = [1, 1]} : vector<1x64xf32> to vector<1x16xf32>
    %831 = arith.negf %830 : vector<1x16xf32>
    %832 = math.exp %831 : vector<1x16xf32>
    %cst_256 = arith.constant 1.000000e+00 : f32
    %833 = vector.broadcast %cst_256 : f32 to vector<1x16xf32>
    %834 = arith.addf %833, %832 : vector<1x16xf32>
    %835 = arith.divf %833, %834 : vector<1x16xf32>
    %836 = vector.extract_strided_slice %804 {offsets = [0, 16], sizes = [1, 16], strides = [1, 1]} : vector<1x64xf32> to vector<1x16xf32>
    %837 = arith.negf %836 : vector<1x16xf32>
    %838 = math.exp %837 : vector<1x16xf32>
    %cst_257 = arith.constant 1.000000e+00 : f32
    %839 = vector.broadcast %cst_257 : f32 to vector<1x16xf32>
    %840 = arith.addf %839, %838 : vector<1x16xf32>
    %841 = arith.divf %839, %840 : vector<1x16xf32>
    %842 = vector.extract_strided_slice %804 {offsets = [0, 32], sizes = [1, 16], strides = [1, 1]} : vector<1x64xf32> to vector<1x16xf32>
    %843 = math.tanh %842 : vector<1x16xf32>
    %844 = vector.extract_strided_slice %804 {offsets = [0, 48], sizes = [1, 16], strides = [1, 1]} : vector<1x64xf32> to vector<1x16xf32>
    %845 = arith.negf %844 : vector<1x16xf32>
    %846 = math.exp %845 : vector<1x16xf32>
    %cst_258 = arith.constant 1.000000e+00 : f32
    %847 = vector.broadcast %cst_258 : f32 to vector<1x16xf32>
    %848 = arith.addf %847, %846 : vector<1x16xf32>
    %849 = arith.divf %847, %848 : vector<1x16xf32>
    %850 = arith.mulf %841, %792 : vector<1x16xf32>
    %851 = arith.mulf %835, %843 : vector<1x16xf32>
    %852 = arith.addf %850, %851 : vector<1x16xf32>
    %853 = math.tanh %852 : vector<1x16xf32>
    %854 = arith.mulf %849, %853 : vector<1x16xf32>
    %c6_259 = arith.constant 6 : index
    %c0_260 = arith.constant 0 : index
    %855 = vector.load %arg30[%c6_259, %c0_260] : memref<8x32xf32, #tpu.memory_space<vmem>>, vector<1x16xf32>
    tpu.vector_store %arg30[%c6_259, %c0_260], %829 {strides = array<i32>} : memref<8x32xf32, #tpu.memory_space<vmem>>, vector<1x16xf32>,
    %c1_261 = arith.constant 1 : index
    %c16_262 = arith.constant 16 : index
    %856 = vector.load %arg30[%c1_261, %c16_262] : memref<8x32xf32, #tpu.memory_space<vmem>>, vector<1x16xf32>
    tpu.vector_store %arg30[%c1_261, %c16_262], %854 {strides = array<i32>} : memref<8x32xf32, #tpu.memory_space<vmem>>, vector<1x16xf32>,
    %857 = vector.extract_strided_slice %429 {offsets = [7, 0], sizes = [1, 64], strides = [1, 1]} : vector<8x64xf32> to vector<1x64xf32>
    %858 = arith.truncf %829 : vector<1x16xf32> to vector<1x16xbf16>
    %cst_263 = arith.constant dense<0.000000e+00> : vector<1x64xf32>
    %859 = tpu.matmul %858, %431, %cst_263 {dimension_numbers = #tpu.dot_dimension_numbers<[1], [0], [0], [1], [0, 0, 1, 1], [], []>} : vector<1x16xbf16>, vector<16x64xbf16>, vector<1x64xf32> -> vector<1x64xf32>
    %860 = arith.addf %857, %859 : vector<1x64xf32>
    %861 = vector.extract_strided_slice %430 {offsets = [0, 0], sizes = [1, 64], strides = [1, 1]} : vector<8x64xf32> to vector<1x64xf32>
    %862 = arith.truncf %854 : vector<1x16xf32> to vector<1x16xbf16>
    %cst_264 = arith.constant dense<0.000000e+00> : vector<1x64xf32>
    %863 = tpu.matmul %862, %432, %cst_264 {dimension_numbers = #tpu.dot_dimension_numbers<[1], [0], [0], [1], [0, 0, 1, 1], [], []>} : vector<1x16xbf16>, vector<16x64xbf16>, vector<1x64xf32> -> vector<1x64xf32>
    %864 = arith.addf %861, %863 : vector<1x64xf32>
    %865 = vector.extract_strided_slice %860 {offsets = [0, 0], sizes = [1, 16], strides = [1, 1]} : vector<1x64xf32> to vector<1x16xf32>
    %866 = arith.negf %865 : vector<1x16xf32>
    %867 = math.exp %866 : vector<1x16xf32>
    %cst_265 = arith.constant 1.000000e+00 : f32
    %868 = vector.broadcast %cst_265 : f32 to vector<1x16xf32>
    %869 = arith.addf %868, %867 : vector<1x16xf32>
    %870 = arith.divf %868, %869 : vector<1x16xf32>
    %871 = vector.extract_strided_slice %860 {offsets = [0, 16], sizes = [1, 16], strides = [1, 1]} : vector<1x64xf32> to vector<1x16xf32>
    %872 = arith.negf %871 : vector<1x16xf32>
    %873 = math.exp %872 : vector<1x16xf32>
    %cst_266 = arith.constant 1.000000e+00 : f32
    %874 = vector.broadcast %cst_266 : f32 to vector<1x16xf32>
    %875 = arith.addf %874, %873 : vector<1x16xf32>
    %876 = arith.divf %874, %875 : vector<1x16xf32>
    %877 = vector.extract_strided_slice %860 {offsets = [0, 32], sizes = [1, 16], strides = [1, 1]} : vector<1x64xf32> to vector<1x16xf32>
    %878 = math.tanh %877 : vector<1x16xf32>
    %879 = vector.extract_strided_slice %860 {offsets = [0, 48], sizes = [1, 16], strides = [1, 1]} : vector<1x64xf32> to vector<1x16xf32>
    %880 = arith.negf %879 : vector<1x16xf32>
    %881 = math.exp %880 : vector<1x16xf32>
    %cst_267 = arith.constant 1.000000e+00 : f32
    %882 = vector.broadcast %cst_267 : f32 to vector<1x16xf32>
    %883 = arith.addf %882, %881 : vector<1x16xf32>
    %884 = arith.divf %882, %883 : vector<1x16xf32>
    %885 = arith.mulf %876, %827 : vector<1x16xf32>
    %886 = arith.mulf %870, %878 : vector<1x16xf32>
    %887 = arith.addf %885, %886 : vector<1x16xf32>
    %888 = math.tanh %887 : vector<1x16xf32>
    %889 = arith.mulf %884, %888 : vector<1x16xf32>
    %890 = vector.extract_strided_slice %864 {offsets = [0, 0], sizes = [1, 16], strides = [1, 1]} : vector<1x64xf32> to vector<1x16xf32>
    %891 = arith.negf %890 : vector<1x16xf32>
    %892 = math.exp %891 : vector<1x16xf32>
    %cst_268 = arith.constant 1.000000e+00 : f32
    %893 = vector.broadcast %cst_268 : f32 to vector<1x16xf32>
    %894 = arith.addf %893, %892 : vector<1x16xf32>
    %895 = arith.divf %893, %894 : vector<1x16xf32>
    %896 = vector.extract_strided_slice %864 {offsets = [0, 16], sizes = [1, 16], strides = [1, 1]} : vector<1x64xf32> to vector<1x16xf32>
    %897 = arith.negf %896 : vector<1x16xf32>
    %898 = math.exp %897 : vector<1x16xf32>
    %cst_269 = arith.constant 1.000000e+00 : f32
    %899 = vector.broadcast %cst_269 : f32 to vector<1x16xf32>
    %900 = arith.addf %899, %898 : vector<1x16xf32>
    %901 = arith.divf %899, %900 : vector<1x16xf32>
    %902 = vector.extract_strided_slice %864 {offsets = [0, 32], sizes = [1, 16], strides = [1, 1]} : vector<1x64xf32> to vector<1x16xf32>
    %903 = math.tanh %902 : vector<1x16xf32>
    %904 = vector.extract_strided_slice %864 {offsets = [0, 48], sizes = [1, 16], strides = [1, 1]} : vector<1x64xf32> to vector<1x16xf32>
    %905 = arith.negf %904 : vector<1x16xf32>
    %906 = math.exp %905 : vector<1x16xf32>
    %cst_270 = arith.constant 1.000000e+00 : f32
    %907 = vector.broadcast %cst_270 : f32 to vector<1x16xf32>
    %908 = arith.addf %907, %906 : vector<1x16xf32>
    %909 = arith.divf %907, %908 : vector<1x16xf32>
    %910 = arith.mulf %901, %852 : vector<1x16xf32>
    %911 = arith.mulf %895, %903 : vector<1x16xf32>
    %912 = arith.addf %910, %911 : vector<1x16xf32>
    %913 = math.tanh %912 : vector<1x16xf32>
    %914 = arith.mulf %909, %913 : vector<1x16xf32>
    %c7_271 = arith.constant 7 : index
    %c0_272 = arith.constant 0 : index
    %915 = vector.load %arg30[%c7_271, %c0_272] : memref<8x32xf32, #tpu.memory_space<vmem>>, vector<1x16xf32>
    tpu.vector_store %arg30[%c7_271, %c0_272], %889 {strides = array<i32>} : memref<8x32xf32, #tpu.memory_space<vmem>>, vector<1x16xf32>,
    %c0_273 = arith.constant 0 : index
    %c16_274 = arith.constant 16 : index
    %916 = vector.load %arg30[%c0_273, %c16_274] : memref<8x32xf32, #tpu.memory_space<vmem>>, vector<1x16xf32>
    tpu.vector_store %arg30[%c0_273, %c16_274], %914 {strides = array<i32>} : memref<8x32xf32, #tpu.memory_space<vmem>>, vector<1x16xf32>,
    %c0_275 = arith.constant 0 : index
    %c0_276 = arith.constant 0 : index
    %917 = vector.load %arg30[%c0_275, %c0_276] : memref<8x32xf32, #tpu.memory_space<vmem>>, vector<8x32xf32>
    %918 = arith.truncf %917 : vector<8x32xf32> to vector<8x32xbf16>
    %c0_277 = arith.constant 0 : index
    %c0_278 = arith.constant 0 : index
    %919 = vector.load %arg24[%c0_277, %c0_278] : memref<32x8xbf16, #tpu.memory_space<vmem>>, vector<32x8xbf16>
    %cst_279 = arith.constant dense<0.000000e+00> : vector<8x8xf32>
    %920 = tpu.matmul %918, %919, %cst_279 {dimension_numbers = #tpu.dot_dimension_numbers<[1], [0], [0], [1], [0, 0, 1, 1], [], []>} : vector<8x32xbf16>, vector<32x8xbf16>, vector<8x8xf32> -> vector<8x8xf32>
    %c0_280 = arith.constant 0 : index
    %c0_281 = arith.constant 0 : index
    %921 = vector.load %arg25[%c0_280, %c0_281] : memref<1x8xf32, #tpu.memory_space<vmem>>, vector<1x8xf32>
    %922 = vector.broadcast %921 : vector<1x8xf32> to vector<8x8xf32>
    %923 = arith.addf %920, %922 : vector<8x8xf32>
    %c0_282 = arith.constant 0 : index
    %c0_283 = arith.constant 0 : index
    %c0_284 = arith.constant 0 : index
    %924 = vector.load %arg2[%c0_282, %c0_283, %c0_284] : memref<1x1x8xi32, #tpu.memory_space<vmem>>, vector<1x1x8xi32>
    %925 = vector.shape_cast %924 : vector<1x1x8xi32> to vector<1x8xi32>
    %c0_i32 = arith.constant 0 : i32
    %926 = vector.broadcast %c0_i32 : i32 to vector<1x8xi32>
    %927 = arith.cmpi ne, %925, %926 : vector<1x8xi32>
    %c0_285 = arith.constant 0 : index
    %c0_286 = arith.constant 0 : index
    %928 = vector.load %arg28[%c0_285, %c0_286] : memref<8x8xf32, #tpu.memory_space<vmem>>, vector<8x8xf32>
    %c0_287 = arith.constant 0 : index
    %c0_288 = arith.constant 0 : index
    %929 = vector.load %arg26[%c0_287, %c0_288] : memref<1x8xf32, #tpu.memory_space<vmem>>, vector<1x8xf32>
    %930 = vector.extract_strided_slice %923 {offsets = [0, 0], sizes = [1, 8], strides = [1, 1]} : vector<8x8xf32> to vector<1x8xf32>
    %931 = arith.addf %929, %930 : vector<1x8xf32>
    %932 = vector.extract_strided_slice %923 {offsets = [1, 0], sizes = [1, 8], strides = [1, 1]} : vector<8x8xf32> to vector<1x8xf32>
    %933 = vector.shape_cast %931 : vector<1x8xf32> to vector<1x1x8xf32>
    %934 = vector.shape_cast %928 : vector<8x8xf32> to vector<1x8x8xf32>
    %935 = vector.broadcast %933 : vector<1x1x8xf32> to vector<1x8x8xf32>
    %936 = arith.addf %935, %934 : vector<1x8x8xf32>
    %937 = vector.shape_cast %932 : vector<1x8xf32> to vector<1x8x1xf32>
    %938 = vector.broadcast %937 : vector<1x8x1xf32> to vector<1x8x8xf32>
    %939 = arith.addf %936, %938 : vector<1x8x8xf32>
    %cst_289 = arith.constant dense<0xFF800000> : vector<1x8xf32>
    %940 = vector.multi_reduction <maximumf>, %939, %cst_289 [2] : vector<1x8x8xf32> to vector<1x8xf32>
    %941 = tpu.iota {dimensions = array<i32: 2>} : vector<1x8x8xi32>
    %942 = vector.shape_cast %940 : vector<1x8xf32> to vector<1x8x1xf32>
    %943 = vector.broadcast %942 : vector<1x8x1xf32> to vector<1x8x8xf32>
    %944 = arith.cmpf oeq, %939, %943 : vector<1x8x8xf32>
    %c8_i32 = arith.constant 8 : i32
    %945 = vector.broadcast %c8_i32 : i32 to vector<1x8x8xi32>
    %946 = arith.select %944, %941, %945 : vector<1x8x8xi1>, vector<1x8x8xi32>
    %cst_290 = arith.constant dense<2147483647> : vector<1x8xi32>
    %947 = vector.multi_reduction <minsi>, %946, %cst_290 [2] : vector<1x8x8xi32> to vector<1x8xi32>
    %948 = vector.extract_strided_slice %927 {offsets = [0, 1], sizes = [1, 1], strides = [1, 1]} : vector<1x8xi1> to vector<1x1xi1>
    %949 = vector.shape_cast %948 : vector<1x1xi1> to vector<1x1xi1>
    %950 = vector.broadcast %949 : vector<1x1xi1> to vector<1x8xi1>
    %951 = arith.select %950, %940, %931 : vector<1x8xi1>, vector<1x8xf32>
    %c0_291 = arith.constant 0 : index
    %c0_292 = arith.constant 0 : index
    %952 = vector.load %arg31[%c0_291, %c0_292] : memref<8x8xi32, #tpu.memory_space<vmem>>, vector<1x8xi32>
    tpu.vector_store %arg31[%c0_291, %c0_292], %947 {strides = array<i32>} : memref<8x8xi32, #tpu.memory_space<vmem>>, vector<1x8xi32>,
    %953 = vector.extract_strided_slice %923 {offsets = [2, 0], sizes = [1, 8], strides = [1, 1]} : vector<8x8xf32> to vector<1x8xf32>
    %954 = vector.shape_cast %951 : vector<1x8xf32> to vector<1x1x8xf32>
    %955 = vector.shape_cast %928 : vector<8x8xf32> to vector<1x8x8xf32>
    %956 = vector.broadcast %954 : vector<1x1x8xf32> to vector<1x8x8xf32>
    %957 = arith.addf %956, %955 : vector<1x8x8xf32>
    %958 = vector.shape_cast %953 : vector<1x8xf32> to vector<1x8x1xf32>
    %959 = vector.broadcast %958 : vector<1x8x1xf32> to vector<1x8x8xf32>
    %960 = arith.addf %957, %959 : vector<1x8x8xf32>
    %cst_293 = arith.constant dense<0xFF800000> : vector<1x8xf32>
    %961 = vector.multi_reduction <maximumf>, %960, %cst_293 [2] : vector<1x8x8xf32> to vector<1x8xf32>
    %962 = tpu.iota {dimensions = array<i32: 2>} : vector<1x8x8xi32>
    %963 = vector.shape_cast %961 : vector<1x8xf32> to vector<1x8x1xf32>
    %964 = vector.broadcast %963 : vector<1x8x1xf32> to vector<1x8x8xf32>
    %965 = arith.cmpf oeq, %960, %964 : vector<1x8x8xf32>
    %c8_i32_294 = arith.constant 8 : i32
    %966 = vector.broadcast %c8_i32_294 : i32 to vector<1x8x8xi32>
    %967 = arith.select %965, %962, %966 : vector<1x8x8xi1>, vector<1x8x8xi32>
    %cst_295 = arith.constant dense<2147483647> : vector<1x8xi32>
    %968 = vector.multi_reduction <minsi>, %967, %cst_295 [2] : vector<1x8x8xi32> to vector<1x8xi32>
    %969 = vector.extract_strided_slice %927 {offsets = [0, 2], sizes = [1, 1], strides = [1, 1]} : vector<1x8xi1> to vector<1x1xi1>
    %970 = vector.shape_cast %969 : vector<1x1xi1> to vector<1x1xi1>
    %971 = vector.broadcast %970 : vector<1x1xi1> to vector<1x8xi1>
    %972 = arith.select %971, %961, %951 : vector<1x8xi1>, vector<1x8xf32>
    %c1_296 = arith.constant 1 : index
    %c0_297 = arith.constant 0 : index
    %973 = vector.load %arg31[%c1_296, %c0_297] : memref<8x8xi32, #tpu.memory_space<vmem>>, vector<1x8xi32>
    tpu.vector_store %arg31[%c1_296, %c0_297], %968 {strides = array<i32>} : memref<8x8xi32, #tpu.memory_space<vmem>>, vector<1x8xi32>,
    %974 = vector.extract_strided_slice %923 {offsets = [3, 0], sizes = [1, 8], strides = [1, 1]} : vector<8x8xf32> to vector<1x8xf32>
    %975 = vector.shape_cast %972 : vector<1x8xf32> to vector<1x1x8xf32>
    %976 = vector.shape_cast %928 : vector<8x8xf32> to vector<1x8x8xf32>
    %977 = vector.broadcast %975 : vector<1x1x8xf32> to vector<1x8x8xf32>
    %978 = arith.addf %977, %976 : vector<1x8x8xf32>
    %979 = vector.shape_cast %974 : vector<1x8xf32> to vector<1x8x1xf32>
    %980 = vector.broadcast %979 : vector<1x8x1xf32> to vector<1x8x8xf32>
    %981 = arith.addf %978, %980 : vector<1x8x8xf32>
    %cst_298 = arith.constant dense<0xFF800000> : vector<1x8xf32>
    %982 = vector.multi_reduction <maximumf>, %981, %cst_298 [2] : vector<1x8x8xf32> to vector<1x8xf32>
    %983 = tpu.iota {dimensions = array<i32: 2>} : vector<1x8x8xi32>
    %984 = vector.shape_cast %982 : vector<1x8xf32> to vector<1x8x1xf32>
    %985 = vector.broadcast %984 : vector<1x8x1xf32> to vector<1x8x8xf32>
    %986 = arith.cmpf oeq, %981, %985 : vector<1x8x8xf32>
    %c8_i32_299 = arith.constant 8 : i32
    %987 = vector.broadcast %c8_i32_299 : i32 to vector<1x8x8xi32>
    %988 = arith.select %986, %983, %987 : vector<1x8x8xi1>, vector<1x8x8xi32>
    %cst_300 = arith.constant dense<2147483647> : vector<1x8xi32>
    %989 = vector.multi_reduction <minsi>, %988, %cst_300 [2] : vector<1x8x8xi32> to vector<1x8xi32>
    %990 = vector.extract_strided_slice %927 {offsets = [0, 3], sizes = [1, 1], strides = [1, 1]} : vector<1x8xi1> to vector<1x1xi1>
    %991 = vector.shape_cast %990 : vector<1x1xi1> to vector<1x1xi1>
    %992 = vector.broadcast %991 : vector<1x1xi1> to vector<1x8xi1>
    %993 = arith.select %992, %982, %972 : vector<1x8xi1>, vector<1x8xf32>
    %c2_301 = arith.constant 2 : index
    %c0_302 = arith.constant 0 : index
    %994 = vector.load %arg31[%c2_301, %c0_302] : memref<8x8xi32, #tpu.memory_space<vmem>>, vector<1x8xi32>
    tpu.vector_store %arg31[%c2_301, %c0_302], %989 {strides = array<i32>} : memref<8x8xi32, #tpu.memory_space<vmem>>, vector<1x8xi32>,
    %995 = vector.extract_strided_slice %923 {offsets = [4, 0], sizes = [1, 8], strides = [1, 1]} : vector<8x8xf32> to vector<1x8xf32>
    %996 = vector.shape_cast %993 : vector<1x8xf32> to vector<1x1x8xf32>
    %997 = vector.shape_cast %928 : vector<8x8xf32> to vector<1x8x8xf32>
    %998 = vector.broadcast %996 : vector<1x1x8xf32> to vector<1x8x8xf32>
    %999 = arith.addf %998, %997 : vector<1x8x8xf32>
    %1000 = vector.shape_cast %995 : vector<1x8xf32> to vector<1x8x1xf32>
    %1001 = vector.broadcast %1000 : vector<1x8x1xf32> to vector<1x8x8xf32>
    %1002 = arith.addf %999, %1001 : vector<1x8x8xf32>
    %cst_303 = arith.constant dense<0xFF800000> : vector<1x8xf32>
    %1003 = vector.multi_reduction <maximumf>, %1002, %cst_303 [2] : vector<1x8x8xf32> to vector<1x8xf32>
    %1004 = tpu.iota {dimensions = array<i32: 2>} : vector<1x8x8xi32>
    %1005 = vector.shape_cast %1003 : vector<1x8xf32> to vector<1x8x1xf32>
    %1006 = vector.broadcast %1005 : vector<1x8x1xf32> to vector<1x8x8xf32>
    %1007 = arith.cmpf oeq, %1002, %1006 : vector<1x8x8xf32>
    %c8_i32_304 = arith.constant 8 : i32
    %1008 = vector.broadcast %c8_i32_304 : i32 to vector<1x8x8xi32>
    %1009 = arith.select %1007, %1004, %1008 : vector<1x8x8xi1>, vector<1x8x8xi32>
    %cst_305 = arith.constant dense<2147483647> : vector<1x8xi32>
    %1010 = vector.multi_reduction <minsi>, %1009, %cst_305 [2] : vector<1x8x8xi32> to vector<1x8xi32>
    %1011 = vector.extract_strided_slice %927 {offsets = [0, 4], sizes = [1, 1], strides = [1, 1]} : vector<1x8xi1> to vector<1x1xi1>
    %1012 = vector.shape_cast %1011 : vector<1x1xi1> to vector<1x1xi1>
    %1013 = vector.broadcast %1012 : vector<1x1xi1> to vector<1x8xi1>
    %1014 = arith.select %1013, %1003, %993 : vector<1x8xi1>, vector<1x8xf32>
    %c3_306 = arith.constant 3 : index
    %c0_307 = arith.constant 0 : index
    %1015 = vector.load %arg31[%c3_306, %c0_307] : memref<8x8xi32, #tpu.memory_space<vmem>>, vector<1x8xi32>
    tpu.vector_store %arg31[%c3_306, %c0_307], %1010 {strides = array<i32>} : memref<8x8xi32, #tpu.memory_space<vmem>>, vector<1x8xi32>,
    %1016 = vector.extract_strided_slice %923 {offsets = [5, 0], sizes = [1, 8], strides = [1, 1]} : vector<8x8xf32> to vector<1x8xf32>
    %1017 = vector.shape_cast %1014 : vector<1x8xf32> to vector<1x1x8xf32>
    %1018 = vector.shape_cast %928 : vector<8x8xf32> to vector<1x8x8xf32>
    %1019 = vector.broadcast %1017 : vector<1x1x8xf32> to vector<1x8x8xf32>
    %1020 = arith.addf %1019, %1018 : vector<1x8x8xf32>
    %1021 = vector.shape_cast %1016 : vector<1x8xf32> to vector<1x8x1xf32>
    %1022 = vector.broadcast %1021 : vector<1x8x1xf32> to vector<1x8x8xf32>
    %1023 = arith.addf %1020, %1022 : vector<1x8x8xf32>
    %cst_308 = arith.constant dense<0xFF800000> : vector<1x8xf32>
    %1024 = vector.multi_reduction <maximumf>, %1023, %cst_308 [2] : vector<1x8x8xf32> to vector<1x8xf32>
    %1025 = tpu.iota {dimensions = array<i32: 2>} : vector<1x8x8xi32>
    %1026 = vector.shape_cast %1024 : vector<1x8xf32> to vector<1x8x1xf32>
    %1027 = vector.broadcast %1026 : vector<1x8x1xf32> to vector<1x8x8xf32>
    %1028 = arith.cmpf oeq, %1023, %1027 : vector<1x8x8xf32>
    %c8_i32_309 = arith.constant 8 : i32
    %1029 = vector.broadcast %c8_i32_309 : i32 to vector<1x8x8xi32>
    %1030 = arith.select %1028, %1025, %1029 : vector<1x8x8xi1>, vector<1x8x8xi32>
    %cst_310 = arith.constant dense<2147483647> : vector<1x8xi32>
    %1031 = vector.multi_reduction <minsi>, %1030, %cst_310 [2] : vector<1x8x8xi32> to vector<1x8xi32>
    %1032 = vector.extract_strided_slice %927 {offsets = [0, 5], sizes = [1, 1], strides = [1, 1]} : vector<1x8xi1> to vector<1x1xi1>
    %1033 = vector.shape_cast %1032 : vector<1x1xi1> to vector<1x1xi1>
    %1034 = vector.broadcast %1033 : vector<1x1xi1> to vector<1x8xi1>
    %1035 = arith.select %1034, %1024, %1014 : vector<1x8xi1>, vector<1x8xf32>
    %c4_311 = arith.constant 4 : index
    %c0_312 = arith.constant 0 : index
    %1036 = vector.load %arg31[%c4_311, %c0_312] : memref<8x8xi32, #tpu.memory_space<vmem>>, vector<1x8xi32>
    tpu.vector_store %arg31[%c4_311, %c0_312], %1031 {strides = array<i32>} : memref<8x8xi32, #tpu.memory_space<vmem>>, vector<1x8xi32>,
    %1037 = vector.extract_strided_slice %923 {offsets = [6, 0], sizes = [1, 8], strides = [1, 1]} : vector<8x8xf32> to vector<1x8xf32>
    %1038 = vector.shape_cast %1035 : vector<1x8xf32> to vector<1x1x8xf32>
    %1039 = vector.shape_cast %928 : vector<8x8xf32> to vector<1x8x8xf32>
    %1040 = vector.broadcast %1038 : vector<1x1x8xf32> to vector<1x8x8xf32>
    %1041 = arith.addf %1040, %1039 : vector<1x8x8xf32>
    %1042 = vector.shape_cast %1037 : vector<1x8xf32> to vector<1x8x1xf32>
    %1043 = vector.broadcast %1042 : vector<1x8x1xf32> to vector<1x8x8xf32>
    %1044 = arith.addf %1041, %1043 : vector<1x8x8xf32>
    %cst_313 = arith.constant dense<0xFF800000> : vector<1x8xf32>
    %1045 = vector.multi_reduction <maximumf>, %1044, %cst_313 [2] : vector<1x8x8xf32> to vector<1x8xf32>
    %1046 = tpu.iota {dimensions = array<i32: 2>} : vector<1x8x8xi32>
    %1047 = vector.shape_cast %1045 : vector<1x8xf32> to vector<1x8x1xf32>
    %1048 = vector.broadcast %1047 : vector<1x8x1xf32> to vector<1x8x8xf32>
    %1049 = arith.cmpf oeq, %1044, %1048 : vector<1x8x8xf32>
    %c8_i32_314 = arith.constant 8 : i32
    %1050 = vector.broadcast %c8_i32_314 : i32 to vector<1x8x8xi32>
    %1051 = arith.select %1049, %1046, %1050 : vector<1x8x8xi1>, vector<1x8x8xi32>
    %cst_315 = arith.constant dense<2147483647> : vector<1x8xi32>
    %1052 = vector.multi_reduction <minsi>, %1051, %cst_315 [2] : vector<1x8x8xi32> to vector<1x8xi32>
    %1053 = vector.extract_strided_slice %927 {offsets = [0, 6], sizes = [1, 1], strides = [1, 1]} : vector<1x8xi1> to vector<1x1xi1>
    %1054 = vector.shape_cast %1053 : vector<1x1xi1> to vector<1x1xi1>
    %1055 = vector.broadcast %1054 : vector<1x1xi1> to vector<1x8xi1>
    %1056 = arith.select %1055, %1045, %1035 : vector<1x8xi1>, vector<1x8xf32>
    %c5_316 = arith.constant 5 : index
    %c0_317 = arith.constant 0 : index
    %1057 = vector.load %arg31[%c5_316, %c0_317] : memref<8x8xi32, #tpu.memory_space<vmem>>, vector<1x8xi32>
    tpu.vector_store %arg31[%c5_316, %c0_317], %1052 {strides = array<i32>} : memref<8x8xi32, #tpu.memory_space<vmem>>, vector<1x8xi32>,
    %1058 = vector.extract_strided_slice %923 {offsets = [7, 0], sizes = [1, 8], strides = [1, 1]} : vector<8x8xf32> to vector<1x8xf32>
    %1059 = vector.shape_cast %1056 : vector<1x8xf32> to vector<1x1x8xf32>
    %1060 = vector.shape_cast %928 : vector<8x8xf32> to vector<1x8x8xf32>
    %1061 = vector.broadcast %1059 : vector<1x1x8xf32> to vector<1x8x8xf32>
    %1062 = arith.addf %1061, %1060 : vector<1x8x8xf32>
    %1063 = vector.shape_cast %1058 : vector<1x8xf32> to vector<1x8x1xf32>
    %1064 = vector.broadcast %1063 : vector<1x8x1xf32> to vector<1x8x8xf32>
    %1065 = arith.addf %1062, %1064 : vector<1x8x8xf32>
    %cst_318 = arith.constant dense<0xFF800000> : vector<1x8xf32>
    %1066 = vector.multi_reduction <maximumf>, %1065, %cst_318 [2] : vector<1x8x8xf32> to vector<1x8xf32>
    %1067 = tpu.iota {dimensions = array<i32: 2>} : vector<1x8x8xi32>
    %1068 = vector.shape_cast %1066 : vector<1x8xf32> to vector<1x8x1xf32>
    %1069 = vector.broadcast %1068 : vector<1x8x1xf32> to vector<1x8x8xf32>
    %1070 = arith.cmpf oeq, %1065, %1069 : vector<1x8x8xf32>
    %c8_i32_319 = arith.constant 8 : i32
    %1071 = vector.broadcast %c8_i32_319 : i32 to vector<1x8x8xi32>
    %1072 = arith.select %1070, %1067, %1071 : vector<1x8x8xi1>, vector<1x8x8xi32>
    %cst_320 = arith.constant dense<2147483647> : vector<1x8xi32>
    %1073 = vector.multi_reduction <minsi>, %1072, %cst_320 [2] : vector<1x8x8xi32> to vector<1x8xi32>
    %1074 = vector.extract_strided_slice %927 {offsets = [0, 7], sizes = [1, 1], strides = [1, 1]} : vector<1x8xi1> to vector<1x1xi1>
    %1075 = vector.shape_cast %1074 : vector<1x1xi1> to vector<1x1xi1>
    %1076 = vector.broadcast %1075 : vector<1x1xi1> to vector<1x8xi1>
    %1077 = arith.select %1076, %1066, %1056 : vector<1x8xi1>, vector<1x8xf32>
    %c6_321 = arith.constant 6 : index
    %c0_322 = arith.constant 0 : index
    %1078 = vector.load %arg31[%c6_321, %c0_322] : memref<8x8xi32, #tpu.memory_space<vmem>>, vector<1x8xi32>
    tpu.vector_store %arg31[%c6_321, %c0_322], %1073 {strides = array<i32>} : memref<8x8xi32, #tpu.memory_space<vmem>>, vector<1x8xi32>,
    %c0_323 = arith.constant 0 : index
    %c0_324 = arith.constant 0 : index
    %1079 = vector.load %arg27[%c0_323, %c0_324] : memref<1x8xf32, #tpu.memory_space<vmem>>, vector<1x8xf32>
    %1080 = arith.addf %1077, %1079 : vector<1x8xf32>
    %cst_325 = arith.constant dense<0.000000e+00> : vector<1xf32>
    %1081 = vector.multi_reduction <add>, %114, %cst_325 [1] : vector<1x8xf32> to vector<1xf32>
    %1082 = vector.shape_cast %1081 : vector<1xf32> to vector<1x1xf32>
    %1083 = arith.fptosi %1082 : vector<1x1xf32> to vector<1x1xi32>
    %c1_i32 = arith.constant 1 : i32
    %1084 = vector.broadcast %c1_i32 : i32 to vector<1x1xi32>
    %1085 = arith.subi %1083, %1084 : vector<1x1xi32>
    %1086 = tpu.iota {dimensions = array<i32: 1>} : vector<1x8xi32>
    %1087 = tpu.iota {dimensions = array<i32: 1>} : vector<1x8xi32>
    %cst_326 = arith.constant dense<0xFF800000> : vector<1xf32>
    %1088 = vector.multi_reduction <maximumf>, %1080, %cst_326 [1] : vector<1x8xf32> to vector<1xf32>
    %1089 = vector.shape_cast %1088 : vector<1xf32> to vector<1x1xf32>
    %1090 = vector.broadcast %1089 : vector<1x1xf32> to vector<1x8xf32>
    %1091 = arith.cmpf oeq, %1080, %1090 : vector<1x8xf32>
    %c8_i32_327 = arith.constant 8 : i32
    %1092 = vector.broadcast %c8_i32_327 : i32 to vector<1x8xi32>
    %1093 = arith.select %1091, %1086, %1092 : vector<1x8xi1>, vector<1x8xi32>
    %cst_328 = arith.constant dense<2147483647> : vector<1xi32>
    %1094 = vector.multi_reduction <minsi>, %1093, %cst_328 [1] : vector<1x8xi32> to vector<1xi32>
    %1095 = vector.shape_cast %1094 : vector<1xi32> to vector<1x1xi32>
    %c0_i32_329 = arith.constant 0 : i32
    %1096 = vector.broadcast %c0_i32_329 : i32 to vector<1x8xi32>
    %c0_i32_330 = arith.constant 0 : i32
    %1097 = vector.broadcast %c0_i32_330 : i32 to vector<1x1xi32>
    %c6_331 = arith.constant 6 : index
    %c0_332 = arith.constant 0 : index
    %1098 = vector.load %arg31[%c6_331, %c0_332] : memref<8x8xi32, #tpu.memory_space<vmem>>, vector<1x8xi32>
    %1099 = vector.broadcast %1097 : vector<1x1xi32> to vector<1x8xi32>
    %1100 = arith.cmpi eq, %1086, %1099 : vector<1x8xi32>
    %1101 = arith.sitofp %1098 : vector<1x8xi32> to vector<1x8xf32>
    %cst_333 = arith.constant 0.000000e+00 : f32
    %1102 = vector.broadcast %cst_333 : f32 to vector<1x8xf32>
    %1103 = arith.select %1100, %1101, %1102 : vector<1x8xi1>, vector<1x8xf32>
    %cst_334 = arith.constant dense<0.000000e+00> : vector<1xf32>
    %1104 = vector.multi_reduction <add>, %1103, %cst_334 [1] : vector<1x8xf32> to vector<1xf32>
    %1105 = vector.shape_cast %1104 : vector<1xf32> to vector<1x1xf32>
    %1106 = arith.fptosi %1105 : vector<1x1xf32> to vector<1x1xi32>
    %c7_i32 = arith.constant 7 : i32
    %1107 = vector.broadcast %c7_i32 : i32 to vector<1x1xi32>
    %1108 = arith.cmpi eq, %1085, %1107 : vector<1x1xi32>
    %c7_i32_335 = arith.constant 7 : i32
    %1109 = vector.broadcast %c7_i32_335 : i32 to vector<1x1xi32>
    %1110 = arith.cmpi sgt, %1085, %1109 : vector<1x1xi32>
    %c0_i32_336 = arith.constant 0 : i32
    %1111 = vector.broadcast %c0_i32_336 : i32 to vector<1x1xi32>
    %1112 = arith.select %1110, %1106, %1111 : vector<1x1xi1>, vector<1x1xi32>
    %1113 = arith.select %1108, %1095, %1112 : vector<1x1xi1>, vector<1x1xi32>
    %c7_i32_337 = arith.constant 7 : i32
    %1114 = vector.broadcast %c7_i32_337 : i32 to vector<1x8xi32>
    %1115 = arith.cmpi eq, %1087, %1114 : vector<1x8xi32>
    %1116 = vector.shape_cast %1113 : vector<1x1xi32> to vector<1x1xi32>
    %1117 = vector.broadcast %1116 : vector<1x1xi32> to vector<1x8xi32>
    %1118 = arith.select %1115, %1117, %1096 : vector<1x8xi1>, vector<1x8xi32>
    %c6_338 = arith.constant 6 : index
    %c0_339 = arith.constant 0 : index
    %1119 = vector.load %arg31[%c6_338, %c0_339] : memref<8x8xi32, #tpu.memory_space<vmem>>, vector<1x8xi32>
    %1120 = vector.broadcast %1113 : vector<1x1xi32> to vector<1x8xi32>
    %1121 = arith.cmpi eq, %1086, %1120 : vector<1x8xi32>
    %1122 = arith.sitofp %1119 : vector<1x8xi32> to vector<1x8xf32>
    %cst_340 = arith.constant 0.000000e+00 : f32
    %1123 = vector.broadcast %cst_340 : f32 to vector<1x8xf32>
    %1124 = arith.select %1121, %1122, %1123 : vector<1x8xi1>, vector<1x8xf32>
    %cst_341 = arith.constant dense<0.000000e+00> : vector<1xf32>
    %1125 = vector.multi_reduction <add>, %1124, %cst_341 [1] : vector<1x8xf32> to vector<1xf32>
    %1126 = vector.shape_cast %1125 : vector<1xf32> to vector<1x1xf32>
    %1127 = arith.fptosi %1126 : vector<1x1xf32> to vector<1x1xi32>
    %c6_i32 = arith.constant 6 : i32
    %1128 = vector.broadcast %c6_i32 : i32 to vector<1x1xi32>
    %1129 = arith.cmpi eq, %1085, %1128 : vector<1x1xi32>
    %c6_i32_342 = arith.constant 6 : i32
    %1130 = vector.broadcast %c6_i32_342 : i32 to vector<1x1xi32>
    %1131 = arith.cmpi sgt, %1085, %1130 : vector<1x1xi32>
    %c0_i32_343 = arith.constant 0 : i32
    %1132 = vector.broadcast %c0_i32_343 : i32 to vector<1x1xi32>
    %1133 = arith.select %1131, %1127, %1132 : vector<1x1xi1>, vector<1x1xi32>
    %1134 = arith.select %1129, %1095, %1133 : vector<1x1xi1>, vector<1x1xi32>
    %c6_i32_344 = arith.constant 6 : i32
    %1135 = vector.broadcast %c6_i32_344 : i32 to vector<1x8xi32>
    %1136 = arith.cmpi eq, %1087, %1135 : vector<1x8xi32>
    %1137 = vector.shape_cast %1134 : vector<1x1xi32> to vector<1x1xi32>
    %1138 = vector.broadcast %1137 : vector<1x1xi32> to vector<1x8xi32>
    %1139 = arith.select %1136, %1138, %1118 : vector<1x8xi1>, vector<1x8xi32>
    %c5_345 = arith.constant 5 : index
    %c0_346 = arith.constant 0 : index
    %1140 = vector.load %arg31[%c5_345, %c0_346] : memref<8x8xi32, #tpu.memory_space<vmem>>, vector<1x8xi32>
    %1141 = vector.broadcast %1134 : vector<1x1xi32> to vector<1x8xi32>
    %1142 = arith.cmpi eq, %1086, %1141 : vector<1x8xi32>
    %1143 = arith.sitofp %1140 : vector<1x8xi32> to vector<1x8xf32>
    %cst_347 = arith.constant 0.000000e+00 : f32
    %1144 = vector.broadcast %cst_347 : f32 to vector<1x8xf32>
    %1145 = arith.select %1142, %1143, %1144 : vector<1x8xi1>, vector<1x8xf32>
    %cst_348 = arith.constant dense<0.000000e+00> : vector<1xf32>
    %1146 = vector.multi_reduction <add>, %1145, %cst_348 [1] : vector<1x8xf32> to vector<1xf32>
    %1147 = vector.shape_cast %1146 : vector<1xf32> to vector<1x1xf32>
    %1148 = arith.fptosi %1147 : vector<1x1xf32> to vector<1x1xi32>
    %c5_i32 = arith.constant 5 : i32
    %1149 = vector.broadcast %c5_i32 : i32 to vector<1x1xi32>
    %1150 = arith.cmpi eq, %1085, %1149 : vector<1x1xi32>
    %c5_i32_349 = arith.constant 5 : i32
    %1151 = vector.broadcast %c5_i32_349 : i32 to vector<1x1xi32>
    %1152 = arith.cmpi sgt, %1085, %1151 : vector<1x1xi32>
    %c0_i32_350 = arith.constant 0 : i32
    %1153 = vector.broadcast %c0_i32_350 : i32 to vector<1x1xi32>
    %1154 = arith.select %1152, %1148, %1153 : vector<1x1xi1>, vector<1x1xi32>
    %1155 = arith.select %1150, %1095, %1154 : vector<1x1xi1>, vector<1x1xi32>
    %c5_i32_351 = arith.constant 5 : i32
    %1156 = vector.broadcast %c5_i32_351 : i32 to vector<1x8xi32>
    %1157 = arith.cmpi eq, %1087, %1156 : vector<1x8xi32>
    %1158 = vector.shape_cast %1155 : vector<1x1xi32> to vector<1x1xi32>
    %1159 = vector.broadcast %1158 : vector<1x1xi32> to vector<1x8xi32>
    %1160 = arith.select %1157, %1159, %1139 : vector<1x8xi1>, vector<1x8xi32>
    %c4_352 = arith.constant 4 : index
    %c0_353 = arith.constant 0 : index
    %1161 = vector.load %arg31[%c4_352, %c0_353] : memref<8x8xi32, #tpu.memory_space<vmem>>, vector<1x8xi32>
    %1162 = vector.broadcast %1155 : vector<1x1xi32> to vector<1x8xi32>
    %1163 = arith.cmpi eq, %1086, %1162 : vector<1x8xi32>
    %1164 = arith.sitofp %1161 : vector<1x8xi32> to vector<1x8xf32>
    %cst_354 = arith.constant 0.000000e+00 : f32
    %1165 = vector.broadcast %cst_354 : f32 to vector<1x8xf32>
    %1166 = arith.select %1163, %1164, %1165 : vector<1x8xi1>, vector<1x8xf32>
    %cst_355 = arith.constant dense<0.000000e+00> : vector<1xf32>
    %1167 = vector.multi_reduction <add>, %1166, %cst_355 [1] : vector<1x8xf32> to vector<1xf32>
    %1168 = vector.shape_cast %1167 : vector<1xf32> to vector<1x1xf32>
    %1169 = arith.fptosi %1168 : vector<1x1xf32> to vector<1x1xi32>
    %c4_i32 = arith.constant 4 : i32
    %1170 = vector.broadcast %c4_i32 : i32 to vector<1x1xi32>
    %1171 = arith.cmpi eq, %1085, %1170 : vector<1x1xi32>
    %c4_i32_356 = arith.constant 4 : i32
    %1172 = vector.broadcast %c4_i32_356 : i32 to vector<1x1xi32>
    %1173 = arith.cmpi sgt, %1085, %1172 : vector<1x1xi32>
    %c0_i32_357 = arith.constant 0 : i32
    %1174 = vector.broadcast %c0_i32_357 : i32 to vector<1x1xi32>
    %1175 = arith.select %1173, %1169, %1174 : vector<1x1xi1>, vector<1x1xi32>
    %1176 = arith.select %1171, %1095, %1175 : vector<1x1xi1>, vector<1x1xi32>
    %c4_i32_358 = arith.constant 4 : i32
    %1177 = vector.broadcast %c4_i32_358 : i32 to vector<1x8xi32>
    %1178 = arith.cmpi eq, %1087, %1177 : vector<1x8xi32>
    %1179 = vector.shape_cast %1176 : vector<1x1xi32> to vector<1x1xi32>
    %1180 = vector.broadcast %1179 : vector<1x1xi32> to vector<1x8xi32>
    %1181 = arith.select %1178, %1180, %1160 : vector<1x8xi1>, vector<1x8xi32>
    %c3_359 = arith.constant 3 : index
    %c0_360 = arith.constant 0 : index
    %1182 = vector.load %arg31[%c3_359, %c0_360] : memref<8x8xi32, #tpu.memory_space<vmem>>, vector<1x8xi32>
    %1183 = vector.broadcast %1176 : vector<1x1xi32> to vector<1x8xi32>
    %1184 = arith.cmpi eq, %1086, %1183 : vector<1x8xi32>
    %1185 = arith.sitofp %1182 : vector<1x8xi32> to vector<1x8xf32>
    %cst_361 = arith.constant 0.000000e+00 : f32
    %1186 = vector.broadcast %cst_361 : f32 to vector<1x8xf32>
    %1187 = arith.select %1184, %1185, %1186 : vector<1x8xi1>, vector<1x8xf32>
    %cst_362 = arith.constant dense<0.000000e+00> : vector<1xf32>
    %1188 = vector.multi_reduction <add>, %1187, %cst_362 [1] : vector<1x8xf32> to vector<1xf32>
    %1189 = vector.shape_cast %1188 : vector<1xf32> to vector<1x1xf32>
    %1190 = arith.fptosi %1189 : vector<1x1xf32> to vector<1x1xi32>
    %c3_i32 = arith.constant 3 : i32
    %1191 = vector.broadcast %c3_i32 : i32 to vector<1x1xi32>
    %1192 = arith.cmpi eq, %1085, %1191 : vector<1x1xi32>
    %c3_i32_363 = arith.constant 3 : i32
    %1193 = vector.broadcast %c3_i32_363 : i32 to vector<1x1xi32>
    %1194 = arith.cmpi sgt, %1085, %1193 : vector<1x1xi32>
    %c0_i32_364 = arith.constant 0 : i32
    %1195 = vector.broadcast %c0_i32_364 : i32 to vector<1x1xi32>
    %1196 = arith.select %1194, %1190, %1195 : vector<1x1xi1>, vector<1x1xi32>
    %1197 = arith.select %1192, %1095, %1196 : vector<1x1xi1>, vector<1x1xi32>
    %c3_i32_365 = arith.constant 3 : i32
    %1198 = vector.broadcast %c3_i32_365 : i32 to vector<1x8xi32>
    %1199 = arith.cmpi eq, %1087, %1198 : vector<1x8xi32>
    %1200 = vector.shape_cast %1197 : vector<1x1xi32> to vector<1x1xi32>
    %1201 = vector.broadcast %1200 : vector<1x1xi32> to vector<1x8xi32>
    %1202 = arith.select %1199, %1201, %1181 : vector<1x8xi1>, vector<1x8xi32>
    %c2_366 = arith.constant 2 : index
    %c0_367 = arith.constant 0 : index
    %1203 = vector.load %arg31[%c2_366, %c0_367] : memref<8x8xi32, #tpu.memory_space<vmem>>, vector<1x8xi32>
    %1204 = vector.broadcast %1197 : vector<1x1xi32> to vector<1x8xi32>
    %1205 = arith.cmpi eq, %1086, %1204 : vector<1x8xi32>
    %1206 = arith.sitofp %1203 : vector<1x8xi32> to vector<1x8xf32>
    %cst_368 = arith.constant 0.000000e+00 : f32
    %1207 = vector.broadcast %cst_368 : f32 to vector<1x8xf32>
    %1208 = arith.select %1205, %1206, %1207 : vector<1x8xi1>, vector<1x8xf32>
    %cst_369 = arith.constant dense<0.000000e+00> : vector<1xf32>
    %1209 = vector.multi_reduction <add>, %1208, %cst_369 [1] : vector<1x8xf32> to vector<1xf32>
    %1210 = vector.shape_cast %1209 : vector<1xf32> to vector<1x1xf32>
    %1211 = arith.fptosi %1210 : vector<1x1xf32> to vector<1x1xi32>
    %c2_i32 = arith.constant 2 : i32
    %1212 = vector.broadcast %c2_i32 : i32 to vector<1x1xi32>
    %1213 = arith.cmpi eq, %1085, %1212 : vector<1x1xi32>
    %c2_i32_370 = arith.constant 2 : i32
    %1214 = vector.broadcast %c2_i32_370 : i32 to vector<1x1xi32>
    %1215 = arith.cmpi sgt, %1085, %1214 : vector<1x1xi32>
    %c0_i32_371 = arith.constant 0 : i32
    %1216 = vector.broadcast %c0_i32_371 : i32 to vector<1x1xi32>
    %1217 = arith.select %1215, %1211, %1216 : vector<1x1xi1>, vector<1x1xi32>
    %1218 = arith.select %1213, %1095, %1217 : vector<1x1xi1>, vector<1x1xi32>
    %c2_i32_372 = arith.constant 2 : i32
    %1219 = vector.broadcast %c2_i32_372 : i32 to vector<1x8xi32>
    %1220 = arith.cmpi eq, %1087, %1219 : vector<1x8xi32>
    %1221 = vector.shape_cast %1218 : vector<1x1xi32> to vector<1x1xi32>
    %1222 = vector.broadcast %1221 : vector<1x1xi32> to vector<1x8xi32>
    %1223 = arith.select %1220, %1222, %1202 : vector<1x8xi1>, vector<1x8xi32>
    %c1_373 = arith.constant 1 : index
    %c0_374 = arith.constant 0 : index
    %1224 = vector.load %arg31[%c1_373, %c0_374] : memref<8x8xi32, #tpu.memory_space<vmem>>, vector<1x8xi32>
    %1225 = vector.broadcast %1218 : vector<1x1xi32> to vector<1x8xi32>
    %1226 = arith.cmpi eq, %1086, %1225 : vector<1x8xi32>
    %1227 = arith.sitofp %1224 : vector<1x8xi32> to vector<1x8xf32>
    %cst_375 = arith.constant 0.000000e+00 : f32
    %1228 = vector.broadcast %cst_375 : f32 to vector<1x8xf32>
    %1229 = arith.select %1226, %1227, %1228 : vector<1x8xi1>, vector<1x8xf32>
    %cst_376 = arith.constant dense<0.000000e+00> : vector<1xf32>
    %1230 = vector.multi_reduction <add>, %1229, %cst_376 [1] : vector<1x8xf32> to vector<1xf32>
    %1231 = vector.shape_cast %1230 : vector<1xf32> to vector<1x1xf32>
    %1232 = arith.fptosi %1231 : vector<1x1xf32> to vector<1x1xi32>
    %c1_i32_377 = arith.constant 1 : i32
    %1233 = vector.broadcast %c1_i32_377 : i32 to vector<1x1xi32>
    %1234 = arith.cmpi eq, %1085, %1233 : vector<1x1xi32>
    %c1_i32_378 = arith.constant 1 : i32
    %1235 = vector.broadcast %c1_i32_378 : i32 to vector<1x1xi32>
    %1236 = arith.cmpi sgt, %1085, %1235 : vector<1x1xi32>
    %c0_i32_379 = arith.constant 0 : i32
    %1237 = vector.broadcast %c0_i32_379 : i32 to vector<1x1xi32>
    %1238 = arith.select %1236, %1232, %1237 : vector<1x1xi1>, vector<1x1xi32>
    %1239 = arith.select %1234, %1095, %1238 : vector<1x1xi1>, vector<1x1xi32>
    %c1_i32_380 = arith.constant 1 : i32
    %1240 = vector.broadcast %c1_i32_380 : i32 to vector<1x8xi32>
    %1241 = arith.cmpi eq, %1087, %1240 : vector<1x8xi32>
    %1242 = vector.shape_cast %1239 : vector<1x1xi32> to vector<1x1xi32>
    %1243 = vector.broadcast %1242 : vector<1x1xi32> to vector<1x8xi32>
    %1244 = arith.select %1241, %1243, %1223 : vector<1x8xi1>, vector<1x8xi32>
    %c0_381 = arith.constant 0 : index
    %c0_382 = arith.constant 0 : index
    %1245 = vector.load %arg31[%c0_381, %c0_382] : memref<8x8xi32, #tpu.memory_space<vmem>>, vector<1x8xi32>
    %1246 = vector.broadcast %1239 : vector<1x1xi32> to vector<1x8xi32>
    %1247 = arith.cmpi eq, %1086, %1246 : vector<1x8xi32>
    %1248 = arith.sitofp %1245 : vector<1x8xi32> to vector<1x8xf32>
    %cst_383 = arith.constant 0.000000e+00 : f32
    %1249 = vector.broadcast %cst_383 : f32 to vector<1x8xf32>
    %1250 = arith.select %1247, %1248, %1249 : vector<1x8xi1>, vector<1x8xf32>
    %cst_384 = arith.constant dense<0.000000e+00> : vector<1xf32>
    %1251 = vector.multi_reduction <add>, %1250, %cst_384 [1] : vector<1x8xf32> to vector<1xf32>
    %1252 = vector.shape_cast %1251 : vector<1xf32> to vector<1x1xf32>
    %1253 = arith.fptosi %1252 : vector<1x1xf32> to vector<1x1xi32>
    %c0_i32_385 = arith.constant 0 : i32
    %1254 = vector.broadcast %c0_i32_385 : i32 to vector<1x1xi32>
    %1255 = arith.cmpi eq, %1085, %1254 : vector<1x1xi32>
    %c0_i32_386 = arith.constant 0 : i32
    %1256 = vector.broadcast %c0_i32_386 : i32 to vector<1x1xi32>
    %1257 = arith.cmpi sgt, %1085, %1256 : vector<1x1xi32>
    %c0_i32_387 = arith.constant 0 : i32
    %1258 = vector.broadcast %c0_i32_387 : i32 to vector<1x1xi32>
    %1259 = arith.select %1257, %1253, %1258 : vector<1x1xi1>, vector<1x1xi32>
    %1260 = arith.select %1255, %1095, %1259 : vector<1x1xi1>, vector<1x1xi32>
    %c0_i32_388 = arith.constant 0 : i32
    %1261 = vector.broadcast %c0_i32_388 : i32 to vector<1x8xi32>
    %1262 = arith.cmpi eq, %1087, %1261 : vector<1x8xi32>
    %1263 = vector.shape_cast %1260 : vector<1x1xi32> to vector<1x1xi32>
    %1264 = vector.broadcast %1263 : vector<1x1xi32> to vector<1x8xi32>
    %1265 = arith.select %1262, %1264, %1244 : vector<1x8xi1>, vector<1x8xi32>
    %c0_389 = arith.constant 0 : index
    %c0_390 = arith.constant 0 : index
    %c0_391 = arith.constant 0 : index
    %1266 = vector.load %arg29[%c0_389, %c0_390, %c0_391] : memref<1x1x8xi32, #tpu.memory_space<vmem>>, vector<1x1x8xi32>
    %1267 = vector.shape_cast %1266 : vector<1x1x8xi32> to vector<1x8xi32>
    %1268 = vector.shape_cast %1265 : vector<1x8xi32> to vector<1x1x8xi32>
    tpu.vector_store %arg29[%c0_389, %c0_390, %c0_391], %1268 {strides = array<i32>} : memref<1x1x8xi32, #tpu.memory_space<vmem>>, vector<1x1x8xi32>,
    return
  }
  func.func @transform_0(%arg0: i32, %arg1: memref<2x8xi32, #tpu.memory_space<smem>>) -> (i32, i32, i32) {
    %c0_i32 = arith.constant 0 : i32
    %c0_i32_0 = arith.constant 0 : i32
    %c0_i32_1 = arith.constant 0 : i32
    return %arg0, %c0_i32, %c0_i32_0 : i32, i32, i32
  }
  func.func @transform_1(%arg0: i32, %arg1: memref<2x8xi32, #tpu.memory_space<smem>>) -> (i32, i32) {
    %c0_i32 = arith.constant 0 : i32
    %c0_i32_0 = arith.constant 0 : i32
    %c0_i32_1 = arith.constant 0 : i32
    return %c0_i32, %c0_i32_0 : i32, i32
  }
  func.func @transform_2(%arg0: i32, %arg1: memref<2x8xi32, #tpu.memory_space<smem>>) -> (i32, i32) {
    %c0_i32 = arith.constant 0 : i32
    %c0_i32_0 = arith.constant 0 : i32
    %c0_i32_1 = arith.constant 0 : i32
    return %c0_i32, %c0_i32_0 : i32, i32
  }
  func.func @transform_3(%arg0: i32, %arg1: memref<2x8xi32, #tpu.memory_space<smem>>) -> (i32, i32) {
    %c0_i32 = arith.constant 0 : i32
    %c0_i32_0 = arith.constant 0 : i32
    %c0_i32_1 = arith.constant 0 : i32
    return %c0_i32, %c0_i32_0 : i32, i32
  }
  func.func @transform_4(%arg0: i32, %arg1: memref<2x8xi32, #tpu.memory_space<smem>>) -> (i32, i32) {
    %c0_i32 = arith.constant 0 : i32
    %c0_i32_0 = arith.constant 0 : i32
    %c0_i32_1 = arith.constant 0 : i32
    return %c0_i32, %c0_i32_0 : i32, i32
  }
  func.func @transform_5(%arg0: i32, %arg1: memref<2x8xi32, #tpu.memory_space<smem>>) -> (i32, i32) {
    %c0_i32 = arith.constant 0 : i32
    %c0_i32_0 = arith.constant 0 : i32
    %c0_i32_1 = arith.constant 0 : i32
    return %c0_i32, %c0_i32_0 : i32, i32
  }
  func.func @transform_6(%arg0: i32, %arg1: memref<2x8xi32, #tpu.memory_space<smem>>) -> (i32, i32, i32) {
    %c0_i32 = arith.constant 0 : i32
    %c0_i32_0 = arith.constant 0 : i32
    %c0_i32_1 = arith.constant 0 : i32
    %c0_i32_2 = arith.constant 0 : i32
    return %c0_i32, %c0_i32_0, %c0_i32_1 : i32, i32, i32
  }
  func.func @transform_7(%arg0: i32, %arg1: memref<2x8xi32, #tpu.memory_space<smem>>) -> (i32, i32, i32) {
    %c0_i32 = arith.constant 0 : i32
    %c0_i32_0 = arith.constant 0 : i32
    %c0_i32_1 = arith.constant 0 : i32
    %c0_i32_2 = arith.constant 0 : i32
    return %c0_i32, %c0_i32_0, %c0_i32_1 : i32, i32, i32
  }
  func.func @transform_8(%arg0: i32, %arg1: memref<2x8xi32, #tpu.memory_space<smem>>) -> (i32, i32, i32) {
    %c0_i32 = arith.constant 0 : i32
    %c0_i32_0 = arith.constant 0 : i32
    %c0_i32_1 = arith.constant 0 : i32
    %c0_i32_2 = arith.constant 0 : i32
    return %c0_i32, %c0_i32_0, %c0_i32_1 : i32, i32, i32
  }
  func.func @transform_9(%arg0: i32, %arg1: memref<2x8xi32, #tpu.memory_space<smem>>) -> (i32, i32, i32) {
    %c0_i32 = arith.constant 0 : i32
    %c0_i32_0 = arith.constant 0 : i32
    %c0_i32_1 = arith.constant 0 : i32
    %c0_i32_2 = arith.constant 0 : i32
    return %c0_i32, %c0_i32_0, %c0_i32_1 : i32, i32, i32
  }
  func.func @transform_10(%arg0: i32, %arg1: memref<2x8xi32, #tpu.memory_space<smem>>) -> (i32, i32, i32) {
    %c0_i32 = arith.constant 0 : i32
    %c0_i32_0 = arith.constant 0 : i32
    %c0_i32_1 = arith.constant 0 : i32
    %c0_i32_2 = arith.constant 0 : i32
    return %c0_i32, %c0_i32_0, %c0_i32_1 : i32, i32, i32
  }
  func.func @transform_11(%arg0: i32, %arg1: memref<2x8xi32, #tpu.memory_space<smem>>) -> (i32, i32, i32) {
    %c0_i32 = arith.constant 0 : i32
    %c0_i32_0 = arith.constant 0 : i32
    %c0_i32_1 = arith.constant 0 : i32
    %c0_i32_2 = arith.constant 0 : i32
    return %c0_i32, %c0_i32_0, %c0_i32_1 : i32, i32, i32
  }
  func.func @transform_12(%arg0: i32, %arg1: memref<2x8xi32, #tpu.memory_space<smem>>) -> (i32, i32, i32) {
    %c0_i32 = arith.constant 0 : i32
    %c0_i32_0 = arith.constant 0 : i32
    %c0_i32_1 = arith.constant 0 : i32
    %c0_i32_2 = arith.constant 0 : i32
    return %c0_i32, %c0_i32_0, %c0_i32_1 : i32, i32, i32
  }
  func.func @transform_13(%arg0: i32, %arg1: memref<2x8xi32, #tpu.memory_space<smem>>) -> (i32, i32, i32) {
    %c0_i32 = arith.constant 0 : i32
    %c0_i32_0 = arith.constant 0 : i32
    %c0_i32_1 = arith.constant 0 : i32
    %c0_i32_2 = arith.constant 0 : i32
    return %c0_i32, %c0_i32_0, %c0_i32_1 : i32, i32, i32
  }
  func.func @transform_14(%arg0: i32, %arg1: memref<2x8xi32, #tpu.memory_space<smem>>) -> (i32, i32, i32) {
    %c0_i32 = arith.constant 0 : i32
    %c0_i32_0 = arith.constant 0 : i32
    %c0_i32_1 = arith.constant 0 : i32
    %c0_i32_2 = arith.constant 0 : i32
    return %c0_i32, %c0_i32_0, %c0_i32_1 : i32, i32, i32
  }
  func.func @transform_15(%arg0: i32, %arg1: memref<2x8xi32, #tpu.memory_space<smem>>) -> (i32, i32, i32) {
    %c0_i32 = arith.constant 0 : i32
    %c0_i32_0 = arith.constant 0 : i32
    %c0_i32_1 = arith.constant 0 : i32
    %c0_i32_2 = arith.constant 0 : i32
    return %c0_i32, %c0_i32_0, %c0_i32_1 : i32, i32, i32
  }
  func.func @transform_16(%arg0: i32, %arg1: memref<2x8xi32, #tpu.memory_space<smem>>) -> (i32, i32, i32) {
    %c0_i32 = arith.constant 0 : i32
    %c0_i32_0 = arith.constant 0 : i32
    %c0_i32_1 = arith.constant 0 : i32
    %c0_i32_2 = arith.constant 0 : i32
    return %c0_i32, %c0_i32_0, %c0_i32_1 : i32, i32, i32
  }
  func.func @transform_17(%arg0: i32, %arg1: memref<2x8xi32, #tpu.memory_space<smem>>) -> (i32, i32, i32) {
    %c0_i32 = arith.constant 0 : i32
    %c0_i32_0 = arith.constant 0 : i32
    %c0_i32_1 = arith.constant 0 : i32
    %c0_i32_2 = arith.constant 0 : i32
    return %c0_i32, %c0_i32_0, %c0_i32_1 : i32, i32, i32
  }
  func.func @transform_18(%arg0: i32, %arg1: memref<2x8xi32, #tpu.memory_space<smem>>) -> (i32, i32) {
    %c0_i32 = arith.constant 0 : i32
    %c0_i32_0 = arith.constant 0 : i32
    %c0_i32_1 = arith.constant 0 : i32
    return %c0_i32, %c0_i32_0 : i32, i32
  }
  func.func @transform_19(%arg0: i32, %arg1: memref<2x8xi32, #tpu.memory_space<smem>>) -> (i32, i32) {
    %c0_i32 = arith.constant 0 : i32
    %c0_i32_0 = arith.constant 0 : i32
    %c0_i32_1 = arith.constant 0 : i32
    return %c0_i32, %c0_i32_0 : i32, i32
  }
  func.func @transform_20(%arg0: i32, %arg1: memref<2x8xi32, #tpu.memory_space<smem>>) -> (i32, i32) {
    %c0_i32 = arith.constant 0 : i32
    %c0_i32_0 = arith.constant 0 : i32
    %c0_i32_1 = arith.constant 0 : i32
    return %c0_i32, %c0_i32_0 : i32, i32
  }
  func.func @transform_21(%arg0: i32, %arg1: memref<2x8xi32, #tpu.memory_space<smem>>) -> (i32, i32) {
    %c0_i32 = arith.constant 0 : i32
    %c0_i32_0 = arith.constant 0 : i32
    %c0_i32_1 = arith.constant 0 : i32
    return %c0_i32, %c0_i32_0 : i32, i32
  }
  func.func @transform_22(%arg0: i32, %arg1: memref<2x8xi32, #tpu.memory_space<smem>>) -> (i32, i32) {
    %c0_i32 = arith.constant 0 : i32
    %c0_i32_0 = arith.constant 0 : i32
    %c0_i32_1 = arith.constant 0 : i32
    return %c0_i32, %c0_i32_0 : i32, i32
  }
  func.func @transform_23(%arg0: i32, %arg1: memref<2x8xi32, #tpu.memory_space<smem>>) -> (i32, i32) {
    %c0_i32 = arith.constant 0 : i32
    %c0_i32_0 = arith.constant 0 : i32
    %c0_i32_1 = arith.constant 0 : i32
    return %c0_i32, %c0_i32_0 : i32, i32
  }
  func.func @transform_24(%arg0: i32, %arg1: memref<2x8xi32, #tpu.memory_space<smem>>) -> (i32, i32) {
    %c0_i32 = arith.constant 0 : i32
    %c0_i32_0 = arith.constant 0 : i32
    %c0_i32_1 = arith.constant 0 : i32
    return %c0_i32, %c0_i32_0 : i32, i32
  }
  func.func @transform_25(%arg0: i32, %arg1: memref<2x8xi32, #tpu.memory_space<smem>>) -> (i32, i32) {
    %c0_i32 = arith.constant 0 : i32
    %c0_i32_0 = arith.constant 0 : i32
    %c0_i32_1 = arith.constant 0 : i32
    return %c0_i32, %c0_i32_0 : i32, i32
  }
  func.func @transform_26(%arg0: i32, %arg1: memref<2x8xi32, #tpu.memory_space<smem>>) -> (i32, i32) {
    %c0_i32 = arith.constant 0 : i32
    %c0_i32_0 = arith.constant 0 : i32
    %c0_i32_1 = arith.constant 0 : i32
    return %c0_i32, %c0_i32_0 : i32, i32
  }
  func.func @transform_27(%arg0: i32, %arg1: memref<2x8xi32, #tpu.memory_space<smem>>) -> (i32, i32, i32) {
    %c0_i32 = arith.constant 0 : i32
    %c0_i32_0 = arith.constant 0 : i32
    %c0_i32_1 = arith.constant 0 : i32
    return %arg0, %c0_i32, %c0_i32_0 : i32, i32, i32
  }
}

</mosaic_0001>

<llo_original>
// kernel: forward.1
$region0: #{forward.1}
  #allocation0 [shape = 'u32[]', space=smem, size = 0x4, offset = 0x4, fixed_abs, tag = 'smem constant byte address 0x4 - core index']
  #allocation1 [shape = 'u32[144,128]{1,0:T(1,128)}', space=vmem, size = 0x12000, scoped, tag = 'internal scratch']
  #allocation2 [shape = 'f32[8,32]{1,0:T(8,128)}', space=vmem, size = 0x1000, scoped, tag = 'scratch operand']
  #allocation3 [shape = 's32[8,8]{1,0:T(8,128)}', space=vmem, size = 0x1000, scoped, tag = 'scratch operand']
  #allocation4 [shape = 's32[1]{0}', space=sflag, size = 0x4, scoped, tag = 'scoped memory for forward.1']
  #allocation5 [shape = 'u8[1024]{0}', space=smem, size = 0x400, scoped, tag = 'prefetched SMEM operand 0']
  %s0 = inlined_call_operand.vmem [shape: s32[2,8], index: 0, kind: input, shape index: {}]
  %s1 = inlined_call_operand.vmem [shape: s32[2,1,8], index: 1, kind: input, shape index: {}]
  %s2 = inlined_call_operand.vmem [shape: f32[64,32], index: 2, kind: input, shape index: {}]
  %s3 = inlined_call_operand.vmem [shape: f32[16,32], index: 3, kind: input, shape index: {}]
  %s4 = inlined_call_operand.vmem [shape: f32[1,32], index: 4, kind: input, shape index: {}]
  %s5 = inlined_call_operand.vmem [shape: f32[1,32], index: 5, kind: input, shape index: {}]
  %s6 = inlined_call_operand.vmem [shape: f32[1,32], index: 6, kind: input, shape index: {}]
  %s7 = inlined_call_operand.vmem [shape: bf16[2,32,96], index: 7, kind: input, shape index: {}]
  %s8 = inlined_call_operand.vmem [shape: f32[2,1,96], index: 8, kind: input, shape index: {}]
  %s9 = inlined_call_operand.vmem [shape: bf16[2,32,32], index: 9, kind: input, shape index: {}]
  %s10 = inlined_call_operand.vmem [shape: f32[2,1,32], index: 10, kind: input, shape index: {}]
  %s11 = inlined_call_operand.vmem [shape: f32[2,1,32], index: 11, kind: input, shape index: {}]
  %s12 = inlined_call_operand.vmem [shape: f32[2,1,32], index: 12, kind: input, shape index: {}]
  %s13 = inlined_call_operand.vmem [shape: bf16[2,32,64], index: 13, kind: input, shape index: {}]
  %s14 = inlined_call_operand.vmem [shape: f32[2,1,64], index: 14, kind: input, shape index: {}]
  %s15 = inlined_call_operand.vmem [shape: bf16[2,64,32], index: 15, kind: input, shape index: {}]
  %s16 = inlined_call_operand.vmem [shape: f32[2,1,32], index: 16, kind: input, shape index: {}]
  %s17 = inlined_call_operand.vmem [shape: f32[2,1,32], index: 17, kind: input, shape index: {}]
  %s18 = inlined_call_operand.vmem [shape: f32[2,1,32], index: 18, kind: input, shape index: {}]
  %s19 = inlined_call_operand.vmem [shape: bf16[32,128], index: 19, kind: input, shape index: {}]
  %s20 = inlined_call_operand.vmem [shape: f32[1,128], index: 20, kind: input, shape index: {}]
  %s21 = inlined_call_operand.vmem [shape: bf16[16,64], index: 21, kind: input, shape index: {}]
  %s22 = inlined_call_operand.vmem [shape: bf16[16,64], index: 22, kind: input, shape index: {}]
  %s23 = inlined_call_operand.vmem [shape: bf16[32,8], index: 23, kind: input, shape index: {}]
  %s24 = inlined_call_operand.vmem [shape: f32[1,8], index: 24, kind: input, shape index: {}]
  %s25 = inlined_call_operand.vmem [shape: f32[1,8], index: 25, kind: input, shape index: {}]
  %s26 = inlined_call_operand.vmem [shape: f32[1,8], index: 26, kind: input, shape index: {}]
  %s27 = inlined_call_operand.vmem [shape: f32[8,8], index: 27, kind: input, shape index: {}]
  %s28 = inlined_call_operand.hbm [shape: s32[2,1,8], index: 28, kind: output, shape index: {}]
  %s29 = sld [smem:[#allocation0]]
  $region141: #{forward.1} parent=0
    _
  %s31 = ssub.s32 1, %s29
  %s32 = scalar_select 0, %s31, %s29
  %s33 = sshll.u32 %s0, 4
  %s34 = int_to_ptr.vmem [resolvable:$true] %s33
  %36 = dma.vmem_to_smem %s34, 32, [#allocation5], [#allocation4]
  %37 = dma.done [#allocation4], 32
  %38 = sfence
  $region1: #{forward.1} parent=0
    #allocation6 [shape = 'u8[1024]{0}', space=vmem, size = 0x400, scoped, tag = 'output window, operand 0']
    #allocation7 [shape = 's32[2]{0}', space=sflag, size = 0x8, scoped, tag = 'scoped memory for forward.1']
    %39 = vsyncpa [#allocation7], 0
    %s40 = scalar_lea.sflag [#allocation7], 1
    %41 = vsyncpa %s40, 0
    loop: start=0, step=1, limit=4
    $region2: #{forward.1} parent=1 // loop_pre_header
      _
    $region3: #{forward.1} parent=1 // loop_header
      %s43 = sphi 0, %s47
      %p44 = scmp.ge.s32.totalorder %s43, 4
      %s53 = sphi 0, %s55
      %s56 = sphi 0, %s53
      %s57 = sphi 0, %s56
      %s73 = sphi 0, %s57
      %s77 = sphi 0, %s77
      %s79 = sphi 0, %s77
      %s80 = sphi 0, %s79
      %s94 = sphi 0, %s80
      %s98 = sphi 0, %s98
      %s100 = sphi 0, %s98
      %s101 = sphi 0, %s100
      %s115 = sphi 0, %s101
      %s119 = sphi 0, %s119
      %s121 = sphi 0, %s119
      %s122 = sphi 0, %s121
      %s136 = sphi 0, %s122
      %s140 = sphi 0, %s140
      %s142 = sphi 0, %s140
      %s143 = sphi 0, %s142
      %s157 = sphi 0, %s143
      %s161 = sphi 0, %s161
      %s163 = sphi 0, %s161
      %s164 = sphi 0, %s163
      %s178 = sphi 0, %s164
      %s182 = sphi 0, %s182
      %s184 = sphi 0, %s182
      %s185 = sphi 0, %s184
      %s199 = sphi 0, %s185
      %s203 = sphi 0, %s203
      %s205 = sphi 0, %s203
      %s206 = sphi 0, %s205
      %s220 = sphi 0, %s206
      %s224 = sphi 0, %s224
      %s226 = sphi 0, %s224
      %s227 = sphi 0, %s226
      %s241 = sphi 0, %s227
      %s245 = sphi 0, %s245
      %s247 = sphi 0, %s245
      %s248 = sphi 0, %s247
      %s262 = sphi 0, %s248
      %s266 = sphi 0, %s266
      %s268 = sphi 0, %s266
      %s269 = sphi 0, %s268
      %s283 = sphi 0, %s269
      %s287 = sphi 0, %s287
      %s289 = sphi 0, %s287
      %s290 = sphi 0, %s289
      %s304 = sphi 0, %s290
      %s308 = sphi 0, %s308
      %s310 = sphi 0, %s308
      %s311 = sphi 0, %s310
      %s325 = sphi 0, %s311
      %s329 = sphi 0, %s329
      %s331 = sphi 0, %s329
      %s332 = sphi 0, %s331
      %s346 = sphi 0, %s332
      %s350 = sphi 0, %s350
      %s352 = sphi 0, %s350
      %s353 = sphi 0, %s352
      %s367 = sphi 0, %s353
      %s371 = sphi 0, %s371
      %s373 = sphi 0, %s371
      %s374 = sphi 0, %s373
      %s388 = sphi 0, %s374
      %s392 = sphi 0, %s392
      %s394 = sphi 0, %s392
      %s395 = sphi 0, %s394
      %s409 = sphi 0, %s395
      %s413 = sphi 0, %s413
      %s415 = sphi 0, %s413
      %s416 = sphi 0, %s415
      %s430 = sphi 0, %s416
      %s434 = sphi 0, %s434
      %s436 = sphi 0, %s434
      %s437 = sphi 0, %s436
      %s451 = sphi 0, %s437
      %s455 = sphi 0, %s455
      %s457 = sphi 0, %s455
      %s458 = sphi 0, %s457
      %s472 = sphi 0, %s458
      %s476 = sphi 0, %s476
      %s478 = sphi 0, %s476
      %s479 = sphi 0, %s478
      %s493 = sphi 0, %s479
      %s497 = sphi 0, %s497
      %s499 = sphi 0, %s497
      %s500 = sphi 0, %s499
      %s514 = sphi 0, %s500
      %s518 = sphi 0, %s518
      %s520 = sphi 0, %s518
      %s521 = sphi 0, %s520
      %s535 = sphi 0, %s521
      %s539 = sphi 0, %s539
      %s541 = sphi 0, %s539
      %s542 = sphi 0, %s541
      %s556 = sphi 0, %s542
      %s560 = sphi 0, %s560
      %s562 = sphi 0, %s560
      %s563 = sphi 0, %s562
      %s577 = sphi 0, %s563
      %s581 = sphi 0, %s581
      %s583 = sphi 0, %s581
      %s584 = sphi 0, %s583
      %s598 = sphi 0, %s584
      %s602 = sphi 0, %s602
      %s604 = sphi 0, %s602
      %s605 = sphi 0, %s604
      %s619 = sphi 0, %s605
      %s625 = sphi 0, %s627
      %s628 = sphi 0, %s625
      %s629 = sphi 0, %s628
      %s645 = sphi 0, %s629
    $region4: #{forward.1} parent=1 // loop_header_branch
      %46 = sbr.rel (%p44) target = $region8
    $region5: #{forward.1} parent=1 // loop_body
      %s48 = ssub.s32 %s43, 1
      %s49 = ssub.s32 %s43, 2
      %s50 = sadd.s32 %s43, 1
      %s51 = ssub.s32 %s43, %s50
      %p52 = scmp.eq.s32.totalorder %s51, 0
      %s54 = sadd.s32 %s53, 1
      %s55 = scalar_select %p52, %s53, %s54
      %p58 = pneg %p52
      %p59 = scmp.eq.s32.totalorder %s43, 1
      %p60 = por %p58, %p59
      %p61 = scmp.ne.s32.totalorder %s53, %s56
      %p62 = scmp.eq.s32.totalorder %s43, 0
      %p63 = por %p61, %p62
      %p64 = scmp.ne.s32.totalorder %s53, %s56
      %p65 = scmp.eq.s32.totalorder %s48, 1
      %p66 = por %p64, %p65
      %p67 = scmp.ne.s32.totalorder %s56, %s57
      %p68 = scmp.eq.s32.totalorder %s48, 0
      %p69 = por %p67, %p68
      %p70 = scmp.ne.s32.totalorder %s56, %s57
      %p71 = scmp.eq.s32.totalorder %s49, 1
      %p72 = por %p70, %p71
      %p74 = scmp.ne.s32.totalorder %s57, %s73
      %p75 = scmp.eq.s32.totalorder %s49, 0
      %p76 = por %p74, %p75
      %s78 = sadd.s32 %s77, 1
      %p81 = scmp.eq.s32.totalorder %s43, 1
      %p82 = scmp.ne.s32.totalorder %s77, %s79
      %p83 = scmp.eq.s32.totalorder %s43, 0
      %p84 = por %p82, %p83
      %p85 = scmp.ne.s32.totalorder %s77, %s79
      %p86 = scmp.eq.s32.totalorder %s48, 1
      %p87 = por %p85, %p86
      %p88 = scmp.ne.s32.totalorder %s79, %s80
      %p89 = scmp.eq.s32.totalorder %s48, 0
      %p90 = por %p88, %p89
      %p91 = scmp.ne.s32.totalorder %s79, %s80
      %p92 = scmp.eq.s32.totalorder %s49, 1
      %p93 = por %p91, %p92
      %p95 = scmp.ne.s32.totalorder %s80, %s94
      %p96 = scmp.eq.s32.totalorder %s49, 0
      %p97 = por %p95, %p96
      %s99 = sadd.s32 %s98, 1
      %p102 = scmp.eq.s32.totalorder %s43, 1
      %p103 = scmp.ne.s32.totalorder %s98, %s100
      %p104 = scmp.eq.s32.totalorder %s43, 0
      %p105 = por %p103, %p104
      %p106 = scmp.ne.s32.totalorder %s98, %s100
      %p107 = scmp.eq.s32.totalorder %s48, 1
      %p108 = por %p106, %p107
      %p109 = scmp.ne.s32.totalorder %s100, %s101
      %p110 = scmp.eq.s32.totalorder %s48, 0
      %p111 = por %p109, %p110
      %p112 = scmp.ne.s32.totalorder %s100, %s101
      %p113 = scmp.eq.s32.totalorder %s49, 1
      %p114 = por %p112, %p113
      %p116 = scmp.ne.s32.totalorder %s101, %s115
      %p117 = scmp.eq.s32.totalorder %s49, 0
      %p118 = por %p116, %p117
      %s120 = sadd.s32 %s119, 1
      %p123 = scmp.eq.s32.totalorder %s43, 1
      %p124 = scmp.ne.s32.totalorder %s119, %s121
      %p125 = scmp.eq.s32.totalorder %s43, 0
      %p126 = por %p124, %p125
      %p127 = scmp.ne.s32.totalorder %s119, %s121
      %p128 = scmp.eq.s32.totalorder %s48, 1
      %p129 = por %p127, %p128
      %p130 = scmp.ne.s32.totalorder %s121, %s122
      %p131 = scmp.eq.s32.totalorder %s48, 0
      %p132 = por %p130, %p131
      %p133 = scmp.ne.s32.totalorder %s121, %s122
      %p134 = scmp.eq.s32.totalorder %s49, 1
      %p135 = por %p133, %p134
      %p137 = scmp.ne.s32.totalorder %s122, %s136
      %p138 = scmp.eq.s32.totalorder %s49, 0
      %p139 = por %p137, %p138
      %s141 = sadd.s32 %s140, 1
      %p144 = scmp.eq.s32.totalorder %s43, 1
      %p145 = scmp.ne.s32.totalorder %s140, %s142
      %p146 = scmp.eq.s32.totalorder %s43, 0
      %p147 = por %p145, %p146
      %p148 = scmp.ne.s32.totalorder %s140, %s142
      %p149 = scmp.eq.s32.totalorder %s48, 1
      %p150 = por %p148, %p149
      %p151 = scmp.ne.s32.totalorder %s142, %s143
      %p152 = scmp.eq.s32.totalorder %s48, 0
      %p153 = por %p151, %p152
      %p154 = scmp.ne.s32.totalorder %s142, %s143
      %p155 = scmp.eq.s32.totalorder %s49, 1
      %p156 = por %p154, %p155
      %p158 = scmp.ne.s32.totalorder %s143, %s157
      %p159 = scmp.eq.s32.totalorder %s49, 0
      %p160 = por %p158, %p159
      %s162 = sadd.s32 %s161, 1
      %p165 = scmp.eq.s32.totalorder %s43, 1
      %p166 = scmp.ne.s32.totalorder %s161, %s163
      %p167 = scmp.eq.s32.totalorder %s43, 0
      %p168 = por %p166, %p167
      %p169 = scmp.ne.s32.totalorder %s161, %s163
      %p170 = scmp.eq.s32.totalorder %s48, 1
      %p171 = por %p169, %p170
      %p172 = scmp.ne.s32.totalorder %s163, %s164
      %p173 = scmp.eq.s32.totalorder %s48, 0
      %p174 = por %p172, %p173
      %p175 = scmp.ne.s32.totalorder %s163, %s164
      %p176 = scmp.eq.s32.totalorder %s49, 1
      %p177 = por %p175, %p176
      %p179 = scmp.ne.s32.totalorder %s164, %s178
      %p180 = scmp.eq.s32.totalorder %s49, 0
      %p181 = por %p179, %p180
      %s183 = sadd.s32 %s182, 1
      %p186 = scmp.eq.s32.totalorder %s43, 1
      %p187 = scmp.ne.s32.totalorder %s182, %s184
      %p188 = scmp.eq.s32.totalorder %s43, 0
      %p189 = por %p187, %p188
      %p190 = scmp.ne.s32.totalorder %s182, %s184
      %p191 = scmp.eq.s32.totalorder %s48, 1
      %p192 = por %p190, %p191
      %p193 = scmp.ne.s32.totalorder %s184, %s185
      %p194 = scmp.eq.s32.totalorder %s48, 0
      %p195 = por %p193, %p194
      %p196 = scmp.ne.s32.totalorder %s184, %s185
      %p197 = scmp.eq.s32.totalorder %s49, 1
      %p198 = por %p196, %p197
      %p200 = scmp.ne.s32.totalorder %s185, %s199
      %p201 = scmp.eq.s32.totalorder %s49, 0
      %p202 = por %p200, %p201
      %s204 = sadd.s32 %s203, 1
      %p207 = scmp.eq.s32.totalorder %s43, 1
      %p208 = scmp.ne.s32.totalorder %s203, %s205
      %p209 = scmp.eq.s32.totalorder %s43, 0
      %p210 = por %p208, %p209
      %p211 = scmp.ne.s32.totalorder %s203, %s205
      %p212 = scmp.eq.s32.totalorder %s48, 1
      %p213 = por %p211, %p212
      %p214 = scmp.ne.s32.totalorder %s205, %s206
      %p215 = scmp.eq.s32.totalorder %s48, 0
      %p216 = por %p214, %p215
      %p217 = scmp.ne.s32.totalorder %s205, %s206
      %p218 = scmp.eq.s32.totalorder %s49, 1
      %p219 = por %p217, %p218
      %p221 = scmp.ne.s32.totalorder %s206, %s220
      %p222 = scmp.eq.s32.totalorder %s49, 0
      %p223 = por %p221, %p222
      %s225 = sadd.s32 %s224, 1
      %p228 = scmp.eq.s32.totalorder %s43, 1
      %p229 = scmp.ne.s32.totalorder %s224, %s226
      %p230 = scmp.eq.s32.totalorder %s43, 0
      %p231 = por %p229, %p230
      %p232 = scmp.ne.s32.totalorder %s224, %s226
      %p233 = scmp.eq.s32.totalorder %s48, 1
      %p234 = por %p232, %p233
      %p235 = scmp.ne.s32.totalorder %s226, %s227
      %p236 = scmp.eq.s32.totalorder %s48, 0
      %p237 = por %p235, %p236
      %p238 = scmp.ne.s32.totalorder %s226, %s227
      %p239 = scmp.eq.s32.totalorder %s49, 1
      %p240 = por %p238, %p239
      %p242 = scmp.ne.s32.totalorder %s227, %s241
      %p243 = scmp.eq.s32.totalorder %s49, 0
      %p244 = por %p242, %p243
      %s246 = sadd.s32 %s245, 1
      %p249 = scmp.eq.s32.totalorder %s43, 1
      %p250 = scmp.ne.s32.totalorder %s245, %s247
      %p251 = scmp.eq.s32.totalorder %s43, 0
      %p252 = por %p250, %p251
      %p253 = scmp.ne.s32.totalorder %s245, %s247
      %p254 = scmp.eq.s32.totalorder %s48, 1
      %p255 = por %p253, %p254
      %p256 = scmp.ne.s32.totalorder %s247, %s248
      %p257 = scmp.eq.s32.totalorder %s48, 0
      %p258 = por %p256, %p257
      %p259 = scmp.ne.s32.totalorder %s247, %s248
      %p260 = scmp.eq.s32.totalorder %s49, 1
      %p261 = por %p259, %p260
      %p263 = scmp.ne.s32.totalorder %s248, %s262
      %p264 = scmp.eq.s32.totalorder %s49, 0
      %p265 = por %p263, %p264
      %s267 = sadd.s32 %s266, 1
      %p270 = scmp.eq.s32.totalorder %s43, 1
      %p271 = scmp.ne.s32.totalorder %s266, %s268
      %p272 = scmp.eq.s32.totalorder %s43, 0
      %p273 = por %p271, %p272
      %p274 = scmp.ne.s32.totalorder %s266, %s268
      %p275 = scmp.eq.s32.totalorder %s48, 1
      %p276 = por %p274, %p275
      %p277 = scmp.ne.s32.totalorder %s268, %s269
      %p278 = scmp.eq.s32.totalorder %s48, 0
      %p279 = por %p277, %p278
      %p280 = scmp.ne.s32.totalorder %s268, %s269
      %p281 = scmp.eq.s32.totalorder %s49, 1
      %p282 = por %p280, %p281
      %p284 = scmp.ne.s32.totalorder %s269, %s283
      %p285 = scmp.eq.s32.totalorder %s49, 0
      %p286 = por %p284, %p285
      %s288 = sadd.s32 %s287, 1
      %p291 = scmp.eq.s32.totalorder %s43, 1
      %p292 = scmp.ne.s32.totalorder %s287, %s289
      %p293 = scmp.eq.s32.totalorder %s43, 0
      %p294 = por %p292, %p293
      %p295 = scmp.ne.s32.totalorder %s287, %s289
      %p296 = scmp.eq.s32.totalorder %s48, 1
      %p297 = por %p295, %p296
      %p298 = scmp.ne.s32.totalorder %s289, %s290
      %p299 = scmp.eq.s32.totalorder %s48, 0
      %p300 = por %p298, %p299
      %p301 = scmp.ne.s32.totalorder %s289, %s290
      %p302 = scmp.eq.s32.totalorder %s49, 1
      %p303 = por %p301, %p302
      %p305 = scmp.ne.s32.totalorder %s290, %s304
      %p306 = scmp.eq.s32.totalorder %s49, 0
      %p307 = por %p305, %p306
      %s309 = sadd.s32 %s308, 1
      %p312 = scmp.eq.s32.totalorder %s43, 1
      %p313 = scmp.ne.s32.totalorder %s308, %s310
      %p314 = scmp.eq.s32.totalorder %s43, 0
      %p315 = por %p313, %p314
      %p316 = scmp.ne.s32.totalorder %s308, %s310
      %p317 = scmp.eq.s32.totalorder %s48, 1
      %p318 = por %p316, %p317
      %p319 = scmp.ne.s32.totalorder %s310, %s311
      %p320 = scmp.eq.s32.totalorder %s48, 0
      %p321 = por %p319, %p320
      %p322 = scmp.ne.s32.totalorder %s310, %s311
      %p323 = scmp.eq.s32.totalorder %s49, 1
      %p324 = por %p322, %p323
      %p326 = scmp.ne.s32.totalorder %s311, %s325
      %p327 = scmp.eq.s32.totalorder %s49, 0
      %p328 = por %p326, %p327
      %s330 = sadd.s32 %s329, 1
      %p333 = scmp.eq.s32.totalorder %s43, 1
      %p334 = scmp.ne.s32.totalorder %s329, %s331
      %p335 = scmp.eq.s32.totalorder %s43, 0
      %p336 = por %p334, %p335
      %p337 = scmp.ne.s32.totalorder %s329, %s331
      %p338 = scmp.eq.s32.totalorder %s48, 1
      %p339 = por %p337, %p338
      %p340 = scmp.ne.s32.totalorder %s331, %s332
      %p341 = scmp.eq.s32.totalorder %s48, 0
      %p342 = por %p340, %p341
      %p343 = scmp.ne.s32.totalorder %s331, %s332
      %p344 = scmp.eq.s32.totalorder %s49, 1
      %p345 = por %p343, %p344
      %p347 = scmp.ne.s32.totalorder %s332, %s346
      %p348 = scmp.eq.s32.totalorder %s49, 0
      %p349 = por %p347, %p348
      %s351 = sadd.s32 %s350, 1
      %p354 = scmp.eq.s32.totalorder %s43, 1
      %p355 = scmp.ne.s32.totalorder %s350, %s352
      %p356 = scmp.eq.s32.totalorder %s43, 0
      %p357 = por %p355, %p356
      %p358 = scmp.ne.s32.totalorder %s350, %s352
      %p359 = scmp.eq.s32.totalorder %s48, 1
      %p360 = por %p358, %p359
      %p361 = scmp.ne.s32.totalorder %s352, %s353
      %p362 = scmp.eq.s32.totalorder %s48, 0
      %p363 = por %p361, %p362
      %p364 = scmp.ne.s32.totalorder %s352, %s353
      %p365 = scmp.eq.s32.totalorder %s49, 1
      %p366 = por %p364, %p365
      %p368 = scmp.ne.s32.totalorder %s353, %s367
      %p369 = scmp.eq.s32.totalorder %s49, 0
      %p370 = por %p368, %p369
      %s372 = sadd.s32 %s371, 1
      %p375 = scmp.eq.s32.totalorder %s43, 1
      %p376 = scmp.ne.s32.totalorder %s371, %s373
      %p377 = scmp.eq.s32.totalorder %s43, 0
      %p378 = por %p376, %p377
      %p379 = scmp.ne.s32.totalorder %s371, %s373
      %p380 = scmp.eq.s32.totalorder %s48, 1
      %p381 = por %p379, %p380
      %p382 = scmp.ne.s32.totalorder %s373, %s374
      %p383 = scmp.eq.s32.totalorder %s48, 0
      %p384 = por %p382, %p383
      %p385 = scmp.ne.s32.totalorder %s373, %s374
      %p386 = scmp.eq.s32.totalorder %s49, 1
      %p387 = por %p385, %p386
      %p389 = scmp.ne.s32.totalorder %s374, %s388
      %p390 = scmp.eq.s32.totalorder %s49, 0
      %p391 = por %p389, %p390
      %s393 = sadd.s32 %s392, 1
      %p396 = scmp.eq.s32.totalorder %s43, 1
      %p397 = scmp.ne.s32.totalorder %s392, %s394
      %p398 = scmp.eq.s32.totalorder %s43, 0
      %p399 = por %p397, %p398
      %p400 = scmp.ne.s32.totalorder %s392, %s394
      %p401 = scmp.eq.s32.totalorder %s48, 1
      %p402 = por %p400, %p401
      %p403 = scmp.ne.s32.totalorder %s394, %s395
      %p404 = scmp.eq.s32.totalorder %s48, 0
      %p405 = por %p403, %p404
      %p406 = scmp.ne.s32.totalorder %s394, %s395
      %p407 = scmp.eq.s32.totalorder %s49, 1
      %p408 = por %p406, %p407
      %p410 = scmp.ne.s32.totalorder %s395, %s409
      %p411 = scmp.eq.s32.totalorder %s49, 0
      %p412 = por %p410, %p411
      %s414 = sadd.s32 %s413, 1
      %p417 = scmp.eq.s32.totalorder %s43, 1
      %p418 = scmp.ne.s32.totalorder %s413, %s415
      %p419 = scmp.eq.s32.totalorder %s43, 0
      %p420 = por %p418, %p419
      %p421 = scmp.ne.s32.totalorder %s413, %s415
      %p422 = scmp.eq.s32.totalorder %s48, 1
      %p423 = por %p421, %p422
      %p424 = scmp.ne.s32.totalorder %s415, %s416
      %p425 = scmp.eq.s32.totalorder %s48, 0
      %p426 = por %p424, %p425
      %p427 = scmp.ne.s32.totalorder %s415, %s416
      %p428 = scmp.eq.s32.totalorder %s49, 1
      %p429 = por %p427, %p428
      %p431 = scmp.ne.s32.totalorder %s416, %s430
      %p432 = scmp.eq.s32.totalorder %s49, 0
      %p433 = por %p431, %p432
      %s435 = sadd.s32 %s434, 1
      %p438 = scmp.eq.s32.totalorder %s43, 1
      %p439 = scmp.ne.s32.totalorder %s434, %s436
      %p440 = scmp.eq.s32.totalorder %s43, 0
      %p441 = por %p439, %p440
      %p442 = scmp.ne.s32.totalorder %s434, %s436
      %p443 = scmp.eq.s32.totalorder %s48, 1
      %p444 = por %p442, %p443
      %p445 = scmp.ne.s32.totalorder %s436, %s437
      %p446 = scmp.eq.s32.totalorder %s48, 0
      %p447 = por %p445, %p446
      %p448 = scmp.ne.s32.totalorder %s436, %s437
      %p449 = scmp.eq.s32.totalorder %s49, 1
      %p450 = por %p448, %p449
      %p452 = scmp.ne.s32.totalorder %s437, %s451
      %p453 = scmp.eq.s32.totalorder %s49, 0
      %p454 = por %p452, %p453
      %s456 = sadd.s32 %s455, 1
      %p459 = scmp.eq.s32.totalorder %s43, 1
      %p460 = scmp.ne.s32.totalorder %s455, %s457
      %p461 = scmp.eq.s32.totalorder %s43, 0
      %p462 = por %p460, %p461
      %p463 = scmp.ne.s32.totalorder %s455, %s457
      %p464 = scmp.eq.s32.totalorder %s48, 1
      %p465 = por %p463, %p464
      %p466 = scmp.ne.s32.totalorder %s457, %s458
      %p467 = scmp.eq.s32.totalorder %s48, 0
      %p468 = por %p466, %p467
      %p469 = scmp.ne.s32.totalorder %s457, %s458
      %p470 = scmp.eq.s32.totalorder %s49, 1
      %p471 = por %p469, %p470
      %p473 = scmp.ne.s32.totalorder %s458, %s472
      %p474 = scmp.eq.s32.totalorder %s49, 0
      %p475 = por %p473, %p474
      %s477 = sadd.s32 %s476, 1
      %p480 = scmp.eq.s32.totalorder %s43, 1
      %p481 = scmp.ne.s32.totalorder %s476, %s478
      %p482 = scmp.eq.s32.totalorder %s43, 0
      %p483 = por %p481, %p482
      %p484 = scmp.ne.s32.totalorder %s476, %s478
      %p485 = scmp.eq.s32.totalorder %s48, 1
      %p486 = por %p484, %p485
      %p487 = scmp.ne.s32.totalorder %s478, %s479
      %p488 = scmp.eq.s32.totalorder %s48, 0
      %p489 = por %p487, %p488
      %p490 = scmp.ne.s32.totalorder %s478, %s479
      %p491 = scmp.eq.s32.totalorder %s49, 1
      %p492 = por %p490, %p491
      %p494 = scmp.ne.s32.totalorder %s479, %s493
      %p495 = scmp.eq.s32.totalorder %s49, 0
      %p496 = por %p494, %p495
      %s498 = sadd.s32 %s497, 1
      %p501 = scmp.eq.s32.totalorder %s43, 1
      %p502 = scmp.ne.s32.totalorder %s497, %s499
      %p503 = scmp.eq.s32.totalorder %s43, 0
      %p504 = por %p502, %p503
      %p505 = scmp.ne.s32.totalorder %s497, %s499
      %p506 = scmp.eq.s32.totalorder %s48, 1
      %p507 = por %p505, %p506
      %p508 = scmp.ne.s32.totalorder %s499, %s500
      %p509 = scmp.eq.s32.totalorder %s48, 0
      %p510 = por %p508, %p509
      %p511 = scmp.ne.s32.totalorder %s499, %s500
      %p512 = scmp.eq.s32.totalorder %s49, 1
      %p513 = por %p511, %p512
      %p515 = scmp.ne.s32.totalorder %s500, %s514
      %p516 = scmp.eq.s32.totalorder %s49, 0
      %p517 = por %p515, %p516
      %s519 = sadd.s32 %s518, 1
      %p522 = scmp.eq.s32.totalorder %s43, 1
      %p523 = scmp.ne.s32.totalorder %s518, %s520
      %p524 = scmp.eq.s32.totalorder %s43, 0
      %p525 = por %p523, %p524
      %p526 = scmp.ne.s32.totalorder %s518, %s520
      %p527 = scmp.eq.s32.totalorder %s48, 1
      %p528 = por %p526, %p527
      %p529 = scmp.ne.s32.totalorder %s520, %s521
      %p530 = scmp.eq.s32.totalorder %s48, 0
      %p531 = por %p529, %p530
      %p532 = scmp.ne.s32.totalorder %s520, %s521
      %p533 = scmp.eq.s32.totalorder %s49, 1
      %p534 = por %p532, %p533
      %p536 = scmp.ne.s32.totalorder %s521, %s535
      %p537 = scmp.eq.s32.totalorder %s49, 0
      %p538 = por %p536, %p537
      %s540 = sadd.s32 %s539, 1
      %p543 = scmp.eq.s32.totalorder %s43, 1
      %p544 = scmp.ne.s32.totalorder %s539, %s541
      %p545 = scmp.eq.s32.totalorder %s43, 0
      %p546 = por %p544, %p545
      %p547 = scmp.ne.s32.totalorder %s539, %s541
      %p548 = scmp.eq.s32.totalorder %s48, 1
      %p549 = por %p547, %p548
      %p550 = scmp.ne.s32.totalorder %s541, %s542
      %p551 = scmp.eq.s32.totalorder %s48, 0
      %p552 = por %p550, %p551
      %p553 = scmp.ne.s32.totalorder %s541, %s542
      %p554 = scmp.eq.s32.totalorder %s49, 1
      %p555 = por %p553, %p554
      %p557 = scmp.ne.s32.totalorder %s542, %s556
      %p558 = scmp.eq.s32.totalorder %s49, 0
      %p559 = por %p557, %p558
      %s561 = sadd.s32 %s560, 1
      %p564 = scmp.eq.s32.totalorder %s43, 1
      %p565 = scmp.ne.s32.totalorder %s560, %s562
      %p566 = scmp.eq.s32.totalorder %s43, 0
      %p567 = por %p565, %p566
      %p568 = scmp.ne.s32.totalorder %s560, %s562
      %p569 = scmp.eq.s32.totalorder %s48, 1
      %p570 = por %p568, %p569
      %p571 = scmp.ne.s32.totalorder %s562, %s563
      %p572 = scmp.eq.s32.totalorder %s48, 0
      %p573 = por %p571, %p572
      %p574 = scmp.ne.s32.totalorder %s562, %s563
      %p575 = scmp.eq.s32.totalorder %s49, 1
      %p576 = por %p574, %p575
      %p578 = scmp.ne.s32.totalorder %s563, %s577
      %p579 = scmp.eq.s32.totalorder %s49, 0
      %p580 = por %p578, %p579
      %s582 = sadd.s32 %s581, 1
      %p585 = scmp.eq.s32.totalorder %s43, 1
      %p586 = scmp.ne.s32.totalorder %s581, %s583
      %p587 = scmp.eq.s32.totalorder %s43, 0
      %p588 = por %p586, %p587
      %p589 = scmp.ne.s32.totalorder %s581, %s583
      %p590 = scmp.eq.s32.totalorder %s48, 1
      %p591 = por %p589, %p590
      %p592 = scmp.ne.s32.totalorder %s583, %s584
      %p593 = scmp.eq.s32.totalorder %s48, 0
      %p594 = por %p592, %p593
      %p595 = scmp.ne.s32.totalorder %s583, %s584
      %p596 = scmp.eq.s32.totalorder %s49, 1
      %p597 = por %p595, %p596
      %p599 = scmp.ne.s32.totalorder %s584, %s598
      %p600 = scmp.eq.s32.totalorder %s49, 0
      %p601 = por %p599, %p600
      %s603 = sadd.s32 %s602, 1
      %p606 = scmp.eq.s32.totalorder %s43, 1
      %p607 = scmp.ne.s32.totalorder %s602, %s604
      %p608 = scmp.eq.s32.totalorder %s43, 0
      %p609 = por %p607, %p608
      %p610 = scmp.ne.s32.totalorder %s602, %s604
      %p611 = scmp.eq.s32.totalorder %s48, 1
      %p612 = por %p610, %p611
      %p613 = scmp.ne.s32.totalorder %s604, %s605
      %p614 = scmp.eq.s32.totalorder %s48, 0
      %p615 = por %p613, %p614
      %p616 = scmp.ne.s32.totalorder %s604, %s605
      %p617 = scmp.eq.s32.totalorder %s49, 1
      %p618 = por %p616, %p617
      %p620 = scmp.ne.s32.totalorder %s605, %s619
      %p621 = scmp.eq.s32.totalorder %s49, 0
      %p622 = por %p620, %p621
      %s623 = ssub.s32 %s43, %s50
      %p624 = scmp.eq.s32.totalorder %s623, 0
      %s626 = sadd.s32 %s625, 1
      %s627 = scalar_select %p624, %s625, %s626
      %p630 = pneg %p624
      %p631 = scmp.eq.s32.totalorder %s43, 1
      %p632 = por %p630, %p631
      %p633 = scmp.ne.s32.totalorder %s625, %s628
      %p634 = scmp.eq.s32.totalorder %s43, 0
      %p635 = por %p633, %p634
      %p636 = scmp.ne.s32.totalorder %s625, %s628
      %p637 = scmp.eq.s32.totalorder %s48, 1
      %p638 = por %p636, %p637
      %p639 = scmp.ne.s32.totalorder %s628, %s629
      %p640 = scmp.eq.s32.totalorder %s48, 0
      %p641 = por %p639, %p640
      %p642 = scmp.ne.s32.totalorder %s628, %s629
      %p643 = scmp.eq.s32.totalorder %s49, 1
      %p644 = por %p642, %p643
      %p646 = scmp.ne.s32.totalorder %s629, %s645
      %p647 = scmp.eq.s32.totalorder %s49, 0
      %p648 = por %p646, %p647
      %p649 = scmp.le.s32.totalorder 1, %s43
      %p650 = scmp.lt.s32.totalorder %s43, 3
      %p651 = pnand %p649, %p650
      %p652 = pneg %p651
      // Predicated region
      $region9: #{forward.1} parent=5 // pred_check
        _
      $region10: #{forward.1} parent=5 // pred_check_branch
        %654 = sbr.rel (%p651) target = $region12
      $region11: #{forward.1} parent=5 // pred_region
        %s655 = ssub.s32 %s43, 1
        // Predicated region
        $region13: #{forward.1} parent=11 // pred_check
          %p656 = pneg %p90
        $region14: #{forward.1} parent=11 // pred_check_branch
          %658 = sbr.rel (%p656) target = $region16
        $region15: #{forward.1} parent=11 // pred_region
          _
        $region16: #{forward.1} parent=11 // pred_fallthru
          _
        // Predicated region
        $region17: #{forward.1} parent=11 // pred_check
          %p659 = pneg %p111
        $region18: #{forward.1} parent=11 // pred_check_branch
          %661 = sbr.rel (%p659) target = $region20
        $region19: #{forward.1} parent=11 // pred_region
          _
        $region20: #{forward.1} parent=11 // pred_fallthru
          _
        // Predicated region
        $region21: #{forward.1} parent=11 // pred_check
          %p662 = pneg %p132
        $region22: #{forward.1} parent=11 // pred_check_branch
          %664 = sbr.rel (%p662) target = $region24
        $region23: #{forward.1} parent=11 // pred_region
          _
        $region24: #{forward.1} parent=11 // pred_fallthru
          _
        // Predicated region
        $region25: #{forward.1} parent=11 // pred_check
          %p665 = pneg %p153
        $region26: #{forward.1} parent=11 // pred_check_branch
          %667 = sbr.rel (%p665) target = $region28
        $region27: #{forward.1} parent=11 // pred_region
          _
        $region28: #{forward.1} parent=11 // pred_fallthru
          _
        // Predicated region
        $region29: #{forward.1} parent=11 // pred_check
          %p668 = pneg %p174
        $region30: #{forward.1} parent=11 // pred_check_branch
          %670 = sbr.rel (%p668) target = $region32
        $region31: #{forward.1} parent=11 // pred_region
          _
        $region32: #{forward.1} parent=11 // pred_fallthru
          _
        // Predicated region
        $region33: #{forward.1} parent=11 // pred_check
          %p671 = pneg %p195
        $region34: #{forward.1} parent=11 // pred_check_branch
          %673 = sbr.rel (%p671) target = $region36
        $region35: #{forward.1} parent=11 // pred_region
          _
        $region36: #{forward.1} parent=11 // pred_fallthru
          _
        // Predicated region
        $region37: #{forward.1} parent=11 // pred_check
          %p674 = pneg %p216
        $region38: #{forward.1} parent=11 // pred_check_branch
          %676 = sbr.rel (%p674) target = $region40
        $region39: #{forward.1} parent=11 // pred_region
          _
        $region40: #{forward.1} parent=11 // pred_fallthru
          _
        // Predicated region
        $region41: #{forward.1} parent=11 // pred_check
          %p677 = pneg %p237
        $region42: #{forward.1} parent=11 // pred_check_branch
          %679 = sbr.rel (%p677) target = $region44
        $region43: #{forward.1} parent=11 // pred_region
          _
        $region44: #{forward.1} parent=11 // pred_fallthru
          _
        // Predicated region
        $region45: #{forward.1} parent=11 // pred_check
          %p680 = pneg %p258
        $region46: #{forward.1} parent=11 // pred_check_branch
          %682 = sbr.rel (%p680) target = $region48
        $region47: #{forward.1} parent=11 // pred_region
          _
        $region48: #{forward.1} parent=11 // pred_fallthru
          _
        // Predicated region
        $region49: #{forward.1} parent=11 // pred_check
          %p683 = pneg %p279
        $region50: #{forward.1} parent=11 // pred_check_branch
          %685 = sbr.rel (%p683) target = $region52
        $region51: #{forward.1} parent=11 // pred_region
          _
        $region52: #{forward.1} parent=11 // pred_fallthru
          _
        // Predicated region
        $region53: #{forward.1} parent=11 // pred_check
          %p686 = pneg %p300
        $region54: #{forward.1} parent=11 // pred_check_branch
          %688 = sbr.rel (%p686) target = $region56
        $region55: #{forward.1} parent=11 // pred_region
          _
        $region56: #{forward.1} parent=11 // pred_fallthru
          _
        // Predicated region
        $region57: #{forward.1} parent=11 // pred_check
          %p689 = pneg %p321
        $region58: #{forward.1} parent=11 // pred_check_branch
          %691 = sbr.rel (%p689) target = $region60
        $region59: #{forward.1} parent=11 // pred_region
          _
        $region60: #{forward.1} parent=11 // pred_fallthru
          _
        // Predicated region
        $region61: #{forward.1} parent=11 // pred_check
          %p692 = pneg %p342
        $region62: #{forward.1} parent=11 // pred_check_branch
          %694 = sbr.rel (%p692) target = $region64
        $region63: #{forward.1} parent=11 // pred_region
          _
        $region64: #{forward.1} parent=11 // pred_fallthru
          _
        // Predicated region
        $region65: #{forward.1} parent=11 // pred_check
          %p695 = pneg %p363
        $region66: #{forward.1} parent=11 // pred_check_branch
          %697 = sbr.rel (%p695) target = $region68
        $region67: #{forward.1} parent=11 // pred_region
          _
        $region68: #{forward.1} parent=11 // pred_fallthru
          _
        // Predicated region
        $region69: #{forward.1} parent=11 // pred_check
          %p698 = pneg %p384
        $region70: #{forward.1} parent=11 // pred_check_branch
          %700 = sbr.rel (%p698) target = $region72
        $region71: #{forward.1} parent=11 // pred_region
          _
        $region72: #{forward.1} parent=11 // pred_fallthru
          _
        // Predicated region
        $region73: #{forward.1} parent=11 // pred_check
          %p701 = pneg %p405
        $region74: #{forward.1} parent=11 // pred_check_branch
          %703 = sbr.rel (%p701) target = $region76
        $region75: #{forward.1} parent=11 // pred_region
          _
        $region76: #{forward.1} parent=11 // pred_fallthru
          _
        // Predicated region
        $region77: #{forward.1} parent=11 // pred_check
          %p704 = pneg %p426
        $region78: #{forward.1} parent=11 // pred_check_branch
          %706 = sbr.rel (%p704) target = $region80
        $region79: #{forward.1} parent=11 // pred_region
          _
        $region80: #{forward.1} parent=11 // pred_fallthru
          _
        // Predicated region
        $region81: #{forward.1} parent=11 // pred_check
          %p707 = pneg %p447
        $region82: #{forward.1} parent=11 // pred_check_branch
          %709 = sbr.rel (%p707) target = $region84
        $region83: #{forward.1} parent=11 // pred_region
          _
        $region84: #{forward.1} parent=11 // pred_fallthru
          _
        // Predicated region
        $region85: #{forward.1} parent=11 // pred_check
          %p710 = pneg %p468
        $region86: #{forward.1} parent=11 // pred_check_branch
          %712 = sbr.rel (%p710) target = $region88
        $region87: #{forward.1} parent=11 // pred_region
          _
        $region88: #{forward.1} parent=11 // pred_fallthru
          _
        // Predicated region
        $region89: #{forward.1} parent=11 // pred_check
          %p713 = pneg %p489
        $region90: #{forward.1} parent=11 // pred_check_branch
          %715 = sbr.rel (%p713) target = $region92
        $region91: #{forward.1} parent=11 // pred_region
          _
        $region92: #{forward.1} parent=11 // pred_fallthru
          _
        // Predicated region
        $region93: #{forward.1} parent=11 // pred_check
          %p716 = pneg %p510
        $region94: #{forward.1} parent=11 // pred_check_branch
          %718 = sbr.rel (%p716) target = $region96
        $region95: #{forward.1} parent=11 // pred_region
          _
        $region96: #{forward.1} parent=11 // pred_fallthru
          _
        // Predicated region
        $region97: #{forward.1} parent=11 // pred_check
          %p719 = pneg %p531
        $region98: #{forward.1} parent=11 // pred_check_branch
          %721 = sbr.rel (%p719) target = $region100
        $region99: #{forward.1} parent=11 // pred_region
          _
        $region100: #{forward.1} parent=11 // pred_fallthru
          _
        // Predicated region
        $region101: #{forward.1} parent=11 // pred_check
          %p722 = pneg %p552
        $region102: #{forward.1} parent=11 // pred_check_branch
          %724 = sbr.rel (%p722) target = $region104
        $region103: #{forward.1} parent=11 // pred_region
          _
        $region104: #{forward.1} parent=11 // pred_fallthru
          _
        // Predicated region
        $region105: #{forward.1} parent=11 // pred_check
          %p725 = pneg %p573
        $region106: #{forward.1} parent=11 // pred_check_branch
          %727 = sbr.rel (%p725) target = $region108
        $region107: #{forward.1} parent=11 // pred_region
          _
        $region108: #{forward.1} parent=11 // pred_fallthru
          _
        // Predicated region
        $region109: #{forward.1} parent=11 // pred_check
          %p728 = pneg %p594
        $region110: #{forward.1} parent=11 // pred_check_branch
          %730 = sbr.rel (%p728) target = $region112
        $region111: #{forward.1} parent=11 // pred_region
          _
        $region112: #{forward.1} parent=11 // pred_fallthru
          _
        // Predicated region
        $region113: #{forward.1} parent=11 // pred_check
          %p731 = pneg %p615
        $region114: #{forward.1} parent=11 // pred_check_branch
          %733 = sbr.rel (%p731) target = $region116
        $region115: #{forward.1} parent=11 // pred_region
          _
        $region116: #{forward.1} parent=11 // pred_fallthru
          _
      $region12: #{forward.1} parent=5 // pred_fallthru
        _
      %p734 = scmp.lt.s32.totalorder %s43, 2
      // Predicated region
      $region117: #{forward.1} parent=5 // pred_check
        %p735 = pneg %p734
      $region118: #{forward.1} parent=5 // pred_check_branch
        %737 = sbr.rel (%p735) target = $region120
      $region119: #{forward.1} parent=5 // pred_region
        // Predicated region
        $region121: #{forward.1} parent=119 // pred_check
          %p738 = pneg %p63
        $region122: #{forward.1} parent=119 // pred_check_branch
          %740 = sbr.rel (%p738) target = $region124
        $region123: #{forward.1} parent=119 // pred_region
          %p741 = scmp.lt.s32.totalorder %s43, 1
          %s742 = scalar_select %p741, %s43, 1
          %s743 = scalar_lea.vmem %s1, %s742
        $region124: #{forward.1} parent=119 // pred_fallthru
          _
      $region120: #{forward.1} parent=5 // pred_fallthru
        _
      %p744 = scmp.le.s32.totalorder 1, %s43
      %p745 = scmp.lt.s32.totalorder %s43, 3
      %p746 = pnand %p744, %p745
      %p747 = pneg %p746
      // Predicated region
      $region125: #{forward.1} parent=5 // pred_check
        _
      $region126: #{forward.1} parent=5 // pred_check_branch
        %749 = sbr.rel (%p746) target = $region128
      $region127: #{forward.1} parent=5 // pred_region
        %s750 = ssub.s32 %s43, 1
        %p751 = scmp.lt.s32.totalorder %s48, 1
        %s752 = scalar_select %p751, %s48, 1
        %s753 = scalar_lea.vmem %s1, %s752
        %p754 = pneg %p69
        %p755 = pneg %p66
        %p756 = pneg %p90
        %p757 = pneg %p87
        %p758 = pneg %p111
        %p759 = pneg %p108
        %p760 = pneg %p132
        %p761 = pneg %p129
        %p762 = pneg %p153
        %p763 = pneg %p150
        %p764 = pneg %p174
        %p765 = pneg %p171
        %p766 = pneg %p195
        %p767 = pneg %p192
        %p768 = pneg %p216
        %p769 = pneg %p213
        %p770 = pneg %p237
        %p771 = pneg %p234
        %p772 = pneg %p258
        %p773 = pneg %p255
        %p774 = pneg %p279
        %p775 = pneg %p276
        %p776 = pneg %p300
        %p777 = pneg %p297
        %p778 = pneg %p321
        %p779 = pneg %p318
        %p780 = pneg %p342
        %p781 = pneg %p339
        %p782 = pneg %p363
        %p783 = pneg %p360
        %p784 = pneg %p384
        %p785 = pneg %p381
        %p786 = pneg %p405
        %p787 = pneg %p402
        %p788 = pneg %p426
        %p789 = pneg %p423
        %p790 = pneg %p447
        %p791 = pneg %p444
        %p792 = pneg %p468
        %p793 = pneg %p465
        %p794 = pneg %p489
        %p795 = pneg %p486
        %p796 = pneg %p510
        %p797 = pneg %p507
        %p798 = pneg %p531
        %p799 = pneg %p528
        %p800 = pneg %p552
        %p801 = pneg %p549
        %p802 = pneg %p573
        %p803 = pneg %p570
        %p804 = pneg %p594
        %p805 = pneg %p591
        %p806 = pneg %p615
        %p807 = pneg %p612
        %p808 = pneg %p641
        %p809 = pneg %p638
        %s810 = sand.u32 %s628, 1
        %s811 = scalar_lea.sflag [#allocation7], %s810
        %s812 = sand.u32 %s628, 1
        %s813 = scalar_lea.vmem [#allocation6], %s812
        %p814 = scmp.lt.s32.totalorder %s48, 1
        %s815 = scalar_select %p814, %s48, 1
        %s816 = scalar_lea.vmem %s1, %s815
        %v818 = vld [vmem:[%s2] sm:$0xff]
        %v819 = vld [vmem:[%s2 + $0x8] sm:$0xff]
        %v820 = vld [vmem:[%s2 + $0x10] sm:$0xff]
        %v821 = vld [vmem:[%s2 + $0x18] sm:$0xff]
        %v822 = vld [vmem:[%s2 + $0x20] sm:$0xff]
        %v823 = vld [vmem:[%s2 + $0x28] sm:$0xff]
        %v824 = vld [vmem:[%s2 + $0x30] sm:$0xff]
        %v825 = vld [vmem:[%s2 + $0x38] sm:$0xff]
        %v826 = vlaneseq
        %v827 = vshrl.u32 %v826, 7
        %v828 = vadd.s32 %v827, 8
        %v829 = vadd.s32 %v827, 16
        %v830 = vadd.s32 %v827, 24
        %v831 = vadd.s32 %v827, 32
        %v832 = vadd.s32 %v827, 40
        %v833 = vadd.s32 %v827, 48
        %v834 = vadd.s32 %v827, 56
        %s835 = smul.u32 %s48, 128
        %s836 = sld [smem:[#allocation5 + %s835]]
        %v837 = vstv %s836
        %vm838 = vcmp.eq.s32.totalorder %v827, %v837
        %vm839 = vcmp.eq.s32.totalorder %v828, %v837
        %vm840 = vcmp.eq.s32.totalorder %v829, %v837
        %vm841 = vcmp.eq.s32.totalorder %v830, %v837
        %vm842 = vcmp.eq.s32.totalorder %v831, %v837
        %vm843 = vcmp.eq.s32.totalorder %v832, %v837
        %vm844 = vcmp.eq.s32.totalorder %v833, %v837
        %vm845 = vcmp.eq.s32.totalorder %v834, %v837
        %v846 = vsel %vm838, 1, 0
        %v847 = vsel %vm839, 1, 0
        %v848 = vsel %vm840, 1, 0
        %v849 = vsel %vm841, 1, 0
        %v850 = vsel %vm842, 1, 0
        %v851 = vsel %vm843, 1, 0
        %v852 = vsel %vm844, 1, 0
        %v853 = vsel %vm845, 1, 0
        %vm854 = vcmp.eq.s32.totalorder %v846, 1
        %vm855 = vcmp.eq.s32.totalorder %v847, 1
        %vm856 = vcmp.eq.s32.totalorder %v848, 1
        %vm857 = vcmp.eq.s32.totalorder %v849, 1
        %vm858 = vcmp.eq.s32.totalorder %v850, 1
        %vm859 = vcmp.eq.s32.totalorder %v851, 1
        %vm860 = vcmp.eq.s32.totalorder %v852, 1
        %vm861 = vcmp.eq.s32.totalorder %v853, 1
        %v862 = vsel %vm854, %v818, 0.0
        %v863 = vsel %vm855, %v819, 0.0
        %v864 = vsel %vm856, %v820, 0.0
        %v865 = vsel %vm857, %v821, 0.0
        %v866 = vsel %vm858, %v822, 0.0
        %v867 = vsel %vm859, %v823, 0.0
        %v868 = vsel %vm860, %v824, 0.0
        %v869 = vsel %vm861, %v825, 0.0
        %vm870 = vcmask 261120
        %v871 = vsel %vm870, %v862, 0.0
        %v872 = vsel %vm870, %v863, 0.0
        %v873 = vadd.f32 %v871, %v872
        %v874 = vsel %vm870, %v864, 0.0
        %v875 = vadd.f32 %v873, %v874
        %v876 = vsel %vm870, %v865, 0.0
        %v877 = vadd.f32 %v875, %v876
        %v878 = vsel %vm870, %v866, 0.0
        %v879 = vadd.f32 %v877, %v878
        %v880 = vsel %vm870, %v867, 0.0
        %v881 = vadd.f32 %v879, %v880
        %v882 = vsel %vm870, %v868, 0.0
        %v883 = vadd.f32 %v881, %v882
        %v884 = vsel %vm870, %v869, 0.0
        %v885 = vadd.f32 %v883, %v884
        %v886 = vrot.slane %v885, 4
        %v887 = vadd.f32 %v885, %v886
        %v888 = vrot.slane %v887, 2
        %v889 = vadd.f32 %v887, %v888
        %v890 = vrot.slane %v889, 1
        %v891 = vadd.f32 %v889, %v890
        %s892 = sadd.s32 %s835, 1
        %s893 = sld [smem:[#allocation5 + %s892]]
        %v894 = vstv %s893
        %vm895 = vcmp.eq.s32.totalorder %v827, %v894
        %vm896 = vcmp.eq.s32.totalorder %v828, %v894
        %vm897 = vcmp.eq.s32.totalorder %v829, %v894
        %vm898 = vcmp.eq.s32.totalorder %v830, %v894
        %vm899 = vcmp.eq.s32.totalorder %v831, %v894
        %vm900 = vcmp.eq.s32.totalorder %v832, %v894
        %vm901 = vcmp.eq.s32.totalorder %v833, %v894
        %vm902 = vcmp.eq.s32.totalorder %v834, %v894
        %v903 = vsel %vm895, 1, 0
        %v904 = vsel %vm896, 1, 0
        %v905 = vsel %vm897, 1, 0
        %v906 = vsel %vm898, 1, 0
        %v907 = vsel %vm899, 1, 0
        %v908 = vsel %vm900, 1, 0
        %v909 = vsel %vm901, 1, 0
        %v910 = vsel %vm902, 1, 0
        %vm911 = vcmp.eq.s32.totalorder %v903, 1
        %vm912 = vcmp.eq.s32.totalorder %v904, 1
        %vm913 = vcmp.eq.s32.totalorder %v905, 1
        %vm914 = vcmp.eq.s32.totalorder %v906, 1
        %vm915 = vcmp.eq.s32.totalorder %v907, 1
        %vm916 = vcmp.eq.s32.totalorder %v908, 1
        %vm917 = vcmp.eq.s32.totalorder %v909, 1
        %vm918 = vcmp.eq.s32.totalorder %v910, 1
        %v919 = vsel %vm911, %v818, 0.0
        %v920 = vsel %vm912, %v819, 0.0
        %v921 = vsel %vm913, %v820, 0.0
        %v922 = vsel %vm914, %v821, 0.0
        %v923 = vsel %vm915, %v822, 0.0
        %v924 = vsel %vm916, %v823, 0.0
        %v925 = vsel %vm917, %v824, 0.0
        %v926 = vsel %vm918, %v825, 0.0
        %v927 = vsel %vm870, %v919, 0.0
        %v928 = vsel %vm870, %v920, 0.0
        %v929 = vadd.f32 %v927, %v928
        %v930 = vsel %vm870, %v921, 0.0
        %v931 = vadd.f32 %v929, %v930
        %v932 = vsel %vm870, %v922, 0.0
        %v933 = vadd.f32 %v931, %v932
        %v934 = vsel %vm870, %v923, 0.0
        %v935 = vadd.f32 %v933, %v934
        %v936 = vsel %vm870, %v924, 0.0
        %v937 = vadd.f32 %v935, %v936
        %v938 = vsel %vm870, %v925, 0.0
        %v939 = vadd.f32 %v937, %v938
        %v940 = vsel %vm870, %v926, 0.0
        %v941 = vadd.f32 %v939, %v940
        %v942 = vrot.slane %v941, 4
        %v943 = vadd.f32 %v941, %v942
        %v944 = vrot.slane %v943, 2
        %v945 = vadd.f32 %v943, %v944
        %v946 = vrot.slane %v945, 1
        %v947 = vadd.f32 %v945, %v946
        %s948 = sadd.s32 %s835, 2
        %s949 = sld [smem:[#allocation5 + %s948]]
        %v950 = vstv %s949
        %vm951 = vcmp.eq.s32.totalorder %v827, %v950
        %vm952 = vcmp.eq.s32.totalorder %v828, %v950
        %vm953 = vcmp.eq.s32.totalorder %v829, %v950
        %vm954 = vcmp.eq.s32.totalorder %v830, %v950
        %vm955 = vcmp.eq.s32.totalorder %v831, %v950
        %vm956 = vcmp.eq.s32.totalorder %v832, %v950
        %vm957 = vcmp.eq.s32.totalorder %v833, %v950
        %vm958 = vcmp.eq.s32.totalorder %v834, %v950
        %v959 = vsel %vm951, 1, 0
        %v960 = vsel %vm952, 1, 0
        %v961 = vsel %vm953, 1, 0
        %v962 = vsel %vm954, 1, 0
        %v963 = vsel %vm955, 1, 0
        %v964 = vsel %vm956, 1, 0
        %v965 = vsel %vm957, 1, 0
        %v966 = vsel %vm958, 1, 0
        %vm967 = vcmp.eq.s32.totalorder %v959, 1
        %vm968 = vcmp.eq.s32.totalorder %v960, 1
        %vm969 = vcmp.eq.s32.totalorder %v961, 1
        %vm970 = vcmp.eq.s32.totalorder %v962, 1
        %vm971 = vcmp.eq.s32.totalorder %v963, 1
        %vm972 = vcmp.eq.s32.totalorder %v964, 1
        %vm973 = vcmp.eq.s32.totalorder %v965, 1
        %vm974 = vcmp.eq.s32.totalorder %v966, 1
        %v975 = vsel %vm967, %v818, 0.0
        %v976 = vsel %vm968, %v819, 0.0
        %v977 = vsel %vm969, %v820, 0.0
        %v978 = vsel %vm970, %v821, 0.0
        %v979 = vsel %vm971, %v822, 0.0
        %v980 = vsel %vm972, %v823, 0.0
        %v981 = vsel %vm973, %v824, 0.0
        %v982 = vsel %vm974, %v825, 0.0
        %v983 = vsel %vm870, %v975, 0.0
        %v984 = vsel %vm870, %v976, 0.0
        %v985 = vadd.f32 %v983, %v984
        %v986 = vsel %vm870, %v977, 0.0
        %v987 = vadd.f32 %v985, %v986
        %v988 = vsel %vm870, %v978, 0.0
        %v989 = vadd.f32 %v987, %v988
        %v990 = vsel %vm870, %v979, 0.0
        %v991 = vadd.f32 %v989, %v990
        %v992 = vsel %vm870, %v980, 0.0
        %v993 = vadd.f32 %v991, %v992
        %v994 = vsel %vm870, %v981, 0.0
        %v995 = vadd.f32 %v993, %v994
        %v996 = vsel %vm870, %v982, 0.0
        %v997 = vadd.f32 %v995, %v996
        %v998 = vrot.slane %v997, 4
        %v999 = vadd.f32 %v997, %v998
        %v1000 = vrot.slane %v999, 2
        %v1001 = vadd.f32 %v999, %v1000
        %v1002 = vrot.slane %v1001, 1
        %v1003 = vadd.f32 %v1001, %v1002
        %s1004 = sadd.s32 %s835, 3
        %s1005 = sld [smem:[#allocation5 + %s1004]]
        %v1006 = vstv %s1005
        %vm1007 = vcmp.eq.s32.totalorder %v827, %v1006
        %vm1008 = vcmp.eq.s32.totalorder %v828, %v1006
        %vm1009 = vcmp.eq.s32.totalorder %v829, %v1006
        %vm1010 = vcmp.eq.s32.totalorder %v830, %v1006
        %vm1011 = vcmp.eq.s32.totalorder %v831, %v1006
        %vm1012 = vcmp.eq.s32.totalorder %v832, %v1006
        %vm1013 = vcmp.eq.s32.totalorder %v833, %v1006
        %vm1014 = vcmp.eq.s32.totalorder %v834, %v1006
        %v1015 = vsel %vm1007, 1, 0
        %v1016 = vsel %vm1008, 1, 0
        %v1017 = vsel %vm1009, 1, 0
        %v1018 = vsel %vm1010, 1, 0
        %v1019 = vsel %vm1011, 1, 0
        %v1020 = vsel %vm1012, 1, 0
        %v1021 = vsel %vm1013, 1, 0
        %v1022 = vsel %vm1014, 1, 0
        %vm1023 = vcmp.eq.s32.totalorder %v1015, 1
        %vm1024 = vcmp.eq.s32.totalorder %v1016, 1
        %vm1025 = vcmp.eq.s32.totalorder %v1017, 1
        %vm1026 = vcmp.eq.s32.totalorder %v1018, 1
        %vm1027 = vcmp.eq.s32.totalorder %v1019, 1
        %vm1028 = vcmp.eq.s32.totalorder %v1020, 1
        %vm1029 = vcmp.eq.s32.totalorder %v1021, 1
        %vm1030 = vcmp.eq.s32.totalorder %v1022, 1
        %v1031 = vsel %vm1023, %v818, 0.0
        %v1032 = vsel %vm1024, %v819, 0.0
        %v1033 = vsel %vm1025, %v820, 0.0
        %v1034 = vsel %vm1026, %v821, 0.0
        %v1035 = vsel %vm1027, %v822, 0.0
        %v1036 = vsel %vm1028, %v823, 0.0
        %v1037 = vsel %vm1029, %v824, 0.0
        %v1038 = vsel %vm1030, %v825, 0.0
        %v1039 = vsel %vm870, %v1031, 0.0
        %v1040 = vsel %vm870, %v1032, 0.0
        %v1041 = vadd.f32 %v1039, %v1040
        %v1042 = vsel %vm870, %v1033, 0.0
        %v1043 = vadd.f32 %v1041, %v1042
        %v1044 = vsel %vm870, %v1034, 0.0
        %v1045 = vadd.f32 %v1043, %v1044
        %v1046 = vsel %vm870, %v1035, 0.0
        %v1047 = vadd.f32 %v1045, %v1046
        %v1048 = vsel %vm870, %v1036, 0.0
        %v1049 = vadd.f32 %v1047, %v1048
        %v1050 = vsel %vm870, %v1037, 0.0
        %v1051 = vadd.f32 %v1049, %v1050
        %v1052 = vsel %vm870, %v1038, 0.0
        %v1053 = vadd.f32 %v1051, %v1052
        %v1054 = vrot.slane %v1053, 4
        %v1055 = vadd.f32 %v1053, %v1054
        %v1056 = vrot.slane %v1055, 2
        %v1057 = vadd.f32 %v1055, %v1056
        %v1058 = vrot.slane %v1057, 1
        %v1059 = vadd.f32 %v1057, %v1058
        %s1060 = sadd.s32 %s835, 4
        %s1061 = sld [smem:[#allocation5 + %s1060]]
        %v1062 = vstv %s1061
        %vm1063 = vcmp.eq.s32.totalorder %v827, %v1062
        %vm1064 = vcmp.eq.s32.totalorder %v828, %v1062
        %vm1065 = vcmp.eq.s32.totalorder %v829, %v1062
        %vm1066 = vcmp.eq.s32.totalorder %v830, %v1062
        %vm1067 = vcmp.eq.s32.totalorder %v831, %v1062
        %vm1068 = vcmp.eq.s32.totalorder %v832, %v1062
        %vm1069 = vcmp.eq.s32.totalorder %v833, %v1062
        %vm1070 = vcmp.eq.s32.totalorder %v834, %v1062
        %v1071 = vsel %vm1063, 1, 0
        %v1072 = vsel %vm1064, 1, 0
        %v1073 = vsel %vm1065, 1, 0
        %v1074 = vsel %vm1066, 1, 0
        %v1075 = vsel %vm1067, 1, 0
        %v1076 = vsel %vm1068, 1, 0
        %v1077 = vsel %vm1069, 1, 0
        %v1078 = vsel %vm1070, 1, 0
        %vm1079 = vcmp.eq.s32.totalorder %v1071, 1
        %vm1080 = vcmp.eq.s32.totalorder %v1072, 1
        %vm1081 = vcmp.eq.s32.totalorder %v1073, 1
        %vm1082 = vcmp.eq.s32.totalorder %v1074, 1
        %vm1083 = vcmp.eq.s32.totalorder %v1075, 1
        %vm1084 = vcmp.eq.s32.totalorder %v1076, 1
        %vm1085 = vcmp.eq.s32.totalorder %v1077, 1
        %vm1086 = vcmp.eq.s32.totalorder %v1078, 1
        %v1087 = vsel %vm1079, %v818, 0.0
        %v1088 = vsel %vm1080, %v819, 0.0
        %v1089 = vsel %vm1081, %v820, 0.0
        %v1090 = vsel %vm1082, %v821, 0.0
        %v1091 = vsel %vm1083, %v822, 0.0
        %v1092 = vsel %vm1084, %v823, 0.0
        %v1093 = vsel %vm1085, %v824, 0.0
        %v1094 = vsel %vm1086, %v825, 0.0
        %v1095 = vsel %vm870, %v1087, 0.0
        %v1096 = vsel %vm870, %v1088, 0.0
        %v1097 = vadd.f32 %v1095, %v1096
        %v1098 = vsel %vm870, %v1089, 0.0
        %v1099 = vadd.f32 %v1097, %v1098
        %v1100 = vsel %vm870, %v1090, 0.0
        %v1101 = vadd.f32 %v1099, %v1100
        %v1102 = vsel %vm870, %v1091, 0.0
        %v1103 = vadd.f32 %v1101, %v1102
        %v1104 = vsel %vm870, %v1092, 0.0
        %v1105 = vadd.f32 %v1103, %v1104
        %v1106 = vsel %vm870, %v1093, 0.0
        %v1107 = vadd.f32 %v1105, %v1106
        %v1108 = vsel %vm870, %v1094, 0.0
        %v1109 = vadd.f32 %v1107, %v1108
        %v1110 = vrot.slane %v1109, 4
        %v1111 = vadd.f32 %v1109, %v1110
        %v1112 = vrot.slane %v1111, 2
        %v1113 = vadd.f32 %v1111, %v1112
        %v1114 = vrot.slane %v1113, 1
        %v1115 = vadd.f32 %v1113, %v1114
        %s1116 = sadd.s32 %s835, 5
        %s1117 = sld [smem:[#allocation5 + %s1116]]
        %v1118 = vstv %s1117
        %vm1119 = vcmp.eq.s32.totalorder %v827, %v1118
        %vm1120 = vcmp.eq.s32.totalorder %v828, %v1118
        %vm1121 = vcmp.eq.s32.totalorder %v829, %v1118
        %vm1122 = vcmp.eq.s32.totalorder %v830, %v1118
        %vm1123 = vcmp.eq.s32.totalorder %v831, %v1118
        %vm1124 = vcmp.eq.s32.totalorder %v832, %v1118
        %vm1125 = vcmp.eq.s32.totalorder %v833, %v1118
        %vm1126 = vcmp.eq.s32.totalorder %v834, %v1118
        %v1127 = vsel %vm1119, 1, 0
        %v1128 = vsel %vm1120, 1, 0
        %v1129 = vsel %vm1121, 1, 0
        %v1130 = vsel %vm1122, 1, 0
        %v1131 = vsel %vm1123, 1, 0
        %v1132 = vsel %vm1124, 1, 0
        %v1133 = vsel %vm1125, 1, 0
        %v1134 = vsel %vm1126, 1, 0
        %vm1135 = vcmp.eq.s32.totalorder %v1127, 1
        %vm1136 = vcmp.eq.s32.totalorder %v1128, 1
        %vm1137 = vcmp.eq.s32.totalorder %v1129, 1
        %vm1138 = vcmp.eq.s32.totalorder %v1130, 1
        %vm1139 = vcmp.eq.s32.totalorder %v1131, 1
        %vm1140 = vcmp.eq.s32.totalorder %v1132, 1
        %vm1141 = vcmp.eq.s32.totalorder %v1133, 1
        %vm1142 = vcmp.eq.s32.totalorder %v1134, 1
        %v1143 = vsel %vm1135, %v818, 0.0
        %v1144 = vsel %vm1136, %v819, 0.0
        %v1145 = vsel %vm1137, %v820, 0.0
        %v1146 = vsel %vm1138, %v821, 0.0
        %v1147 = vsel %vm1139, %v822, 0.0
        %v1148 = vsel %vm1140, %v823, 0.0
        %v1149 = vsel %vm1141, %v824, 0.0
        %v1150 = vsel %vm1142, %v825, 0.0
        %v1151 = vsel %vm870, %v1143, 0.0
        %v1152 = vsel %vm870, %v1144, 0.0
        %v1153 = vadd.f32 %v1151, %v1152
        %v1154 = vsel %vm870, %v1145, 0.0
        %v1155 = vadd.f32 %v1153, %v1154
        %v1156 = vsel %vm870, %v1146, 0.0
        %v1157 = vadd.f32 %v1155, %v1156
        %v1158 = vsel %vm870, %v1147, 0.0
        %v1159 = vadd.f32 %v1157, %v1158
        %v1160 = vsel %vm870, %v1148, 0.0
        %v1161 = vadd.f32 %v1159, %v1160
        %v1162 = vsel %vm870, %v1149, 0.0
        %v1163 = vadd.f32 %v1161, %v1162
        %v1164 = vsel %vm870, %v1150, 0.0
        %v1165 = vadd.f32 %v1163, %v1164
        %v1166 = vrot.slane %v1165, 4
        %v1167 = vadd.f32 %v1165, %v1166
        %v1168 = vrot.slane %v1167, 2
        %v1169 = vadd.f32 %v1167, %v1168
        %v1170 = vrot.slane %v1169, 1
        %v1171 = vadd.f32 %v1169, %v1170
        %s1172 = sadd.s32 %s835, 6
        %s1173 = sld [smem:[#allocation5 + %s1172]]
        %v1174 = vstv %s1173
        %vm1175 = vcmp.eq.s32.totalorder %v827, %v1174
        %vm1176 = vcmp.eq.s32.totalorder %v828, %v1174
        %vm1177 = vcmp.eq.s32.totalorder %v829, %v1174
        %vm1178 = vcmp.eq.s32.totalorder %v830, %v1174
        %vm1179 = vcmp.eq.s32.totalorder %v831, %v1174
        %vm1180 = vcmp.eq.s32.totalorder %v832, %v1174
        %vm1181 = vcmp.eq.s32.totalorder %v833, %v1174
        %vm1182 = vcmp.eq.s32.totalorder %v834, %v1174
        %v1183 = vsel %vm1175, 1, 0
        %v1184 = vsel %vm1176, 1, 0
        %v1185 = vsel %vm1177, 1, 0
        %v1186 = vsel %vm1178, 1, 0
        %v1187 = vsel %vm1179, 1, 0
        %v1188 = vsel %vm1180, 1, 0
        %v1189 = vsel %vm1181, 1, 0
        %v1190 = vsel %vm1182, 1, 0
        %vm1191 = vcmp.eq.s32.totalorder %v1183, 1
        %vm1192 = vcmp.eq.s32.totalorder %v1184, 1
        %vm1193 = vcmp.eq.s32.totalorder %v1185, 1
        %vm1194 = vcmp.eq.s32.totalorder %v1186, 1
        %vm1195 = vcmp.eq.s32.totalorder %v1187, 1
        %vm1196 = vcmp.eq.s32.totalorder %v1188, 1
        %vm1197 = vcmp.eq.s32.totalorder %v1189, 1
        %vm1198 = vcmp.eq.s32.totalorder %v1190, 1
        %v1199 = vsel %vm1191, %v818, 0.0
        %v1200 = vsel %vm1192, %v819, 0.0
        %v1201 = vsel %vm1193, %v820, 0.0
        %v1202 = vsel %vm1194, %v821, 0.0
        %v1203 = vsel %vm1195, %v822, 0.0
        %v1204 = vsel %vm1196, %v823, 0.0
        %v1205 = vsel %vm1197, %v824, 0.0
        %v1206 = vsel %vm1198, %v825, 0.0
        %v1207 = vsel %vm870, %v1199, 0.0
        %v1208 = vsel %vm870, %v1200, 0.0
        %v1209 = vadd.f32 %v1207, %v1208
        %v1210 = vsel %vm870, %v1201, 0.0
        %v1211 = vadd.f32 %v1209, %v1210
        %v1212 = vsel %vm870, %v1202, 0.0
        %v1213 = vadd.f32 %v1211, %v1212
        %v1214 = vsel %vm870, %v1203, 0.0
        %v1215 = vadd.f32 %v1213, %v1214
        %v1216 = vsel %vm870, %v1204, 0.0
        %v1217 = vadd.f32 %v1215, %v1216
        %v1218 = vsel %vm870, %v1205, 0.0
        %v1219 = vadd.f32 %v1217, %v1218
        %v1220 = vsel %vm870, %v1206, 0.0
        %v1221 = vadd.f32 %v1219, %v1220
        %v1222 = vrot.slane %v1221, 4
        %v1223 = vadd.f32 %v1221, %v1222
        %v1224 = vrot.slane %v1223, 2
        %v1225 = vadd.f32 %v1223, %v1224
        %v1226 = vrot.slane %v1225, 1
        %v1227 = vadd.f32 %v1225, %v1226
        %s1228 = sadd.s32 %s835, 7
        %s1229 = sld [smem:[#allocation5 + %s1228]]
        %v1230 = vstv %s1229
        %vm1231 = vcmp.eq.s32.totalorder %v827, %v1230
        %vm1232 = vcmp.eq.s32.totalorder %v828, %v1230
        %vm1233 = vcmp.eq.s32.totalorder %v829, %v1230
        %vm1234 = vcmp.eq.s32.totalorder %v830, %v1230
        %vm1235 = vcmp.eq.s32.totalorder %v831, %v1230
        %vm1236 = vcmp.eq.s32.totalorder %v832, %v1230
        %vm1237 = vcmp.eq.s32.totalorder %v833, %v1230
        %vm1238 = vcmp.eq.s32.totalorder %v834, %v1230
        %v1239 = vsel %vm1231, 1, 0
        %v1240 = vsel %vm1232, 1, 0
        %v1241 = vsel %vm1233, 1, 0
        %v1242 = vsel %vm1234, 1, 0
        %v1243 = vsel %vm1235, 1, 0
        %v1244 = vsel %vm1236, 1, 0
        %v1245 = vsel %vm1237, 1, 0
        %v1246 = vsel %vm1238, 1, 0
        %vm1247 = vcmp.eq.s32.totalorder %v1239, 1
        %vm1248 = vcmp.eq.s32.totalorder %v1240, 1
        %vm1249 = vcmp.eq.s32.totalorder %v1241, 1
        %vm1250 = vcmp.eq.s32.totalorder %v1242, 1
        %vm1251 = vcmp.eq.s32.totalorder %v1243, 1
        %vm1252 = vcmp.eq.s32.totalorder %v1244, 1
        %vm1253 = vcmp.eq.s32.totalorder %v1245, 1
        %vm1254 = vcmp.eq.s32.totalorder %v1246, 1
        %v1255 = vsel %vm1247, %v818, 0.0
        %v1256 = vsel %vm1248, %v819, 0.0
        %v1257 = vsel %vm1249, %v820, 0.0
        %v1258 = vsel %vm1250, %v821, 0.0
        %v1259 = vsel %vm1251, %v822, 0.0
        %v1260 = vsel %vm1252, %v823, 0.0
        %v1261 = vsel %vm1253, %v824, 0.0
        %v1262 = vsel %vm1254, %v825, 0.0
        %v1263 = vsel %vm870, %v1255, 0.0
        %v1264 = vsel %vm870, %v1256, 0.0
        %v1265 = vadd.f32 %v1263, %v1264
        %v1266 = vsel %vm870, %v1257, 0.0
        %v1267 = vadd.f32 %v1265, %v1266
        %v1268 = vsel %vm870, %v1258, 0.0
        %v1269 = vadd.f32 %v1267, %v1268
        %v1270 = vsel %vm870, %v1259, 0.0
        %v1271 = vadd.f32 %v1269, %v1270
        %v1272 = vsel %vm870, %v1260, 0.0
        %v1273 = vadd.f32 %v1271, %v1272
        %v1274 = vsel %vm870, %v1261, 0.0
        %v1275 = vadd.f32 %v1273, %v1274
        %v1276 = vsel %vm870, %v1262, 0.0
        %v1277 = vadd.f32 %v1275, %v1276
        %v1278 = vrot.slane %v1277, 4
        %v1279 = vadd.f32 %v1277, %v1278
        %v1280 = vrot.slane %v1279, 2
        %v1281 = vadd.f32 %v1279, %v1280
        %v1282 = vrot.slane %v1281, 1
        %v1283 = vadd.f32 %v1281, %v1282
        %vm1284 = vcmask 1040384
        %v1285 = vsel %vm1284, %v891, %v947
        %vm1286 = vcmask 1041408
        %v1287 = vsel %vm1286, %v1285, %v1003
        %vm1288 = vcmask 1042432
        %v1289 = vsel %vm1288, %v1287, %v1059
        %vm1290 = vcmask 1043456
        %v1291 = vsel %vm1290, %v1289, %v1115
        %vm1292 = vcmask 1044480
        %v1293 = vsel %vm1292, %v1291, %v1171
        %vm1294 = vcmask 1045504
        %v1295 = vsel %vm1294, %v1293, %v1227
        %vm1296 = vcmask 1046528
        %v1297 = vsel %vm1296, %v1295, %v1283
        %v1298 = vld [vmem:[%s3] sm:$0xff]
        %v1299 = vadd.f32 %v1297, %v1298
        %v1300 = vld [vmem:[%s4] sm:$0x1]
        %v1302 = vlaneseq
        %v1303 = vshrl.u32 %v1302, 7
        %v1304 = vsub.s32 0, %v1303
        %v1305 = vrot.slane %v1300, %v1304
        %v1307 = vadd.f32 %v1299, %v1305
        %v1308 = vld [vmem:[%s5] sm:$0x1]
        %v1309 = vld [vmem:[%s6] sm:$0x1]
        %v1310 = vsel %vm870, %v1307, 0.0
        %1311 = vadd.xlane.f32.xlu0 %v1310
        %v1312 = vpop.xlane.xlu0 %1311
        %v1313 = vrcp.pop 32.0
        %v1314 = vmul.f32 %v1312, %v1313
        %v1315 = vsub.f32 %v1307, %v1314
        %v1316 = vmul.f32 %v1315, %v1315
        %v1317 = vsel %vm870, %v1316, 0.0
        %1318 = vadd.xlane.f32.xlu0 %v1317
        %v1319 = vpop.xlane.xlu0 %1318
        %v1320 = vmul.f32 %v1319, %v1313
        %v1321 = vadd.f32 %v1320, 1e-12
        %v1322 = vrsqrt.pop %v1321
        %v1323 = vmul.f32 %v1315, %v1322
        %v1325 = vlaneseq
        %v1326 = vshrl.u32 %v1325, 7
        %v1327 = vsub.s32 0, %v1326
        %v1328 = vrot.slane %v1308, %v1327
        %v1330 = vmul.f32 %v1323, %v1328
        %v1332 = vlaneseq
        %v1333 = vshrl.u32 %v1332, 7
        %v1334 = vsub.s32 0, %v1333
        %v1335 = vrot.slane %v1309, %v1334
        %v1337 = vadd.f32 %v1330, %v1335
        %v1338 = vld [vmem:[%s816] sm:$0x1]
        %v1339 = vcvt.s32.f32 %v1338
        %v1340 = vsub.f32 1.0, %v1339
        %v1341 = vmul.f32 %v1340, -10000.0
        %v1342 = vpack.c.bf16 %v1337, %v1337
        %v1343 = vld [vmem:[%s7] sm:$0xf]
        %v1344 = vld [vmem:[%s7 + $0x4] sm:$0xf]
        %v1345 = vld [vmem:[%s7 + $0x8] sm:$0xf]
        %v1346 = vld [vmem:[%s7 + $0xc] sm:$0xf]
        %v1347 = vld [vmem:[%s8] sm:$0x1]
        %v1349 = vlaneseq
        %v1350 = vshrl.u32 %v1349, 7
        %v1351 = vsub.s32 0, %v1350
        %v1352 = vrot.slane %v1347, %v1351
        %v1358 = vunpack.c.l.b16 %v1343
        %v1359 = vunpack.c.l.b16 %v1344
        %v1360 = vunpack.c.l.b16 %v1345
        %v1361 = vunpack.c.l.b16 %v1346
        %v1362 = vpack.c.b16 %v1359, %v1358
        %v1363 = vpack.c.b16 %v1361, %v1360
        %v1367 = vsel %vm870, %v1342, 0
        %1369 = vmatprep.subr.bf16.mxu0 0
        %1370 = vmatpush1.bf16.msra.mxu0 %v1362
        %1371 = vmatprep.subr.bf16.mxu0 0
        %1372 = vmatpush1.bf16.msra.mxu0 %v1363
        %1373 = vmatprep.subr.bf16.mxu0 0
        %1374 = vmatpush1.bf16.msra.mxu0 0
        %1375 = vmatprep.subr.bf16.mxu0 0
        %1376 = vmatpush1.bf16.msra.mxu0 0
        %1377 = vmatprep.subr.bf16.mxu0 0
        %1378 = vmatpush1.bf16.msra.mxu0 0
        %1379 = vmatprep.subr.bf16.mxu0 0
        %1380 = vmatpush1.bf16.msra.mxu0 0
        %1381 = vmatprep.subr.bf16.mxu0 0
        %1382 = vmatpush1.bf16.msra.mxu0 0
        %1383 = vmatprep.subr.bf16.mxu0 0
        %1384 = vmatpush1.bf16.msra.mxu0 0
        %1385 = vmatprep.subr.bf16.mxu0 0
        %1386 = vmatpush1.bf16.msra.mxu0 0
        %1387 = vmatprep.subr.bf16.mxu0 0
        %1388 = vmatpush1.bf16.msra.mxu0 0
        %1389 = vmatprep.subr.bf16.mxu0 0
        %1390 = vmatpush1.bf16.msra.mxu0 0
        %1391 = vmatprep.subr.bf16.mxu0 0
        %1392 = vmatpush1.bf16.msra.mxu0 0
        %1393 = vmatprep.subr.bf16.mxu0 0
        %1394 = vmatpush1.bf16.msra.mxu0 0
        %1395 = vmatprep.subr.bf16.mxu0 0
        %1396 = vmatpush1.bf16.msra.mxu0 0
        %1397 = vmatprep.subr.bf16.mxu0 0
        %1398 = vmatpush1.bf16.msra.mxu0 0
        %1399 = vmatprep.subr.bf16.mxu0 0
        %1400 = vmatpush1.bf16.msra.mxu0 0
        %1401 = vmatprep.mubr.bf16.mxu0 0
        %1402 = vmatmul.mubr.bf16.gmra.mrb[0].mxu0 %v1367
        %v1403 = vpop.f32.mrb[0].mxu0
        %v1404 = vadd.f32 %v1352, %v1403
        %v1405 = vpop.f32.mrb[0].mxu0
        %v1406 = vpop.f32.mrb[0].mxu0
        %v1407 = vpop.f32.mrb[0].mxu0
        %1408 = vdwg.mxu0
        %v1409 = vld [vmem:[%s9] sm:$0xf]
        %v1410 = vld [vmem:[%s9 + $0x4] sm:$0xf]
        %v1411 = vld [vmem:[%s9 + $0x8] sm:$0xf]
        %v1412 = vld [vmem:[%s9 + $0xc] sm:$0xf]
        %v1413 = vpack.c.bf16 %v1404, %v1404
        %1415 = vrot.lane.b32.xlu0 %v1413, 112
        %v1416 = vpop.permute.xlu0 %1415
        %vm1417 = vcmask 130048
        %v1419 = vsel %vm1417, %v1413, 0
        %v1422 = vsel %vm1417, %v1416, 0
        %1424 = vmatprep.subr.bf16.mxu0 0
        %1425 = vmatpush1.bf16.xpose.msra.mxu0 %v1422
        %1426 = vmatprep.subr.bf16.mxu0 0
        %1427 = vmatpush1.bf16.xpose.msra.mxu0 0
        %1428 = vmatprep.subr.bf16.mxu0 0
        %1429 = vmatpush1.bf16.xpose.msra.mxu0 0
        %1430 = vmatprep.subr.bf16.mxu0 0
        %1431 = vmatpush1.bf16.xpose.msra.mxu0 0
        %1432 = vmatprep.subr.bf16.mxu0 0
        %1433 = vmatpush1.bf16.xpose.msra.mxu0 0
        %1434 = vmatprep.subr.bf16.mxu0 0
        %1435 = vmatpush1.bf16.xpose.msra.mxu0 0
        %1436 = vmatprep.subr.bf16.mxu0 0
        %1437 = vmatpush1.bf16.xpose.msra.mxu0 0
        %1438 = vmatprep.subr.bf16.mxu0 0
        %1439 = vmatpush1.bf16.xpose.msra.mxu0 0
        %1440 = vmatprep.subr.bf16.mxu0 0
        %1441 = vmatpush1.bf16.xpose.msra.mxu0 0
        %1442 = vmatprep.subr.bf16.mxu0 0
        %1443 = vmatpush1.bf16.xpose.msra.mxu0 0
        %1444 = vmatprep.subr.bf16.mxu0 0
        %1445 = vmatpush1.bf16.xpose.msra.mxu0 0
        %1446 = vmatprep.subr.bf16.mxu0 0
        %1447 = vmatpush1.bf16.xpose.msra.mxu0 0
        %1448 = vmatprep.subr.bf16.mxu0 0
        %1449 = vmatpush1.bf16.xpose.msra.mxu0 0
        %1450 = vmatprep.subr.bf16.mxu0 0
        %1451 = vmatpush1.bf16.xpose.msra.mxu0 0
        %1452 = vmatprep.subr.bf16.mxu0 0
        %1453 = vmatpush1.bf16.xpose.msra.mxu0 0
        %1454 = vmatprep.subr.bf16.mxu0 0
        %1455 = vmatpush1.bf16.xpose.msra.mxu0 0
        %1456 = vmatprep.mubr.bf16.mxu0 0
        %1457 = vmatmul.mubr.bf16.gmra.mrb[0].mxu0 %v1419
        %v1458 = vpop.f32.mrb[0].mxu0
        %v1459 = vadd.f32 0.0, %v1458
        %v1460 = vpop.f32.mrb[0].mxu0
        %v1461 = vpop.f32.mrb[0].mxu0
        %v1462 = vpop.f32.mrb[0].mxu0
        %1463 = vdwg.mxu0
        %v1464 = vmul.f32 %v1459, 0.25
        %v1466 = vlaneseq
        %v1467 = vshrl.u32 %v1466, 7
        %v1468 = vsub.s32 0, %v1467
        %v1469 = vrot.slane %v1341, %v1468
        %v1471 = vadd.f32 %v1464, %v1469
        %vm1472 = vcmask 64512
        %v1473 = vsel %vm1472, %v1471, -inf
        %1474 = vmax.xlane.f32.xlu0 %v1473
        %v1475 = vpop.xlane.xlu0 %1474
        %v1476 = vsub.f32 %v1471, %v1475
        %v1477 = vmul.f32 %v1476, 1.442695
        %v1478 = vpow.pop %v1477
        %v1479 = vsel %vm1472, %v1478, 0.0
        %1480 = vadd.xlane.f32.xlu0 %v1479
        %v1481 = vpop.xlane.xlu0 %1480
        %v1482 = vrcp.pop %v1481
        %v1483 = vmul.f32 %v1478, %v1482
        %v1484 = vpack.c.bf16 %v1483, %v1483
        %1485 = vrot.lane.b32.xlu0 %v1413, 96
        %v1486 = vpop.permute.xlu0 %1485
        %v1488 = vsel %vm1472, %v1484, 0
        %v1491 = vsel %vm1290, %v1486, 0
        %1493 = vmatprep.subr.bf16.mxu0 0
        %1494 = vmatpush1.bf16.msra.mxu0 %v1491
        %1495 = vmatprep.subr.bf16.mxu0 0
        %1496 = vmatpush1.bf16.msra.mxu0 0
        %1497 = vmatprep.subr.bf16.mxu0 0
        %1498 = vmatpush1.bf16.msra.mxu0 0
        %1499 = vmatprep.subr.bf16.mxu0 0
        %1500 = vmatpush1.bf16.msra.mxu0 0
        %1501 = vmatprep.subr.bf16.mxu0 0
        %1502 = vmatpush1.bf16.msra.mxu0 0
        %1503 = vmatprep.subr.bf16.mxu0 0
        %1504 = vmatpush1.bf16.msra.mxu0 0
        %1505 = vmatprep.subr.bf16.mxu0 0
        %1506 = vmatpush1.bf16.msra.mxu0 0
        %1507 = vmatprep.subr.bf16.mxu0 0
        %1508 = vmatpush1.bf16.msra.mxu0 0
        %1509 = vmatprep.subr.bf16.mxu0 0
        %1510 = vmatpush1.bf16.msra.mxu0 0
        %1511 = vmatprep.subr.bf16.mxu0 0
        %1512 = vmatpush1.bf16.msra.mxu0 0
        %1513 = vmatprep.subr.bf16.mxu0 0
        %1514 = vmatpush1.bf16.msra.mxu0 0
        %1515 = vmatprep.subr.bf16.mxu0 0
        %1516 = vmatpush1.bf16.msra.mxu0 0
        %1517 = vmatprep.subr.bf16.mxu0 0
        %1518 = vmatpush1.bf16.msra.mxu0 0
        %1519 = vmatprep.subr.bf16.mxu0 0
        %1520 = vmatpush1.bf16.msra.mxu0 0
        %1521 = vmatprep.subr.bf16.mxu0 0
        %1522 = vmatpush1.bf16.msra.mxu0 0
        %1523 = vmatprep.subr.bf16.mxu0 0
        %1524 = vmatpush1.bf16.msra.mxu0 0
        %1525 = vmatprep.mubr.bf16.mxu0 0
        %1526 = vmatmul.mubr.bf16.gmra.mrb[0].mxu0 %v1488
        %v1527 = vpop.f32.mrb[0].mxu0
        %v1528 = vadd.f32 0.0, %v1527
        %v1529 = vpop.f32.mrb[0].mxu0
        %v1530 = vpop.f32.mrb[0].mxu0
        %v1531 = vpop.f32.mrb[0].mxu0
        %1532 = vdwg.mxu0
        %v1533 = vpack.c.bf16 %v1528, %v1528
        %1534 = vrot.lane.b32.xlu0 %v1413, 80
        %v1535 = vpop.permute.xlu0 %1534
        %1536 = vrot.lane.b32.xlu0 %v1413, 64
        %v1537 = vpop.permute.xlu0 %1536
        %v1539 = vsel %vm1417, %v1535, 0
        %v1542 = vsel %vm1417, %v1537, 0
        %1544 = vmatprep.subr.bf16.mxu0 0
        %1545 = vmatpush1.bf16.xpose.msra.mxu0 %v1542
        %1546 = vmatprep.subr.bf16.mxu0 0
        %1547 = vmatpush1.bf16.xpose.msra.mxu0 0
        %1548 = vmatprep.subr.bf16.mxu0 0
        %1549 = vmatpush1.bf16.xpose.msra.mxu0 0
        %1550 = vmatprep.subr.bf16.mxu0 0
        %1551 = vmatpush1.bf16.xpose.msra.mxu0 0
        %1552 = vmatprep.subr.bf16.mxu0 0
        %1553 = vmatpush1.bf16.xpose.msra.mxu0 0
        %1554 = vmatprep.subr.bf16.mxu0 0
        %1555 = vmatpush1.bf16.xpose.msra.mxu0 0
        %1556 = vmatprep.subr.bf16.mxu0 0
        %1557 = vmatpush1.bf16.xpose.msra.mxu0 0
        %1558 = vmatprep.subr.bf16.mxu0 0
        %1559 = vmatpush1.bf16.xpose.msra.mxu0 0
        %1560 = vmatprep.subr.bf16.mxu0 0
        %1561 = vmatpush1.bf16.xpose.msra.mxu0 0
        %1562 = vmatprep.subr.bf16.mxu0 0
        %1563 = vmatpush1.bf16.xpose.msra.mxu0 0
        %1564 = vmatprep.subr.bf16.mxu0 0
        %1565 = vmatpush1.bf16.xpose.msra.mxu0 0
        %1566 = vmatprep.subr.bf16.mxu0 0
        %1567 = vmatpush1.bf16.xpose.msra.mxu0 0
        %1568 = vmatprep.subr.bf16.mxu0 0
        %1569 = vmatpush1.bf16.xpose.msra.mxu0 0
        %1570 = vmatprep.subr.bf16.mxu0 0
        %1571 = vmatpush1.bf16.xpose.msra.mxu0 0
        %1572 = vmatprep.subr.bf16.mxu0 0
        %1573 = vmatpush1.bf16.xpose.msra.mxu0 0
        %1574 = vmatprep.subr.bf16.mxu0 0
        %1575 = vmatpush1.bf16.xpose.msra.mxu0 0
        %1576 = vmatprep.mubr.bf16.mxu0 0
        %1577 = vmatmul.mubr.bf16.gmra.mrb[0].mxu0 %v1539
        %v1578 = vpop.f32.mrb[0].mxu0
        %v1579 = vadd.f32 0.0, %v1578
        %v1580 = vpop.f32.mrb[0].mxu0
        %v1581 = vpop.f32.mrb[0].mxu0
        %v1582 = vpop.f32.mrb[0].mxu0
        %1583 = vdwg.mxu0
        %v1584 = vmul.f32 %v1579, 0.25
        %v1585 = vadd.f32 %v1584, %v1469
        %v1586 = vsel %vm1472, %v1585, -inf
        %1587 = vmax.xlane.f32.xlu0 %v1586
        %v1588 = vpop.xlane.xlu0 %1587
        %v1589 = vsub.f32 %v1585, %v1588
        %v1590 = vmul.f32 %v1589, 1.442695
        %v1591 = vpow.pop %v1590
        %v1592 = vsel %vm1472, %v1591, 0.0
        %1593 = vadd.xlane.f32.xlu0 %v1592
        %v1594 = vpop.xlane.xlu0 %1593
        %v1595 = vrcp.pop %v1594
        %v1596 = vmul.f32 %v1591, %v1595
        %v1597 = vpack.c.bf16 %v1596, %v1596
        %1598 = vrot.lane.b32.xlu0 %v1413, 48
        %v1599 = vpop.permute.xlu0 %1598
        %v1601 = vsel %vm1472, %v1597, 0
        %v1604 = vsel %vm1290, %v1599, 0
        %1606 = vmatprep.subr.bf16.mxu0 0
        %1607 = vmatpush1.bf16.msra.mxu0 %v1604
        %1608 = vmatprep.subr.bf16.mxu0 0
        %1609 = vmatpush1.bf16.msra.mxu0 0
        %1610 = vmatprep.subr.bf16.mxu0 0
        %1611 = vmatpush1.bf16.msra.mxu0 0
        %1612 = vmatprep.subr.bf16.mxu0 0
        %1613 = vmatpush1.bf16.msra.mxu0 0
        %1614 = vmatprep.subr.bf16.mxu0 0
        %1615 = vmatpush1.bf16.msra.mxu0 0
        %1616 = vmatprep.subr.bf16.mxu0 0
        %1617 = vmatpush1.bf16.msra.mxu0 0
        %1618 = vmatprep.subr.bf16.mxu0 0
        %1619 = vmatpush1.bf16.msra.mxu0 0
        %1620 = vmatprep.subr.bf16.mxu0 0
        %1621 = vmatpush1.bf16.msra.mxu0 0
        %1622 = vmatprep.subr.bf16.mxu0 0
        %1623 = vmatpush1.bf16.msra.mxu0 0
        %1624 = vmatprep.subr.bf16.mxu0 0
        %1625 = vmatpush1.bf16.msra.mxu0 0
        %1626 = vmatprep.subr.bf16.mxu0 0
        %1627 = vmatpush1.bf16.msra.mxu0 0
        %1628 = vmatprep.subr.bf16.mxu0 0
        %1629 = vmatpush1.bf16.msra.mxu0 0
        %1630 = vmatprep.subr.bf16.mxu0 0
        %1631 = vmatpush1.bf16.msra.mxu0 0
        %1632 = vmatprep.subr.bf16.mxu0 0
        %1633 = vmatpush1.bf16.msra.mxu0 0
        %1634 = vmatprep.subr.bf16.mxu0 0
        %1635 = vmatpush1.bf16.msra.mxu0 0
        %1636 = vmatprep.subr.bf16.mxu0 0
        %1637 = vmatpush1.bf16.msra.mxu0 0
        %1638 = vmatprep.mubr.bf16.mxu0 0
        %1639 = vmatmul.mubr.bf16.gmra.mrb[0].mxu0 %v1601
        %v1640 = vpop.f32.mrb[0].mxu0
        %v1641 = vadd.f32 0.0, %v1640
        %v1642 = vpop.f32.mrb[0].mxu0
        %v1643 = vpop.f32.mrb[0].mxu0
        %v1644 = vpop.f32.mrb[0].mxu0
        %1645 = vdwg.mxu0
        %v1646 = vpack.c.bf16 %v1641, %v1641
        %v1649 = vunpack.c.l.b16 %v1411
        %v1650 = vunpack.c.l.b16 %v1412
        %v1651 = vpack.c.b16 %v1650, %v1649
        %v1654 = vsel %vm1417, %v1646, 0
        %1656 = vmatprep.subr.bf16.mxu0 0
        %1657 = vmatpush1.bf16.msra.mxu0 %v1651
        %1658 = vmatprep.subr.bf16.mxu0 0
        %1659 = vmatpush1.bf16.msra.mxu0 0
        %1660 = vmatprep.subr.bf16.mxu0 0
        %1661 = vmatpush1.bf16.msra.mxu0 0
        %1662 = vmatprep.subr.bf16.mxu0 0
        %1663 = vmatpush1.bf16.msra.mxu0 0
        %1664 = vmatprep.subr.bf16.mxu0 0
        %1665 = vmatpush1.bf16.msra.mxu0 0
        %1666 = vmatprep.subr.bf16.mxu0 0
        %1667 = vmatpush1.bf16.msra.mxu0 0
        %1668 = vmatprep.subr.bf16.mxu0 0
        %1669 = vmatpush1.bf16.msra.mxu0 0
        %1670 = vmatprep.subr.bf16.mxu0 0
        %1671 = vmatpush1.bf16.msra.mxu0 0
        %1672 = vmatprep.subr.bf16.mxu0 0
        %1673 = vmatpush1.bf16.msra.mxu0 0
        %1674 = vmatprep.subr.bf16.mxu0 0
        %1675 = vmatpush1.bf16.msra.mxu0 0
        %1676 = vmatprep.subr.bf16.mxu0 0
        %1677 = vmatpush1.bf16.msra.mxu0 0
        %1678 = vmatprep.subr.bf16.mxu0 0
        %1679 = vmatpush1.bf16.msra.mxu0 0
        %1680 = vmatprep.subr.bf16.mxu0 0
        %1681 = vmatpush1.bf16.msra.mxu0 0
        %1682 = vmatprep.subr.bf16.mxu0 0
        %1683 = vmatpush1.bf16.msra.mxu0 0
        %1684 = vmatprep.subr.bf16.mxu0 0
        %1685 = vmatpush1.bf16.msra.mxu0 0
        %1686 = vmatprep.subr.bf16.mxu0 0
        %1687 = vmatpush1.bf16.msra.mxu0 0
        %1688 = vmatprep.mubr.bf16.mxu0 0
        %1689 = vmatmul.mubr.bf16.gmra.mrb[0].mxu0 %v1654
        %v1690 = vpop.f32.mrb[0].mxu0
        %v1691 = vadd.f32 0.0, %v1690
        %v1692 = vpop.f32.mrb[0].mxu0
        %v1693 = vpop.f32.mrb[0].mxu0
        %v1694 = vpop.f32.mrb[0].mxu0
        %1695 = vdwg.mxu0
        %v1698 = vunpack.c.l.b16 %v1409
        %v1699 = vunpack.c.l.b16 %v1410
        %v1700 = vpack.c.b16 %v1699, %v1698
        %v1703 = vsel %vm1417, %v1533, 0
        %1705 = vmatprep.subr.bf16.mxu0 0
        %1706 = vmatpush1.bf16.msra.mxu0 %v1700
        %1707 = vmatprep.subr.bf16.mxu0 0
        %1708 = vmatpush1.bf16.msra.mxu0 0
        %1709 = vmatprep.subr.bf16.mxu0 0
        %1710 = vmatpush1.bf16.msra.mxu0 0
        %1711 = vmatprep.subr.bf16.mxu0 0
        %1712 = vmatpush1.bf16.msra.mxu0 0
        %1713 = vmatprep.subr.bf16.mxu0 0
        %1714 = vmatpush1.bf16.msra.mxu0 0
        %1715 = vmatprep.subr.bf16.mxu0 0
        %1716 = vmatpush1.bf16.msra.mxu0 0
        %1717 = vmatprep.subr.bf16.mxu0 0
        %1718 = vmatpush1.bf16.msra.mxu0 0
        %1719 = vmatprep.subr.bf16.mxu0 0
        %1720 = vmatpush1.bf16.msra.mxu0 0
        %1721 = vmatprep.subr.bf16.mxu0 0
        %1722 = vmatpush1.bf16.msra.mxu0 0
        %1723 = vmatprep.subr.bf16.mxu0 0
        %1724 = vmatpush1.bf16.msra.mxu0 0
        %1725 = vmatprep.subr.bf16.mxu0 0
        %1726 = vmatpush1.bf16.msra.mxu0 0
        %1727 = vmatprep.subr.bf16.mxu0 0
        %1728 = vmatpush1.bf16.msra.mxu0 0
        %1729 = vmatprep.subr.bf16.mxu0 0
        %1730 = vmatpush1.bf16.msra.mxu0 0
        %1731 = vmatprep.subr.bf16.mxu0 0
        %1732 = vmatpush1.bf16.msra.mxu0 0
        %1733 = vmatprep.subr.bf16.mxu0 0
        %1734 = vmatpush1.bf16.msra.mxu0 0
        %1735 = vmatprep.subr.bf16.mxu0 0
        %1736 = vmatpush1.bf16.msra.mxu0 0
        %1737 = vmatprep.mubr.bf16.mxu0 0
        %1738 = vmatmul.mubr.bf16.gmra.mrb[0].mxu0 %v1703
        %v1739 = vpop.f32.mrb[0].mxu0
        %v1740 = vadd.f32 %v1691, %v1739
        %v1741 = vpop.f32.mrb[0].mxu0
        %v1742 = vpop.f32.mrb[0].mxu0
        %v1743 = vpop.f32.mrb[0].mxu0
        %1744 = vdwg.mxu0
        %v1745 = vld [vmem:[%s10] sm:$0x1]
        %v1747 = vlaneseq
        %v1748 = vshrl.u32 %v1747, 7
        %v1749 = vsub.s32 0, %v1748
        %v1750 = vrot.slane %v1745, %v1749
        %v1752 = vadd.f32 %v1740, %v1750
        %v1753 = vadd.f32 %v1752, %v1337
        %v1754 = vld [vmem:[%s11] sm:$0x1]
        %v1755 = vld [vmem:[%s12] sm:$0x1]
        %v1756 = vsel %vm870, %v1753, 0.0
        %1757 = vadd.xlane.f32.xlu0 %v1756
        %v1758 = vpop.xlane.xlu0 %1757
        %v1759 = vmul.f32 %v1758, %v1313
        %v1760 = vsub.f32 %v1753, %v1759
        %v1761 = vmul.f32 %v1760, %v1760
        %v1762 = vsel %vm870, %v1761, 0.0
        %1763 = vadd.xlane.f32.xlu0 %v1762
        %v1764 = vpop.xlane.xlu0 %1763
        %v1765 = vmul.f32 %v1764, %v1313
        %v1766 = vadd.f32 %v1765, 1e-12
        %v1767 = vrsqrt.pop %v1766
        %v1768 = vmul.f32 %v1760, %v1767
        %v1770 = vlaneseq
        %v1771 = vshrl.u32 %v1770, 7
        %v1772 = vsub.s32 0, %v1771
        %v1773 = vrot.slane %v1754, %v1772
        %v1775 = vmul.f32 %v1768, %v1773
        %v1777 = vlaneseq
        %v1778 = vshrl.u32 %v1777, 7
        %v1779 = vsub.s32 0, %v1778
        %v1780 = vrot.slane %v1755, %v1779
        %v1782 = vadd.f32 %v1775, %v1780
        %v1783 = vpack.c.bf16 %v1782, %v1782
        %v1784 = vld [vmem:[%s13] sm:$0xf]
        %v1785 = vld [vmem:[%s13 + $0x4] sm:$0xf]
        %v1786 = vld [vmem:[%s13 + $0x8] sm:$0xf]
        %v1787 = vld [vmem:[%s13 + $0xc] sm:$0xf]
        %v1788 = vld [vmem:[%s14] sm:$0x1]
        %v1790 = vlaneseq
        %v1791 = vshrl.u32 %v1790, 7
        %v1792 = vsub.s32 0, %v1791
        %v1793 = vrot.slane %v1788, %v1792
        %v1799 = vunpack.c.l.b16 %v1784
        %v1800 = vunpack.c.l.b16 %v1785
        %v1801 = vunpack.c.l.b16 %v1786
        %v1802 = vunpack.c.l.b16 %v1787
        %v1803 = vpack.c.b16 %v1800, %v1799
        %v1804 = vpack.c.b16 %v1802, %v1801
        %v1808 = vsel %vm870, %v1783, 0
        %1810 = vmatprep.subr.bf16.mxu0 0
        %1811 = vmatpush1.bf16.msra.mxu0 %v1803
        %1812 = vmatprep.subr.bf16.mxu0 0
        %1813 = vmatpush1.bf16.msra.mxu0 %v1804
        %1814 = vmatprep.subr.bf16.mxu0 0
        %1815 = vmatpush1.bf16.msra.mxu0 0
        %1816 = vmatprep.subr.bf16.mxu0 0
        %1817 = vmatpush1.bf16.msra.mxu0 0
        %1818 = vmatprep.subr.bf16.mxu0 0
        %1819 = vmatpush1.bf16.msra.mxu0 0
        %1820 = vmatprep.subr.bf16.mxu0 0
        %1821 = vmatpush1.bf16.msra.mxu0 0
        %1822 = vmatprep.subr.bf16.mxu0 0
        %1823 = vmatpush1.bf16.msra.mxu0 0
        %1824 = vmatprep.subr.bf16.mxu0 0
        %1825 = vmatpush1.bf16.msra.mxu0 0
        %1826 = vmatprep.subr.bf16.mxu0 0
        %1827 = vmatpush1.bf16.msra.mxu0 0
        %1828 = vmatprep.subr.bf16.mxu0 0
        %1829 = vmatpush1.bf16.msra.mxu0 0
        %1830 = vmatprep.subr.bf16.mxu0 0
        %1831 = vmatpush1.bf16.msra.mxu0 0
        %1832 = vmatprep.subr.bf16.mxu0 0
        %1833 = vmatpush1.bf16.msra.mxu0 0
        %1834 = vmatprep.subr.bf16.mxu0 0
        %1835 = vmatpush1.bf16.msra.mxu0 0
        %1836 = vmatprep.subr.bf16.mxu0 0
        %1837 = vmatpush1.bf16.msra.mxu0 0
        %1838 = vmatprep.subr.bf16.mxu0 0
        %1839 = vmatpush1.bf16.msra.mxu0 0
        %1840 = vmatprep.subr.bf16.mxu0 0
        %1841 = vmatpush1.bf16.msra.mxu0 0
        %1842 = vmatprep.mubr.bf16.mxu0 0
        %1843 = vmatmul.mubr.bf16.gmra.mrb[0].mxu0 %v1808
        %v1844 = vpop.f32.mrb[0].mxu0
        %v1845 = vadd.f32 %v1793, %v1844
        %v1846 = vpop.f32.mrb[0].mxu0
        %v1847 = vpop.f32.mrb[0].mxu0
        %v1848 = vpop.f32.mrb[0].mxu0
        %1849 = vdwg.mxu0
        %v1850 = vmul.f32 %v1845, 0.5
        %v1851 = vmul.f32 %v1845, 0.044715
        %v1852 = vmul.f32 %v1851, %v1845
        %v1853 = vmul.f32 %v1852, %v1845
        %v1854 = vadd.f32 %v1845, %v1853
        %v1855 = vmul.f32 %v1854, 0.7978846
        %v1856 = vtanh.pop %v1855
        %v1857 = vadd.f32 %v1856, 1.0
        %v1858 = vmul.f32 %v1850, %v1857
        %v1859 = vpack.c.bf16 %v1858, %v1858
        %v1860 = vld [vmem:[%s15] sm:$0xf]
        %v1861 = vld [vmem:[%s15 + $0x4] sm:$0xf]
        %v1862 = vld [vmem:[%s15 + $0x8] sm:$0xf]
        %v1863 = vld [vmem:[%s15 + $0xc] sm:$0xf]
        %v1864 = vld [vmem:[%s15 + $0x10] sm:$0xf]
        %v1865 = vld [vmem:[%s15 + $0x14] sm:$0xf]
        %v1866 = vld [vmem:[%s15 + $0x18] sm:$0xf]
        %v1867 = vld [vmem:[%s15 + $0x1c] sm:$0xf]
        %v1868 = vld [vmem:[%s16] sm:$0x1]
        %v1870 = vlaneseq
        %v1871 = vshrl.u32 %v1870, 7
        %v1872 = vsub.s32 0, %v1871
        %v1873 = vrot.slane %v1868, %v1872
        %v1883 = vunpack.c.l.b16 %v1860
        %v1884 = vunpack.c.l.b16 %v1861
        %v1885 = vunpack.c.l.b16 %v1862
        %v1886 = vunpack.c.l.b16 %v1863
        %v1887 = vunpack.c.l.b16 %v1864
        %v1888 = vunpack.c.l.b16 %v1865
        %v1889 = vunpack.c.l.b16 %v1866
        %v1890 = vunpack.c.l.b16 %v1867
        %v1891 = vpack.c.b16 %v1884, %v1883
        %v1892 = vpack.c.b16 %v1886, %v1885
        %v1893 = vpack.c.b16 %v1888, %v1887
        %v1894 = vpack.c.b16 %v1890, %v1889
        %vm1899 = vcmask 523264
        %v1901 = vsel %vm1899, %v1859, 0
        %1903 = vmatprep.subr.bf16.mxu0 0
        %1904 = vmatpush1.bf16.msra.mxu0 %v1891
        %1905 = vmatprep.subr.bf16.mxu0 0
        %1906 = vmatpush1.bf16.msra.mxu0 %v1892
        %1907 = vmatprep.subr.bf16.mxu0 0
        %1908 = vmatpush1.bf16.msra.mxu0 %v1893
        %1909 = vmatprep.subr.bf16.mxu0 0
        %1910 = vmatpush1.bf16.msra.mxu0 %v1894
        %1911 = vmatprep.subr.bf16.mxu0 0
        %1912 = vmatpush1.bf16.msra.mxu0 0
        %1913 = vmatprep.subr.bf16.mxu0 0
        %1914 = vmatpush1.bf16.msra.mxu0 0
        %1915 = vmatprep.subr.bf16.mxu0 0
        %1916 = vmatpush1.bf16.msra.mxu0 0
        %1917 = vmatprep.subr.bf16.mxu0 0
        %1918 = vmatpush1.bf16.msra.mxu0 0
        %1919 = vmatprep.subr.bf16.mxu0 0
        %1920 = vmatpush1.bf16.msra.mxu0 0
        %1921 = vmatprep.subr.bf16.mxu0 0
        %1922 = vmatpush1.bf16.msra.mxu0 0
        %1923 = vmatprep.subr.bf16.mxu0 0
        %1924 = vmatpush1.bf16.msra.mxu0 0
        %1925 = vmatprep.subr.bf16.mxu0 0
        %1926 = vmatpush1.bf16.msra.mxu0 0
        %1927 = vmatprep.subr.bf16.mxu0 0
        %1928 = vmatpush1.bf16.msra.mxu0 0
        %1929 = vmatprep.subr.bf16.mxu0 0
        %1930 = vmatpush1.bf16.msra.mxu0 0
        %1931 = vmatprep.subr.bf16.mxu0 0
        %1932 = vmatpush1.bf16.msra.mxu0 0
        %1933 = vmatprep.subr.bf16.mxu0 0
        %1934 = vmatpush1.bf16.msra.mxu0 0
        %1935 = vmatprep.mubr.bf16.mxu0 0
        %1936 = vmatmul.mubr.bf16.gmra.mrb[0].mxu0 %v1901
        %v1937 = vpop.f32.mrb[0].mxu0
        %v1938 = vadd.f32 %v1873, %v1937
        %v1939 = vpop.f32.mrb[0].mxu0
        %v1940 = vpop.f32.mrb[0].mxu0
        %v1941 = vpop.f32.mrb[0].mxu0
        %1942 = vdwg.mxu0
        %v1943 = vadd.f32 %v1938, %v1782
        %v1944 = vld [vmem:[%s17] sm:$0x1]
        %v1945 = vld [vmem:[%s18] sm:$0x1]
        %v1946 = vsel %vm870, %v1943, 0.0
        %1947 = vadd.xlane.f32.xlu0 %v1946
        %v1948 = vpop.xlane.xlu0 %1947
        %v1949 = vmul.f32 %v1948, %v1313
        %v1950 = vsub.f32 %v1943, %v1949
        %v1951 = vmul.f32 %v1950, %v1950
        %v1952 = vsel %vm870, %v1951, 0.0
        %1953 = vadd.xlane.f32.xlu0 %v1952
        %v1954 = vpop.xlane.xlu0 %1953
        %v1955 = vmul.f32 %v1954, %v1313
        %v1956 = vadd.f32 %v1955, 1e-12
        %v1957 = vrsqrt.pop %v1956
        %v1958 = vmul.f32 %v1950, %v1957
        %v1960 = vlaneseq
        %v1961 = vshrl.u32 %v1960, 7
        %v1962 = vsub.s32 0, %v1961
        %v1963 = vrot.slane %v1944, %v1962
        %v1965 = vmul.f32 %v1958, %v1963
        %v1967 = vlaneseq
        %v1968 = vshrl.u32 %v1967, 7
        %v1969 = vsub.s32 0, %v1968
        %v1970 = vrot.slane %v1945, %v1969
        %v1972 = vadd.f32 %v1965, %v1970
        %v1973 = vpack.c.bf16 %v1972, %v1972
        %s1974 = scalar_lea.vmem %s7, 16
        %v1975 = vld [vmem:[%s1974] sm:$0xf]
        %v1976 = vld [vmem:[%s1974 + $0x4] sm:$0xf]
        %v1977 = vld [vmem:[%s1974 + $0x8] sm:$0xf]
        %v1978 = vld [vmem:[%s1974 + $0xc] sm:$0xf]
        %s1979 = scalar_lea.vmem %s8, 1
        %v1980 = vld [vmem:[%s1979] sm:$0x1]
        %v1982 = vlaneseq
        %v1983 = vshrl.u32 %v1982, 7
        %v1984 = vsub.s32 0, %v1983
        %v1985 = vrot.slane %v1980, %v1984
        %v1991 = vunpack.c.l.b16 %v1975
        %v1992 = vunpack.c.l.b16 %v1976
        %v1993 = vunpack.c.l.b16 %v1977
        %v1994 = vunpack.c.l.b16 %v1978
        %v1995 = vpack.c.b16 %v1992, %v1991
        %v1996 = vpack.c.b16 %v1994, %v1993
        %v2000 = vsel %vm870, %v1973, 0
        %2002 = vmatprep.subr.bf16.mxu0 0
        %2003 = vmatpush1.bf16.msra.mxu0 %v1995
        %2004 = vmatprep.subr.bf16.mxu0 0
        %2005 = vmatpush1.bf16.msra.mxu0 %v1996
        %2006 = vmatprep.subr.bf16.mxu0 0
        %2007 = vmatpush1.bf16.msra.mxu0 0
        %2008 = vmatprep.subr.bf16.mxu0 0
        %2009 = vmatpush1.bf16.msra.mxu0 0
        %2010 = vmatprep.subr.bf16.mxu0 0
        %2011 = vmatpush1.bf16.msra.mxu0 0
        %2012 = vmatprep.subr.bf16.mxu0 0
        %2013 = vmatpush1.bf16.msra.mxu0 0
        %2014 = vmatprep.subr.bf16.mxu0 0
        %2015 = vmatpush1.bf16.msra.mxu0 0
        %2016 = vmatprep.subr.bf16.mxu0 0
        %2017 = vmatpush1.bf16.msra.mxu0 0
        %2018 = vmatprep.subr.bf16.mxu0 0
        %2019 = vmatpush1.bf16.msra.mxu0 0
        %2020 = vmatprep.subr.bf16.mxu0 0
        %2021 = vmatpush1.bf16.msra.mxu0 0
        %2022 = vmatprep.subr.bf16.mxu0 0
        %2023 = vmatpush1.bf16.msra.mxu0 0
        %2024 = vmatprep.subr.bf16.mxu0 0
        %2025 = vmatpush1.bf16.msra.mxu0 0
        %2026 = vmatprep.subr.bf16.mxu0 0
        %2027 = vmatpush1.bf16.msra.mxu0 0
        %2028 = vmatprep.subr.bf16.mxu0 0
        %2029 = vmatpush1.bf16.msra.mxu0 0
        %2030 = vmatprep.subr.bf16.mxu0 0
        %2031 = vmatpush1.bf16.msra.mxu0 0
        %2032 = vmatprep.subr.bf16.mxu0 0
        %2033 = vmatpush1.bf16.msra.mxu0 0
        %2034 = vmatprep.mubr.bf16.mxu0 0
        %2035 = vmatmul.mubr.bf16.gmra.mrb[0].mxu0 %v2000
        %v2036 = vpop.f32.mrb[0].mxu0
        %v2037 = vadd.f32 %v1985, %v2036
        %v2038 = vpop.f32.mrb[0].mxu0
        %v2039 = vpop.f32.mrb[0].mxu0
        %v2040 = vpop.f32.mrb[0].mxu0
        %2041 = vdwg.mxu0
        %s2042 = scalar_lea.vmem %s9, 16
        %v2043 = vld [vmem:[%s2042] sm:$0xf]
        %v2044 = vld [vmem:[%s2042 + $0x4] sm:$0xf]
        %v2045 = vld [vmem:[%s2042 + $0x8] sm:$0xf]
        %v2046 = vld [vmem:[%s2042 + $0xc] sm:$0xf]
        %v2047 = vpack.c.bf16 %v2037, %v2037
        %2049 = vrot.lane.b32.xlu0 %v2047, 112
        %v2050 = vpop.permute.xlu0 %2049
        %v2052 = vsel %vm1417, %v2047, 0
        %v2055 = vsel %vm1417, %v2050, 0
        %2057 = vmatprep.subr.bf16.mxu0 0
        %2058 = vmatpush1.bf16.xpose.msra.mxu0 %v2055
        %2059 = vmatprep.subr.bf16.mxu0 0
        %2060 = vmatpush1.bf16.xpose.msra.mxu0 0
        %2061 = vmatprep.subr.bf16.mxu0 0
        %2062 = vmatpush1.bf16.xpose.msra.mxu0 0
        %2063 = vmatprep.subr.bf16.mxu0 0
        %2064 = vmatpush1.bf16.xpose.msra.mxu0 0
        %2065 = vmatprep.subr.bf16.mxu0 0
        %2066 = vmatpush1.bf16.xpose.msra.mxu0 0
        %2067 = vmatprep.subr.bf16.mxu0 0
        %2068 = vmatpush1.bf16.xpose.msra.mxu0 0
        %2069 = vmatprep.subr.bf16.mxu0 0
        %2070 = vmatpush1.bf16.xpose.msra.mxu0 0
        %2071 = vmatprep.subr.bf16.mxu0 0
        %2072 = vmatpush1.bf16.xpose.msra.mxu0 0
        %2073 = vmatprep.subr.bf16.mxu0 0
        %2074 = vmatpush1.bf16.xpose.msra.mxu0 0
        %2075 = vmatprep.subr.bf16.mxu0 0
        %2076 = vmatpush1.bf16.xpose.msra.mxu0 0
        %2077 = vmatprep.subr.bf16.mxu0 0
        %2078 = vmatpush1.bf16.xpose.msra.mxu0 0
        %2079 = vmatprep.subr.bf16.mxu0 0
        %2080 = vmatpush1.bf16.xpose.msra.mxu0 0
        %2081 = vmatprep.subr.bf16.mxu0 0
        %2082 = vmatpush1.bf16.xpose.msra.mxu0 0
        %2083 = vmatprep.subr.bf16.mxu0 0
        %2084 = vmatpush1.bf16.xpose.msra.mxu0 0
        %2085 = vmatprep.subr.bf16.mxu0 0
        %2086 = vmatpush1.bf16.xpose.msra.mxu0 0
        %2087 = vmatprep.subr.bf16.mxu0 0
        %2088 = vmatpush1.bf16.xpose.msra.mxu0 0
        %2089 = vmatprep.mubr.bf16.mxu0 0
        %2090 = vmatmul.mubr.bf16.gmra.mrb[0].mxu0 %v2052
        %v2091 = vpop.f32.mrb[0].mxu0
        %v2092 = vadd.f32 0.0, %v2091
        %v2093 = vpop.f32.mrb[0].mxu0
        %v2094 = vpop.f32.mrb[0].mxu0
        %v2095 = vpop.f32.mrb[0].mxu0
        %2096 = vdwg.mxu0
        %v2097 = vmul.f32 %v2092, 0.25
        %v2098 = vadd.f32 %v2097, %v1469
        %v2099 = vsel %vm1472, %v2098, -inf
        %2100 = vmax.xlane.f32.xlu0 %v2099
        %v2101 = vpop.xlane.xlu0 %2100
        %v2102 = vsub.f32 %v2098, %v2101
        %v2103 = vmul.f32 %v2102, 1.442695
        %v2104 = vpow.pop %v2103
        %v2105 = vsel %vm1472, %v2104, 0.0
        %2106 = vadd.xlane.f32.xlu0 %v2105
        %v2107 = vpop.xlane.xlu0 %2106
        %v2108 = vrcp.pop %v2107
        %v2109 = vmul.f32 %v2104, %v2108
        %v2110 = vpack.c.bf16 %v2109, %v2109
        %2111 = vrot.lane.b32.xlu0 %v2047, 96
        %v2112 = vpop.permute.xlu0 %2111
        %v2114 = vsel %vm1472, %v2110, 0
        %v2117 = vsel %vm1290, %v2112, 0
        %2119 = vmatprep.subr.bf16.mxu0 0
        %2120 = vmatpush1.bf16.msra.mxu0 %v2117
        %2121 = vmatprep.subr.bf16.mxu0 0
        %2122 = vmatpush1.bf16.msra.mxu0 0
        %2123 = vmatprep.subr.bf16.mxu0 0
        %2124 = vmatpush1.bf16.msra.mxu0 0
        %2125 = vmatprep.subr.bf16.mxu0 0
        %2126 = vmatpush1.bf16.msra.mxu0 0
        %2127 = vmatprep.subr.bf16.mxu0 0
        %2128 = vmatpush1.bf16.msra.mxu0 0
        %2129 = vmatprep.subr.bf16.mxu0 0
        %2130 = vmatpush1.bf16.msra.mxu0 0
        %2131 = vmatprep.subr.bf16.mxu0 0
        %2132 = vmatpush1.bf16.msra.mxu0 0
        %2133 = vmatprep.subr.bf16.mxu0 0
        %2134 = vmatpush1.bf16.msra.mxu0 0
        %2135 = vmatprep.subr.bf16.mxu0 0
        %2136 = vmatpush1.bf16.msra.mxu0 0
        %2137 = vmatprep.subr.bf16.mxu0 0
        %2138 = vmatpush1.bf16.msra.mxu0 0
        %2139 = vmatprep.subr.bf16.mxu0 0
        %2140 = vmatpush1.bf16.msra.mxu0 0
        %2141 = vmatprep.subr.bf16.mxu0 0
        %2142 = vmatpush1.bf16.msra.mxu0 0
        %2143 = vmatprep.subr.bf16.mxu0 0
        %2144 = vmatpush1.bf16.msra.mxu0 0
        %2145 = vmatprep.subr.bf16.mxu0 0
        %2146 = vmatpush1.bf16.msra.mxu0 0
        %2147 = vmatprep.subr.bf16.mxu0 0
        %2148 = vmatpush1.bf16.msra.mxu0 0
        %2149 = vmatprep.subr.bf16.mxu0 0
        %2150 = vmatpush1.bf16.msra.mxu0 0
        %2151 = vmatprep.mubr.bf16.mxu0 0
        %2152 = vmatmul.mubr.bf16.gmra.mrb[0].mxu0 %v2114
        %v2153 = vpop.f32.mrb[0].mxu0
        %v2154 = vadd.f32 0.0, %v2153
        %v2155 = vpop.f32.mrb[0].mxu0
        %v2156 = vpop.f32.mrb[0].mxu0
        %v2157 = vpop.f32.mrb[0].mxu0
        %2158 = vdwg.mxu0
        %v2159 = vpack.c.bf16 %v2154, %v2154
        %2160 = vrot.lane.b32.xlu0 %v2047, 80
        %v2161 = vpop.permute.xlu0 %2160
        %2162 = vrot.lane.b32.xlu0 %v2047, 64
        %v2163 = vpop.permute.xlu0 %2162
        %v2165 = vsel %vm1417, %v2161, 0
        %v2168 = vsel %vm1417, %v2163, 0
        %2170 = vmatprep.subr.bf16.mxu0 0
        %2171 = vmatpush1.bf16.xpose.msra.mxu0 %v2168
        %2172 = vmatprep.subr.bf16.mxu0 0
        %2173 = vmatpush1.bf16.xpose.msra.mxu0 0
        %2174 = vmatprep.subr.bf16.mxu0 0
        %2175 = vmatpush1.bf16.xpose.msra.mxu0 0
        %2176 = vmatprep.subr.bf16.mxu0 0
        %2177 = vmatpush1.bf16.xpose.msra.mxu0 0
        %2178 = vmatprep.subr.bf16.mxu0 0
        %2179 = vmatpush1.bf16.xpose.msra.mxu0 0
        %2180 = vmatprep.subr.bf16.mxu0 0
        %2181 = vmatpush1.bf16.xpose.msra.mxu0 0
        %2182 = vmatprep.subr.bf16.mxu0 0
        %2183 = vmatpush1.bf16.xpose.msra.mxu0 0
        %2184 = vmatprep.subr.bf16.mxu0 0
        %2185 = vmatpush1.bf16.xpose.msra.mxu0 0
        %2186 = vmatprep.subr.bf16.mxu0 0
        %2187 = vmatpush1.bf16.xpose.msra.mxu0 0
        %2188 = vmatprep.subr.bf16.mxu0 0
        %2189 = vmatpush1.bf16.xpose.msra.mxu0 0
        %2190 = vmatprep.subr.bf16.mxu0 0
        %2191 = vmatpush1.bf16.xpose.msra.mxu0 0
        %2192 = vmatprep.subr.bf16.mxu0 0
        %2193 = vmatpush1.bf16.xpose.msra.mxu0 0
        %2194 = vmatprep.subr.bf16.mxu0 0
        %2195 = vmatpush1.bf16.xpose.msra.mxu0 0
        %2196 = vmatprep.subr.bf16.mxu0 0
        %2197 = vmatpush1.bf16.xpose.msra.mxu0 0
        %2198 = vmatprep.subr.bf16.mxu0 0
        %2199 = vmatpush1.bf16.xpose.msra.mxu0 0
        %2200 = vmatprep.subr.bf16.mxu0 0
        %2201 = vmatpush1.bf16.xpose.msra.mxu0 0
        %2202 = vmatprep.mubr.bf16.mxu0 0
        %2203 = vmatmul.mubr.bf16.gmra.mrb[0].mxu0 %v2165
        %v2204 = vpop.f32.mrb[0].mxu0
        %v2205 = vadd.f32 0.0, %v2204
        %v2206 = vpop.f32.mrb[0].mxu0
        %v2207 = vpop.f32.mrb[0].mxu0
        %v2208 = vpop.f32.mrb[0].mxu0
        %2209 = vdwg.mxu0
        %v2210 = vmul.f32 %v2205, 0.25
        %v2211 = vadd.f32 %v2210, %v1469
        %v2212 = vsel %vm1472, %v2211, -inf
        %2213 = vmax.xlane.f32.xlu0 %v2212
        %v2214 = vpop.xlane.xlu0 %2213
        %v2215 = vsub.f32 %v2211, %v2214
        %v2216 = vmul.f32 %v2215, 1.442695
        %v2217 = vpow.pop %v2216
        %v2218 = vsel %vm1472, %v2217, 0.0
        %2219 = vadd.xlane.f32.xlu0 %v2218
        %v2220 = vpop.xlane.xlu0 %2219
        %v2221 = vrcp.pop %v2220
        %v2222 = vmul.f32 %v2217, %v2221
        %v2223 = vpack.c.bf16 %v2222, %v2222
        %2224 = vrot.lane.b32.xlu0 %v2047, 48
        %v2225 = vpop.permute.xlu0 %2224
        %v2227 = vsel %vm1472, %v2223, 0
        %v2230 = vsel %vm1290, %v2225, 0
        %2232 = vmatprep.subr.bf16.mxu0 0
        %2233 = vmatpush1.bf16.msra.mxu0 %v2230
        %2234 = vmatprep.subr.bf16.mxu0 0
        %2235 = vmatpush1.bf16.msra.mxu0 0
        %2236 = vmatprep.subr.bf16.mxu0 0
        %2237 = vmatpush1.bf16.msra.mxu0 0
        %2238 = vmatprep.subr.bf16.mxu0 0
        %2239 = vmatpush1.bf16.msra.mxu0 0
        %2240 = vmatprep.subr.bf16.mxu0 0
        %2241 = vmatpush1.bf16.msra.mxu0 0
        %2242 = vmatprep.subr.bf16.mxu0 0
        %2243 = vmatpush1.bf16.msra.mxu0 0
        %2244 = vmatprep.subr.bf16.mxu0 0
        %2245 = vmatpush1.bf16.msra.mxu0 0
        %2246 = vmatprep.subr.bf16.mxu0 0
        %2247 = vmatpush1.bf16.msra.mxu0 0
        %2248 = vmatprep.subr.bf16.mxu0 0
        %2249 = vmatpush1.bf16.msra.mxu0 0
        %2250 = vmatprep.subr.bf16.mxu0 0
        %2251 = vmatpush1.bf16.msra.mxu0 0
        %2252 = vmatprep.subr.bf16.mxu0 0
        %2253 = vmatpush1.bf16.msra.mxu0 0
        %2254 = vmatprep.subr.bf16.mxu0 0
        %2255 = vmatpush1.bf16.msra.mxu0 0
        %2256 = vmatprep.subr.bf16.mxu0 0
        %2257 = vmatpush1.bf16.msra.mxu0 0
        %2258 = vmatprep.subr.bf16.mxu0 0
        %2259 = vmatpush1.bf16.msra.mxu0 0
        %2260 = vmatprep.subr.bf16.mxu0 0
        %2261 = vmatpush1.bf16.msra.mxu0 0
        %2262 = vmatprep.subr.bf16.mxu0 0
        %2263 = vmatpush1.bf16.msra.mxu0 0
        %2264 = vmatprep.mubr.bf16.mxu0 0
        %2265 = vmatmul.mubr.bf16.gmra.mrb[0].mxu0 %v2227
        %v2266 = vpop.f32.mrb[0].mxu0
        %v2267 = vadd.f32 0.0, %v2266
        %v2268 = vpop.f32.mrb[0].mxu0
        %v2269 = vpop.f32.mrb[0].mxu0
        %v2270 = vpop.f32.mrb[0].mxu0
        %2271 = vdwg.mxu0
        %v2272 = vpack.c.bf16 %v2267, %v2267
        %v2275 = vunpack.c.l.b16 %v2045
        %v2276 = vunpack.c.l.b16 %v2046
        %v2277 = vpack.c.b16 %v2276, %v2275
        %v2280 = vsel %vm1417, %v2272, 0
        %2282 = vmatprep.subr.bf16.mxu0 0
        %2283 = vmatpush1.bf16.msra.mxu0 %v2277
        %2284 = vmatprep.subr.bf16.mxu0 0
        %2285 = vmatpush1.bf16.msra.mxu0 0
        %2286 = vmatprep.subr.bf16.mxu0 0
        %2287 = vmatpush1.bf16.msra.mxu0 0
        %2288 = vmatprep.subr.bf16.mxu0 0
        %2289 = vmatpush1.bf16.msra.mxu0 0
        %2290 = vmatprep.subr.bf16.mxu0 0
        %2291 = vmatpush1.bf16.msra.mxu0 0
        %2292 = vmatprep.subr.bf16.mxu0 0
        %2293 = vmatpush1.bf16.msra.mxu0 0
        %2294 = vmatprep.subr.bf16.mxu0 0
        %2295 = vmatpush1.bf16.msra.mxu0 0
        %2296 = vmatprep.subr.bf16.mxu0 0
        %2297 = vmatpush1.bf16.msra.mxu0 0
        %2298 = vmatprep.subr.bf16.mxu0 0
        %2299 = vmatpush1.bf16.msra.mxu0 0
        %2300 = vmatprep.subr.bf16.mxu0 0
        %2301 = vmatpush1.bf16.msra.mxu0 0
        %2302 = vmatprep.subr.bf16.mxu0 0
        %2303 = vmatpush1.bf16.msra.mxu0 0
        %2304 = vmatprep.subr.bf16.mxu0 0
        %2305 = vmatpush1.bf16.msra.mxu0 0
        %2306 = vmatprep.subr.bf16.mxu0 0
        %2307 = vmatpush1.bf16.msra.mxu0 0
        %2308 = vmatprep.subr.bf16.mxu0 0
        %2309 = vmatpush1.bf16.msra.mxu0 0
        %2310 = vmatprep.subr.bf16.mxu0 0
        %2311 = vmatpush1.bf16.msra.mxu0 0
        %2312 = vmatprep.subr.bf16.mxu0 0
        %2313 = vmatpush1.bf16.msra.mxu0 0
        %2314 = vmatprep.mubr.bf16.mxu0 0
        %2315 = vmatmul.mubr.bf16.gmra.mrb[0].mxu0 %v2280
        %v2316 = vpop.f32.mrb[0].mxu0
        %v2317 = vadd.f32 0.0, %v2316
        %v2318 = vpop.f32.mrb[0].mxu0
        %v2319 = vpop.f32.mrb[0].mxu0
        %v2320 = vpop.f32.mrb[0].mxu0
        %2321 = vdwg.mxu0
        %v2324 = vunpack.c.l.b16 %v2043
        %v2325 = vunpack.c.l.b16 %v2044
        %v2326 = vpack.c.b16 %v2325, %v2324
        %v2329 = vsel %vm1417, %v2159, 0
        %2331 = vmatprep.subr.bf16.mxu0 0
        %2332 = vmatpush1.bf16.msra.mxu0 %v2326
        %2333 = vmatprep.subr.bf16.mxu0 0
        %2334 = vmatpush1.bf16.msra.mxu0 0
        %2335 = vmatprep.subr.bf16.mxu0 0
        %2336 = vmatpush1.bf16.msra.mxu0 0
        %2337 = vmatprep.subr.bf16.mxu0 0
        %2338 = vmatpush1.bf16.msra.mxu0 0
        %2339 = vmatprep.subr.bf16.mxu0 0
        %2340 = vmatpush1.bf16.msra.mxu0 0
        %2341 = vmatprep.subr.bf16.mxu0 0
        %2342 = vmatpush1.bf16.msra.mxu0 0
        %2343 = vmatprep.subr.bf16.mxu0 0
        %2344 = vmatpush1.bf16.msra.mxu0 0
        %2345 = vmatprep.subr.bf16.mxu0 0
        %2346 = vmatpush1.bf16.msra.mxu0 0
        %2347 = vmatprep.subr.bf16.mxu0 0
        %2348 = vmatpush1.bf16.msra.mxu0 0
        %2349 = vmatprep.subr.bf16.mxu0 0
        %2350 = vmatpush1.bf16.msra.mxu0 0
        %2351 = vmatprep.subr.bf16.mxu0 0
        %2352 = vmatpush1.bf16.msra.mxu0 0
        %2353 = vmatprep.subr.bf16.mxu0 0
        %2354 = vmatpush1.bf16.msra.mxu0 0
        %2355 = vmatprep.subr.bf16.mxu0 0
        %2356 = vmatpush1.bf16.msra.mxu0 0
        %2357 = vmatprep.subr.bf16.mxu0 0
        %2358 = vmatpush1.bf16.msra.mxu0 0
        %2359 = vmatprep.subr.bf16.mxu0 0
        %2360 = vmatpush1.bf16.msra.mxu0 0
        %2361 = vmatprep.subr.bf16.mxu0 0
        %2362 = vmatpush1.bf16.msra.mxu0 0
        %2363 = vmatprep.mubr.bf16.mxu0 0
        %2364 = vmatmul.mubr.bf16.gmra.mrb[0].mxu0 %v2329
        %v2365 = vpop.f32.mrb[0].mxu0
        %v2366 = vadd.f32 %v2317, %v2365
        %v2367 = vpop.f32.mrb[0].mxu0
        %v2368 = vpop.f32.mrb[0].mxu0
        %v2369 = vpop.f32.mrb[0].mxu0
        %2370 = vdwg.mxu0
        %s2371 = scalar_lea.vmem %s10, 1
        %v2372 = vld [vmem:[%s2371] sm:$0x1]
        %v2374 = vlaneseq
        %v2375 = vshrl.u32 %v2374, 7
        %v2376 = vsub.s32 0, %v2375
        %v2377 = vrot.slane %v2372, %v2376
        %v2379 = vadd.f32 %v2366, %v2377
        %v2380 = vadd.f32 %v2379, %v1972
        %s2381 = scalar_lea.vmem %s11, 1
        %v2382 = vld [vmem:[%s2381] sm:$0x1]
        %s2383 = scalar_lea.vmem %s12, 1
        %v2384 = vld [vmem:[%s2383] sm:$0x1]
        %v2385 = vsel %vm870, %v2380, 0.0
        %2386 = vadd.xlane.f32.xlu0 %v2385
        %v2387 = vpop.xlane.xlu0 %2386
        %v2388 = vmul.f32 %v2387, %v1313
        %v2389 = vsub.f32 %v2380, %v2388
        %v2390 = vmul.f32 %v2389, %v2389
        %v2391 = vsel %vm870, %v2390, 0.0
        %2392 = vadd.xlane.f32.xlu0 %v2391
        %v2393 = vpop.xlane.xlu0 %2392
        %v2394 = vmul.f32 %v2393, %v1313
        %v2395 = vadd.f32 %v2394, 1e-12
        %v2396 = vrsqrt.pop %v2395
        %v2397 = vmul.f32 %v2389, %v2396
        %v2399 = vlaneseq
        %v2400 = vshrl.u32 %v2399, 7
        %v2401 = vsub.s32 0, %v2400
        %v2402 = vrot.slane %v2382, %v2401
        %v2404 = vmul.f32 %v2397, %v2402
        %v2406 = vlaneseq
        %v2407 = vshrl.u32 %v2406, 7
        %v2408 = vsub.s32 0, %v2407
        %v2409 = vrot.slane %v2384, %v2408
        %v2411 = vadd.f32 %v2404, %v2409
        %v2412 = vpack.c.bf16 %v2411, %v2411
        %s2413 = scalar_lea.vmem %s13, 16
        %v2414 = vld [vmem:[%s2413] sm:$0xf]
        %v2415 = vld [vmem:[%s2413 + $0x4] sm:$0xf]
        %v2416 = vld [vmem:[%s2413 + $0x8] sm:$0xf]
        %v2417 = vld [vmem:[%s2413 + $0xc] sm:$0xf]
        %s2418 = scalar_lea.vmem %s14, 1
        %v2419 = vld [vmem:[%s2418] sm:$0x1]
        %v2421 = vlaneseq
        %v2422 = vshrl.u32 %v2421, 7
        %v2423 = vsub.s32 0, %v2422
        %v2424 = vrot.slane %v2419, %v2423
        %v2430 = vunpack.c.l.b16 %v2414
        %v2431 = vunpack.c.l.b16 %v2415
        %v2432 = vunpack.c.l.b16 %v2416
        %v2433 = vunpack.c.l.b16 %v2417
        %v2434 = vpack.c.b16 %v2431, %v2430
        %v2435 = vpack.c.b16 %v2433, %v2432
        %v2439 = vsel %vm870, %v2412, 0
        %2441 = vmatprep.subr.bf16.mxu0 0
        %2442 = vmatpush1.bf16.msra.mxu0 %v2434
        %2443 = vmatprep.subr.bf16.mxu0 0
        %2444 = vmatpush1.bf16.msra.mxu0 %v2435
        %2445 = vmatprep.subr.bf16.mxu0 0
        %2446 = vmatpush1.bf16.msra.mxu0 0
        %2447 = vmatprep.subr.bf16.mxu0 0
        %2448 = vmatpush1.bf16.msra.mxu0 0
        %2449 = vmatprep.subr.bf16.mxu0 0
        %2450 = vmatpush1.bf16.msra.mxu0 0
        %2451 = vmatprep.subr.bf16.mxu0 0
        %2452 = vmatpush1.bf16.msra.mxu0 0
        %2453 = vmatprep.subr.bf16.mxu0 0
        %2454 = vmatpush1.bf16.msra.mxu0 0
        %2455 = vmatprep.subr.bf16.mxu0 0
        %2456 = vmatpush1.bf16.msra.mxu0 0
        %2457 = vmatprep.subr.bf16.mxu0 0
        %2458 = vmatpush1.bf16.msra.mxu0 0
        %2459 = vmatprep.subr.bf16.mxu0 0
        %2460 = vmatpush1.bf16.msra.mxu0 0
        %2461 = vmatprep.subr.bf16.mxu0 0
        %2462 = vmatpush1.bf16.msra.mxu0 0
        %2463 = vmatprep.subr.bf16.mxu0 0
        %2464 = vmatpush1.bf16.msra.mxu0 0
        %2465 = vmatprep.subr.bf16.mxu0 0
        %2466 = vmatpush1.bf16.msra.mxu0 0
        %2467 = vmatprep.subr.bf16.mxu0 0
        %2468 = vmatpush1.bf16.msra.mxu0 0
        %2469 = vmatprep.subr.bf16.mxu0 0
        %2470 = vmatpush1.bf16.msra.mxu0 0
        %2471 = vmatprep.subr.bf16.mxu0 0
        %2472 = vmatpush1.bf16.msra.mxu0 0
        %2473 = vmatprep.mubr.bf16.mxu0 0
        %2474 = vmatmul.mubr.bf16.gmra.mrb[0].mxu0 %v2439
        %v2475 = vpop.f32.mrb[0].mxu0
        %v2476 = vadd.f32 %v2424, %v2475
        %v2477 = vpop.f32.mrb[0].mxu0
        %v2478 = vpop.f32.mrb[0].mxu0
        %v2479 = vpop.f32.mrb[0].mxu0
        %2480 = vdwg.mxu0
        %v2481 = vmul.f32 %v2476, 0.5
        %v2482 = vmul.f32 %v2476, 0.044715
        %v2483 = vmul.f32 %v2482, %v2476
        %v2484 = vmul.f32 %v2483, %v2476
        %v2485 = vadd.f32 %v2476, %v2484
        %v2486 = vmul.f32 %v2485, 0.7978846
        %v2487 = vtanh.pop %v2486
        %v2488 = vadd.f32 %v2487, 1.0
        %v2489 = vmul.f32 %v2481, %v2488
        %v2490 = vpack.c.bf16 %v2489, %v2489
        %s2491 = scalar_lea.vmem %s15, 32
        %v2492 = vld [vmem:[%s2491] sm:$0xf]
        %v2493 = vld [vmem:[%s2491 + $0x4] sm:$0xf]
        %v2494 = vld [vmem:[%s2491 + $0x8] sm:$0xf]
        %v2495 = vld [vmem:[%s2491 + $0xc] sm:$0xf]
        %v2496 = vld [vmem:[%s2491 + $0x10] sm:$0xf]
        %v2497 = vld [vmem:[%s2491 + $0x14] sm:$0xf]
        %v2498 = vld [vmem:[%s2491 + $0x18] sm:$0xf]
        %v2499 = vld [vmem:[%s2491 + $0x1c] sm:$0xf]
        %s2500 = scalar_lea.vmem %s16, 1
        %v2501 = vld [vmem:[%s2500] sm:$0x1]
        %v2503 = vlaneseq
        %v2504 = vshrl.u32 %v2503, 7
        %v2505 = vsub.s32 0, %v2504
        %v2506 = vrot.slane %v2501, %v2505
        %v2516 = vunpack.c.l.b16 %v2492
        %v2517 = vunpack.c.l.b16 %v2493
        %v2518 = vunpack.c.l.b16 %v2494
        %v2519 = vunpack.c.l.b16 %v2495
        %v2520 = vunpack.c.l.b16 %v2496
        %v2521 = vunpack.c.l.b16 %v2497
        %v2522 = vunpack.c.l.b16 %v2498
        %v2523 = vunpack.c.l.b16 %v2499
        %v2524 = vpack.c.b16 %v2517, %v2516
        %v2525 = vpack.c.b16 %v2519, %v2518
        %v2526 = vpack.c.b16 %v2521, %v2520
        %v2527 = vpack.c.b16 %v2523, %v2522
        %v2533 = vsel %vm1899, %v2490, 0
        %2535 = vmatprep.subr.bf16.mxu0 0
        %2536 = vmatpush1.bf16.msra.mxu0 %v2524
        %2537 = vmatprep.subr.bf16.mxu0 0
        %2538 = vmatpush1.bf16.msra.mxu0 %v2525
        %2539 = vmatprep.subr.bf16.mxu0 0
        %2540 = vmatpush1.bf16.msra.mxu0 %v2526
        %2541 = vmatprep.subr.bf16.mxu0 0
        %2542 = vmatpush1.bf16.msra.mxu0 %v2527
        %2543 = vmatprep.subr.bf16.mxu0 0
        %2544 = vmatpush1.bf16.msra.mxu0 0
        %2545 = vmatprep.subr.bf16.mxu0 0
        %2546 = vmatpush1.bf16.msra.mxu0 0
        %2547 = vmatprep.subr.bf16.mxu0 0
        %2548 = vmatpush1.bf16.msra.mxu0 0
        %2549 = vmatprep.subr.bf16.mxu0 0
        %2550 = vmatpush1.bf16.msra.mxu0 0
        %2551 = vmatprep.subr.bf16.mxu0 0
        %2552 = vmatpush1.bf16.msra.mxu0 0
        %2553 = vmatprep.subr.bf16.mxu0 0
        %2554 = vmatpush1.bf16.msra.mxu0 0
        %2555 = vmatprep.subr.bf16.mxu0 0
        %2556 = vmatpush1.bf16.msra.mxu0 0
        %2557 = vmatprep.subr.bf16.mxu0 0
        %2558 = vmatpush1.bf16.msra.mxu0 0
        %2559 = vmatprep.subr.bf16.mxu0 0
        %2560 = vmatpush1.bf16.msra.mxu0 0
        %2561 = vmatprep.subr.bf16.mxu0 0
        %2562 = vmatpush1.bf16.msra.mxu0 0
        %2563 = vmatprep.subr.bf16.mxu0 0
        %2564 = vmatpush1.bf16.msra.mxu0 0
        %2565 = vmatprep.subr.bf16.mxu0 0
        %2566 = vmatpush1.bf16.msra.mxu0 0
        %2567 = vmatprep.mubr.bf16.mxu0 0
        %2568 = vmatmul.mubr.bf16.gmra.mrb[0].mxu0 %v2533
        %v2569 = vpop.f32.mrb[0].mxu0
        %v2570 = vadd.f32 %v2506, %v2569
        %v2571 = vpop.f32.mrb[0].mxu0
        %v2572 = vpop.f32.mrb[0].mxu0
        %v2573 = vpop.f32.mrb[0].mxu0
        %2574 = vdwg.mxu0
        %v2575 = vadd.f32 %v2570, %v2411
        %s2576 = scalar_lea.vmem %s17, 1
        %v2577 = vld [vmem:[%s2576] sm:$0x1]
        %s2578 = scalar_lea.vmem %s18, 1
        %v2579 = vld [vmem:[%s2578] sm:$0x1]
        %v2580 = vsel %vm870, %v2575, 0.0
        %2581 = vadd.xlane.f32.xlu0 %v2580
        %v2582 = vpop.xlane.xlu0 %2581
        %v2583 = vmul.f32 %v2582, %v1313
        %v2584 = vsub.f32 %v2575, %v2583
        %v2585 = vmul.f32 %v2584, %v2584
        %v2586 = vsel %vm870, %v2585, 0.0
        %2587 = vadd.xlane.f32.xlu0 %v2586
        %v2588 = vpop.xlane.xlu0 %2587
        %v2589 = vmul.f32 %v2588, %v1313
        %v2590 = vadd.f32 %v2589, 1e-12
        %v2591 = vrsqrt.pop %v2590
        %v2592 = vmul.f32 %v2584, %v2591
        %v2594 = vlaneseq
        %v2595 = vshrl.u32 %v2594, 7
        %v2596 = vsub.s32 0, %v2595
        %v2597 = vrot.slane %v2577, %v2596
        %v2599 = vmul.f32 %v2592, %v2597
        %v2601 = vlaneseq
        %v2602 = vshrl.u32 %v2601, 7
        %v2603 = vsub.s32 0, %v2602
        %v2604 = vrot.slane %v2579, %v2603
        %v2606 = vadd.f32 %v2599, %v2604
        %v2607 = vpack.c.bf16 %v2606, %v2606
        %v2608 = vld [vmem:[%s19] sm:$0xf]
        %v2609 = vld [vmem:[%s19 + $0x4] sm:$0xf]
        %v2610 = vld [vmem:[%s19 + $0x8] sm:$0xf]
        %v2611 = vld [vmem:[%s19 + $0xc] sm:$0xf]
        %v2612 = vld [vmem:[%s20] sm:$0x1]
        %v2614 = vlaneseq
        %v2615 = vshrl.u32 %v2614, 7
        %v2616 = vsub.s32 0, %v2615
        %v2617 = vrot.slane %v2612, %v2616
        %v2623 = vunpack.c.l.b16 %v2608
        %v2624 = vunpack.c.l.b16 %v2609
        %v2625 = vunpack.c.l.b16 %v2610
        %v2626 = vunpack.c.l.b16 %v2611
        %v2627 = vpack.c.b16 %v2624, %v2623
        %v2628 = vpack.c.b16 %v2626, %v2625
        %v2632 = vsel %vm870, %v2607, 0
        %2634 = vmatprep.subr.bf16.mxu0 0
        %2635 = vmatpush1.bf16.msra.mxu0 %v2627
        %2636 = vmatprep.subr.bf16.mxu0 0
        %2637 = vmatpush1.bf16.msra.mxu0 %v2628
        %2638 = vmatprep.subr.bf16.mxu0 0
        %2639 = vmatpush1.bf16.msra.mxu0 0
        %2640 = vmatprep.subr.bf16.mxu0 0
        %2641 = vmatpush1.bf16.msra.mxu0 0
        %2642 = vmatprep.subr.bf16.mxu0 0
        %2643 = vmatpush1.bf16.msra.mxu0 0
        %2644 = vmatprep.subr.bf16.mxu0 0
        %2645 = vmatpush1.bf16.msra.mxu0 0
        %2646 = vmatprep.subr.bf16.mxu0 0
        %2647 = vmatpush1.bf16.msra.mxu0 0
        %2648 = vmatprep.subr.bf16.mxu0 0
        %2649 = vmatpush1.bf16.msra.mxu0 0
        %2650 = vmatprep.subr.bf16.mxu0 0
        %2651 = vmatpush1.bf16.msra.mxu0 0
        %2652 = vmatprep.subr.bf16.mxu0 0
        %2653 = vmatpush1.bf16.msra.mxu0 0
        %2654 = vmatprep.subr.bf16.mxu0 0
        %2655 = vmatpush1.bf16.msra.mxu0 0
        %2656 = vmatprep.subr.bf16.mxu0 0
        %2657 = vmatpush1.bf16.msra.mxu0 0
        %2658 = vmatprep.subr.bf16.mxu0 0
        %2659 = vmatpush1.bf16.msra.mxu0 0
        %2660 = vmatprep.subr.bf16.mxu0 0
        %2661 = vmatpush1.bf16.msra.mxu0 0
        %2662 = vmatprep.subr.bf16.mxu0 0
        %2663 = vmatpush1.bf16.msra.mxu0 0
        %2664 = vmatprep.subr.bf16.mxu0 0
        %2665 = vmatpush1.bf16.msra.mxu0 0
        %2666 = vmatprep.mubr.bf16.mxu0 0
        %2667 = vmatmul.mubr.bf16.gmra.mrb[0].mxu0 %v2632
        %v2668 = vpop.f32.mrb[0].mxu0
        %v2669 = vadd.f32 %v2617, %v2668
        %v2670 = vpop.f32.mrb[0].mxu0
        %v2671 = vpop.f32.mrb[0].mxu0
        %v2672 = vpop.f32.mrb[0].mxu0
        %2673 = vdwg.mxu0
        %v2674 = vld [vmem:[%s21] sm:$0xf]
        %v2675 = vld [vmem:[%s21 + $0x4] sm:$0xf]
        %v2676 = vld [vmem:[%s22] sm:$0xf]
        %v2677 = vld [vmem:[%s22 + $0x4] sm:$0xf]
        %v2680 = vunpack.c.l.b16 %v2674
        %v2681 = vunpack.c.l.b16 %v2675
        %v2682 = vpack.c.b16 %v2681, %v2680
        %v2685 = vsel %vm1417, 0, 0
        %2687 = vmatprep.subr.bf16.mxu0 0
        %2688 = vmatpush1.bf16.msra.mxu0 %v2682
        %2689 = vmatprep.subr.bf16.mxu0 0
        %2690 = vmatpush1.bf16.msra.mxu0 0
        %2691 = vmatprep.subr.bf16.mxu0 0
        %2692 = vmatpush1.bf16.msra.mxu0 0
        %2693 = vmatprep.subr.bf16.mxu0 0
        %2694 = vmatpush1.bf16.msra.mxu0 0
        %2695 = vmatprep.subr.bf16.mxu0 0
        %2696 = vmatpush1.bf16.msra.mxu0 0
        %2697 = vmatprep.subr.bf16.mxu0 0
        %2698 = vmatpush1.bf16.msra.mxu0 0
        %2699 = vmatprep.subr.bf16.mxu0 0
        %2700 = vmatpush1.bf16.msra.mxu0 0
        %2701 = vmatprep.subr.bf16.mxu0 0
        %2702 = vmatpush1.bf16.msra.mxu0 0
        %2703 = vmatprep.subr.bf16.mxu0 0
        %2704 = vmatpush1.bf16.msra.mxu0 0
        %2705 = vmatprep.subr.bf16.mxu0 0
        %2706 = vmatpush1.bf16.msra.mxu0 0
        %2707 = vmatprep.subr.bf16.mxu0 0
        %2708 = vmatpush1.bf16.msra.mxu0 0
        %2709 = vmatprep.subr.bf16.mxu0 0
        %2710 = vmatpush1.bf16.msra.mxu0 0
        %2711 = vmatprep.subr.bf16.mxu0 0
        %2712 = vmatpush1.bf16.msra.mxu0 0
        %2713 = vmatprep.subr.bf16.mxu0 0
        %2714 = vmatpush1.bf16.msra.mxu0 0
        %2715 = vmatprep.subr.bf16.mxu0 0
        %2716 = vmatpush1.bf16.msra.mxu0 0
        %2717 = vmatprep.subr.bf16.mxu0 0
        %2718 = vmatpush1.bf16.msra.mxu0 0
        %2719 = vmatprep.mubr.bf16.mxu0 0
        %2720 = vmatmul.mubr.bf16.gmra.mrb[0].mxu0 %v2685
        %v2721 = vpop.f32.mrb[0].mxu0
        %v2722 = vadd.f32 0.0, %v2721
        %v2723 = vpop.f32.mrb[0].mxu0
        %v2724 = vpop.f32.mrb[0].mxu0
        %v2725 = vpop.f32.mrb[0].mxu0
        %2726 = vdwg.mxu0
        %v2727 = vadd.f32 %v2669, %v2722
        %v2730 = vunpack.c.l.b16 %v2676
        %v2731 = vunpack.c.l.b16 %v2677
        %v2732 = vpack.c.b16 %v2731, %v2730
        %2734 = vmatprep.subr.bf16.mxu0 0
        %2735 = vmatpush1.bf16.msra.mxu0 %v2732
        %2736 = vmatprep.subr.bf16.mxu0 0
        %2737 = vmatpush1.bf16.msra.mxu0 0
        %2738 = vmatprep.subr.bf16.mxu0 0
        %2739 = vmatpush1.bf16.msra.mxu0 0
        %2740 = vmatprep.subr.bf16.mxu0 0
        %2741 = vmatpush1.bf16.msra.mxu0 0
        %2742 = vmatprep.subr.bf16.mxu0 0
        %2743 = vmatpush1.bf16.msra.mxu0 0
        %2744 = vmatprep.subr.bf16.mxu0 0
        %2745 = vmatpush1.bf16.msra.mxu0 0
        %2746 = vmatprep.subr.bf16.mxu0 0
        %2747 = vmatpush1.bf16.msra.mxu0 0
        %2748 = vmatprep.subr.bf16.mxu0 0
        %2749 = vmatpush1.bf16.msra.mxu0 0
        %2750 = vmatprep.subr.bf16.mxu0 0
        %2751 = vmatpush1.bf16.msra.mxu0 0
        %2752 = vmatprep.subr.bf16.mxu0 0
        %2753 = vmatpush1.bf16.msra.mxu0 0
        %2754 = vmatprep.subr.bf16.mxu0 0
        %2755 = vmatpush1.bf16.msra.mxu0 0
        %2756 = vmatprep.subr.bf16.mxu0 0
        %2757 = vmatpush1.bf16.msra.mxu0 0
        %2758 = vmatprep.subr.bf16.mxu0 0
        %2759 = vmatpush1.bf16.msra.mxu0 0
        %2760 = vmatprep.subr.bf16.mxu0 0
        %2761 = vmatpush1.bf16.msra.mxu0 0
        %2762 = vmatprep.subr.bf16.mxu0 0
        %2763 = vmatpush1.bf16.msra.mxu0 0
        %2764 = vmatprep.subr.bf16.mxu0 0
        %2765 = vmatpush1.bf16.msra.mxu0 0
        %2766 = vmatprep.mubr.bf16.mxu0 0
        %2767 = vmatmul.mubr.bf16.gmra.mrb[0].mxu0 %v2685
        %v2768 = vpop.f32.mrb[0].mxu0
        %v2769 = vadd.f32 0.0, %v2768
        %v2770 = vpop.f32.mrb[0].mxu0
        %v2771 = vpop.f32.mrb[0].mxu0
        %v2772 = vpop.f32.mrb[0].mxu0
        %2773 = vdwg.mxu0
        %v2775 = vrot.slane %v2769, 1
        %2776 = vrot.lane.b32.xlu0 %v2775, 64
        %v2777 = vpop.permute.xlu0 %2776
        %v2779 = vadd.f32 %v2669, %v2777
        %v2780 = vxor.u32 %v2727, 2147483648
        %v2781 = vmul.f32 %v2780, 1.442695
        %v2782 = vpow.pop %v2781
        %v2783 = vadd.f32 %v2782, 1.0
        %v2784 = vrcp.pop %v2783
        %v2785 = vmul.f32 1.0, %v2784
        %v2786 = vtanh.pop %v2727
        %v2787 = vmul.f32 %v2785, 0.0
        %2789 = vrot.lane.b32.xlu0 %v2786, 96
        %v2790 = vpop.permute.xlu0 %2789
        %v2792 = vmul.f32 %v2785, %v2790
        %2794 = vrot.lane.b32.xlu0 %v2792, 16
        %v2795 = vpop.permute.xlu0 %2794
        %v2797 = vadd.f32 %v2787, %v2795
        %v2798 = vtanh.pop %v2797
        %2800 = vrot.lane.b32.xlu0 %v2798, 32
        %v2801 = vpop.permute.xlu0 %2800
        %v2803 = vmul.f32 %v2785, %v2801
        %v2804 = vxor.u32 %v2779, 2147483648
        %v2805 = vmul.f32 %v2804, 1.442695
        %v2806 = vpow.pop %v2805
        %v2807 = vadd.f32 %v2806, 1.0
        %v2808 = vrcp.pop %v2807
        %v2809 = vmul.f32 1.0, %v2808
        %v2810 = vtanh.pop %v2779
        %v2811 = vmul.f32 %v2809, 0.0
        %2813 = vrot.lane.b32.xlu0 %v2810, 96
        %v2814 = vpop.permute.xlu0 %2813
        %v2816 = vmul.f32 %v2809, %v2814
        %2818 = vrot.lane.b32.xlu0 %v2816, 16
        %v2819 = vpop.permute.xlu0 %2818
        %v2821 = vadd.f32 %v2811, %v2819
        %v2822 = vtanh.pop %v2821
        %2824 = vrot.lane.b32.xlu0 %v2822, 32
        %v2825 = vpop.permute.xlu0 %2824
        %v2827 = vmul.f32 %v2809, %v2825
        %2829 = vrot.lane.b32.xlu0 %v2803, 80
        %v2830 = vpop.permute.xlu0 %2829
        %vm2832 = vcmask 122880
        %2833 = vst.msk [vmem:[#allocation2] sm:$0x1] %vm2832, %v2830
        %2835 = vrot.lane.b32.xlu0 %v2827, 32
        %v2836 = vpop.permute.xlu0 %2835
        %vm2838 = vcmask 261255
        %2839 = vst.msk [vmem:[#allocation2] sm:$0x80] %vm2838, %v2836
        %v2840 = vpack.c.bf16 %v2803, %v2803
        %2842 = vrot.lane.b32.xlu0 %v2840, 80
        %v2843 = vpop.permute.xlu0 %2842
        %v2845 = vsel %vm1417, %v2843, 0
        %2847 = vmatprep.subr.bf16.mxu0 0
        %2848 = vmatpush1.bf16.msra.mxu0 %v2682
        %2849 = vmatprep.subr.bf16.mxu0 0
        %2850 = vmatpush1.bf16.msra.mxu0 0
        %2851 = vmatprep.subr.bf16.mxu0 0
        %2852 = vmatpush1.bf16.msra.mxu0 0
        %2853 = vmatprep.subr.bf16.mxu0 0
        %2854 = vmatpush1.bf16.msra.mxu0 0
        %2855 = vmatprep.subr.bf16.mxu0 0
        %2856 = vmatpush1.bf16.msra.mxu0 0
        %2857 = vmatprep.subr.bf16.mxu0 0
        %2858 = vmatpush1.bf16.msra.mxu0 0
        %2859 = vmatprep.subr.bf16.mxu0 0
        %2860 = vmatpush1.bf16.msra.mxu0 0
        %2861 = vmatprep.subr.bf16.mxu0 0
        %2862 = vmatpush1.bf16.msra.mxu0 0
        %2863 = vmatprep.subr.bf16.mxu0 0
        %2864 = vmatpush1.bf16.msra.mxu0 0
        %2865 = vmatprep.subr.bf16.mxu0 0
        %2866 = vmatpush1.bf16.msra.mxu0 0
        %2867 = vmatprep.subr.bf16.mxu0 0
        %2868 = vmatpush1.bf16.msra.mxu0 0
        %2869 = vmatprep.subr.bf16.mxu0 0
        %2870 = vmatpush1.bf16.msra.mxu0 0
        %2871 = vmatprep.subr.bf16.mxu0 0
        %2872 = vmatpush1.bf16.msra.mxu0 0
        %2873 = vmatprep.subr.bf16.mxu0 0
        %2874 = vmatpush1.bf16.msra.mxu0 0
        %2875 = vmatprep.subr.bf16.mxu0 0
        %2876 = vmatpush1.bf16.msra.mxu0 0
        %2877 = vmatprep.subr.bf16.mxu0 0
        %2878 = vmatpush1.bf16.msra.mxu0 0
        %2879 = vmatprep.mubr.bf16.mxu0 0
        %2880 = vmatmul.mubr.bf16.gmra.mrb[0].mxu0 %v2845
        %v2881 = vpop.f32.mrb[0].mxu0
        %v2882 = vadd.f32 0.0, %v2881
        %v2883 = vpop.f32.mrb[0].mxu0
        %v2884 = vpop.f32.mrb[0].mxu0
        %v2885 = vpop.f32.mrb[0].mxu0
        %2886 = vdwg.mxu0
        %v2888 = vrot.slane %v2882, 7
        %v2890 = vadd.f32 %v2669, %v2888
        %v2891 = vpack.c.bf16 %v2827, %v2827
        %v2893 = vshrl.u32 %v2891, 16
        %v2895 = vrot.slane %v2893, 3
        %2896 = vrot.lane.b32.xlu0 %v2895, 16
        %v2897 = vpop.permute.xlu0 %2896
        %v2899 = vsel %vm1417, %v2897, 0
        %2901 = vmatprep.subr.bf16.mxu0 0
        %2902 = vmatpush1.bf16.msra.mxu0 %v2732
        %2903 = vmatprep.subr.bf16.mxu0 0
        %2904 = vmatpush1.bf16.msra.mxu0 0
        %2905 = vmatprep.subr.bf16.mxu0 0
        %2906 = vmatpush1.bf16.msra.mxu0 0
        %2907 = vmatprep.subr.bf16.mxu0 0
        %2908 = vmatpush1.bf16.msra.mxu0 0
        %2909 = vmatprep.subr.bf16.mxu0 0
        %2910 = vmatpush1.bf16.msra.mxu0 0
        %2911 = vmatprep.subr.bf16.mxu0 0
        %2912 = vmatpush1.bf16.msra.mxu0 0
        %2913 = vmatprep.subr.bf16.mxu0 0
        %2914 = vmatpush1.bf16.msra.mxu0 0
        %2915 = vmatprep.subr.bf16.mxu0 0
        %2916 = vmatpush1.bf16.msra.mxu0 0
        %2917 = vmatprep.subr.bf16.mxu0 0
        %2918 = vmatpush1.bf16.msra.mxu0 0
        %2919 = vmatprep.subr.bf16.mxu0 0
        %2920 = vmatpush1.bf16.msra.mxu0 0
        %2921 = vmatprep.subr.bf16.mxu0 0
        %2922 = vmatpush1.bf16.msra.mxu0 0
        %2923 = vmatprep.subr.bf16.mxu0 0
        %2924 = vmatpush1.bf16.msra.mxu0 0
        %2925 = vmatprep.subr.bf16.mxu0 0
        %2926 = vmatpush1.bf16.msra.mxu0 0
        %2927 = vmatprep.subr.bf16.mxu0 0
        %2928 = vmatpush1.bf16.msra.mxu0 0
        %2929 = vmatprep.subr.bf16.mxu0 0
        %2930 = vmatpush1.bf16.msra.mxu0 0
        %2931 = vmatprep.subr.bf16.mxu0 0
        %2932 = vmatpush1.bf16.msra.mxu0 0
        %2933 = vmatprep.mubr.bf16.mxu0 0
        %2934 = vmatmul.mubr.bf16.gmra.mrb[0].mxu0 %v2899
        %v2935 = vpop.f32.mrb[0].mxu0
        %v2936 = vadd.f32 0.0, %v2935
        %v2937 = vpop.f32.mrb[0].mxu0
        %v2938 = vpop.f32.mrb[0].mxu0
        %v2939 = vpop.f32.mrb[0].mxu0
        %2940 = vdwg.mxu0
        %v2942 = vrot.slane %v2936, 2
        %2943 = vrot.lane.b32.xlu0 %v2942, 64
        %v2944 = vpop.permute.xlu0 %2943
        %v2946 = vadd.f32 %v2669, %v2944
        %v2947 = vxor.u32 %v2890, 2147483648
        %v2948 = vmul.f32 %v2947, 1.442695
        %v2949 = vpow.pop %v2948
        %v2950 = vadd.f32 %v2949, 1.0
        %v2951 = vrcp.pop %v2950
        %v2952 = vmul.f32 1.0, %v2951
        %v2953 = vtanh.pop %v2890
        %v2955 = vrot.slane %v2797, 7
        %v2957 = vmul.f32 %v2952, %v2955
        %2959 = vrot.lane.b32.xlu0 %v2953, 96
        %v2960 = vpop.permute.xlu0 %2959
        %v2962 = vmul.f32 %v2952, %v2960
        %2964 = vrot.lane.b32.xlu0 %v2962, 16
        %v2965 = vpop.permute.xlu0 %2964
        %v2967 = vadd.f32 %v2957, %v2965
        %v2968 = vtanh.pop %v2967
        %2970 = vrot.lane.b32.xlu0 %v2968, 32
        %v2971 = vpop.permute.xlu0 %2970
        %v2973 = vmul.f32 %v2952, %v2971
        %v2974 = vxor.u32 %v2946, 2147483648
        %v2975 = vmul.f32 %v2974, 1.442695
        %v2976 = vpow.pop %v2975
        %v2977 = vadd.f32 %v2976, 1.0
        %v2978 = vrcp.pop %v2977
        %v2979 = vmul.f32 1.0, %v2978
        %v2980 = vtanh.pop %v2946
        %v2982 = vrot.slane %v2821, 1
        %v2984 = vmul.f32 %v2979, %v2982
        %2986 = vrot.lane.b32.xlu0 %v2980, 96
        %v2987 = vpop.permute.xlu0 %2986
        %v2989 = vmul.f32 %v2979, %v2987
        %2991 = vrot.lane.b32.xlu0 %v2989, 16
        %v2992 = vpop.permute.xlu0 %2991
        %v2994 = vadd.f32 %v2984, %v2992
        %v2995 = vtanh.pop %v2994
        %2997 = vrot.lane.b32.xlu0 %v2995, 32
        %v2998 = vpop.permute.xlu0 %2997
        %v3000 = vmul.f32 %v2979, %v2998
        %3002 = vrot.lane.b32.xlu0 %v2973, 80
        %v3003 = vpop.permute.xlu0 %3002
        %vm3005 = vcmask 123905
        %3006 = vst.msk [vmem:[#allocation2] sm:$0x2] %vm3005, %v3003
        %3008 = vrot.lane.b32.xlu0 %v3000, 32
        %v3009 = vpop.permute.xlu0 %3008
        %vm3011 = vcmask 260230
        %3012 = vst.msk [vmem:[#allocation2] sm:$0x40] %vm3011, %v3009
        %v3013 = vpack.c.bf16 %v2973, %v2973
        %v3015 = vshrl.u32 %v3013, 16
        %3017 = vrot.lane.b32.xlu0 %v3015, 80
        %v3018 = vpop.permute.xlu0 %3017
        %v3020 = vsel %vm1417, %v3018, 0
        %3022 = vmatprep.subr.bf16.mxu0 0
        %3023 = vmatpush1.bf16.msra.mxu0 %v2682
        %3024 = vmatprep.subr.bf16.mxu0 0
        %3025 = vmatpush1.bf16.msra.mxu0 0
        %3026 = vmatprep.subr.bf16.mxu0 0
        %3027 = vmatpush1.bf16.msra.mxu0 0
        %3028 = vmatprep.subr.bf16.mxu0 0
        %3029 = vmatpush1.bf16.msra.mxu0 0
        %3030 = vmatprep.subr.bf16.mxu0 0
        %3031 = vmatpush1.bf16.msra.mxu0 0
        %3032 = vmatprep.subr.bf16.mxu0 0
        %3033 = vmatpush1.bf16.msra.mxu0 0
        %3034 = vmatprep.subr.bf16.mxu0 0
        %3035 = vmatpush1.bf16.msra.mxu0 0
        %3036 = vmatprep.subr.bf16.mxu0 0
        %3037 = vmatpush1.bf16.msra.mxu0 0
        %3038 = vmatprep.subr.bf16.mxu0 0
        %3039 = vmatpush1.bf16.msra.mxu0 0
        %3040 = vmatprep.subr.bf16.mxu0 0
        %3041 = vmatpush1.bf16.msra.mxu0 0
        %3042 = vmatprep.subr.bf16.mxu0 0
        %3043 = vmatpush1.bf16.msra.mxu0 0
        %3044 = vmatprep.subr.bf16.mxu0 0
        %3045 = vmatpush1.bf16.msra.mxu0 0
        %3046 = vmatprep.subr.bf16.mxu0 0
        %3047 = vmatpush1.bf16.msra.mxu0 0
        %3048 = vmatprep.subr.bf16.mxu0 0
        %3049 = vmatpush1.bf16.msra.mxu0 0
        %3050 = vmatprep.subr.bf16.mxu0 0
        %3051 = vmatpush1.bf16.msra.mxu0 0
        %3052 = vmatprep.subr.bf16.mxu0 0
        %3053 = vmatpush1.bf16.msra.mxu0 0
        %3054 = vmatprep.mubr.bf16.mxu0 0
        %3055 = vmatmul.mubr.bf16.gmra.mrb[0].mxu0 %v3020
        %v3056 = vpop.f32.mrb[0].mxu0
        %v3057 = vadd.f32 0.0, %v3056
        %v3058 = vpop.f32.mrb[0].mxu0
        %v3059 = vpop.f32.mrb[0].mxu0
        %v3060 = vpop.f32.mrb[0].mxu0
        %3061 = vdwg.mxu0
        %v3063 = vrot.slane %v3057, 6
        %v3065 = vadd.f32 %v2669, %v3063
        %v3066 = vpack.c.bf16 %v3000, %v3000
        %v3068 = vrot.slane %v3066, 3
        %3069 = vrot.lane.b32.xlu0 %v3068, 16
        %v3070 = vpop.permute.xlu0 %3069
        %v3072 = vsel %vm1417, %v3070, 0
        %3074 = vmatprep.subr.bf16.mxu0 0
        %3075 = vmatpush1.bf16.msra.mxu0 %v2732
        %3076 = vmatprep.subr.bf16.mxu0 0
        %3077 = vmatpush1.bf16.msra.mxu0 0
        %3078 = vmatprep.subr.bf16.mxu0 0
        %3079 = vmatpush1.bf16.msra.mxu0 0
        %3080 = vmatprep.subr.bf16.mxu0 0
        %3081 = vmatpush1.bf16.msra.mxu0 0
        %3082 = vmatprep.subr.bf16.mxu0 0
        %3083 = vmatpush1.bf16.msra.mxu0 0
        %3084 = vmatprep.subr.bf16.mxu0 0
        %3085 = vmatpush1.bf16.msra.mxu0 0
        %3086 = vmatprep.subr.bf16.mxu0 0
        %3087 = vmatpush1.bf16.msra.mxu0 0
        %3088 = vmatprep.subr.bf16.mxu0 0
        %3089 = vmatpush1.bf16.msra.mxu0 0
        %3090 = vmatprep.subr.bf16.mxu0 0
        %3091 = vmatpush1.bf16.msra.mxu0 0
        %3092 = vmatprep.subr.bf16.mxu0 0
        %3093 = vmatpush1.bf16.msra.mxu0 0
        %3094 = vmatprep.subr.bf16.mxu0 0
        %3095 = vmatpush1.bf16.msra.mxu0 0
        %3096 = vmatprep.subr.bf16.mxu0 0
        %3097 = vmatpush1.bf16.msra.mxu0 0
        %3098 = vmatprep.subr.bf16.mxu0 0
        %3099 = vmatpush1.bf16.msra.mxu0 0
        %3100 = vmatprep.subr.bf16.mxu0 0
        %3101 = vmatpush1.bf16.msra.mxu0 0
        %3102 = vmatprep.subr.bf16.mxu0 0
        %3103 = vmatpush1.bf16.msra.mxu0 0
        %3104 = vmatprep.subr.bf16.mxu0 0
        %3105 = vmatpush1.bf16.msra.mxu0 0
        %3106 = vmatprep.mubr.bf16.mxu0 0
        %3107 = vmatmul.mubr.bf16.gmra.mrb[0].mxu0 %v3072
        %v3108 = vpop.f32.mrb[0].mxu0
        %v3109 = vadd.f32 0.0, %v3108
        %v3110 = vpop.f32.mrb[0].mxu0
        %v3111 = vpop.f32.mrb[0].mxu0
        %v3112 = vpop.f32.mrb[0].mxu0
        %3113 = vdwg.mxu0
        %v3115 = vrot.slane %v3109, 3
        %3116 = vrot.lane.b32.xlu0 %v3115, 64
        %v3117 = vpop.permute.xlu0 %3116
        %v3119 = vadd.f32 %v2669, %v3117
        %v3120 = vxor.u32 %v3065, 2147483648
        %v3121 = vmul.f32 %v3120, 1.442695
        %v3122 = vpow.pop %v3121
        %v3123 = vadd.f32 %v3122, 1.0
        %v3124 = vrcp.pop %v3123
        %v3125 = vmul.f32 1.0, %v3124
        %v3126 = vtanh.pop %v3065
        %v3128 = vrot.slane %v2967, 7
        %v3130 = vmul.f32 %v3125, %v3128
        %3132 = vrot.lane.b32.xlu0 %v3126, 96
        %v3133 = vpop.permute.xlu0 %3132
        %v3135 = vmul.f32 %v3125, %v3133
        %3137 = vrot.lane.b32.xlu0 %v3135, 16
        %v3138 = vpop.permute.xlu0 %3137
        %v3140 = vadd.f32 %v3130, %v3138
        %v3141 = vtanh.pop %v3140
        %3143 = vrot.lane.b32.xlu0 %v3141, 32
        %v3144 = vpop.permute.xlu0 %3143
        %v3146 = vmul.f32 %v3125, %v3144
        %v3147 = vxor.u32 %v3119, 2147483648
        %v3148 = vmul.f32 %v3147, 1.442695
        %v3149 = vpow.pop %v3148
        %v3150 = vadd.f32 %v3149, 1.0
        %v3151 = vrcp.pop %v3150
        %v3152 = vmul.f32 1.0, %v3151
        %v3153 = vtanh.pop %v3119
        %v3155 = vrot.slane %v2994, 1
        %v3157 = vmul.f32 %v3152, %v3155
        %3159 = vrot.lane.b32.xlu0 %v3153, 96
        %v3160 = vpop.permute.xlu0 %3159
        %v3162 = vmul.f32 %v3152, %v3160
        %3164 = vrot.lane.b32.xlu0 %v3162, 16
        %v3165 = vpop.permute.xlu0 %3164
        %v3167 = vadd.f32 %v3157, %v3165
        %v3168 = vtanh.pop %v3167
        %3170 = vrot.lane.b32.xlu0 %v3168, 32
        %v3171 = vpop.permute.xlu0 %3170
        %v3173 = vmul.f32 %v3152, %v3171
        %3175 = vrot.lane.b32.xlu0 %v3146, 80
        %v3176 = vpop.permute.xlu0 %3175
        %vm3178 = vcmask 124930
        %3179 = vst.msk [vmem:[#allocation2] sm:$0x4] %vm3178, %v3176
        %3181 = vrot.lane.b32.xlu0 %v3173, 32
        %v3182 = vpop.permute.xlu0 %3181
        %vm3184 = vcmask 259205
        %3185 = vst.msk [vmem:[#allocation2] sm:$0x20] %vm3184, %v3182
        %v3186 = vpack.c.bf16 %v3146, %v3146
        %v3188 = vrot.slane %v3186, 1
        %3189 = vrot.lane.b32.xlu0 %v3188, 80
        %v3190 = vpop.permute.xlu0 %3189
        %v3192 = vsel %vm1417, %v3190, 0
        %3194 = vmatprep.subr.bf16.mxu0 0
        %3195 = vmatpush1.bf16.msra.mxu0 %v2682
        %3196 = vmatprep.subr.bf16.mxu0 0
        %3197 = vmatpush1.bf16.msra.mxu0 0
        %3198 = vmatprep.subr.bf16.mxu0 0
        %3199 = vmatpush1.bf16.msra.mxu0 0
        %3200 = vmatprep.subr.bf16.mxu0 0
        %3201 = vmatpush1.bf16.msra.mxu0 0
        %3202 = vmatprep.subr.bf16.mxu0 0
        %3203 = vmatpush1.bf16.msra.mxu0 0
        %3204 = vmatprep.subr.bf16.mxu0 0
        %3205 = vmatpush1.bf16.msra.mxu0 0
        %3206 = vmatprep.subr.bf16.mxu0 0
        %3207 = vmatpush1.bf16.msra.mxu0 0
        %3208 = vmatprep.subr.bf16.mxu0 0
        %3209 = vmatpush1.bf16.msra.mxu0 0
        %3210 = vmatprep.subr.bf16.mxu0 0
        %3211 = vmatpush1.bf16.msra.mxu0 0
        %3212 = vmatprep.subr.bf16.mxu0 0
        %3213 = vmatpush1.bf16.msra.mxu0 0
        %3214 = vmatprep.subr.bf16.mxu0 0
        %3215 = vmatpush1.bf16.msra.mxu0 0
        %3216 = vmatprep.subr.bf16.mxu0 0
        %3217 = vmatpush1.bf16.msra.mxu0 0
        %3218 = vmatprep.subr.bf16.mxu0 0
        %3219 = vmatpush1.bf16.msra.mxu0 0
        %3220 = vmatprep.subr.bf16.mxu0 0
        %3221 = vmatpush1.bf16.msra.mxu0 0
        %3222 = vmatprep.subr.bf16.mxu0 0
        %3223 = vmatpush1.bf16.msra.mxu0 0
        %3224 = vmatprep.subr.bf16.mxu0 0
        %3225 = vmatpush1.bf16.msra.mxu0 0
        %3226 = vmatprep.mubr.bf16.mxu0 0
        %3227 = vmatmul.mubr.bf16.gmra.mrb[0].mxu0 %v3192
        %v3228 = vpop.f32.mrb[0].mxu0
        %v3229 = vadd.f32 0.0, %v3228
        %v3230 = vpop.f32.mrb[0].mxu0
        %v3231 = vpop.f32.mrb[0].mxu0
        %v3232 = vpop.f32.mrb[0].mxu0
        %3233 = vdwg.mxu0
        %v3235 = vrot.slane %v3229, 5
        %v3237 = vadd.f32 %v2669, %v3235
        %v3238 = vpack.c.bf16 %v3173, %v3173
        %v3240 = vshrl.u32 %v3238, 16
        %v3242 = vrot.slane %v3240, 2
        %3243 = vrot.lane.b32.xlu0 %v3242, 16
        %v3244 = vpop.permute.xlu0 %3243
        %v3246 = vsel %vm1417, %v3244, 0
        %3248 = vmatprep.subr.bf16.mxu0 0
        %3249 = vmatpush1.bf16.msra.mxu0 %v2732
        %3250 = vmatprep.subr.bf16.mxu0 0
        %3251 = vmatpush1.bf16.msra.mxu0 0
        %3252 = vmatprep.subr.bf16.mxu0 0
        %3253 = vmatpush1.bf16.msra.mxu0 0
        %3254 = vmatprep.subr.bf16.mxu0 0
        %3255 = vmatpush1.bf16.msra.mxu0 0
        %3256 = vmatprep.subr.bf16.mxu0 0
        %3257 = vmatpush1.bf16.msra.mxu0 0
        %3258 = vmatprep.subr.bf16.mxu0 0
        %3259 = vmatpush1.bf16.msra.mxu0 0
        %3260 = vmatprep.subr.bf16.mxu0 0
        %3261 = vmatpush1.bf16.msra.mxu0 0
        %3262 = vmatprep.subr.bf16.mxu0 0
        %3263 = vmatpush1.bf16.msra.mxu0 0
        %3264 = vmatprep.subr.bf16.mxu0 0
        %3265 = vmatpush1.bf16.msra.mxu0 0
        %3266 = vmatprep.subr.bf16.mxu0 0
        %3267 = vmatpush1.bf16.msra.mxu0 0
        %3268 = vmatprep.subr.bf16.mxu0 0
        %3269 = vmatpush1.bf16.msra.mxu0 0
        %3270 = vmatprep.subr.bf16.mxu0 0
        %3271 = vmatpush1.bf16.msra.mxu0 0
        %3272 = vmatprep.subr.bf16.mxu0 0
        %3273 = vmatpush1.bf16.msra.mxu0 0
        %3274 = vmatprep.subr.bf16.mxu0 0
        %3275 = vmatpush1.bf16.msra.mxu0 0
        %3276 = vmatprep.subr.bf16.mxu0 0
        %3277 = vmatpush1.bf16.msra.mxu0 0
        %3278 = vmatprep.subr.bf16.mxu0 0
        %3279 = vmatpush1.bf16.msra.mxu0 0
        %3280 = vmatprep.mubr.bf16.mxu0 0
        %3281 = vmatmul.mubr.bf16.gmra.mrb[0].mxu0 %v3246
        %v3282 = vpop.f32.mrb[0].mxu0
        %v3283 = vadd.f32 0.0, %v3282
        %v3284 = vpop.f32.mrb[0].mxu0
        %v3285 = vpop.f32.mrb[0].mxu0
        %v3286 = vpop.f32.mrb[0].mxu0
        %3287 = vdwg.mxu0
        %v3289 = vrot.slane %v3283, 4
        %3290 = vrot.lane.b32.xlu0 %v3289, 64
        %v3291 = vpop.permute.xlu0 %3290
        %v3293 = vadd.f32 %v2669, %v3291
        %v3294 = vxor.u32 %v3237, 2147483648
        %v3295 = vmul.f32 %v3294, 1.442695
        %v3296 = vpow.pop %v3295
        %v3297 = vadd.f32 %v3296, 1.0
        %v3298 = vrcp.pop %v3297
        %v3299 = vmul.f32 1.0, %v3298
        %v3300 = vtanh.pop %v3237
        %v3302 = vrot.slane %v3140, 7
        %v3304 = vmul.f32 %v3299, %v3302
        %3306 = vrot.lane.b32.xlu0 %v3300, 96
        %v3307 = vpop.permute.xlu0 %3306
        %v3309 = vmul.f32 %v3299, %v3307
        %3311 = vrot.lane.b32.xlu0 %v3309, 16
        %v3312 = vpop.permute.xlu0 %3311
        %v3314 = vadd.f32 %v3304, %v3312
        %v3315 = vtanh.pop %v3314
        %3317 = vrot.lane.b32.xlu0 %v3315, 32
        %v3318 = vpop.permute.xlu0 %3317
        %v3320 = vmul.f32 %v3299, %v3318
        %v3321 = vxor.u32 %v3293, 2147483648
        %v3322 = vmul.f32 %v3321, 1.442695
        %v3323 = vpow.pop %v3322
        %v3324 = vadd.f32 %v3323, 1.0
        %v3325 = vrcp.pop %v3324
        %v3326 = vmul.f32 1.0, %v3325
        %v3327 = vtanh.pop %v3293
        %v3329 = vrot.slane %v3167, 1
        %v3331 = vmul.f32 %v3326, %v3329
        %3333 = vrot.lane.b32.xlu0 %v3327, 96
        %v3334 = vpop.permute.xlu0 %3333
        %v3336 = vmul.f32 %v3326, %v3334
        %3338 = vrot.lane.b32.xlu0 %v3336, 16
        %v3339 = vpop.permute.xlu0 %3338
        %v3341 = vadd.f32 %v3331, %v3339
        %v3342 = vtanh.pop %v3341
        %3344 = vrot.lane.b32.xlu0 %v3342, 32
        %v3345 = vpop.permute.xlu0 %3344
        %v3347 = vmul.f32 %v3326, %v3345
        %3349 = vrot.lane.b32.xlu0 %v3320, 80
        %v3350 = vpop.permute.xlu0 %3349
        %vm3352 = vcmask 125955
        %3353 = vst.msk [vmem:[#allocation2] sm:$0x8] %vm3352, %v3350
        %3355 = vrot.lane.b32.xlu0 %v3347, 32
        %v3356 = vpop.permute.xlu0 %3355
        %vm3358 = vcmask 258180
        %3359 = vst.msk [vmem:[#allocation2] sm:$0x10] %vm3358, %v3356
        %v3360 = vpack.c.bf16 %v3320, %v3320
        %v3362 = vshrl.u32 %v3360, 16
        %v3364 = vrot.slane %v3362, 1
        %3365 = vrot.lane.b32.xlu0 %v3364, 80
        %v3366 = vpop.permute.xlu0 %3365
        %v3368 = vsel %vm1417, %v3366, 0
        %3370 = vmatprep.subr.bf16.mxu0 0
        %3371 = vmatpush1.bf16.msra.mxu0 %v2682
        %3372 = vmatprep.subr.bf16.mxu0 0
        %3373 = vmatpush1.bf16.msra.mxu0 0
        %3374 = vmatprep.subr.bf16.mxu0 0
        %3375 = vmatpush1.bf16.msra.mxu0 0
        %3376 = vmatprep.subr.bf16.mxu0 0
        %3377 = vmatpush1.bf16.msra.mxu0 0
        %3378 = vmatprep.subr.bf16.mxu0 0
        %3379 = vmatpush1.bf16.msra.mxu0 0
        %3380 = vmatprep.subr.bf16.mxu0 0
        %3381 = vmatpush1.bf16.msra.mxu0 0
        %3382 = vmatprep.subr.bf16.mxu0 0
        %3383 = vmatpush1.bf16.msra.mxu0 0
        %3384 = vmatprep.subr.bf16.mxu0 0
        %3385 = vmatpush1.bf16.msra.mxu0 0
        %3386 = vmatprep.subr.bf16.mxu0 0
        %3387 = vmatpush1.bf16.msra.mxu0 0
        %3388 = vmatprep.subr.bf16.mxu0 0
        %3389 = vmatpush1.bf16.msra.mxu0 0
        %3390 = vmatprep.subr.bf16.mxu0 0
        %3391 = vmatpush1.bf16.msra.mxu0 0
        %3392 = vmatprep.subr.bf16.mxu0 0
        %3393 = vmatpush1.bf16.msra.mxu0 0
        %3394 = vmatprep.subr.bf16.mxu0 0
        %3395 = vmatpush1.bf16.msra.mxu0 0
        %3396 = vmatprep.subr.bf16.mxu0 0
        %3397 = vmatpush1.bf16.msra.mxu0 0
        %3398 = vmatprep.subr.bf16.mxu0 0
        %3399 = vmatpush1.bf16.msra.mxu0 0
        %3400 = vmatprep.subr.bf16.mxu0 0
        %3401 = vmatpush1.bf16.msra.mxu0 0
        %3402 = vmatprep.mubr.bf16.mxu0 0
        %3403 = vmatmul.mubr.bf16.gmra.mrb[0].mxu0 %v3368
        %v3404 = vpop.f32.mrb[0].mxu0
        %v3405 = vadd.f32 0.0, %v3404
        %v3406 = vpop.f32.mrb[0].mxu0
        %v3407 = vpop.f32.mrb[0].mxu0
        %v3408 = vpop.f32.mrb[0].mxu0
        %3409 = vdwg.mxu0
        %v3411 = vrot.slane %v3405, 4
        %v3413 = vadd.f32 %v2669, %v3411
        %v3414 = vpack.c.bf16 %v3347, %v3347
        %v3416 = vrot.slane %v3414, 2
        %3417 = vrot.lane.b32.xlu0 %v3416, 16
        %v3418 = vpop.permute.xlu0 %3417
        %v3420 = vsel %vm1417, %v3418, 0
        %3422 = vmatprep.subr.bf16.mxu0 0
        %3423 = vmatpush1.bf16.msra.mxu0 %v2732
        %3424 = vmatprep.subr.bf16.mxu0 0
        %3425 = vmatpush1.bf16.msra.mxu0 0
        %3426 = vmatprep.subr.bf16.mxu0 0
        %3427 = vmatpush1.bf16.msra.mxu0 0
        %3428 = vmatprep.subr.bf16.mxu0 0
        %3429 = vmatpush1.bf16.msra.mxu0 0
        %3430 = vmatprep.subr.bf16.mxu0 0
        %3431 = vmatpush1.bf16.msra.mxu0 0
        %3432 = vmatprep.subr.bf16.mxu0 0
        %3433 = vmatpush1.bf16.msra.mxu0 0
        %3434 = vmatprep.subr.bf16.mxu0 0
        %3435 = vmatpush1.bf16.msra.mxu0 0
        %3436 = vmatprep.subr.bf16.mxu0 0
        %3437 = vmatpush1.bf16.msra.mxu0 0
        %3438 = vmatprep.subr.bf16.mxu0 0
        %3439 = vmatpush1.bf16.msra.mxu0 0
        %3440 = vmatprep.subr.bf16.mxu0 0
        %3441 = vmatpush1.bf16.msra.mxu0 0
        %3442 = vmatprep.subr.bf16.mxu0 0
        %3443 = vmatpush1.bf16.msra.mxu0 0
        %3444 = vmatprep.subr.bf16.mxu0 0
        %3445 = vmatpush1.bf16.msra.mxu0 0
        %3446 = vmatprep.subr.bf16.mxu0 0
        %3447 = vmatpush1.bf16.msra.mxu0 0
        %3448 = vmatprep.subr.bf16.mxu0 0
        %3449 = vmatpush1.bf16.msra.mxu0 0
        %3450 = vmatprep.subr.bf16.mxu0 0
        %3451 = vmatpush1.bf16.msra.mxu0 0
        %3452 = vmatprep.subr.bf16.mxu0 0
        %3453 = vmatpush1.bf16.msra.mxu0 0
        %3454 = vmatprep.mubr.bf16.mxu0 0
        %3455 = vmatmul.mubr.bf16.gmra.mrb[0].mxu0 %v3420
        %v3456 = vpop.f32.mrb[0].mxu0
        %v3457 = vadd.f32 0.0, %v3456
        %v3458 = vpop.f32.mrb[0].mxu0
        %v3459 = vpop.f32.mrb[0].mxu0
        %v3460 = vpop.f32.mrb[0].mxu0
        %3461 = vdwg.mxu0
        %v3463 = vrot.slane %v3457, 5
        %3464 = vrot.lane.b32.xlu0 %v3463, 64
        %v3465 = vpop.permute.xlu0 %3464
        %v3467 = vadd.f32 %v2669, %v3465
        %v3468 = vxor.u32 %v3413, 2147483648
        %v3469 = vmul.f32 %v3468, 1.442695
        %v3470 = vpow.pop %v3469
        %v3471 = vadd.f32 %v3470, 1.0
        %v3472 = vrcp.pop %v3471
        %v3473 = vmul.f32 1.0, %v3472
        %v3474 = vtanh.pop %v3413
        %v3476 = vrot.slane %v3314, 7
        %v3478 = vmul.f32 %v3473, %v3476
        %3480 = vrot.lane.b32.xlu0 %v3474, 96
        %v3481 = vpop.permute.xlu0 %3480
        %v3483 = vmul.f32 %v3473, %v3481
        %3485 = vrot.lane.b32.xlu0 %v3483, 16
        %v3486 = vpop.permute.xlu0 %3485
        %v3488 = vadd.f32 %v3478, %v3486
        %v3489 = vtanh.pop %v3488
        %3491 = vrot.lane.b32.xlu0 %v3489, 32
        %v3492 = vpop.permute.xlu0 %3491
        %v3494 = vmul.f32 %v3473, %v3492
        %v3495 = vxor.u32 %v3467, 2147483648
        %v3496 = vmul.f32 %v3495, 1.442695
        %v3497 = vpow.pop %v3496
        %v3498 = vadd.f32 %v3497, 1.0
        %v3499 = vrcp.pop %v3498
        %v3500 = vmul.f32 1.0, %v3499
        %v3501 = vtanh.pop %v3467
        %v3503 = vrot.slane %v3341, 1
        %v3505 = vmul.f32 %v3500, %v3503
        %3507 = vrot.lane.b32.xlu0 %v3501, 96
        %v3508 = vpop.permute.xlu0 %3507
        %v3510 = vmul.f32 %v3500, %v3508
        %3512 = vrot.lane.b32.xlu0 %v3510, 16
        %v3513 = vpop.permute.xlu0 %3512
        %v3515 = vadd.f32 %v3505, %v3513
        %v3516 = vtanh.pop %v3515
        %3518 = vrot.lane.b32.xlu0 %v3516, 32
        %v3519 = vpop.permute.xlu0 %3518
        %v3521 = vmul.f32 %v3500, %v3519
        %3523 = vrot.lane.b32.xlu0 %v3494, 80
        %v3524 = vpop.permute.xlu0 %3523
        %vm3526 = vcmask 126980
        %3527 = vst.msk [vmem:[#allocation2] sm:$0x10] %vm3526, %v3524
        %3529 = vrot.lane.b32.xlu0 %v3521, 32
        %v3530 = vpop.permute.xlu0 %3529
        %vm3532 = vcmask 257155
        %3533 = vst.msk [vmem:[#allocation2] sm:$0x8] %vm3532, %v3530
        %v3534 = vpack.c.bf16 %v3494, %v3494
        %v3536 = vrot.slane %v3534, 2
        %3537 = vrot.lane.b32.xlu0 %v3536, 80
        %v3538 = vpop.permute.xlu0 %3537
        %v3540 = vsel %vm1417, %v3538, 0
        %3542 = vmatprep.subr.bf16.mxu0 0
        %3543 = vmatpush1.bf16.msra.mxu0 %v2682
        %3544 = vmatprep.subr.bf16.mxu0 0
        %3545 = vmatpush1.bf16.msra.mxu0 0
        %3546 = vmatprep.subr.bf16.mxu0 0
        %3547 = vmatpush1.bf16.msra.mxu0 0
        %3548 = vmatprep.subr.bf16.mxu0 0
        %3549 = vmatpush1.bf16.msra.mxu0 0
        %3550 = vmatprep.subr.bf16.mxu0 0
        %3551 = vmatpush1.bf16.msra.mxu0 0
        %3552 = vmatprep.subr.bf16.mxu0 0
        %3553 = vmatpush1.bf16.msra.mxu0 0
        %3554 = vmatprep.subr.bf16.mxu0 0
        %3555 = vmatpush1.bf16.msra.mxu0 0
        %3556 = vmatprep.subr.bf16.mxu0 0
        %3557 = vmatpush1.bf16.msra.mxu0 0
        %3558 = vmatprep.subr.bf16.mxu0 0
        %3559 = vmatpush1.bf16.msra.mxu0 0
        %3560 = vmatprep.subr.bf16.mxu0 0
        %3561 = vmatpush1.bf16.msra.mxu0 0
        %3562 = vmatprep.subr.bf16.mxu0 0
        %3563 = vmatpush1.bf16.msra.mxu0 0
        %3564 = vmatprep.subr.bf16.mxu0 0
        %3565 = vmatpush1.bf16.msra.mxu0 0
        %3566 = vmatprep.subr.bf16.mxu0 0
        %3567 = vmatpush1.bf16.msra.mxu0 0
        %3568 = vmatprep.subr.bf16.mxu0 0
        %3569 = vmatpush1.bf16.msra.mxu0 0
        %3570 = vmatprep.subr.bf16.mxu0 0
        %3571 = vmatpush1.bf16.msra.mxu0 0
        %3572 = vmatprep.subr.bf16.mxu0 0
        %3573 = vmatpush1.bf16.msra.mxu0 0
        %3574 = vmatprep.mubr.bf16.mxu0 0
        %3575 = vmatmul.mubr.bf16.gmra.mrb[0].mxu0 %v3540
        %v3576 = vpop.f32.mrb[0].mxu0
        %v3577 = vadd.f32 0.0, %v3576
        %v3578 = vpop.f32.mrb[0].mxu0
        %v3579 = vpop.f32.mrb[0].mxu0
        %v3580 = vpop.f32.mrb[0].mxu0
        %3581 = vdwg.mxu0
        %v3583 = vrot.slane %v3577, 3
        %v3585 = vadd.f32 %v2669, %v3583
        %v3586 = vpack.c.bf16 %v3521, %v3521
        %v3588 = vshrl.u32 %v3586, 16
        %v3590 = vrot.slane %v3588, 1
        %3591 = vrot.lane.b32.xlu0 %v3590, 16
        %v3592 = vpop.permute.xlu0 %3591
        %v3594 = vsel %vm1417, %v3592, 0
        %3596 = vmatprep.subr.bf16.mxu0 0
        %3597 = vmatpush1.bf16.msra.mxu0 %v2732
        %3598 = vmatprep.subr.bf16.mxu0 0
        %3599 = vmatpush1.bf16.msra.mxu0 0
        %3600 = vmatprep.subr.bf16.mxu0 0
        %3601 = vmatpush1.bf16.msra.mxu0 0
        %3602 = vmatprep.subr.bf16.mxu0 0
        %3603 = vmatpush1.bf16.msra.mxu0 0
        %3604 = vmatprep.subr.bf16.mxu0 0
        %3605 = vmatpush1.bf16.msra.mxu0 0
        %3606 = vmatprep.subr.bf16.mxu0 0
        %3607 = vmatpush1.bf16.msra.mxu0 0
        %3608 = vmatprep.subr.bf16.mxu0 0
        %3609 = vmatpush1.bf16.msra.mxu0 0
        %3610 = vmatprep.subr.bf16.mxu0 0
        %3611 = vmatpush1.bf16.msra.mxu0 0
        %3612 = vmatprep.subr.bf16.mxu0 0
        %3613 = vmatpush1.bf16.msra.mxu0 0
        %3614 = vmatprep.subr.bf16.mxu0 0
        %3615 = vmatpush1.bf16.msra.mxu0 0
        %3616 = vmatprep.subr.bf16.mxu0 0
        %3617 = vmatpush1.bf16.msra.mxu0 0
        %3618 = vmatprep.subr.bf16.mxu0 0
        %3619 = vmatpush1.bf16.msra.mxu0 0
        %3620 = vmatprep.subr.bf16.mxu0 0
        %3621 = vmatpush1.bf16.msra.mxu0 0
        %3622 = vmatprep.subr.bf16.mxu0 0
        %3623 = vmatpush1.bf16.msra.mxu0 0
        %3624 = vmatprep.subr.bf16.mxu0 0
        %3625 = vmatpush1.bf16.msra.mxu0 0
        %3626 = vmatprep.subr.bf16.mxu0 0
        %3627 = vmatpush1.bf16.msra.mxu0 0
        %3628 = vmatprep.mubr.bf16.mxu0 0
        %3629 = vmatmul.mubr.bf16.gmra.mrb[0].mxu0 %v3594
        %v3630 = vpop.f32.mrb[0].mxu0
        %v3631 = vadd.f32 0.0, %v3630
        %v3632 = vpop.f32.mrb[0].mxu0
        %v3633 = vpop.f32.mrb[0].mxu0
        %v3634 = vpop.f32.mrb[0].mxu0
        %3635 = vdwg.mxu0
        %v3637 = vrot.slane %v3631, 6
        %3638 = vrot.lane.b32.xlu0 %v3637, 64
        %v3639 = vpop.permute.xlu0 %3638
        %v3641 = vadd.f32 %v2669, %v3639
        %v3642 = vxor.u32 %v3585, 2147483648
        %v3643 = vmul.f32 %v3642, 1.442695
        %v3644 = vpow.pop %v3643
        %v3645 = vadd.f32 %v3644, 1.0
        %v3646 = vrcp.pop %v3645
        %v3647 = vmul.f32 1.0, %v3646
        %v3648 = vtanh.pop %v3585
        %v3650 = vrot.slane %v3488, 7
        %v3652 = vmul.f32 %v3647, %v3650
        %3654 = vrot.lane.b32.xlu0 %v3648, 96
        %v3655 = vpop.permute.xlu0 %3654
        %v3657 = vmul.f32 %v3647, %v3655
        %3659 = vrot.lane.b32.xlu0 %v3657, 16
        %v3660 = vpop.permute.xlu0 %3659
        %v3662 = vadd.f32 %v3652, %v3660
        %v3663 = vtanh.pop %v3662
        %3665 = vrot.lane.b32.xlu0 %v3663, 32
        %v3666 = vpop.permute.xlu0 %3665
        %v3668 = vmul.f32 %v3647, %v3666
        %v3669 = vxor.u32 %v3641, 2147483648
        %v3670 = vmul.f32 %v3669, 1.442695
        %v3671 = vpow.pop %v3670
        %v3672 = vadd.f32 %v3671, 1.0
        %v3673 = vrcp.pop %v3672
        %v3674 = vmul.f32 1.0, %v3673
        %v3675 = vtanh.pop %v3641
        %v3677 = vrot.slane %v3515, 1
        %v3679 = vmul.f32 %v3674, %v3677
        %3681 = vrot.lane.b32.xlu0 %v3675, 96
        %v3682 = vpop.permute.xlu0 %3681
        %v3684 = vmul.f32 %v3674, %v3682
        %3686 = vrot.lane.b32.xlu0 %v3684, 16
        %v3687 = vpop.permute.xlu0 %3686
        %v3689 = vadd.f32 %v3679, %v3687
        %v3690 = vtanh.pop %v3689
        %3692 = vrot.lane.b32.xlu0 %v3690, 32
        %v3693 = vpop.permute.xlu0 %3692
        %v3695 = vmul.f32 %v3674, %v3693
        %3697 = vrot.lane.b32.xlu0 %v3668, 80
        %v3698 = vpop.permute.xlu0 %3697
        %vm3700 = vcmask 128005
        %3701 = vst.msk [vmem:[#allocation2] sm:$0x20] %vm3700, %v3698
        %3703 = vrot.lane.b32.xlu0 %v3695, 32
        %v3704 = vpop.permute.xlu0 %3703
        %vm3706 = vcmask 256130
        %3707 = vst.msk [vmem:[#allocation2] sm:$0x4] %vm3706, %v3704
        %v3708 = vpack.c.bf16 %v3668, %v3668
        %v3710 = vshrl.u32 %v3708, 16
        %v3712 = vrot.slane %v3710, 2
        %3713 = vrot.lane.b32.xlu0 %v3712, 80
        %v3714 = vpop.permute.xlu0 %3713
        %v3716 = vsel %vm1417, %v3714, 0
        %3718 = vmatprep.subr.bf16.mxu0 0
        %3719 = vmatpush1.bf16.msra.mxu0 %v2682
        %3720 = vmatprep.subr.bf16.mxu0 0
        %3721 = vmatpush1.bf16.msra.mxu0 0
        %3722 = vmatprep.subr.bf16.mxu0 0
        %3723 = vmatpush1.bf16.msra.mxu0 0
        %3724 = vmatprep.subr.bf16.mxu0 0
        %3725 = vmatpush1.bf16.msra.mxu0 0
        %3726 = vmatprep.subr.bf16.mxu0 0
        %3727 = vmatpush1.bf16.msra.mxu0 0
        %3728 = vmatprep.subr.bf16.mxu0 0
        %3729 = vmatpush1.bf16.msra.mxu0 0
        %3730 = vmatprep.subr.bf16.mxu0 0
        %3731 = vmatpush1.bf16.msra.mxu0 0
        %3732 = vmatprep.subr.bf16.mxu0 0
        %3733 = vmatpush1.bf16.msra.mxu0 0
        %3734 = vmatprep.subr.bf16.mxu0 0
        %3735 = vmatpush1.bf16.msra.mxu0 0
        %3736 = vmatprep.subr.bf16.mxu0 0
        %3737 = vmatpush1.bf16.msra.mxu0 0
        %3738 = vmatprep.subr.bf16.mxu0 0
        %3739 = vmatpush1.bf16.msra.mxu0 0
        %3740 = vmatprep.subr.bf16.mxu0 0
        %3741 = vmatpush1.bf16.msra.mxu0 0
        %3742 = vmatprep.subr.bf16.mxu0 0
        %3743 = vmatpush1.bf16.msra.mxu0 0
        %3744 = vmatprep.subr.bf16.mxu0 0
        %3745 = vmatpush1.bf16.msra.mxu0 0
        %3746 = vmatprep.subr.bf16.mxu0 0
        %3747 = vmatpush1.bf16.msra.mxu0 0
        %3748 = vmatprep.subr.bf16.mxu0 0
        %3749 = vmatpush1.bf16.msra.mxu0 0
        %3750 = vmatprep.mubr.bf16.mxu0 0
        %3751 = vmatmul.mubr.bf16.gmra.mrb[0].mxu0 %v3716
        %v3752 = vpop.f32.mrb[0].mxu0
        %v3753 = vadd.f32 0.0, %v3752
        %v3754 = vpop.f32.mrb[0].mxu0
        %v3755 = vpop.f32.mrb[0].mxu0
        %v3756 = vpop.f32.mrb[0].mxu0
        %3757 = vdwg.mxu0
        %v3759 = vrot.slane %v3753, 2
        %v3761 = vadd.f32 %v2669, %v3759
        %v3762 = vpack.c.bf16 %v3695, %v3695
        %v3764 = vrot.slane %v3762, 1
        %3765 = vrot.lane.b32.xlu0 %v3764, 16
        %v3766 = vpop.permute.xlu0 %3765
        %v3768 = vsel %vm1417, %v3766, 0
        %3770 = vmatprep.subr.bf16.mxu0 0
        %3771 = vmatpush1.bf16.msra.mxu0 %v2732
        %3772 = vmatprep.subr.bf16.mxu0 0
        %3773 = vmatpush1.bf16.msra.mxu0 0
        %3774 = vmatprep.subr.bf16.mxu0 0
        %3775 = vmatpush1.bf16.msra.mxu0 0
        %3776 = vmatprep.subr.bf16.mxu0 0
        %3777 = vmatpush1.bf16.msra.mxu0 0
        %3778 = vmatprep.subr.bf16.mxu0 0
        %3779 = vmatpush1.bf16.msra.mxu0 0
        %3780 = vmatprep.subr.bf16.mxu0 0
        %3781 = vmatpush1.bf16.msra.mxu0 0
        %3782 = vmatprep.subr.bf16.mxu0 0
        %3783 = vmatpush1.bf16.msra.mxu0 0
        %3784 = vmatprep.subr.bf16.mxu0 0
        %3785 = vmatpush1.bf16.msra.mxu0 0
        %3786 = vmatprep.subr.bf16.mxu0 0
        %3787 = vmatpush1.bf16.msra.mxu0 0
        %3788 = vmatprep.subr.bf16.mxu0 0
        %3789 = vmatpush1.bf16.msra.mxu0 0
        %3790 = vmatprep.subr.bf16.mxu0 0
        %3791 = vmatpush1.bf16.msra.mxu0 0
        %3792 = vmatprep.subr.bf16.mxu0 0
        %3793 = vmatpush1.bf16.msra.mxu0 0
        %3794 = vmatprep.subr.bf16.mxu0 0
        %3795 = vmatpush1.bf16.msra.mxu0 0
        %3796 = vmatprep.subr.bf16.mxu0 0
        %3797 = vmatpush1.bf16.msra.mxu0 0
        %3798 = vmatprep.subr.bf16.mxu0 0
        %3799 = vmatpush1.bf16.msra.mxu0 0
        %3800 = vmatprep.subr.bf16.mxu0 0
        %3801 = vmatpush1.bf16.msra.mxu0 0
        %3802 = vmatprep.mubr.bf16.mxu0 0
        %3803 = vmatmul.mubr.bf16.gmra.mrb[0].mxu0 %v3768
        %v3804 = vpop.f32.mrb[0].mxu0
        %v3805 = vadd.f32 0.0, %v3804
        %v3806 = vpop.f32.mrb[0].mxu0
        %v3807 = vpop.f32.mrb[0].mxu0
        %v3808 = vpop.f32.mrb[0].mxu0
        %3809 = vdwg.mxu0
        %v3811 = vrot.slane %v3805, 7
        %3812 = vrot.lane.b32.xlu0 %v3811, 64
        %v3813 = vpop.permute.xlu0 %3812
        %v3815 = vadd.f32 %v2669, %v3813
        %v3816 = vxor.u32 %v3761, 2147483648
        %v3817 = vmul.f32 %v3816, 1.442695
        %v3818 = vpow.pop %v3817
        %v3819 = vadd.f32 %v3818, 1.0
        %v3820 = vrcp.pop %v3819
        %v3821 = vmul.f32 1.0, %v3820
        %v3822 = vtanh.pop %v3761
        %v3824 = vrot.slane %v3662, 7
        %v3826 = vmul.f32 %v3821, %v3824
        %3828 = vrot.lane.b32.xlu0 %v3822, 96
        %v3829 = vpop.permute.xlu0 %3828
        %v3831 = vmul.f32 %v3821, %v3829
        %3833 = vrot.lane.b32.xlu0 %v3831, 16
        %v3834 = vpop.permute.xlu0 %3833
        %v3836 = vadd.f32 %v3826, %v3834
        %v3837 = vtanh.pop %v3836
        %3839 = vrot.lane.b32.xlu0 %v3837, 32
        %v3840 = vpop.permute.xlu0 %3839
        %v3842 = vmul.f32 %v3821, %v3840
        %v3843 = vxor.u32 %v3815, 2147483648
        %v3844 = vmul.f32 %v3843, 1.442695
        %v3845 = vpow.pop %v3844
        %v3846 = vadd.f32 %v3845, 1.0
        %v3847 = vrcp.pop %v3846
        %v3848 = vmul.f32 1.0, %v3847
        %v3849 = vtanh.pop %v3815
        %v3851 = vrot.slane %v3689, 1
        %v3853 = vmul.f32 %v3848, %v3851
        %3855 = vrot.lane.b32.xlu0 %v3849, 96
        %v3856 = vpop.permute.xlu0 %3855
        %v3858 = vmul.f32 %v3848, %v3856
        %3860 = vrot.lane.b32.xlu0 %v3858, 16
        %v3861 = vpop.permute.xlu0 %3860
        %v3863 = vadd.f32 %v3853, %v3861
        %v3864 = vtanh.pop %v3863
        %3866 = vrot.lane.b32.xlu0 %v3864, 32
        %v3867 = vpop.permute.xlu0 %3866
        %v3869 = vmul.f32 %v3848, %v3867
        %3871 = vrot.lane.b32.xlu0 %v3842, 80
        %v3872 = vpop.permute.xlu0 %3871
        %vm3874 = vcmask 129030
        %3875 = vst.msk [vmem:[#allocation2] sm:$0x40] %vm3874, %v3872
        %3877 = vrot.lane.b32.xlu0 %v3869, 32
        %v3878 = vpop.permute.xlu0 %3877
        %vm3880 = vcmask 255105
        %3881 = vst.msk [vmem:[#allocation2] sm:$0x2] %vm3880, %v3878
        %v3882 = vpack.c.bf16 %v3842, %v3842
        %v3884 = vrot.slane %v3882, 3
        %3885 = vrot.lane.b32.xlu0 %v3884, 80
        %v3886 = vpop.permute.xlu0 %3885
        %v3888 = vsel %vm1417, %v3886, 0
        %3890 = vmatprep.subr.bf16.mxu0 0
        %3891 = vmatpush1.bf16.msra.mxu0 %v2682
        %3892 = vmatprep.subr.bf16.mxu0 0
        %3893 = vmatpush1.bf16.msra.mxu0 0
        %3894 = vmatprep.subr.bf16.mxu0 0
        %3895 = vmatpush1.bf16.msra.mxu0 0
        %3896 = vmatprep.subr.bf16.mxu0 0
        %3897 = vmatpush1.bf16.msra.mxu0 0
        %3898 = vmatprep.subr.bf16.mxu0 0
        %3899 = vmatpush1.bf16.msra.mxu0 0
        %3900 = vmatprep.subr.bf16.mxu0 0
        %3901 = vmatpush1.bf16.msra.mxu0 0
        %3902 = vmatprep.subr.bf16.mxu0 0
        %3903 = vmatpush1.bf16.msra.mxu0 0
        %3904 = vmatprep.subr.bf16.mxu0 0
        %3905 = vmatpush1.bf16.msra.mxu0 0
        %3906 = vmatprep.subr.bf16.mxu0 0
        %3907 = vmatpush1.bf16.msra.mxu0 0
        %3908 = vmatprep.subr.bf16.mxu0 0
        %3909 = vmatpush1.bf16.msra.mxu0 0
        %3910 = vmatprep.subr.bf16.mxu0 0
        %3911 = vmatpush1.bf16.msra.mxu0 0
        %3912 = vmatprep.subr.bf16.mxu0 0
        %3913 = vmatpush1.bf16.msra.mxu0 0
        %3914 = vmatprep.subr.bf16.mxu0 0
        %3915 = vmatpush1.bf16.msra.mxu0 0
        %3916 = vmatprep.subr.bf16.mxu0 0
        %3917 = vmatpush1.bf16.msra.mxu0 0
        %3918 = vmatprep.subr.bf16.mxu0 0
        %3919 = vmatpush1.bf16.msra.mxu0 0
        %3920 = vmatprep.subr.bf16.mxu0 0
        %3921 = vmatpush1.bf16.msra.mxu0 0
        %3922 = vmatprep.mubr.bf16.mxu0 0
        %3923 = vmatmul.mubr.bf16.gmra.mrb[0].mxu0 %v3888
        %v3924 = vpop.f32.mrb[0].mxu0
        %v3925 = vadd.f32 0.0, %v3924
        %v3926 = vpop.f32.mrb[0].mxu0
        %v3927 = vpop.f32.mrb[0].mxu0
        %v3928 = vpop.f32.mrb[0].mxu0
        %3929 = vdwg.mxu0
        %v3931 = vrot.slane %v3925, 1
        %v3933 = vadd.f32 %v2669, %v3931
        %v3934 = vpack.c.bf16 %v3869, %v3869
        %v3936 = vshrl.u32 %v3934, 16
        %3938 = vrot.lane.b32.xlu0 %v3936, 16
        %v3939 = vpop.permute.xlu0 %3938
        %v3941 = vsel %vm1417, %v3939, 0
        %3943 = vmatprep.subr.bf16.mxu0 0
        %3944 = vmatpush1.bf16.msra.mxu0 %v2732
        %3945 = vmatprep.subr.bf16.mxu0 0
        %3946 = vmatpush1.bf16.msra.mxu0 0
        %3947 = vmatprep.subr.bf16.mxu0 0
        %3948 = vmatpush1.bf16.msra.mxu0 0
        %3949 = vmatprep.subr.bf16.mxu0 0
        %3950 = vmatpush1.bf16.msra.mxu0 0
        %3951 = vmatprep.subr.bf16.mxu0 0
        %3952 = vmatpush1.bf16.msra.mxu0 0
        %3953 = vmatprep.subr.bf16.mxu0 0
        %3954 = vmatpush1.bf16.msra.mxu0 0
        %3955 = vmatprep.subr.bf16.mxu0 0
        %3956 = vmatpush1.bf16.msra.mxu0 0
        %3957 = vmatprep.subr.bf16.mxu0 0
        %3958 = vmatpush1.bf16.msra.mxu0 0
        %3959 = vmatprep.subr.bf16.mxu0 0
        %3960 = vmatpush1.bf16.msra.mxu0 0
        %3961 = vmatprep.subr.bf16.mxu0 0
        %3962 = vmatpush1.bf16.msra.mxu0 0
        %3963 = vmatprep.subr.bf16.mxu0 0
        %3964 = vmatpush1.bf16.msra.mxu0 0
        %3965 = vmatprep.subr.bf16.mxu0 0
        %3966 = vmatpush1.bf16.msra.mxu0 0
        %3967 = vmatprep.subr.bf16.mxu0 0
        %3968 = vmatpush1.bf16.msra.mxu0 0
        %3969 = vmatprep.subr.bf16.mxu0 0
        %3970 = vmatpush1.bf16.msra.mxu0 0
        %3971 = vmatprep.subr.bf16.mxu0 0
        %3972 = vmatpush1.bf16.msra.mxu0 0
        %3973 = vmatprep.subr.bf16.mxu0 0
        %3974 = vmatpush1.bf16.msra.mxu0 0
        %3975 = vmatprep.mubr.bf16.mxu0 0
        %3976 = vmatmul.mubr.bf16.gmra.mrb[0].mxu0 %v3941
        %v3977 = vpop.f32.mrb[0].mxu0
        %v3978 = vadd.f32 0.0, %v3977
        %v3979 = vpop.f32.mrb[0].mxu0
        %v3980 = vpop.f32.mrb[0].mxu0
        %v3981 = vpop.f32.mrb[0].mxu0
        %3982 = vdwg.mxu0
        %3984 = vrot.lane.b32.xlu0 %v3978, 64
        %v3985 = vpop.permute.xlu0 %3984
        %v3987 = vadd.f32 %v2669, %v3985
        %v3988 = vxor.u32 %v3933, 2147483648
        %v3989 = vmul.f32 %v3988, 1.442695
        %v3990 = vpow.pop %v3989
        %v3991 = vadd.f32 %v3990, 1.0
        %v3992 = vrcp.pop %v3991
        %v3993 = vmul.f32 1.0, %v3992
        %v3994 = vtanh.pop %v3933
        %v3996 = vrot.slane %v3836, 7
        %v3998 = vmul.f32 %v3993, %v3996
        %4000 = vrot.lane.b32.xlu0 %v3994, 96
        %v4001 = vpop.permute.xlu0 %4000
        %v4003 = vmul.f32 %v3993, %v4001
        %4005 = vrot.lane.b32.xlu0 %v4003, 16
        %v4006 = vpop.permute.xlu0 %4005
        %v4008 = vadd.f32 %v3998, %v4006
        %v4009 = vtanh.pop %v4008
        %4011 = vrot.lane.b32.xlu0 %v4009, 32
        %v4012 = vpop.permute.xlu0 %4011
        %v4014 = vmul.f32 %v3993, %v4012
        %v4015 = vxor.u32 %v3987, 2147483648
        %v4016 = vmul.f32 %v4015, 1.442695
        %v4017 = vpow.pop %v4016
        %v4018 = vadd.f32 %v4017, 1.0
        %v4019 = vrcp.pop %v4018
        %v4020 = vmul.f32 1.0, %v4019
        %v4021 = vtanh.pop %v3987
        %v4023 = vrot.slane %v3863, 1
        %v4025 = vmul.f32 %v4020, %v4023
        %4027 = vrot.lane.b32.xlu0 %v4021, 96
        %v4028 = vpop.permute.xlu0 %4027
        %v4030 = vmul.f32 %v4020, %v4028
        %4032 = vrot.lane.b32.xlu0 %v4030, 16
        %v4033 = vpop.permute.xlu0 %4032
        %v4035 = vadd.f32 %v4025, %v4033
        %v4036 = vtanh.pop %v4035
        %4038 = vrot.lane.b32.xlu0 %v4036, 32
        %v4039 = vpop.permute.xlu0 %4038
        %v4041 = vmul.f32 %v4020, %v4039
        %4043 = vrot.lane.b32.xlu0 %v4014, 80
        %v4044 = vpop.permute.xlu0 %4043
        %vm4046 = vcmask 130055
        %4047 = vst.msk [vmem:[#allocation2] sm:$0x80] %vm4046, %v4044
        %4049 = vrot.lane.b32.xlu0 %v4041, 32
        %v4050 = vpop.permute.xlu0 %4049
        %vm4052 = vcmask 254080
        %4053 = vst.msk [vmem:[#allocation2] sm:$0x1] %vm4052, %v4050
        %v4054 = vld [vmem:[#allocation2] sm:$0xff]
        %v4055 = vpack.c.bf16 %v4054, %v4054
        %v4056 = vld [vmem:[%s23] sm:$0xf]
        %v4057 = vld [vmem:[%s23 + $0x4] sm:$0xf]
        %v4058 = vld [vmem:[%s23 + $0x8] sm:$0xf]
        %v4059 = vld [vmem:[%s23 + $0xc] sm:$0xf]
        %v4060 = vld [vmem:[%s24] sm:$0x1]
        %v4062 = vlaneseq
        %v4063 = vshrl.u32 %v4062, 7
        %v4064 = vsub.s32 0, %v4063
        %v4065 = vrot.slane %v4060, %v4064
        %v4071 = vunpack.c.l.b16 %v4056
        %v4072 = vunpack.c.l.b16 %v4057
        %v4073 = vunpack.c.l.b16 %v4058
        %v4074 = vunpack.c.l.b16 %v4059
        %v4075 = vpack.c.b16 %v4072, %v4071
        %v4076 = vpack.c.b16 %v4074, %v4073
        %v4080 = vsel %vm870, %v4055, 0
        %4082 = vmatprep.subr.bf16.mxu0 0
        %4083 = vmatpush1.bf16.msra.mxu0 %v4075
        %4084 = vmatprep.subr.bf16.mxu0 0
        %4085 = vmatpush1.bf16.msra.mxu0 %v4076
        %4086 = vmatprep.subr.bf16.mxu0 0
        %4087 = vmatpush1.bf16.msra.mxu0 0
        %4088 = vmatprep.subr.bf16.mxu0 0
        %4089 = vmatpush1.bf16.msra.mxu0 0
        %4090 = vmatprep.subr.bf16.mxu0 0
        %4091 = vmatpush1.bf16.msra.mxu0 0
        %4092 = vmatprep.subr.bf16.mxu0 0
        %4093 = vmatpush1.bf16.msra.mxu0 0
        %4094 = vmatprep.subr.bf16.mxu0 0
        %4095 = vmatpush1.bf16.msra.mxu0 0
        %4096 = vmatprep.subr.bf16.mxu0 0
        %4097 = vmatpush1.bf16.msra.mxu0 0
        %4098 = vmatprep.subr.bf16.mxu0 0
        %4099 = vmatpush1.bf16.msra.mxu0 0
        %4100 = vmatprep.subr.bf16.mxu0 0
        %4101 = vmatpush1.bf16.msra.mxu0 0
        %4102 = vmatprep.subr.bf16.mxu0 0
        %4103 = vmatpush1.bf16.msra.mxu0 0
        %4104 = vmatprep.subr.bf16.mxu0 0
        %4105 = vmatpush1.bf16.msra.mxu0 0
        %4106 = vmatprep.subr.bf16.mxu0 0
        %4107 = vmatpush1.bf16.msra.mxu0 0
        %4108 = vmatprep.subr.bf16.mxu0 0
        %4109 = vmatpush1.bf16.msra.mxu0 0
        %4110 = vmatprep.subr.bf16.mxu0 0
        %4111 = vmatpush1.bf16.msra.mxu0 0
        %4112 = vmatprep.subr.bf16.mxu0 0
        %4113 = vmatpush1.bf16.msra.mxu0 0
        %4114 = vmatprep.mubr.bf16.mxu0 0
        %4115 = vmatmul.mubr.bf16.gmra.mrb[0].mxu0 %v4080
        %v4116 = vpop.f32.mrb[0].mxu0
        %v4117 = vadd.f32 %v4065, %v4116
        %v4118 = vpop.f32.mrb[0].mxu0
        %v4119 = vpop.f32.mrb[0].mxu0
        %v4120 = vpop.f32.mrb[0].mxu0
        %4121 = vdwg.mxu0
        %v4122 = vld [vmem:[%s816] sm:$0x1]
        %vm4123 = vcmp.ne.s32.totalorder %v4122, 0
        %v4124 = vld [vmem:[%s27] sm:$0xff]
        %v4125 = vld [vmem:[%s25] sm:$0x1]
        %v4126 = vadd.f32 %v4125, %v4117
        %v4128 = vlaneseq
        %v4129 = vshrl.u32 %v4128, 7
        %v4130 = vsub.s32 0, %v4129
        %v4131 = vrot.slane %v4126, %v4130
        %v4133 = vadd.f32 %v4131, %v4124
        %v4134 = vlaneseq
        %v4135 = vshrl.u32 %v4134, 7
        %v4136 = vsub.s32 1, %v4135
        %v4137 = vrot.slane %v4117, %v4136
        %4139 = vbcast.lane.b32.xlu0 %v4137, 256
        %v4140 = vpop.permute.xlu0 %4139
        %v4141 = vadd.f32 %v4133, %v4140
        %v4142 = vsel %vm1472, %v4141, -inf
        %4143 = vmax.xlane.f32.xlu0 %v4142
        %v4144 = vpop.xlane.xlu0 %4143
        %v4145 = vlaneseq
        %v4146 = vand.u32 %v4145, 127
        %vm4147 = vcmp.eq.f32.partialorder %v4141, %v4144
        %v4148 = vsel %vm4147, %v4146, 8
        %v4149 = vsel %vm1472, %v4148, 2147483647
        %v4150 = vand.u32 %v4149, 65535
        %v4151 = vshra.s32 %v4149, 16
        %v4152 = vcvt.s32.f32 %v4150
        %v4153 = vcvt.s32.f32 %v4151
        %4154 = vmin.xlane.f32.xlu0 %v4153
        %v4155 = vpop.xlane.xlu0 %4154
        %vm4156 = vcmp.eq.f32.partialorder %v4153, %v4155
        %v4157 = vsel %vm4156, %v4152, inf
        %4158 = vmin.xlane.f32.xlu0 %v4157
        %v4159 = vpop.xlane.xlu0 %4158
        %v4160 = vcvt.f32.s32 %v4159
        %v4161 = vcvt.f32.s32 %v4155
        %v4162 = vshll.u32 %v4161, 16
        %v4163 = vadd.s32 %v4162, %v4160
        %v4164 = vsel %vm4123, 1, 0
        %4165 = vset.pattern.permute.xlu0 1
        %4166 = vperm.xlu0 %4165, %v4164
        %v4167 = vpop.permute.xlu0 %4166
        %v4168 = vlaneseq
        %v4169 = vshrl.u32 %v4168, 7
        %v4170 = vsub.s32 0, %v4169
        %v4171 = vrot.slane %v4167, %v4170
        %vm4172 = vcmp.eq.s32.totalorder %v4171, 1
        %4174 = vbcast.lane.b32.xlu0 %v4131, 256
        %v4175 = vpop.permute.xlu0 %4174
        %v4177 = vsel %vm4172, %v4144, %v4175
        %v4178 = vlaneseq
        %v4179 = vshrl.u32 %v4178, 7
        %v4180 = vsub.s32 %v4146, %v4179
        %v4181 = vrot.slane %v4163, %v4180
        %vm4182 = vcmask 57344
        %4183 = vst.msk [vmem:[#allocation3] sm:$0x1] %vm4182, %v4181
        %v4185 = vlaneseq
        %v4186 = vshrl.u32 %v4185, 7
        %v4187 = vsub.s32 0, %v4186
        %v4188 = vrot.slane %v4124, %v4187
        %4190 = vbcast.lane.b32.xlu0 %v4188, 256
        %v4191 = vpop.permute.xlu0 %4190
        %v4192 = vlaneseq
        %v4193 = vshrl.u32 %v4192, 7
        %v4194 = vsub.s32 1, %v4193
        %v4195 = vrot.slane %v4124, %v4194
        %4197 = vbcast.lane.b32.xlu0 %v4195, 256
        %v4198 = vpop.permute.xlu0 %4197
        %v4199 = vlaneseq
        %v4200 = vshrl.u32 %v4199, 7
        %v4201 = vsub.s32 2, %v4200
        %v4202 = vrot.slane %v4124, %v4201
        %4204 = vbcast.lane.b32.xlu0 %v4202, 256
        %v4205 = vpop.permute.xlu0 %4204
        %v4206 = vlaneseq
        %v4207 = vshrl.u32 %v4206, 7
        %v4208 = vsub.s32 3, %v4207
        %v4209 = vrot.slane %v4124, %v4208
        %4211 = vbcast.lane.b32.xlu0 %v4209, 256
        %v4212 = vpop.permute.xlu0 %4211
        %v4213 = vlaneseq
        %v4214 = vshrl.u32 %v4213, 7
        %v4215 = vsub.s32 4, %v4214
        %v4216 = vrot.slane %v4124, %v4215
        %4218 = vbcast.lane.b32.xlu0 %v4216, 256
        %v4219 = vpop.permute.xlu0 %4218
        %v4220 = vlaneseq
        %v4221 = vshrl.u32 %v4220, 7
        %v4222 = vsub.s32 5, %v4221
        %v4223 = vrot.slane %v4124, %v4222
        %4225 = vbcast.lane.b32.xlu0 %v4223, 256
        %v4226 = vpop.permute.xlu0 %4225
        %v4227 = vlaneseq
        %v4228 = vshrl.u32 %v4227, 7
        %v4229 = vsub.s32 6, %v4228
        %v4230 = vrot.slane %v4124, %v4229
        %4232 = vbcast.lane.b32.xlu0 %v4230, 256
        %v4233 = vpop.permute.xlu0 %4232
        %v4234 = vlaneseq
        %v4235 = vshrl.u32 %v4234, 7
        %v4236 = vsub.s32 7, %v4235
        %v4237 = vrot.slane %v4124, %v4236
        %4239 = vbcast.lane.b32.xlu0 %v4237, 256
        %v4240 = vpop.permute.xlu0 %4239
        %v4249 = vadd.f32 %v4177, %v4191
        %v4250 = vadd.f32 %v4177, %v4198
        %v4251 = vadd.f32 %v4177, %v4205
        %v4252 = vadd.f32 %v4177, %v4212
        %v4253 = vadd.f32 %v4177, %v4219
        %v4254 = vadd.f32 %v4177, %v4226
        %v4255 = vadd.f32 %v4177, %v4233
        %v4256 = vadd.f32 %v4177, %v4240
        %v4257 = vlaneseq
        %v4258 = vshrl.u32 %v4257, 7
        %v4259 = vsub.s32 2, %v4258
        %v4260 = vrot.slane %v4117, %v4259
        %4262 = vbcast.lane.b32.xlu0 %v4260, 256
        %v4263 = vpop.permute.xlu0 %4262
        %v4265 = vlaneseq
        %v4266 = vshrl.u32 %v4265, 7
        %v4267 = vsub.s32 0, %v4266
        %v4268 = vrot.slane %v4263, %v4267
        %v4269 = vlaneseq
        %v4270 = vshrl.u32 %v4269, 7
        %v4271 = vsub.s32 1, %v4270
        %v4272 = vrot.slane %v4263, %v4271
        %v4273 = vlaneseq
        %v4274 = vshrl.u32 %v4273, 7
        %v4275 = vsub.s32 2, %v4274
        %v4276 = vrot.slane %v4263, %v4275
        %v4277 = vlaneseq
        %v4278 = vshrl.u32 %v4277, 7
        %v4279 = vsub.s32 3, %v4278
        %v4280 = vrot.slane %v4263, %v4279
        %v4281 = vlaneseq
        %v4282 = vshrl.u32 %v4281, 7
        %v4283 = vsub.s32 4, %v4282
        %v4284 = vrot.slane %v4263, %v4283
        %v4285 = vlaneseq
        %v4286 = vshrl.u32 %v4285, 7
        %v4287 = vsub.s32 5, %v4286
        %v4288 = vrot.slane %v4263, %v4287
        %v4289 = vlaneseq
        %v4290 = vshrl.u32 %v4289, 7
        %v4291 = vsub.s32 6, %v4290
        %v4292 = vrot.slane %v4263, %v4291
        %v4293 = vlaneseq
        %v4294 = vshrl.u32 %v4293, 7
        %v4295 = vsub.s32 7, %v4294
        %v4296 = vrot.slane %v4263, %v4295
        %v4305 = vadd.f32 %v4249, %v4268
        %v4306 = vadd.f32 %v4250, %v4272
        %v4307 = vadd.f32 %v4251, %v4276
        %v4308 = vadd.f32 %v4252, %v4280
        %v4309 = vadd.f32 %v4253, %v4284
        %v4310 = vadd.f32 %v4254, %v4288
        %v4311 = vadd.f32 %v4255, %v4292
        %v4312 = vadd.f32 %v4256, %v4296
        %4321 = vset.pattern.permute.xlu0 0
        %4322 = vperm.xlu0 %4321, %v4305
        %v4323 = vpop.permute.xlu0 %4322
        %4324 = vset.pattern.permute.xlu0 0
        %4325 = vperm.xlu0 %4324, %v4306
        %v4326 = vpop.permute.xlu0 %4325
        %4327 = vset.pattern.permute.xlu0 0
        %4328 = vperm.xlu0 %4327, %v4307
        %v4329 = vpop.permute.xlu0 %4328
        %4330 = vset.pattern.permute.xlu0 0
        %4331 = vperm.xlu0 %4330, %v4308
        %v4332 = vpop.permute.xlu0 %4331
        %4333 = vset.pattern.permute.xlu0 0
        %4334 = vperm.xlu0 %4333, %v4309
        %v4335 = vpop.permute.xlu0 %4334
        %4336 = vset.pattern.permute.xlu0 0
        %4337 = vperm.xlu0 %4336, %v4310
        %v4338 = vpop.permute.xlu0 %4337
        %4339 = vset.pattern.permute.xlu0 0
        %4340 = vperm.xlu0 %4339, %v4311
        %v4341 = vpop.permute.xlu0 %4340
        %4342 = vset.pattern.permute.xlu0 0
        %4343 = vperm.xlu0 %4342, %v4312
        %v4344 = vpop.permute.xlu0 %4343
        %v4345 = vlaneseq
        %v4346 = vshrl.u32 %v4345, 7
        %v4347 = vsub.s32 %v4146, %v4346
        %v4348 = vrot.slane %v4323, %v4347
        %v4349 = vlaneseq
        %v4350 = vshrl.u32 %v4349, 7
        %v4351 = vsub.s32 %v4146, %v4350
        %v4352 = vrot.slane %v4326, %v4351
        %v4353 = vlaneseq
        %v4354 = vshrl.u32 %v4353, 7
        %v4355 = vsub.s32 %v4146, %v4354
        %v4356 = vrot.slane %v4329, %v4355
        %v4357 = vlaneseq
        %v4358 = vshrl.u32 %v4357, 7
        %v4359 = vsub.s32 %v4146, %v4358
        %v4360 = vrot.slane %v4332, %v4359
        %v4361 = vlaneseq
        %v4362 = vshrl.u32 %v4361, 7
        %v4363 = vsub.s32 %v4146, %v4362
        %v4364 = vrot.slane %v4335, %v4363
        %v4365 = vlaneseq
        %v4366 = vshrl.u32 %v4365, 7
        %v4367 = vsub.s32 %v4146, %v4366
        %v4368 = vrot.slane %v4338, %v4367
        %v4369 = vlaneseq
        %v4370 = vshrl.u32 %v4369, 7
        %v4371 = vsub.s32 %v4146, %v4370
        %v4372 = vrot.slane %v4341, %v4371
        %v4373 = vlaneseq
        %v4374 = vshrl.u32 %v4373, 7
        %v4375 = vsub.s32 %v4146, %v4374
        %v4376 = vrot.slane %v4344, %v4375
        %vm4377 = vcmask 1041409
        %v4378 = vsel %vm4377, %v4352, %v4348
        %vm4379 = vcmask 1042434
        %v4380 = vsel %vm4379, %v4356, %v4378
        %vm4381 = vcmask 1043459
        %v4382 = vsel %vm4381, %v4360, %v4380
        %vm4383 = vcmask 1044484
        %v4384 = vsel %vm4383, %v4364, %v4382
        %vm4385 = vcmask 1045509
        %v4386 = vsel %vm4385, %v4368, %v4384
        %vm4387 = vcmask 1046534
        %v4388 = vsel %vm4387, %v4372, %v4386
        %vm4389 = vcmask 1047559
        %v4390 = vsel %vm4389, %v4376, %v4388
        %v4392 = vsel %vm1472, %v4390, -inf
        %4393 = vmax.xlane.f32.xlu0 %v4392
        %v4394 = vpop.xlane.xlu0 %4393
        %v4396 = vlaneseq
        %v4397 = vshrl.u32 %v4396, 7
        %v4398 = vsub.s32 0, %v4397
        %v4399 = vrot.slane %v4394, %v4398
        %v4400 = vlaneseq
        %v4401 = vshrl.u32 %v4400, 7
        %v4402 = vsub.s32 1, %v4401
        %v4403 = vrot.slane %v4394, %v4402
        %v4404 = vlaneseq
        %v4405 = vshrl.u32 %v4404, 7
        %v4406 = vsub.s32 2, %v4405
        %v4407 = vrot.slane %v4394, %v4406
        %v4408 = vlaneseq
        %v4409 = vshrl.u32 %v4408, 7
        %v4410 = vsub.s32 3, %v4409
        %v4411 = vrot.slane %v4394, %v4410
        %v4412 = vlaneseq
        %v4413 = vshrl.u32 %v4412, 7
        %v4414 = vsub.s32 4, %v4413
        %v4415 = vrot.slane %v4394, %v4414
        %v4416 = vlaneseq
        %v4417 = vshrl.u32 %v4416, 7
        %v4418 = vsub.s32 5, %v4417
        %v4419 = vrot.slane %v4394, %v4418
        %v4420 = vlaneseq
        %v4421 = vshrl.u32 %v4420, 7
        %v4422 = vsub.s32 6, %v4421
        %v4423 = vrot.slane %v4394, %v4422
        %v4424 = vlaneseq
        %v4425 = vshrl.u32 %v4424, 7
        %v4426 = vsub.s32 7, %v4425
        %v4427 = vrot.slane %v4394, %v4426
        %vm4436 = vcmp.eq.f32.partialorder %v4305, %v4399
        %vm4437 = vcmp.eq.f32.partialorder %v4306, %v4403
        %vm4438 = vcmp.eq.f32.partialorder %v4307, %v4407
        %vm4439 = vcmp.eq.f32.partialorder %v4308, %v4411
        %vm4440 = vcmp.eq.f32.partialorder %v4309, %v4415
        %vm4441 = vcmp.eq.f32.partialorder %v4310, %v4419
        %vm4442 = vcmp.eq.f32.partialorder %v4311, %v4423
        %vm4443 = vcmp.eq.f32.partialorder %v4312, %v4427
        %4445 = vbcast.lane.b32.xlu0 %v4146, 256
        %v4446 = vpop.permute.xlu0 %4445
        %v4447 = vsel %vm4436, %v4446, 8
        %v4448 = vsel %vm4437, %v4446, 8
        %v4449 = vsel %vm4438, %v4446, 8
        %v4450 = vsel %vm4439, %v4446, 8
        %v4451 = vsel %vm4440, %v4446, 8
        %v4452 = vsel %vm4441, %v4446, 8
        %v4453 = vsel %vm4442, %v4446, 8
        %v4454 = vsel %vm4443, %v4446, 8
        %4455 = vset.pattern.permute.xlu0 0
        %4456 = vperm.xlu0 %4455, %v4447
        %v4457 = vpop.permute.xlu0 %4456
        %4458 = vset.pattern.permute.xlu0 0
        %4459 = vperm.xlu0 %4458, %v4448
        %v4460 = vpop.permute.xlu0 %4459
        %4461 = vset.pattern.permute.xlu0 0
        %4462 = vperm.xlu0 %4461, %v4449
        %v4463 = vpop.permute.xlu0 %4462
        %4464 = vset.pattern.permute.xlu0 0
        %4465 = vperm.xlu0 %4464, %v4450
        %v4466 = vpop.permute.xlu0 %4465
        %4467 = vset.pattern.permute.xlu0 0
        %4468 = vperm.xlu0 %4467, %v4451
        %v4469 = vpop.permute.xlu0 %4468
        %4470 = vset.pattern.permute.xlu0 0
        %4471 = vperm.xlu0 %4470, %v4452
        %v4472 = vpop.permute.xlu0 %4471
        %4473 = vset.pattern.permute.xlu0 0
        %4474 = vperm.xlu0 %4473, %v4453
        %v4475 = vpop.permute.xlu0 %4474
        %4476 = vset.pattern.permute.xlu0 0
        %4477 = vperm.xlu0 %4476, %v4454
        %v4478 = vpop.permute.xlu0 %4477
        %v4479 = vlaneseq
        %v4480 = vshrl.u32 %v4479, 7
        %v4481 = vsub.s32 %v4146, %v4480
        %v4482 = vrot.slane %v4457, %v4481
        %v4483 = vlaneseq
        %v4484 = vshrl.u32 %v4483, 7
        %v4485 = vsub.s32 %v4146, %v4484
        %v4486 = vrot.slane %v4460, %v4485
        %v4487 = vlaneseq
        %v4488 = vshrl.u32 %v4487, 7
        %v4489 = vsub.s32 %v4146, %v4488
        %v4490 = vrot.slane %v4463, %v4489
        %v4491 = vlaneseq
        %v4492 = vshrl.u32 %v4491, 7
        %v4493 = vsub.s32 %v4146, %v4492
        %v4494 = vrot.slane %v4466, %v4493
        %v4495 = vlaneseq
        %v4496 = vshrl.u32 %v4495, 7
        %v4497 = vsub.s32 %v4146, %v4496
        %v4498 = vrot.slane %v4469, %v4497
        %v4499 = vlaneseq
        %v4500 = vshrl.u32 %v4499, 7
        %v4501 = vsub.s32 %v4146, %v4500
        %v4502 = vrot.slane %v4472, %v4501
        %v4503 = vlaneseq
        %v4504 = vshrl.u32 %v4503, 7
        %v4505 = vsub.s32 %v4146, %v4504
        %v4506 = vrot.slane %v4475, %v4505
        %v4507 = vlaneseq
        %v4508 = vshrl.u32 %v4507, 7
        %v4509 = vsub.s32 %v4146, %v4508
        %v4510 = vrot.slane %v4478, %v4509
        %v4511 = vsel %vm4377, %v4486, %v4482
        %v4512 = vsel %vm4379, %v4490, %v4511
        %v4513 = vsel %vm4381, %v4494, %v4512
        %v4514 = vsel %vm4383, %v4498, %v4513
        %v4515 = vsel %vm4385, %v4502, %v4514
        %v4516 = vsel %vm4387, %v4506, %v4515
        %v4517 = vsel %vm4389, %v4510, %v4516
        %v4518 = vsel %vm1472, %v4517, 2147483647
        %v4519 = vand.u32 %v4518, 65535
        %v4520 = vshra.s32 %v4518, 16
        %v4521 = vcvt.s32.f32 %v4519
        %v4522 = vcvt.s32.f32 %v4520
        %4523 = vmin.xlane.f32.xlu0 %v4522
        %v4524 = vpop.xlane.xlu0 %4523
        %vm4525 = vcmp.eq.f32.partialorder %v4522, %v4524
        %v4526 = vsel %vm4525, %v4521, inf
        %4527 = vmin.xlane.f32.xlu0 %v4526
        %v4528 = vpop.xlane.xlu0 %4527
        %v4529 = vcvt.f32.s32 %v4528
        %v4530 = vcvt.f32.s32 %v4524
        %v4531 = vshll.u32 %v4530, 16
        %v4532 = vadd.s32 %v4531, %v4529
        %4533 = vset.pattern.permute.xlu0 2
        %4534 = vperm.xlu0 %4533, %v4164
        %v4535 = vpop.permute.xlu0 %4534
        %v4536 = vlaneseq
        %v4537 = vshrl.u32 %v4536, 7
        %v4538 = vsub.s32 0, %v4537
        %v4539 = vrot.slane %v4535, %v4538
        %vm4540 = vcmp.eq.s32.totalorder %v4539, 1
        %v4541 = vsel %vm4540, %v4394, %v4177
        %v4542 = vlaneseq
        %v4543 = vshrl.u32 %v4542, 7
        %v4544 = vsub.s32 %v4146, %v4543
        %v4545 = vrot.slane %v4532, %v4544
        %4546 = vst.msk [vmem:[#allocation3 + $0x1] sm:$0x1] %vm4182, %v4545
        %v4547 = vadd.f32 %v4541, %v4191
        %v4548 = vadd.f32 %v4541, %v4198
        %v4549 = vadd.f32 %v4541, %v4205
        %v4550 = vadd.f32 %v4541, %v4212
        %v4551 = vadd.f32 %v4541, %v4219
        %v4552 = vadd.f32 %v4541, %v4226
        %v4553 = vadd.f32 %v4541, %v4233
        %v4554 = vadd.f32 %v4541, %v4240
        %v4555 = vlaneseq
        %v4556 = vshrl.u32 %v4555, 7
        %v4557 = vsub.s32 3, %v4556
        %v4558 = vrot.slane %v4117, %v4557
        %4560 = vbcast.lane.b32.xlu0 %v4558, 256
        %v4561 = vpop.permute.xlu0 %4560
        %v4563 = vlaneseq
        %v4564 = vshrl.u32 %v4563, 7
        %v4565 = vsub.s32 0, %v4564
        %v4566 = vrot.slane %v4561, %v4565
        %v4567 = vlaneseq
        %v4568 = vshrl.u32 %v4567, 7
        %v4569 = vsub.s32 1, %v4568
        %v4570 = vrot.slane %v4561, %v4569
        %v4571 = vlaneseq
        %v4572 = vshrl.u32 %v4571, 7
        %v4573 = vsub.s32 2, %v4572
        %v4574 = vrot.slane %v4561, %v4573
        %v4575 = vlaneseq
        %v4576 = vshrl.u32 %v4575, 7
        %v4577 = vsub.s32 3, %v4576
        %v4578 = vrot.slane %v4561, %v4577
        %v4579 = vlaneseq
        %v4580 = vshrl.u32 %v4579, 7
        %v4581 = vsub.s32 4, %v4580
        %v4582 = vrot.slane %v4561, %v4581
        %v4583 = vlaneseq
        %v4584 = vshrl.u32 %v4583, 7
        %v4585 = vsub.s32 5, %v4584
        %v4586 = vrot.slane %v4561, %v4585
        %v4587 = vlaneseq
        %v4588 = vshrl.u32 %v4587, 7
        %v4589 = vsub.s32 6, %v4588
        %v4590 = vrot.slane %v4561, %v4589
        %v4591 = vlaneseq
        %v4592 = vshrl.u32 %v4591, 7
        %v4593 = vsub.s32 7, %v4592
        %v4594 = vrot.slane %v4561, %v4593
        %v4603 = vadd.f32 %v4547, %v4566
        %v4604 = vadd.f32 %v4548, %v4570
        %v4605 = vadd.f32 %v4549, %v4574
        %v4606 = vadd.f32 %v4550, %v4578
        %v4607 = vadd.f32 %v4551, %v4582
        %v4608 = vadd.f32 %v4552, %v4586
        %v4609 = vadd.f32 %v4553, %v4590
        %v4610 = vadd.f32 %v4554, %v4594
        %4619 = vset.pattern.permute.xlu0 0
        %4620 = vperm.xlu0 %4619, %v4603
        %v4621 = vpop.permute.xlu0 %4620
        %4622 = vset.pattern.permute.xlu0 0
        %4623 = vperm.xlu0 %4622, %v4604
        %v4624 = vpop.permute.xlu0 %4623
        %4625 = vset.pattern.permute.xlu0 0
        %4626 = vperm.xlu0 %4625, %v4605
        %v4627 = vpop.permute.xlu0 %4626
        %4628 = vset.pattern.permute.xlu0 0
        %4629 = vperm.xlu0 %4628, %v4606
        %v4630 = vpop.permute.xlu0 %4629
        %4631 = vset.pattern.permute.xlu0 0
        %4632 = vperm.xlu0 %4631, %v4607
        %v4633 = vpop.permute.xlu0 %4632
        %4634 = vset.pattern.permute.xlu0 0
        %4635 = vperm.xlu0 %4634, %v4608
        %v4636 = vpop.permute.xlu0 %4635
        %4637 = vset.pattern.permute.xlu0 0
        %4638 = vperm.xlu0 %4637, %v4609
        %v4639 = vpop.permute.xlu0 %4638
        %4640 = vset.pattern.permute.xlu0 0
        %4641 = vperm.xlu0 %4640, %v4610
        %v4642 = vpop.permute.xlu0 %4641
        %v4643 = vlaneseq
        %v4644 = vshrl.u32 %v4643, 7
        %v4645 = vsub.s32 %v4146, %v4644
        %v4646 = vrot.slane %v4621, %v4645
        %v4647 = vlaneseq
        %v4648 = vshrl.u32 %v4647, 7
        %v4649 = vsub.s32 %v4146, %v4648
        %v4650 = vrot.slane %v4624, %v4649
        %v4651 = vlaneseq
        %v4652 = vshrl.u32 %v4651, 7
        %v4653 = vsub.s32 %v4146, %v4652
        %v4654 = vrot.slane %v4627, %v4653
        %v4655 = vlaneseq
        %v4656 = vshrl.u32 %v4655, 7
        %v4657 = vsub.s32 %v4146, %v4656
        %v4658 = vrot.slane %v4630, %v4657
        %v4659 = vlaneseq
        %v4660 = vshrl.u32 %v4659, 7
        %v4661 = vsub.s32 %v4146, %v4660
        %v4662 = vrot.slane %v4633, %v4661
        %v4663 = vlaneseq
        %v4664 = vshrl.u32 %v4663, 7
        %v4665 = vsub.s32 %v4146, %v4664
        %v4666 = vrot.slane %v4636, %v4665
        %v4667 = vlaneseq
        %v4668 = vshrl.u32 %v4667, 7
        %v4669 = vsub.s32 %v4146, %v4668
        %v4670 = vrot.slane %v4639, %v4669
        %v4671 = vlaneseq
        %v4672 = vshrl.u32 %v4671, 7
        %v4673 = vsub.s32 %v4146, %v4672
        %v4674 = vrot.slane %v4642, %v4673
        %v4675 = vsel %vm4377, %v4650, %v4646
        %v4676 = vsel %vm4379, %v4654, %v4675
        %v4677 = vsel %vm4381, %v4658, %v4676
        %v4678 = vsel %vm4383, %v4662, %v4677
        %v4679 = vsel %vm4385, %v4666, %v4678
        %v4680 = vsel %vm4387, %v4670, %v4679
        %v4681 = vsel %vm4389, %v4674, %v4680
        %v4683 = vsel %vm1472, %v4681, -inf
        %4684 = vmax.xlane.f32.xlu0 %v4683
        %v4685 = vpop.xlane.xlu0 %4684
        %v4687 = vlaneseq
        %v4688 = vshrl.u32 %v4687, 7
        %v4689 = vsub.s32 0, %v4688
        %v4690 = vrot.slane %v4685, %v4689
        %v4691 = vlaneseq
        %v4692 = vshrl.u32 %v4691, 7
        %v4693 = vsub.s32 1, %v4692
        %v4694 = vrot.slane %v4685, %v4693
        %v4695 = vlaneseq
        %v4696 = vshrl.u32 %v4695, 7
        %v4697 = vsub.s32 2, %v4696
        %v4698 = vrot.slane %v4685, %v4697
        %v4699 = vlaneseq
        %v4700 = vshrl.u32 %v4699, 7
        %v4701 = vsub.s32 3, %v4700
        %v4702 = vrot.slane %v4685, %v4701
        %v4703 = vlaneseq
        %v4704 = vshrl.u32 %v4703, 7
        %v4705 = vsub.s32 4, %v4704
        %v4706 = vrot.slane %v4685, %v4705
        %v4707 = vlaneseq
        %v4708 = vshrl.u32 %v4707, 7
        %v4709 = vsub.s32 5, %v4708
        %v4710 = vrot.slane %v4685, %v4709
        %v4711 = vlaneseq
        %v4712 = vshrl.u32 %v4711, 7
        %v4713 = vsub.s32 6, %v4712
        %v4714 = vrot.slane %v4685, %v4713
        %v4715 = vlaneseq
        %v4716 = vshrl.u32 %v4715, 7
        %v4717 = vsub.s32 7, %v4716
        %v4718 = vrot.slane %v4685, %v4717
        %vm4727 = vcmp.eq.f32.partialorder %v4603, %v4690
        %vm4728 = vcmp.eq.f32.partialorder %v4604, %v4694
        %vm4729 = vcmp.eq.f32.partialorder %v4605, %v4698
        %vm4730 = vcmp.eq.f32.partialorder %v4606, %v4702
        %vm4731 = vcmp.eq.f32.partialorder %v4607, %v4706
        %vm4732 = vcmp.eq.f32.partialorder %v4608, %v4710
        %vm4733 = vcmp.eq.f32.partialorder %v4609, %v4714
        %vm4734 = vcmp.eq.f32.partialorder %v4610, %v4718
        %v4735 = vsel %vm4727, %v4446, 8
        %v4736 = vsel %vm4728, %v4446, 8
        %v4737 = vsel %vm4729, %v4446, 8
        %v4738 = vsel %vm4730, %v4446, 8
        %v4739 = vsel %vm4731, %v4446, 8
        %v4740 = vsel %vm4732, %v4446, 8
        %v4741 = vsel %vm4733, %v4446, 8
        %v4742 = vsel %vm4734, %v4446, 8
        %4743 = vset.pattern.permute.xlu0 0
        %4744 = vperm.xlu0 %4743, %v4735
        %v4745 = vpop.permute.xlu0 %4744
        %4746 = vset.pattern.permute.xlu0 0
        %4747 = vperm.xlu0 %4746, %v4736
        %v4748 = vpop.permute.xlu0 %4747
        %4749 = vset.pattern.permute.xlu0 0
        %4750 = vperm.xlu0 %4749, %v4737
        %v4751 = vpop.permute.xlu0 %4750
        %4752 = vset.pattern.permute.xlu0 0
        %4753 = vperm.xlu0 %4752, %v4738
        %v4754 = vpop.permute.xlu0 %4753
        %4755 = vset.pattern.permute.xlu0 0
        %4756 = vperm.xlu0 %4755, %v4739
        %v4757 = vpop.permute.xlu0 %4756
        %4758 = vset.pattern.permute.xlu0 0
        %4759 = vperm.xlu0 %4758, %v4740
        %v4760 = vpop.permute.xlu0 %4759
        %4761 = vset.pattern.permute.xlu0 0
        %4762 = vperm.xlu0 %4761, %v4741
        %v4763 = vpop.permute.xlu0 %4762
        %4764 = vset.pattern.permute.xlu0 0
        %4765 = vperm.xlu0 %4764, %v4742
        %v4766 = vpop.permute.xlu0 %4765
        %v4767 = vlaneseq
        %v4768 = vshrl.u32 %v4767, 7
        %v4769 = vsub.s32 %v4146, %v4768
        %v4770 = vrot.slane %v4745, %v4769
        %v4771 = vlaneseq
        %v4772 = vshrl.u32 %v4771, 7
        %v4773 = vsub.s32 %v4146, %v4772
        %v4774 = vrot.slane %v4748, %v4773
        %v4775 = vlaneseq
        %v4776 = vshrl.u32 %v4775, 7
        %v4777 = vsub.s32 %v4146, %v4776
        %v4778 = vrot.slane %v4751, %v4777
        %v4779 = vlaneseq
        %v4780 = vshrl.u32 %v4779, 7
        %v4781 = vsub.s32 %v4146, %v4780
        %v4782 = vrot.slane %v4754, %v4781
        %v4783 = vlaneseq
        %v4784 = vshrl.u32 %v4783, 7
        %v4785 = vsub.s32 %v4146, %v4784
        %v4786 = vrot.slane %v4757, %v4785
        %v4787 = vlaneseq
        %v4788 = vshrl.u32 %v4787, 7
        %v4789 = vsub.s32 %v4146, %v4788
        %v4790 = vrot.slane %v4760, %v4789
        %v4791 = vlaneseq
        %v4792 = vshrl.u32 %v4791, 7
        %v4793 = vsub.s32 %v4146, %v4792
        %v4794 = vrot.slane %v4763, %v4793
        %v4795 = vlaneseq
        %v4796 = vshrl.u32 %v4795, 7
        %v4797 = vsub.s32 %v4146, %v4796
        %v4798 = vrot.slane %v4766, %v4797
        %v4799 = vsel %vm4377, %v4774, %v4770
        %v4800 = vsel %vm4379, %v4778, %v4799
        %v4801 = vsel %vm4381, %v4782, %v4800
        %v4802 = vsel %vm4383, %v4786, %v4801
        %v4803 = vsel %vm4385, %v4790, %v4802
        %v4804 = vsel %vm4387, %v4794, %v4803
        %v4805 = vsel %vm4389, %v4798, %v4804
        %v4806 = vsel %vm1472, %v4805, 2147483647
        %v4807 = vand.u32 %v4806, 65535
        %v4808 = vshra.s32 %v4806, 16
        %v4809 = vcvt.s32.f32 %v4807
        %v4810 = vcvt.s32.f32 %v4808
        %4811 = vmin.xlane.f32.xlu0 %v4810
        %v4812 = vpop.xlane.xlu0 %4811
        %vm4813 = vcmp.eq.f32.partialorder %v4810, %v4812
        %v4814 = vsel %vm4813, %v4809, inf
        %4815 = vmin.xlane.f32.xlu0 %v4814
        %v4816 = vpop.xlane.xlu0 %4815
        %v4817 = vcvt.f32.s32 %v4816
        %v4818 = vcvt.f32.s32 %v4812
        %v4819 = vshll.u32 %v4818, 16
        %v4820 = vadd.s32 %v4819, %v4817
        %4821 = vset.pattern.permute.xlu0 3
        %4822 = vperm.xlu0 %4821, %v4164
        %v4823 = vpop.permute.xlu0 %4822
        %v4824 = vlaneseq
        %v4825 = vshrl.u32 %v4824, 7
        %v4826 = vsub.s32 0, %v4825
        %v4827 = vrot.slane %v4823, %v4826
        %vm4828 = vcmp.eq.s32.totalorder %v4827, 1
        %v4829 = vsel %vm4828, %v4685, %v4541
        %v4830 = vlaneseq
        %v4831 = vshrl.u32 %v4830, 7
        %v4832 = vsub.s32 %v4146, %v4831
        %v4833 = vrot.slane %v4820, %v4832
        %4834 = vst.msk [vmem:[#allocation3 + $0x2] sm:$0x1] %vm4182, %v4833
        %v4835 = vadd.f32 %v4829, %v4191
        %v4836 = vadd.f32 %v4829, %v4198
        %v4837 = vadd.f32 %v4829, %v4205
        %v4838 = vadd.f32 %v4829, %v4212
        %v4839 = vadd.f32 %v4829, %v4219
        %v4840 = vadd.f32 %v4829, %v4226
        %v4841 = vadd.f32 %v4829, %v4233
        %v4842 = vadd.f32 %v4829, %v4240
        %v4843 = vlaneseq
        %v4844 = vshrl.u32 %v4843, 7
        %v4845 = vsub.s32 4, %v4844
        %v4846 = vrot.slane %v4117, %v4845
        %4848 = vbcast.lane.b32.xlu0 %v4846, 256
        %v4849 = vpop.permute.xlu0 %4848
        %v4851 = vlaneseq
        %v4852 = vshrl.u32 %v4851, 7
        %v4853 = vsub.s32 0, %v4852
        %v4854 = vrot.slane %v4849, %v4853
        %v4855 = vlaneseq
        %v4856 = vshrl.u32 %v4855, 7
        %v4857 = vsub.s32 1, %v4856
        %v4858 = vrot.slane %v4849, %v4857
        %v4859 = vlaneseq
        %v4860 = vshrl.u32 %v4859, 7
        %v4861 = vsub.s32 2, %v4860
        %v4862 = vrot.slane %v4849, %v4861
        %v4863 = vlaneseq
        %v4864 = vshrl.u32 %v4863, 7
        %v4865 = vsub.s32 3, %v4864
        %v4866 = vrot.slane %v4849, %v4865
        %v4867 = vlaneseq
        %v4868 = vshrl.u32 %v4867, 7
        %v4869 = vsub.s32 4, %v4868
        %v4870 = vrot.slane %v4849, %v4869
        %v4871 = vlaneseq
        %v4872 = vshrl.u32 %v4871, 7
        %v4873 = vsub.s32 5, %v4872
        %v4874 = vrot.slane %v4849, %v4873
        %v4875 = vlaneseq
        %v4876 = vshrl.u32 %v4875, 7
        %v4877 = vsub.s32 6, %v4876
        %v4878 = vrot.slane %v4849, %v4877
        %v4879 = vlaneseq
        %v4880 = vshrl.u32 %v4879, 7
        %v4881 = vsub.s32 7, %v4880
        %v4882 = vrot.slane %v4849, %v4881
        %v4891 = vadd.f32 %v4835, %v4854
        %v4892 = vadd.f32 %v4836, %v4858
        %v4893 = vadd.f32 %v4837, %v4862
        %v4894 = vadd.f32 %v4838, %v4866
        %v4895 = vadd.f32 %v4839, %v4870
        %v4896 = vadd.f32 %v4840, %v4874
        %v4897 = vadd.f32 %v4841, %v4878
        %v4898 = vadd.f32 %v4842, %v4882
        %4907 = vset.pattern.permute.xlu0 0
        %4908 = vperm.xlu0 %4907, %v4891
        %v4909 = vpop.permute.xlu0 %4908
        %4910 = vset.pattern.permute.xlu0 0
        %4911 = vperm.xlu0 %4910, %v4892
        %v4912 = vpop.permute.xlu0 %4911
        %4913 = vset.pattern.permute.xlu0 0
        %4914 = vperm.xlu0 %4913, %v4893
        %v4915 = vpop.permute.xlu0 %4914
        %4916 = vset.pattern.permute.xlu0 0
        %4917 = vperm.xlu0 %4916, %v4894
        %v4918 = vpop.permute.xlu0 %4917
        %4919 = vset.pattern.permute.xlu0 0
        %4920 = vperm.xlu0 %4919, %v4895
        %v4921 = vpop.permute.xlu0 %4920
        %4922 = vset.pattern.permute.xlu0 0
        %4923 = vperm.xlu0 %4922, %v4896
        %v4924 = vpop.permute.xlu0 %4923
        %4925 = vset.pattern.permute.xlu0 0
        %4926 = vperm.xlu0 %4925, %v4897
        %v4927 = vpop.permute.xlu0 %4926
        %4928 = vset.pattern.permute.xlu0 0
        %4929 = vperm.xlu0 %4928, %v4898
        %v4930 = vpop.permute.xlu0 %4929
        %v4931 = vlaneseq
        %v4932 = vshrl.u32 %v4931, 7
        %v4933 = vsub.s32 %v4146, %v4932
        %v4934 = vrot.slane %v4909, %v4933
        %v4935 = vlaneseq
        %v4936 = vshrl.u32 %v4935, 7
        %v4937 = vsub.s32 %v4146, %v4936
        %v4938 = vrot.slane %v4912, %v4937
        %v4939 = vlaneseq
        %v4940 = vshrl.u32 %v4939, 7
        %v4941 = vsub.s32 %v4146, %v4940
        %v4942 = vrot.slane %v4915, %v4941
        %v4943 = vlaneseq
        %v4944 = vshrl.u32 %v4943, 7
        %v4945 = vsub.s32 %v4146, %v4944
        %v4946 = vrot.slane %v4918, %v4945
        %v4947 = vlaneseq
        %v4948 = vshrl.u32 %v4947, 7
        %v4949 = vsub.s32 %v4146, %v4948
        %v4950 = vrot.slane %v4921, %v4949
        %v4951 = vlaneseq
        %v4952 = vshrl.u32 %v4951, 7
        %v4953 = vsub.s32 %v4146, %v4952
        %v4954 = vrot.slane %v4924, %v4953
        %v4955 = vlaneseq
        %v4956 = vshrl.u32 %v4955, 7
        %v4957 = vsub.s32 %v4146, %v4956
        %v4958 = vrot.slane %v4927, %v4957
        %v4959 = vlaneseq
        %v4960 = vshrl.u32 %v4959, 7
        %v4961 = vsub.s32 %v4146, %v4960
        %v4962 = vrot.slane %v4930, %v4961
        %v4963 = vsel %vm4377, %v4938, %v4934
        %v4964 = vsel %vm4379, %v4942, %v4963
        %v4965 = vsel %vm4381, %v4946, %v4964
        %v4966 = vsel %vm4383, %v4950, %v4965
        %v4967 = vsel %vm4385, %v4954, %v4966
        %v4968 = vsel %vm4387, %v4958, %v4967
        %v4969 = vsel %vm4389, %v4962, %v4968
        %v4971 = vsel %vm1472, %v4969, -inf
        %4972 = vmax.xlane.f32.xlu0 %v4971
        %v4973 = vpop.xlane.xlu0 %4972
        %v4975 = vlaneseq
        %v4976 = vshrl.u32 %v4975, 7
        %v4977 = vsub.s32 0, %v4976
        %v4978 = vrot.slane %v4973, %v4977
        %v4979 = vlaneseq
        %v4980 = vshrl.u32 %v4979, 7
        %v4981 = vsub.s32 1, %v4980
        %v4982 = vrot.slane %v4973, %v4981
        %v4983 = vlaneseq
        %v4984 = vshrl.u32 %v4983, 7
        %v4985 = vsub.s32 2, %v4984
        %v4986 = vrot.slane %v4973, %v4985
        %v4987 = vlaneseq
        %v4988 = vshrl.u32 %v4987, 7
        %v4989 = vsub.s32 3, %v4988
        %v4990 = vrot.slane %v4973, %v4989
        %v4991 = vlaneseq
        %v4992 = vshrl.u32 %v4991, 7
        %v4993 = vsub.s32 4, %v4992
        %v4994 = vrot.slane %v4973, %v4993
        %v4995 = vlaneseq
        %v4996 = vshrl.u32 %v4995, 7
        %v4997 = vsub.s32 5, %v4996
        %v4998 = vrot.slane %v4973, %v4997
        %v4999 = vlaneseq
        %v5000 = vshrl.u32 %v4999, 7
        %v5001 = vsub.s32 6, %v5000
        %v5002 = vrot.slane %v4973, %v5001
        %v5003 = vlaneseq
        %v5004 = vshrl.u32 %v5003, 7
        %v5005 = vsub.s32 7, %v5004
        %v5006 = vrot.slane %v4973, %v5005
        %vm5015 = vcmp.eq.f32.partialorder %v4891, %v4978
        %vm5016 = vcmp.eq.f32.partialorder %v4892, %v4982
        %vm5017 = vcmp.eq.f32.partialorder %v4893, %v4986
        %vm5018 = vcmp.eq.f32.partialorder %v4894, %v4990
        %vm5019 = vcmp.eq.f32.partialorder %v4895, %v4994
        %vm5020 = vcmp.eq.f32.partialorder %v4896, %v4998
        %vm5021 = vcmp.eq.f32.partialorder %v4897, %v5002
        %vm5022 = vcmp.eq.f32.partialorder %v4898, %v5006
        %v5023 = vsel %vm5015, %v4446, 8
        %v5024 = vsel %vm5016, %v4446, 8
        %v5025 = vsel %vm5017, %v4446, 8
        %v5026 = vsel %vm5018, %v4446, 8
        %v5027 = vsel %vm5019, %v4446, 8
        %v5028 = vsel %vm5020, %v4446, 8
        %v5029 = vsel %vm5021, %v4446, 8
        %v5030 = vsel %vm5022, %v4446, 8
        %5031 = vset.pattern.permute.xlu0 0
        %5032 = vperm.xlu0 %5031, %v5023
        %v5033 = vpop.permute.xlu0 %5032
        %5034 = vset.pattern.permute.xlu0 0
        %5035 = vperm.xlu0 %5034, %v5024
        %v5036 = vpop.permute.xlu0 %5035
        %5037 = vset.pattern.permute.xlu0 0
        %5038 = vperm.xlu0 %5037, %v5025
        %v5039 = vpop.permute.xlu0 %5038
        %5040 = vset.pattern.permute.xlu0 0
        %5041 = vperm.xlu0 %5040, %v5026
        %v5042 = vpop.permute.xlu0 %5041
        %5043 = vset.pattern.permute.xlu0 0
        %5044 = vperm.xlu0 %5043, %v5027
        %v5045 = vpop.permute.xlu0 %5044
        %5046 = vset.pattern.permute.xlu0 0
        %5047 = vperm.xlu0 %5046, %v5028
        %v5048 = vpop.permute.xlu0 %5047
        %5049 = vset.pattern.permute.xlu0 0
        %5050 = vperm.xlu0 %5049, %v5029
        %v5051 = vpop.permute.xlu0 %5050
        %5052 = vset.pattern.permute.xlu0 0
        %5053 = vperm.xlu0 %5052, %v5030
        %v5054 = vpop.permute.xlu0 %5053
        %v5055 = vlaneseq
        %v5056 = vshrl.u32 %v5055, 7
        %v5057 = vsub.s32 %v4146, %v5056
        %v5058 = vrot.slane %v5033, %v5057
        %v5059 = vlaneseq
        %v5060 = vshrl.u32 %v5059, 7
        %v5061 = vsub.s32 %v4146, %v5060
        %v5062 = vrot.slane %v5036, %v5061
        %v5063 = vlaneseq
        %v5064 = vshrl.u32 %v5063, 7
        %v5065 = vsub.s32 %v4146, %v5064
        %v5066 = vrot.slane %v5039, %v5065
        %v5067 = vlaneseq
        %v5068 = vshrl.u32 %v5067, 7
        %v5069 = vsub.s32 %v4146, %v5068
        %v5070 = vrot.slane %v5042, %v5069
        %v5071 = vlaneseq
        %v5072 = vshrl.u32 %v5071, 7
        %v5073 = vsub.s32 %v4146, %v5072
        %v5074 = vrot.slane %v5045, %v5073
        %v5075 = vlaneseq
        %v5076 = vshrl.u32 %v5075, 7
        %v5077 = vsub.s32 %v4146, %v5076
        %v5078 = vrot.slane %v5048, %v5077
        %v5079 = vlaneseq
        %v5080 = vshrl.u32 %v5079, 7
        %v5081 = vsub.s32 %v4146, %v5080
        %v5082 = vrot.slane %v5051, %v5081
        %v5083 = vlaneseq
        %v5084 = vshrl.u32 %v5083, 7
        %v5085 = vsub.s32 %v4146, %v5084
        %v5086 = vrot.slane %v5054, %v5085
        %v5087 = vsel %vm4377, %v5062, %v5058
        %v5088 = vsel %vm4379, %v5066, %v5087
        %v5089 = vsel %vm4381, %v5070, %v5088
        %v5090 = vsel %vm4383, %v5074, %v5089
        %v5091 = vsel %vm4385, %v5078, %v5090
        %v5092 = vsel %vm4387, %v5082, %v5091
        %v5093 = vsel %vm4389, %v5086, %v5092
        %v5094 = vsel %vm1472, %v5093, 2147483647
        %v5095 = vand.u32 %v5094, 65535
        %v5096 = vshra.s32 %v5094, 16
        %v5097 = vcvt.s32.f32 %v5095
        %v5098 = vcvt.s32.f32 %v5096
        %5099 = vmin.xlane.f32.xlu0 %v5098
        %v5100 = vpop.xlane.xlu0 %5099
        %vm5101 = vcmp.eq.f32.partialorder %v5098, %v5100
        %v5102 = vsel %vm5101, %v5097, inf
        %5103 = vmin.xlane.f32.xlu0 %v5102
        %v5104 = vpop.xlane.xlu0 %5103
        %v5105 = vcvt.f32.s32 %v5104
        %v5106 = vcvt.f32.s32 %v5100
        %v5107 = vshll.u32 %v5106, 16
        %v5108 = vadd.s32 %v5107, %v5105
        %5109 = vset.pattern.permute.xlu0 4
        %5110 = vperm.xlu0 %5109, %v4164
        %v5111 = vpop.permute.xlu0 %5110
        %v5112 = vlaneseq
        %v5113 = vshrl.u32 %v5112, 7
        %v5114 = vsub.s32 0, %v5113
        %v5115 = vrot.slane %v5111, %v5114
        %vm5116 = vcmp.eq.s32.totalorder %v5115, 1
        %v5117 = vsel %vm5116, %v4973, %v4829
        %v5118 = vlaneseq
        %v5119 = vshrl.u32 %v5118, 7
        %v5120 = vsub.s32 %v4146, %v5119
        %v5121 = vrot.slane %v5108, %v5120
        %5122 = vst.msk [vmem:[#allocation3 + $0x3] sm:$0x1] %vm4182, %v5121
        %v5123 = vadd.f32 %v5117, %v4191
        %v5124 = vadd.f32 %v5117, %v4198
        %v5125 = vadd.f32 %v5117, %v4205
        %v5126 = vadd.f32 %v5117, %v4212
        %v5127 = vadd.f32 %v5117, %v4219
        %v5128 = vadd.f32 %v5117, %v4226
        %v5129 = vadd.f32 %v5117, %v4233
        %v5130 = vadd.f32 %v5117, %v4240
        %v5131 = vlaneseq
        %v5132 = vshrl.u32 %v5131, 7
        %v5133 = vsub.s32 5, %v5132
        %v5134 = vrot.slane %v4117, %v5133
        %5136 = vbcast.lane.b32.xlu0 %v5134, 256
        %v5137 = vpop.permute.xlu0 %5136
        %v5139 = vlaneseq
        %v5140 = vshrl.u32 %v5139, 7
        %v5141 = vsub.s32 0, %v5140
        %v5142 = vrot.slane %v5137, %v5141
        %v5143 = vlaneseq
        %v5144 = vshrl.u32 %v5143, 7
        %v5145 = vsub.s32 1, %v5144
        %v5146 = vrot.slane %v5137, %v5145
        %v5147 = vlaneseq
        %v5148 = vshrl.u32 %v5147, 7
        %v5149 = vsub.s32 2, %v5148
        %v5150 = vrot.slane %v5137, %v5149
        %v5151 = vlaneseq
        %v5152 = vshrl.u32 %v5151, 7
        %v5153 = vsub.s32 3, %v5152
        %v5154 = vrot.slane %v5137, %v5153
        %v5155 = vlaneseq
        %v5156 = vshrl.u32 %v5155, 7
        %v5157 = vsub.s32 4, %v5156
        %v5158 = vrot.slane %v5137, %v5157
        %v5159 = vlaneseq
        %v5160 = vshrl.u32 %v5159, 7
        %v5161 = vsub.s32 5, %v5160
        %v5162 = vrot.slane %v5137, %v5161
        %v5163 = vlaneseq
        %v5164 = vshrl.u32 %v5163, 7
        %v5165 = vsub.s32 6, %v5164
        %v5166 = vrot.slane %v5137, %v5165
        %v5167 = vlaneseq
        %v5168 = vshrl.u32 %v5167, 7
        %v5169 = vsub.s32 7, %v5168
        %v5170 = vrot.slane %v5137, %v5169
        %v5179 = vadd.f32 %v5123, %v5142
        %v5180 = vadd.f32 %v5124, %v5146
        %v5181 = vadd.f32 %v5125, %v5150
        %v5182 = vadd.f32 %v5126, %v5154
        %v5183 = vadd.f32 %v5127, %v5158
        %v5184 = vadd.f32 %v5128, %v5162
        %v5185 = vadd.f32 %v5129, %v5166
        %v5186 = vadd.f32 %v5130, %v5170
        %5195 = vset.pattern.permute.xlu0 0
        %5196 = vperm.xlu0 %5195, %v5179
        %v5197 = vpop.permute.xlu0 %5196
        %5198 = vset.pattern.permute.xlu0 0
        %5199 = vperm.xlu0 %5198, %v5180
        %v5200 = vpop.permute.xlu0 %5199
        %5201 = vset.pattern.permute.xlu0 0
        %5202 = vperm.xlu0 %5201, %v5181
        %v5203 = vpop.permute.xlu0 %5202
        %5204 = vset.pattern.permute.xlu0 0
        %5205 = vperm.xlu0 %5204, %v5182
        %v5206 = vpop.permute.xlu0 %5205
        %5207 = vset.pattern.permute.xlu0 0
        %5208 = vperm.xlu0 %5207, %v5183
        %v5209 = vpop.permute.xlu0 %5208
        %5210 = vset.pattern.permute.xlu0 0
        %5211 = vperm.xlu0 %5210, %v5184
        %v5212 = vpop.permute.xlu0 %5211
        %5213 = vset.pattern.permute.xlu0 0
        %5214 = vperm.xlu0 %5213, %v5185
        %v5215 = vpop.permute.xlu0 %5214
        %5216 = vset.pattern.permute.xlu0 0
        %5217 = vperm.xlu0 %5216, %v5186
        %v5218 = vpop.permute.xlu0 %5217
        %v5219 = vlaneseq
        %v5220 = vshrl.u32 %v5219, 7
        %v5221 = vsub.s32 %v4146, %v5220
        %v5222 = vrot.slane %v5197, %v5221
        %v5223 = vlaneseq
        %v5224 = vshrl.u32 %v5223, 7
        %v5225 = vsub.s32 %v4146, %v5224
        %v5226 = vrot.slane %v5200, %v5225
        %v5227 = vlaneseq
        %v5228 = vshrl.u32 %v5227, 7
        %v5229 = vsub.s32 %v4146, %v5228
        %v5230 = vrot.slane %v5203, %v5229
        %v5231 = vlaneseq
        %v5232 = vshrl.u32 %v5231, 7
        %v5233 = vsub.s32 %v4146, %v5232
        %v5234 = vrot.slane %v5206, %v5233
        %v5235 = vlaneseq
        %v5236 = vshrl.u32 %v5235, 7
        %v5237 = vsub.s32 %v4146, %v5236
        %v5238 = vrot.slane %v5209, %v5237
        %v5239 = vlaneseq
        %v5240 = vshrl.u32 %v5239, 7
        %v5241 = vsub.s32 %v4146, %v5240
        %v5242 = vrot.slane %v5212, %v5241
        %v5243 = vlaneseq
        %v5244 = vshrl.u32 %v5243, 7
        %v5245 = vsub.s32 %v4146, %v5244
        %v5246 = vrot.slane %v5215, %v5245
        %v5247 = vlaneseq
        %v5248 = vshrl.u32 %v5247, 7
        %v5249 = vsub.s32 %v4146, %v5248
        %v5250 = vrot.slane %v5218, %v5249
        %v5251 = vsel %vm4377, %v5226, %v5222
        %v5252 = vsel %vm4379, %v5230, %v5251
        %v5253 = vsel %vm4381, %v5234, %v5252
        %v5254 = vsel %vm4383, %v5238, %v5253
        %v5255 = vsel %vm4385, %v5242, %v5254
        %v5256 = vsel %vm4387, %v5246, %v5255
        %v5257 = vsel %vm4389, %v5250, %v5256
        %v5259 = vsel %vm1472, %v5257, -inf
        %5260 = vmax.xlane.f32.xlu0 %v5259
        %v5261 = vpop.xlane.xlu0 %5260
        %v5263 = vlaneseq
        %v5264 = vshrl.u32 %v5263, 7
        %v5265 = vsub.s32 0, %v5264
        %v5266 = vrot.slane %v5261, %v5265
        %v5267 = vlaneseq
        %v5268 = vshrl.u32 %v5267, 7
        %v5269 = vsub.s32 1, %v5268
        %v5270 = vrot.slane %v5261, %v5269
        %v5271 = vlaneseq
        %v5272 = vshrl.u32 %v5271, 7
        %v5273 = vsub.s32 2, %v5272
        %v5274 = vrot.slane %v5261, %v5273
        %v5275 = vlaneseq
        %v5276 = vshrl.u32 %v5275, 7
        %v5277 = vsub.s32 3, %v5276
        %v5278 = vrot.slane %v5261, %v5277
        %v5279 = vlaneseq
        %v5280 = vshrl.u32 %v5279, 7
        %v5281 = vsub.s32 4, %v5280
        %v5282 = vrot.slane %v5261, %v5281
        %v5283 = vlaneseq
        %v5284 = vshrl.u32 %v5283, 7
        %v5285 = vsub.s32 5, %v5284
        %v5286 = vrot.slane %v5261, %v5285
        %v5287 = vlaneseq
        %v5288 = vshrl.u32 %v5287, 7
        %v5289 = vsub.s32 6, %v5288
        %v5290 = vrot.slane %v5261, %v5289
        %v5291 = vlaneseq
        %v5292 = vshrl.u32 %v5291, 7
        %v5293 = vsub.s32 7, %v5292
        %v5294 = vrot.slane %v5261, %v5293
        %vm5303 = vcmp.eq.f32.partialorder %v5179, %v5266
        %vm5304 = vcmp.eq.f32.partialorder %v5180, %v5270
        %vm5305 = vcmp.eq.f32.partialorder %v5181, %v5274
        %vm5306 = vcmp.eq.f32.partialorder %v5182, %v5278
        %vm5307 = vcmp.eq.f32.partialorder %v5183, %v5282
        %vm5308 = vcmp.eq.f32.partialorder %v5184, %v5286
        %vm5309 = vcmp.eq.f32.partialorder %v5185, %v5290
        %vm5310 = vcmp.eq.f32.partialorder %v5186, %v5294
        %v5311 = vsel %vm5303, %v4446, 8
        %v5312 = vsel %vm5304, %v4446, 8
        %v5313 = vsel %vm5305, %v4446, 8
        %v5314 = vsel %vm5306, %v4446, 8
        %v5315 = vsel %vm5307, %v4446, 8
        %v5316 = vsel %vm5308, %v4446, 8
        %v5317 = vsel %vm5309, %v4446, 8
        %v5318 = vsel %vm5310, %v4446, 8
        %5319 = vset.pattern.permute.xlu0 0
        %5320 = vperm.xlu0 %5319, %v5311
        %v5321 = vpop.permute.xlu0 %5320
        %5322 = vset.pattern.permute.xlu0 0
        %5323 = vperm.xlu0 %5322, %v5312
        %v5324 = vpop.permute.xlu0 %5323
        %5325 = vset.pattern.permute.xlu0 0
        %5326 = vperm.xlu0 %5325, %v5313
        %v5327 = vpop.permute.xlu0 %5326
        %5328 = vset.pattern.permute.xlu0 0
        %5329 = vperm.xlu0 %5328, %v5314
        %v5330 = vpop.permute.xlu0 %5329
        %5331 = vset.pattern.permute.xlu0 0
        %5332 = vperm.xlu0 %5331, %v5315
        %v5333 = vpop.permute.xlu0 %5332
        %5334 = vset.pattern.permute.xlu0 0
        %5335 = vperm.xlu0 %5334, %v5316
        %v5336 = vpop.permute.xlu0 %5335
        %5337 = vset.pattern.permute.xlu0 0
        %5338 = vperm.xlu0 %5337, %v5317
        %v5339 = vpop.permute.xlu0 %5338
        %5340 = vset.pattern.permute.xlu0 0
        %5341 = vperm.xlu0 %5340, %v5318
        %v5342 = vpop.permute.xlu0 %5341
        %v5343 = vlaneseq
        %v5344 = vshrl.u32 %v5343, 7
        %v5345 = vsub.s32 %v4146, %v5344
        %v5346 = vrot.slane %v5321, %v5345
        %v5347 = vlaneseq
        %v5348 = vshrl.u32 %v5347, 7
        %v5349 = vsub.s32 %v4146, %v5348
        %v5350 = vrot.slane %v5324, %v5349
        %v5351 = vlaneseq
        %v5352 = vshrl.u32 %v5351, 7
        %v5353 = vsub.s32 %v4146, %v5352
        %v5354 = vrot.slane %v5327, %v5353
        %v5355 = vlaneseq
        %v5356 = vshrl.u32 %v5355, 7
        %v5357 = vsub.s32 %v4146, %v5356
        %v5358 = vrot.slane %v5330, %v5357
        %v5359 = vlaneseq
        %v5360 = vshrl.u32 %v5359, 7
        %v5361 = vsub.s32 %v4146, %v5360
        %v5362 = vrot.slane %v5333, %v5361
        %v5363 = vlaneseq
        %v5364 = vshrl.u32 %v5363, 7
        %v5365 = vsub.s32 %v4146, %v5364
        %v5366 = vrot.slane %v5336, %v5365
        %v5367 = vlaneseq
        %v5368 = vshrl.u32 %v5367, 7
        %v5369 = vsub.s32 %v4146, %v5368
        %v5370 = vrot.slane %v5339, %v5369
        %v5371 = vlaneseq
        %v5372 = vshrl.u32 %v5371, 7
        %v5373 = vsub.s32 %v4146, %v5372
        %v5374 = vrot.slane %v5342, %v5373
        %v5375 = vsel %vm4377, %v5350, %v5346
        %v5376 = vsel %vm4379, %v5354, %v5375
        %v5377 = vsel %vm4381, %v5358, %v5376
        %v5378 = vsel %vm4383, %v5362, %v5377
        %v5379 = vsel %vm4385, %v5366, %v5378
        %v5380 = vsel %vm4387, %v5370, %v5379
        %v5381 = vsel %vm4389, %v5374, %v5380
        %v5382 = vsel %vm1472, %v5381, 2147483647
        %v5383 = vand.u32 %v5382, 65535
        %v5384 = vshra.s32 %v5382, 16
        %v5385 = vcvt.s32.f32 %v5383
        %v5386 = vcvt.s32.f32 %v5384
        %5387 = vmin.xlane.f32.xlu0 %v5386
        %v5388 = vpop.xlane.xlu0 %5387
        %vm5389 = vcmp.eq.f32.partialorder %v5386, %v5388
        %v5390 = vsel %vm5389, %v5385, inf
        %5391 = vmin.xlane.f32.xlu0 %v5390
        %v5392 = vpop.xlane.xlu0 %5391
        %v5393 = vcvt.f32.s32 %v5392
        %v5394 = vcvt.f32.s32 %v5388
        %v5395 = vshll.u32 %v5394, 16
        %v5396 = vadd.s32 %v5395, %v5393
        %5397 = vset.pattern.permute.xlu0 5
        %5398 = vperm.xlu0 %5397, %v4164
        %v5399 = vpop.permute.xlu0 %5398
        %v5400 = vlaneseq
        %v5401 = vshrl.u32 %v5400, 7
        %v5402 = vsub.s32 0, %v5401
        %v5403 = vrot.slane %v5399, %v5402
        %vm5404 = vcmp.eq.s32.totalorder %v5403, 1
        %v5405 = vsel %vm5404, %v5261, %v5117
        %v5406 = vlaneseq
        %v5407 = vshrl.u32 %v5406, 7
        %v5408 = vsub.s32 %v4146, %v5407
        %v5409 = vrot.slane %v5396, %v5408
        %5410 = vst.msk [vmem:[#allocation3 + $0x4] sm:$0x1] %vm4182, %v5409
        %v5411 = vadd.f32 %v5405, %v4191
        %v5412 = vadd.f32 %v5405, %v4198
        %v5413 = vadd.f32 %v5405, %v4205
        %v5414 = vadd.f32 %v5405, %v4212
        %v5415 = vadd.f32 %v5405, %v4219
        %v5416 = vadd.f32 %v5405, %v4226
        %v5417 = vadd.f32 %v5405, %v4233
        %v5418 = vadd.f32 %v5405, %v4240
        %v5419 = vlaneseq
        %v5420 = vshrl.u32 %v5419, 7
        %v5421 = vsub.s32 6, %v5420
        %v5422 = vrot.slane %v4117, %v5421
        %5424 = vbcast.lane.b32.xlu0 %v5422, 256
        %v5425 = vpop.permute.xlu0 %5424
        %v5427 = vlaneseq
        %v5428 = vshrl.u32 %v5427, 7
        %v5429 = vsub.s32 0, %v5428
        %v5430 = vrot.slane %v5425, %v5429
        %v5431 = vlaneseq
        %v5432 = vshrl.u32 %v5431, 7
        %v5433 = vsub.s32 1, %v5432
        %v5434 = vrot.slane %v5425, %v5433
        %v5435 = vlaneseq
        %v5436 = vshrl.u32 %v5435, 7
        %v5437 = vsub.s32 2, %v5436
        %v5438 = vrot.slane %v5425, %v5437
        %v5439 = vlaneseq
        %v5440 = vshrl.u32 %v5439, 7
        %v5441 = vsub.s32 3, %v5440
        %v5442 = vrot.slane %v5425, %v5441
        %v5443 = vlaneseq
        %v5444 = vshrl.u32 %v5443, 7
        %v5445 = vsub.s32 4, %v5444
        %v5446 = vrot.slane %v5425, %v5445
        %v5447 = vlaneseq
        %v5448 = vshrl.u32 %v5447, 7
        %v5449 = vsub.s32 5, %v5448
        %v5450 = vrot.slane %v5425, %v5449
        %v5451 = vlaneseq
        %v5452 = vshrl.u32 %v5451, 7
        %v5453 = vsub.s32 6, %v5452
        %v5454 = vrot.slane %v5425, %v5453
        %v5455 = vlaneseq
        %v5456 = vshrl.u32 %v5455, 7
        %v5457 = vsub.s32 7, %v5456
        %v5458 = vrot.slane %v5425, %v5457
        %v5467 = vadd.f32 %v5411, %v5430
        %v5468 = vadd.f32 %v5412, %v5434
        %v5469 = vadd.f32 %v5413, %v5438
        %v5470 = vadd.f32 %v5414, %v5442
        %v5471 = vadd.f32 %v5415, %v5446
        %v5472 = vadd.f32 %v5416, %v5450
        %v5473 = vadd.f32 %v5417, %v5454
        %v5474 = vadd.f32 %v5418, %v5458
        %5483 = vset.pattern.permute.xlu0 0
        %5484 = vperm.xlu0 %5483, %v5467
        %v5485 = vpop.permute.xlu0 %5484
        %5486 = vset.pattern.permute.xlu0 0
        %5487 = vperm.xlu0 %5486, %v5468
        %v5488 = vpop.permute.xlu0 %5487
        %5489 = vset.pattern.permute.xlu0 0
        %5490 = vperm.xlu0 %5489, %v5469
        %v5491 = vpop.permute.xlu0 %5490
        %5492 = vset.pattern.permute.xlu0 0
        %5493 = vperm.xlu0 %5492, %v5470
        %v5494 = vpop.permute.xlu0 %5493
        %5495 = vset.pattern.permute.xlu0 0
        %5496 = vperm.xlu0 %5495, %v5471
        %v5497 = vpop.permute.xlu0 %5496
        %5498 = vset.pattern.permute.xlu0 0
        %5499 = vperm.xlu0 %5498, %v5472
        %v5500 = vpop.permute.xlu0 %5499
        %5501 = vset.pattern.permute.xlu0 0
        %5502 = vperm.xlu0 %5501, %v5473
        %v5503 = vpop.permute.xlu0 %5502
        %5504 = vset.pattern.permute.xlu0 0
        %5505 = vperm.xlu0 %5504, %v5474
        %v5506 = vpop.permute.xlu0 %5505
        %v5507 = vlaneseq
        %v5508 = vshrl.u32 %v5507, 7
        %v5509 = vsub.s32 %v4146, %v5508
        %v5510 = vrot.slane %v5485, %v5509
        %v5511 = vlaneseq
        %v5512 = vshrl.u32 %v5511, 7
        %v5513 = vsub.s32 %v4146, %v5512
        %v5514 = vrot.slane %v5488, %v5513
        %v5515 = vlaneseq
        %v5516 = vshrl.u32 %v5515, 7
        %v5517 = vsub.s32 %v4146, %v5516
        %v5518 = vrot.slane %v5491, %v5517
        %v5519 = vlaneseq
        %v5520 = vshrl.u32 %v5519, 7
        %v5521 = vsub.s32 %v4146, %v5520
        %v5522 = vrot.slane %v5494, %v5521
        %v5523 = vlaneseq
        %v5524 = vshrl.u32 %v5523, 7
        %v5525 = vsub.s32 %v4146, %v5524
        %v5526 = vrot.slane %v5497, %v5525
        %v5527 = vlaneseq
        %v5528 = vshrl.u32 %v5527, 7
        %v5529 = vsub.s32 %v4146, %v5528
        %v5530 = vrot.slane %v5500, %v5529
        %v5531 = vlaneseq
        %v5532 = vshrl.u32 %v5531, 7
        %v5533 = vsub.s32 %v4146, %v5532
        %v5534 = vrot.slane %v5503, %v5533
        %v5535 = vlaneseq
        %v5536 = vshrl.u32 %v5535, 7
        %v5537 = vsub.s32 %v4146, %v5536
        %v5538 = vrot.slane %v5506, %v5537
        %v5539 = vsel %vm4377, %v5514, %v5510
        %v5540 = vsel %vm4379, %v5518, %v5539
        %v5541 = vsel %vm4381, %v5522, %v5540
        %v5542 = vsel %vm4383, %v5526, %v5541
        %v5543 = vsel %vm4385, %v5530, %v5542
        %v5544 = vsel %vm4387, %v5534, %v5543
        %v5545 = vsel %vm4389, %v5538, %v5544
        %v5547 = vsel %vm1472, %v5545, -inf
        %5548 = vmax.xlane.f32.xlu0 %v5547
        %v5549 = vpop.xlane.xlu0 %5548
        %v5551 = vlaneseq
        %v5552 = vshrl.u32 %v5551, 7
        %v5553 = vsub.s32 0, %v5552
        %v5554 = vrot.slane %v5549, %v5553
        %v5555 = vlaneseq
        %v5556 = vshrl.u32 %v5555, 7
        %v5557 = vsub.s32 1, %v5556
        %v5558 = vrot.slane %v5549, %v5557
        %v5559 = vlaneseq
        %v5560 = vshrl.u32 %v5559, 7
        %v5561 = vsub.s32 2, %v5560
        %v5562 = vrot.slane %v5549, %v5561
        %v5563 = vlaneseq
        %v5564 = vshrl.u32 %v5563, 7
        %v5565 = vsub.s32 3, %v5564
        %v5566 = vrot.slane %v5549, %v5565
        %v5567 = vlaneseq
        %v5568 = vshrl.u32 %v5567, 7
        %v5569 = vsub.s32 4, %v5568
        %v5570 = vrot.slane %v5549, %v5569
        %v5571 = vlaneseq
        %v5572 = vshrl.u32 %v5571, 7
        %v5573 = vsub.s32 5, %v5572
        %v5574 = vrot.slane %v5549, %v5573
        %v5575 = vlaneseq
        %v5576 = vshrl.u32 %v5575, 7
        %v5577 = vsub.s32 6, %v5576
        %v5578 = vrot.slane %v5549, %v5577
        %v5579 = vlaneseq
        %v5580 = vshrl.u32 %v5579, 7
        %v5581 = vsub.s32 7, %v5580
        %v5582 = vrot.slane %v5549, %v5581
        %vm5591 = vcmp.eq.f32.partialorder %v5467, %v5554
        %vm5592 = vcmp.eq.f32.partialorder %v5468, %v5558
        %vm5593 = vcmp.eq.f32.partialorder %v5469, %v5562
        %vm5594 = vcmp.eq.f32.partialorder %v5470, %v5566
        %vm5595 = vcmp.eq.f32.partialorder %v5471, %v5570
        %vm5596 = vcmp.eq.f32.partialorder %v5472, %v5574
        %vm5597 = vcmp.eq.f32.partialorder %v5473, %v5578
        %vm5598 = vcmp.eq.f32.partialorder %v5474, %v5582
        %v5599 = vsel %vm5591, %v4446, 8
        %v5600 = vsel %vm5592, %v4446, 8
        %v5601 = vsel %vm5593, %v4446, 8
        %v5602 = vsel %vm5594, %v4446, 8
        %v5603 = vsel %vm5595, %v4446, 8
        %v5604 = vsel %vm5596, %v4446, 8
        %v5605 = vsel %vm5597, %v4446, 8
        %v5606 = vsel %vm5598, %v4446, 8
        %5607 = vset.pattern.permute.xlu0 0
        %5608 = vperm.xlu0 %5607, %v5599
        %v5609 = vpop.permute.xlu0 %5608
        %5610 = vset.pattern.permute.xlu0 0
        %5611 = vperm.xlu0 %5610, %v5600
        %v5612 = vpop.permute.xlu0 %5611
        %5613 = vset.pattern.permute.xlu0 0
        %5614 = vperm.xlu0 %5613, %v5601
        %v5615 = vpop.permute.xlu0 %5614
        %5616 = vset.pattern.permute.xlu0 0
        %5617 = vperm.xlu0 %5616, %v5602
        %v5618 = vpop.permute.xlu0 %5617
        %5619 = vset.pattern.permute.xlu0 0
        %5620 = vperm.xlu0 %5619, %v5603
        %v5621 = vpop.permute.xlu0 %5620
        %5622 = vset.pattern.permute.xlu0 0
        %5623 = vperm.xlu0 %5622, %v5604
        %v5624 = vpop.permute.xlu0 %5623
        %5625 = vset.pattern.permute.xlu0 0
        %5626 = vperm.xlu0 %5625, %v5605
        %v5627 = vpop.permute.xlu0 %5626
        %5628 = vset.pattern.permute.xlu0 0
        %5629 = vperm.xlu0 %5628, %v5606
        %v5630 = vpop.permute.xlu0 %5629
        %v5631 = vlaneseq
        %v5632 = vshrl.u32 %v5631, 7
        %v5633 = vsub.s32 %v4146, %v5632
        %v5634 = vrot.slane %v5609, %v5633
        %v5635 = vlaneseq
        %v5636 = vshrl.u32 %v5635, 7
        %v5637 = vsub.s32 %v4146, %v5636
        %v5638 = vrot.slane %v5612, %v5637
        %v5639 = vlaneseq
        %v5640 = vshrl.u32 %v5639, 7
        %v5641 = vsub.s32 %v4146, %v5640
        %v5642 = vrot.slane %v5615, %v5641
        %v5643 = vlaneseq
        %v5644 = vshrl.u32 %v5643, 7
        %v5645 = vsub.s32 %v4146, %v5644
        %v5646 = vrot.slane %v5618, %v5645
        %v5647 = vlaneseq
        %v5648 = vshrl.u32 %v5647, 7
        %v5649 = vsub.s32 %v4146, %v5648
        %v5650 = vrot.slane %v5621, %v5649
        %v5651 = vlaneseq
        %v5652 = vshrl.u32 %v5651, 7
        %v5653 = vsub.s32 %v4146, %v5652
        %v5654 = vrot.slane %v5624, %v5653
        %v5655 = vlaneseq
        %v5656 = vshrl.u32 %v5655, 7
        %v5657 = vsub.s32 %v4146, %v5656
        %v5658 = vrot.slane %v5627, %v5657
        %v5659 = vlaneseq
        %v5660 = vshrl.u32 %v5659, 7
        %v5661 = vsub.s32 %v4146, %v5660
        %v5662 = vrot.slane %v5630, %v5661
        %v5663 = vsel %vm4377, %v5638, %v5634
        %v5664 = vsel %vm4379, %v5642, %v5663
        %v5665 = vsel %vm4381, %v5646, %v5664
        %v5666 = vsel %vm4383, %v5650, %v5665
        %v5667 = vsel %vm4385, %v5654, %v5666
        %v5668 = vsel %vm4387, %v5658, %v5667
        %v5669 = vsel %vm4389, %v5662, %v5668
        %v5670 = vsel %vm1472, %v5669, 2147483647
        %v5671 = vand.u32 %v5670, 65535
        %v5672 = vshra.s32 %v5670, 16
        %v5673 = vcvt.s32.f32 %v5671
        %v5674 = vcvt.s32.f32 %v5672
        %5675 = vmin.xlane.f32.xlu0 %v5674
        %v5676 = vpop.xlane.xlu0 %5675
        %vm5677 = vcmp.eq.f32.partialorder %v5674, %v5676
        %v5678 = vsel %vm5677, %v5673, inf
        %5679 = vmin.xlane.f32.xlu0 %v5678
        %v5680 = vpop.xlane.xlu0 %5679
        %v5681 = vcvt.f32.s32 %v5680
        %v5682 = vcvt.f32.s32 %v5676
        %v5683 = vshll.u32 %v5682, 16
        %v5684 = vadd.s32 %v5683, %v5681
        %5685 = vset.pattern.permute.xlu0 6
        %5686 = vperm.xlu0 %5685, %v4164
        %v5687 = vpop.permute.xlu0 %5686
        %v5688 = vlaneseq
        %v5689 = vshrl.u32 %v5688, 7
        %v5690 = vsub.s32 0, %v5689
        %v5691 = vrot.slane %v5687, %v5690
        %vm5692 = vcmp.eq.s32.totalorder %v5691, 1
        %v5693 = vsel %vm5692, %v5549, %v5405
        %v5694 = vlaneseq
        %v5695 = vshrl.u32 %v5694, 7
        %v5696 = vsub.s32 %v4146, %v5695
        %v5697 = vrot.slane %v5684, %v5696
        %5698 = vst.msk [vmem:[#allocation3 + $0x5] sm:$0x1] %vm4182, %v5697
        %v5699 = vadd.f32 %v5693, %v4191
        %v5700 = vadd.f32 %v5693, %v4198
        %v5701 = vadd.f32 %v5693, %v4205
        %v5702 = vadd.f32 %v5693, %v4212
        %v5703 = vadd.f32 %v5693, %v4219
        %v5704 = vadd.f32 %v5693, %v4226
        %v5705 = vadd.f32 %v5693, %v4233
        %v5706 = vadd.f32 %v5693, %v4240
        %v5707 = vlaneseq
        %v5708 = vshrl.u32 %v5707, 7
        %v5709 = vsub.s32 7, %v5708
        %v5710 = vrot.slane %v4117, %v5709
        %5712 = vbcast.lane.b32.xlu0 %v5710, 256
        %v5713 = vpop.permute.xlu0 %5712
        %v5715 = vlaneseq
        %v5716 = vshrl.u32 %v5715, 7
        %v5717 = vsub.s32 0, %v5716
        %v5718 = vrot.slane %v5713, %v5717
        %v5719 = vlaneseq
        %v5720 = vshrl.u32 %v5719, 7
        %v5721 = vsub.s32 1, %v5720
        %v5722 = vrot.slane %v5713, %v5721
        %v5723 = vlaneseq
        %v5724 = vshrl.u32 %v5723, 7
        %v5725 = vsub.s32 2, %v5724
        %v5726 = vrot.slane %v5713, %v5725
        %v5727 = vlaneseq
        %v5728 = vshrl.u32 %v5727, 7
        %v5729 = vsub.s32 3, %v5728
        %v5730 = vrot.slane %v5713, %v5729
        %v5731 = vlaneseq
        %v5732 = vshrl.u32 %v5731, 7
        %v5733 = vsub.s32 4, %v5732
        %v5734 = vrot.slane %v5713, %v5733
        %v5735 = vlaneseq
        %v5736 = vshrl.u32 %v5735, 7
        %v5737 = vsub.s32 5, %v5736
        %v5738 = vrot.slane %v5713, %v5737
        %v5739 = vlaneseq
        %v5740 = vshrl.u32 %v5739, 7
        %v5741 = vsub.s32 6, %v5740
        %v5742 = vrot.slane %v5713, %v5741
        %v5743 = vlaneseq
        %v5744 = vshrl.u32 %v5743, 7
        %v5745 = vsub.s32 7, %v5744
        %v5746 = vrot.slane %v5713, %v5745
        %v5755 = vadd.f32 %v5699, %v5718
        %v5756 = vadd.f32 %v5700, %v5722
        %v5757 = vadd.f32 %v5701, %v5726
        %v5758 = vadd.f32 %v5702, %v5730
        %v5759 = vadd.f32 %v5703, %v5734
        %v5760 = vadd.f32 %v5704, %v5738
        %v5761 = vadd.f32 %v5705, %v5742
        %v5762 = vadd.f32 %v5706, %v5746
        %5771 = vset.pattern.permute.xlu0 0
        %5772 = vperm.xlu0 %5771, %v5755
        %v5773 = vpop.permute.xlu0 %5772
        %5774 = vset.pattern.permute.xlu0 0
        %5775 = vperm.xlu0 %5774, %v5756
        %v5776 = vpop.permute.xlu0 %5775
        %5777 = vset.pattern.permute.xlu0 0
        %5778 = vperm.xlu0 %5777, %v5757
        %v5779 = vpop.permute.xlu0 %5778
        %5780 = vset.pattern.permute.xlu0 0
        %5781 = vperm.xlu0 %5780, %v5758
        %v5782 = vpop.permute.xlu0 %5781
        %5783 = vset.pattern.permute.xlu0 0
        %5784 = vperm.xlu0 %5783, %v5759
        %v5785 = vpop.permute.xlu0 %5784
        %5786 = vset.pattern.permute.xlu0 0
        %5787 = vperm.xlu0 %5786, %v5760
        %v5788 = vpop.permute.xlu0 %5787
        %5789 = vset.pattern.permute.xlu0 0
        %5790 = vperm.xlu0 %5789, %v5761
        %v5791 = vpop.permute.xlu0 %5790
        %5792 = vset.pattern.permute.xlu0 0
        %5793 = vperm.xlu0 %5792, %v5762
        %v5794 = vpop.permute.xlu0 %5793
        %v5795 = vlaneseq
        %v5796 = vshrl.u32 %v5795, 7
        %v5797 = vsub.s32 %v4146, %v5796
        %v5798 = vrot.slane %v5773, %v5797
        %v5799 = vlaneseq
        %v5800 = vshrl.u32 %v5799, 7
        %v5801 = vsub.s32 %v4146, %v5800
        %v5802 = vrot.slane %v5776, %v5801
        %v5803 = vlaneseq
        %v5804 = vshrl.u32 %v5803, 7
        %v5805 = vsub.s32 %v4146, %v5804
        %v5806 = vrot.slane %v5779, %v5805
        %v5807 = vlaneseq
        %v5808 = vshrl.u32 %v5807, 7
        %v5809 = vsub.s32 %v4146, %v5808
        %v5810 = vrot.slane %v5782, %v5809
        %v5811 = vlaneseq
        %v5812 = vshrl.u32 %v5811, 7
        %v5813 = vsub.s32 %v4146, %v5812
        %v5814 = vrot.slane %v5785, %v5813
        %v5815 = vlaneseq
        %v5816 = vshrl.u32 %v5815, 7
        %v5817 = vsub.s32 %v4146, %v5816
        %v5818 = vrot.slane %v5788, %v5817
        %v5819 = vlaneseq
        %v5820 = vshrl.u32 %v5819, 7
        %v5821 = vsub.s32 %v4146, %v5820
        %v5822 = vrot.slane %v5791, %v5821
        %v5823 = vlaneseq
        %v5824 = vshrl.u32 %v5823, 7
        %v5825 = vsub.s32 %v4146, %v5824
        %v5826 = vrot.slane %v5794, %v5825
        %v5827 = vsel %vm4377, %v5802, %v5798
        %v5828 = vsel %vm4379, %v5806, %v5827
        %v5829 = vsel %vm4381, %v5810, %v5828
        %v5830 = vsel %vm4383, %v5814, %v5829
        %v5831 = vsel %vm4385, %v5818, %v5830
        %v5832 = vsel %vm4387, %v5822, %v5831
        %v5833 = vsel %vm4389, %v5826, %v5832
        %v5835 = vsel %vm1472, %v5833, -inf
        %5836 = vmax.xlane.f32.xlu0 %v5835
        %v5837 = vpop.xlane.xlu0 %5836
        %v5839 = vlaneseq
        %v5840 = vshrl.u32 %v5839, 7
        %v5841 = vsub.s32 0, %v5840
        %v5842 = vrot.slane %v5837, %v5841
        %v5843 = vlaneseq
        %v5844 = vshrl.u32 %v5843, 7
        %v5845 = vsub.s32 1, %v5844
        %v5846 = vrot.slane %v5837, %v5845
        %v5847 = vlaneseq
        %v5848 = vshrl.u32 %v5847, 7
        %v5849 = vsub.s32 2, %v5848
        %v5850 = vrot.slane %v5837, %v5849
        %v5851 = vlaneseq
        %v5852 = vshrl.u32 %v5851, 7
        %v5853 = vsub.s32 3, %v5852
        %v5854 = vrot.slane %v5837, %v5853
        %v5855 = vlaneseq
        %v5856 = vshrl.u32 %v5855, 7
        %v5857 = vsub.s32 4, %v5856
        %v5858 = vrot.slane %v5837, %v5857
        %v5859 = vlaneseq
        %v5860 = vshrl.u32 %v5859, 7
        %v5861 = vsub.s32 5, %v5860
        %v5862 = vrot.slane %v5837, %v5861
        %v5863 = vlaneseq
        %v5864 = vshrl.u32 %v5863, 7
        %v5865 = vsub.s32 6, %v5864
        %v5866 = vrot.slane %v5837, %v5865
        %v5867 = vlaneseq
        %v5868 = vshrl.u32 %v5867, 7
        %v5869 = vsub.s32 7, %v5868
        %v5870 = vrot.slane %v5837, %v5869
        %vm5879 = vcmp.eq.f32.partialorder %v5755, %v5842
        %vm5880 = vcmp.eq.f32.partialorder %v5756, %v5846
        %vm5881 = vcmp.eq.f32.partialorder %v5757, %v5850
        %vm5882 = vcmp.eq.f32.partialorder %v5758, %v5854
        %vm5883 = vcmp.eq.f32.partialorder %v5759, %v5858
        %vm5884 = vcmp.eq.f32.partialorder %v5760, %v5862
        %vm5885 = vcmp.eq.f32.partialorder %v5761, %v5866
        %vm5886 = vcmp.eq.f32.partialorder %v5762, %v5870
        %v5887 = vsel %vm5879, %v4446, 8
        %v5888 = vsel %vm5880, %v4446, 8
        %v5889 = vsel %vm5881, %v4446, 8
        %v5890 = vsel %vm5882, %v4446, 8
        %v5891 = vsel %vm5883, %v4446, 8
        %v5892 = vsel %vm5884, %v4446, 8
        %v5893 = vsel %vm5885, %v4446, 8
        %v5894 = vsel %vm5886, %v4446, 8
        %5895 = vset.pattern.permute.xlu0 0
        %5896 = vperm.xlu0 %5895, %v5887
        %v5897 = vpop.permute.xlu0 %5896
        %5898 = vset.pattern.permute.xlu0 0
        %5899 = vperm.xlu0 %5898, %v5888
        %v5900 = vpop.permute.xlu0 %5899
        %5901 = vset.pattern.permute.xlu0 0
        %5902 = vperm.xlu0 %5901, %v5889
        %v5903 = vpop.permute.xlu0 %5902
        %5904 = vset.pattern.permute.xlu0 0
        %5905 = vperm.xlu0 %5904, %v5890
        %v5906 = vpop.permute.xlu0 %5905
        %5907 = vset.pattern.permute.xlu0 0
        %5908 = vperm.xlu0 %5907, %v5891
        %v5909 = vpop.permute.xlu0 %5908
        %5910 = vset.pattern.permute.xlu0 0
        %5911 = vperm.xlu0 %5910, %v5892
        %v5912 = vpop.permute.xlu0 %5911
        %5913 = vset.pattern.permute.xlu0 0
        %5914 = vperm.xlu0 %5913, %v5893
        %v5915 = vpop.permute.xlu0 %5914
        %5916 = vset.pattern.permute.xlu0 0
        %5917 = vperm.xlu0 %5916, %v5894
        %v5918 = vpop.permute.xlu0 %5917
        %v5919 = vlaneseq
        %v5920 = vshrl.u32 %v5919, 7
        %v5921 = vsub.s32 %v4146, %v5920
        %v5922 = vrot.slane %v5897, %v5921
        %v5923 = vlaneseq
        %v5924 = vshrl.u32 %v5923, 7
        %v5925 = vsub.s32 %v4146, %v5924
        %v5926 = vrot.slane %v5900, %v5925
        %v5927 = vlaneseq
        %v5928 = vshrl.u32 %v5927, 7
        %v5929 = vsub.s32 %v4146, %v5928
        %v5930 = vrot.slane %v5903, %v5929
        %v5931 = vlaneseq
        %v5932 = vshrl.u32 %v5931, 7
        %v5933 = vsub.s32 %v4146, %v5932
        %v5934 = vrot.slane %v5906, %v5933
        %v5935 = vlaneseq
        %v5936 = vshrl.u32 %v5935, 7
        %v5937 = vsub.s32 %v4146, %v5936
        %v5938 = vrot.slane %v5909, %v5937
        %v5939 = vlaneseq
        %v5940 = vshrl.u32 %v5939, 7
        %v5941 = vsub.s32 %v4146, %v5940
        %v5942 = vrot.slane %v5912, %v5941
        %v5943 = vlaneseq
        %v5944 = vshrl.u32 %v5943, 7
        %v5945 = vsub.s32 %v4146, %v5944
        %v5946 = vrot.slane %v5915, %v5945
        %v5947 = vlaneseq
        %v5948 = vshrl.u32 %v5947, 7
        %v5949 = vsub.s32 %v4146, %v5948
        %v5950 = vrot.slane %v5918, %v5949
        %v5951 = vsel %vm4377, %v5926, %v5922
        %v5952 = vsel %vm4379, %v5930, %v5951
        %v5953 = vsel %vm4381, %v5934, %v5952
        %v5954 = vsel %vm4383, %v5938, %v5953
        %v5955 = vsel %vm4385, %v5942, %v5954
        %v5956 = vsel %vm4387, %v5946, %v5955
        %v5957 = vsel %vm4389, %v5950, %v5956
        %v5958 = vsel %vm1472, %v5957, 2147483647
        %v5959 = vand.u32 %v5958, 65535
        %v5960 = vshra.s32 %v5958, 16
        %v5961 = vcvt.s32.f32 %v5959
        %v5962 = vcvt.s32.f32 %v5960
        %5963 = vmin.xlane.f32.xlu0 %v5962
        %v5964 = vpop.xlane.xlu0 %5963
        %vm5965 = vcmp.eq.f32.partialorder %v5962, %v5964
        %v5966 = vsel %vm5965, %v5961, inf
        %5967 = vmin.xlane.f32.xlu0 %v5966
        %v5968 = vpop.xlane.xlu0 %5967
        %v5969 = vcvt.f32.s32 %v5968
        %v5970 = vcvt.f32.s32 %v5964
        %v5971 = vshll.u32 %v5970, 16
        %v5972 = vadd.s32 %v5971, %v5969
        %5973 = vset.pattern.permute.xlu0 7
        %5974 = vperm.xlu0 %5973, %v4164
        %v5975 = vpop.permute.xlu0 %5974
        %v5976 = vlaneseq
        %v5977 = vshrl.u32 %v5976, 7
        %v5978 = vsub.s32 0, %v5977
        %v5979 = vrot.slane %v5975, %v5978
        %vm5980 = vcmp.eq.s32.totalorder %v5979, 1
        %v5981 = vsel %vm5980, %v5837, %v5693
        %v5982 = vlaneseq
        %v5983 = vshrl.u32 %v5982, 7
        %v5984 = vsub.s32 %v4146, %v5983
        %v5985 = vrot.slane %v5972, %v5984
        %5986 = vst.msk [vmem:[#allocation3 + $0x6] sm:$0x1] %vm4182, %v5985
        %v5987 = vld [vmem:[%s26] sm:$0x1]
        %v5989 = vlaneseq
        %v5990 = vshrl.u32 %v5989, 7
        %v5991 = vsub.s32 0, %v5990
        %v5992 = vrot.slane %v5987, %v5991
        %5994 = vbcast.lane.b32.xlu0 %v5992, 256
        %v5995 = vpop.permute.xlu0 %5994
        %v5997 = vadd.f32 %v5981, %v5995
        %v5998 = vsel %vm4182, %v1339, 0.0
        %5999 = vadd.xlane.f32.xlu0 %v5998
        %v6000 = vpop.xlane.xlu0 %5999
        %v6001 = vcvt.f32.s32.to.zero.pseudo %v6000
        %v6002 = vsub.s32 %v6001, 1
        %vm6003 = vcmask 7168
        %v6004 = vsel %vm6003, %v5997, -inf
        %v6005 = vrot.slane %v6004, 4
        %v6006 = vmax.f32 %v6004, %v6005
        %v6007 = vrot.slane %v6006, 2
        %v6008 = vmax.f32 %v6006, %v6007
        %v6009 = vrot.slane %v6008, 1
        %v6010 = vmax.f32 %v6008, %v6009
        %6012 = vset.pattern.permute.xlu0 0
        %6013 = vperm.xlu0 %6012, %v6010
        %v6014 = vpop.permute.xlu0 %6013
        %vm6016 = vcmp.eq.f32.partialorder %v5997, %v6014
        %v6017 = vsel %vm6016, %v4446, 8
        %v6018 = vsel %vm6003, %v6017, 2147483647
        %v6019 = vrot.slane %v6018, 4
        %vm6020 = vcmp.lt.s32.totalorder %v6018, %v6019
        %v6021 = vsel %vm6020, %v6018, %v6019
        %v6022 = vrot.slane %v6021, 2
        %vm6023 = vcmp.lt.s32.totalorder %v6021, %v6022
        %v6024 = vsel %vm6023, %v6021, %v6022
        %v6025 = vrot.slane %v6024, 1
        %vm6026 = vcmp.lt.s32.totalorder %v6024, %v6025
        %v6027 = vsel %vm6026, %v6024, %v6025
        %v6028 = vld [vmem:[#allocation3 + $0x6] sm:$0x1]
        %vm6029 = vcmp.eq.s32.totalorder %v4146, 0
        %v6030 = vcvt.s32.f32 %v6028
        %v6031 = vsel %vm6029, %v6030, 0.0
        %v6032 = vsel %vm4182, %v6031, 0.0
        %6033 = vadd.xlane.f32.xlu0 %v6032
        %v6034 = vpop.xlane.xlu0 %6033
        %v6035 = vcvt.f32.s32.to.zero.pseudo %v6034
        %vm6036 = vcmp.eq.s32.totalorder %v6002, 7
        %vm6037 = vcmp.gt.s32.totalorder %v6002, 7
        %v6038 = vsel %vm6037, %v6035, 0
        %v6039 = vsel %vm6036, %v6027, %v6038
        %vm6040 = vcmp.eq.s32.totalorder %v4146, 7
        %6041 = vset.pattern.permute.xlu0 0
        %6042 = vperm.xlu0 %6041, %v6039
        %v6043 = vpop.permute.xlu0 %6042
        %v6044 = vsel %vm6040, %v6043, 0
        %vm6045 = vcmp.eq.s32.totalorder %v4146, %v6043
        %v6046 = vsel %vm6045, %v6030, 0.0
        %v6047 = vsel %vm4182, %v6046, 0.0
        %6048 = vadd.xlane.f32.xlu0 %v6047
        %v6049 = vpop.xlane.xlu0 %6048
        %v6050 = vcvt.f32.s32.to.zero.pseudo %v6049
        %vm6051 = vcmp.eq.s32.totalorder %v6002, 6
        %vm6052 = vcmp.gt.s32.totalorder %v6002, 6
        %v6053 = vsel %vm6052, %v6050, 0
        %v6054 = vsel %vm6051, %v6027, %v6053
        %vm6055 = vcmp.eq.s32.totalorder %v4146, 6
        %6056 = vset.pattern.permute.xlu0 0
        %6057 = vperm.xlu0 %6056, %v6054
        %v6058 = vpop.permute.xlu0 %6057
        %v6059 = vsel %vm6055, %v6058, %v6044
        %v6060 = vld [vmem:[#allocation3 + $0x5] sm:$0x1]
        %vm6061 = vcmp.eq.s32.totalorder %v4146, %v6058
        %v6062 = vcvt.s32.f32 %v6060
        %v6063 = vsel %vm6061, %v6062, 0.0
        %v6064 = vsel %vm4182, %v6063, 0.0
        %6065 = vadd.xlane.f32.xlu0 %v6064
        %v6066 = vpop.xlane.xlu0 %6065
        %v6067 = vcvt.f32.s32.to.zero.pseudo %v6066
        %vm6068 = vcmp.eq.s32.totalorder %v6002, 5
        %vm6069 = vcmp.gt.s32.totalorder %v6002, 5
        %v6070 = vsel %vm6069, %v6067, 0
        %v6071 = vsel %vm6068, %v6027, %v6070
        %vm6072 = vcmp.eq.s32.totalorder %v4146, 5
        %6073 = vset.pattern.permute.xlu0 0
        %6074 = vperm.xlu0 %6073, %v6071
        %v6075 = vpop.permute.xlu0 %6074
        %v6076 = vsel %vm6072, %v6075, %v6059
        %v6077 = vld [vmem:[#allocation3 + $0x4] sm:$0x1]
        %vm6078 = vcmp.eq.s32.totalorder %v4146, %v6075
        %v6079 = vcvt.s32.f32 %v6077
        %v6080 = vsel %vm6078, %v6079, 0.0
        %v6081 = vsel %vm4182, %v6080, 0.0
        %6082 = vadd.xlane.f32.xlu0 %v6081
        %v6083 = vpop.xlane.xlu0 %6082
        %v6084 = vcvt.f32.s32.to.zero.pseudo %v6083
        %vm6085 = vcmp.eq.s32.totalorder %v6002, 4
        %vm6086 = vcmp.gt.s32.totalorder %v6002, 4
        %v6087 = vsel %vm6086, %v6084, 0
        %v6088 = vsel %vm6085, %v6027, %v6087
        %vm6089 = vcmp.eq.s32.totalorder %v4146, 4
        %6090 = vset.pattern.permute.xlu0 0
        %6091 = vperm.xlu0 %6090, %v6088
        %v6092 = vpop.permute.xlu0 %6091
        %v6093 = vsel %vm6089, %v6092, %v6076
        %v6094 = vld [vmem:[#allocation3 + $0x3] sm:$0x1]
        %vm6095 = vcmp.eq.s32.totalorder %v4146, %v6092
        %v6096 = vcvt.s32.f32 %v6094
        %v6097 = vsel %vm6095, %v6096, 0.0
        %v6098 = vsel %vm4182, %v6097, 0.0
        %6099 = vadd.xlane.f32.xlu0 %v6098
        %v6100 = vpop.xlane.xlu0 %6099
        %v6101 = vcvt.f32.s32.to.zero.pseudo %v6100
        %vm6102 = vcmp.eq.s32.totalorder %v6002, 3
        %vm6103 = vcmp.gt.s32.totalorder %v6002, 3
        %v6104 = vsel %vm6103, %v6101, 0
        %v6105 = vsel %vm6102, %v6027, %v6104
        %vm6106 = vcmp.eq.s32.totalorder %v4146, 3
        %6107 = vset.pattern.permute.xlu0 0
        %6108 = vperm.xlu0 %6107, %v6105
        %v6109 = vpop.permute.xlu0 %6108
        %v6110 = vsel %vm6106, %v6109, %v6093
        %v6111 = vld [vmem:[#allocation3 + $0x2] sm:$0x1]
        %vm6112 = vcmp.eq.s32.totalorder %v4146, %v6109
        %v6113 = vcvt.s32.f32 %v6111
        %v6114 = vsel %vm6112, %v6113, 0.0
        %v6115 = vsel %vm4182, %v6114, 0.0
        %6116 = vadd.xlane.f32.xlu0 %v6115
        %v6117 = vpop.xlane.xlu0 %6116
        %v6118 = vcvt.f32.s32.to.zero.pseudo %v6117
        %vm6119 = vcmp.eq.s32.totalorder %v6002, 2
        %vm6120 = vcmp.gt.s32.totalorder %v6002, 2
        %v6121 = vsel %vm6120, %v6118, 0
        %v6122 = vsel %vm6119, %v6027, %v6121
        %vm6123 = vcmp.eq.s32.totalorder %v4146, 2
        %6124 = vset.pattern.permute.xlu0 0
        %6125 = vperm.xlu0 %6124, %v6122
        %v6126 = vpop.permute.xlu0 %6125
        %v6127 = vsel %vm6123, %v6126, %v6110
        %v6128 = vld [vmem:[#allocation3 + $0x1] sm:$0x1]
        %vm6129 = vcmp.eq.s32.totalorder %v4146, %v6126
        %v6130 = vcvt.s32.f32 %v6128
        %v6131 = vsel %vm6129, %v6130, 0.0
        %v6132 = vsel %vm4182, %v6131, 0.0
        %6133 = vadd.xlane.f32.xlu0 %v6132
        %v6134 = vpop.xlane.xlu0 %6133
        %v6135 = vcvt.f32.s32.to.zero.pseudo %v6134
        %vm6136 = vcmp.eq.s32.totalorder %v6002, 1
        %vm6137 = vcmp.gt.s32.totalorder %v6002, 1
        %v6138 = vsel %vm6137, %v6135, 0
        %v6139 = vsel %vm6136, %v6027, %v6138
        %vm6140 = vcmp.eq.s32.totalorder %v4146, 1
        %6141 = vset.pattern.permute.xlu0 0
        %6142 = vperm.xlu0 %6141, %v6139
        %v6143 = vpop.permute.xlu0 %6142
        %v6144 = vsel %vm6140, %v6143, %v6127
        %v6145 = vld [vmem:[#allocation3] sm:$0x1]
        %vm6146 = vcmp.eq.s32.totalorder %v4146, %v6143
        %v6147 = vcvt.s32.f32 %v6145
        %v6148 = vsel %vm6146, %v6147, 0.0
        %v6149 = vsel %vm4182, %v6148, 0.0
        %6150 = vadd.xlane.f32.xlu0 %v6149
        %v6151 = vpop.xlane.xlu0 %6150
        %v6152 = vcvt.f32.s32.to.zero.pseudo %v6151
        %vm6153 = vcmp.eq.s32.totalorder %v6002, 0
        %vm6154 = vcmp.gt.s32.totalorder %v6002, 0
        %v6155 = vsel %vm6154, %v6152, 0
        %v6156 = vsel %vm6153, %v6027, %v6155
        %6157 = vset.pattern.permute.xlu0 0
        %6158 = vperm.xlu0 %6157, %v6156
        %v6159 = vpop.permute.xlu0 %6158
        %v6160 = vsel %vm6029, %v6159, %v6144
        %6161 = vst.msk [vmem:[%s813] sm:$0x1] %vm4182, %v6160
        %s6162 = sand.u32 %s628, 1
        %s6163 = scalar_lea.sflag [#allocation7], %s6162
        %s6164 = sand.u32 %s628, 1
        %s6165 = scalar_lea.vmem [#allocation6], %s6164
        // Predicated region
        $region129: #{forward.1} parent=127 // pred_check
          %p6166 = pneg %p638
        $region130: #{forward.1} parent=127 // pred_check_branch
          %6168 = sbr.rel (%p6166) target = $region132
        $region131: #{forward.1} parent=127 // pred_region
          %s6170 = ssub.s32 16, 16
          %6171 = vsyncadd %s6163, %s6170
          %s6172 = smul.addr %s48, 16
          %s6173 = scalar_lea.hbm %s28, %s6172
          %s6175 = sshll.u32 %s6165, 4
          %s6176 = int_to_ptr.vmem [resolvable:$true] %s6175
          %6178 = dma.vmem_to_hbm [thread:$0]  %s6176, 16, %s6173, %s6163
        $region132: #{forward.1} parent=127 // pred_fallthru
          _
      $region128: #{forward.1} parent=5 // pred_fallthru
        _
      %p6179 = scmp.le.s32.totalorder 2, %s43
      // Predicated region
      $region133: #{forward.1} parent=5 // pred_check
        %p6180 = pneg %p6179
      $region134: #{forward.1} parent=5 // pred_check_branch
        %6182 = sbr.rel (%p6180) target = $region136
      $region135: #{forward.1} parent=5 // pred_region
        %s6183 = ssub.s32 %s43, 2
        // Predicated region
        $region137: #{forward.1} parent=135 // pred_check
          %p6184 = pneg %p644
        $region138: #{forward.1} parent=135 // pred_check_branch
          %6186 = sbr.rel (%p6184) target = $region140
        $region139: #{forward.1} parent=135 // pred_region
          %s6187 = sand.u32 %s629, 1
          %s6188 = scalar_lea.sflag [#allocation7], %s6187
          %s6189 = sand.u32 %s629, 1
          %s6190 = scalar_lea.vmem [#allocation6], %s6189
          %6191 = dma.done %s6188, 16
        $region140: #{forward.1} parent=135 // pred_fallthru
          _
      $region136: #{forward.1} parent=5 // pred_fallthru
        _
    $region6: #{forward.1} parent=1 // loop_footer
      %s47 = sadd.s32 1, %s43
    $region7: #{forward.1} parent=1 // loop_footer_branch
      %42 = sbr.rel target = $region3
    $region8: #{forward.1} parent=1 // loop_exit
      _
    %6192 = vsyncpa [#allocation7], 1
    %s6193 = scalar_lea.sflag [#allocation7], 1
    %6194 = vsyncpa %s6193, 1

</llo_original>
